<compile_context>
chip_gen: v5e
topology: v5e:2x2
jax: 0.10.0
libtpu: 0.0.40
codegen_flags: <defaults>
</compile_context>

<pallas_src>
import functools

import jax
import jax.numpy as jnp
from jax import lax
from jax.experimental import pallas as pl
from jax.experimental.pallas import tpu as pltpu

LN_EPS = 1e-5                      # torch.nn.LayerNorm default
MATMUL_DTYPE = jnp.bfloat16        # MXU operand dtype (accumulation is f32)
VMEM_LIMIT = 32 * 1024 * 1024      # safe on v5e/v6e/v7x (<= scoped default)

# 'qd,kd->qk': contract the last dim of both operands (MXU q @ k^T pattern).
_DN_QK = (((1,), (1,)), ((), ()))


# ----------------------------- in-kernel helpers -----------------------------

def _layernorm(x, gamma, beta):
    # torch LayerNorm: biased variance over last dim, eps inside sqrt. (f32)
    mu = jnp.mean(x, axis=-1, keepdims=True)
    var = jnp.mean((x - mu) ** 2, axis=-1, keepdims=True)
    return (x - mu) * lax.rsqrt(var + LN_EPS) * gamma + beta


def _gelu(x):
    # TODO(synk): PyTorch nn.GELU default is the exact erf form; erf lowering
    # on the Mosaic backend is not guaranteed, so the tanh approximation is
    # used (small numeric divergence vs the reference).
    c = 0.7978845608028654  # sqrt(2/pi)
    return 0.5 * x * (1.0 + jnp.tanh(c * (x + 0.044715 * x * x * x)))


# --------------------- fused embed + transformer kernel ----------------------

def _fused_kernel(tok_ref, ew_ref, eb_ref, cls_ref,
                  g1_ref, b1_ref, wq_ref, wk_ref, wv_ref, wo_ref, bo_ref,
                  g2_ref, b2_ref, w1_ref, c1_ref, w2_ref, c2_ref,
                  op_ref, oc_ref, xp_scr, xc_scr, *, heads, dim_head):
    l = pl.program_id(1)
    dh = dim_head

    # ---- depth step 0: patch embedding, activations become VMEM-resident ----
    @pl.when(l == 0)
    def _():
        xp_scr[...] = (jnp.dot(tok_ref[0], ew_ref[...],
                               preferred_element_type=jnp.float32)
                       + eb_ref[...])
        xc_scr[...] = cls_ref[...]

    xp = xp_scr[...]                                  # (N, D) f32 patch tokens
    xc = xc_scr[...]                                  # (1, D) f32 cls token

    # -------------------- PreNorm + multi-head attention ---------------------
    g1 = g1_ref[0]; b1 = b1_ref[0]
    xpn = _layernorm(xp, g1, b1).astype(MATMUL_DTYPE)
    xcn = _layernorm(xc, g1, b1).astype(MATMUL_DTYPE)

    wq = wq_ref[0]; wk = wk_ref[0]; wv = wv_ref[0]    # (D, H*dh) bf16
    # Plain 2-D projections (scale dh^-0.5 pre-folded into wq at init).
    q = jnp.dot(xpn, wq, preferred_element_type=jnp.float32)   # (N, H*dh)
    k = jnp.dot(xpn, wk, preferred_element_type=jnp.float32)
    v = jnp.dot(xpn, wv, preferred_element_type=jnp.float32)
    qc = jnp.dot(xcn, wq, preferred_element_type=jnp.float32)  # (1, H*dh)
    kc = jnp.dot(xcn, wk, preferred_element_type=jnp.float32)
    vc = jnp.dot(xcn, wv, preferred_element_type=jnp.float32)
    q_b = q.astype(MATMUL_DTYPE)
    k_b = k.astype(MATMUL_DTYPE)
    v_b = v.astype(MATMUL_DTYPE)

    av_parts, avc_parts = [], []
    for h in range(heads):                            # static, fully unrolled
        sl = slice(h * dh, (h + 1) * dh)
        qh_b, kh_b, vh_b = q_b[:, sl], k_b[:, sl], v_b[:, sl]
        qh, kh, vh = q[:, sl], k[:, sl], v[:, sl]
        qch, kch, vch = qc[:, sl], kc[:, sl], vc[:, sl]

        # --- patch-query rows: dense NxN block + rank-1 cls-key column ---
        s_pp = lax.dot_general(qh_b, kh_b, _DN_QK,
                               preferred_element_type=jnp.float32)   # (N, N)
        s_pc = jnp.sum(qh * kch, axis=-1, keepdims=True)             # (N, 1)
        m = jnp.maximum(jnp.max(s_pp, axis=-1, keepdims=True), s_pc)
        e_pp = jnp.exp(s_pp - m)
        e_pc = jnp.exp(s_pc - m)
        r = pl.reciprocal(jnp.sum(e_pp, axis=-1, keepdims=True) + e_pc,
                          approx=True)                               # (N, 1)
        # Deferred normalization: scale the (N, dh) result once, not (N, N).
        av = (jnp.dot(e_pp.astype(MATMUL_DTYPE), vh_b,
                      preferred_element_type=jnp.float32)
              + e_pc * vch) * r                                      # (N, dh)
        av_parts.append(av)

        # --- cls-query row: elementwise + reductions (stays dense) ---
        s_cp = jnp.sum(qch * kh, axis=-1, keepdims=True)             # (N, 1)
        s_cc = jnp.sum(qch * kch, axis=-1, keepdims=True)            # (1, 1)
        m_c = jnp.maximum(jnp.max(s_cp, axis=0, keepdims=True), s_cc)
        e_cp = jnp.exp(s_cp - m_c)
        e_cc = jnp.exp(s_cc - m_c)
        r_c = pl.reciprocal(jnp.sum(e_cp, axis=0, keepdims=True) + e_cc,
                            approx=True)                             # (1, 1)
        avc = (jnp.sum(e_cp * vh, axis=0, keepdims=True)
               + e_cc * vch) * r_c                                   # (1, dh)
        avc_parts.append(avc)

    # Out-projection on lane-concatenated heads == concat(heads) @ Wo.
    av_all = jnp.concatenate(av_parts, axis=-1).astype(MATMUL_DTYPE)   # (N, H*dh)
    avc_all = jnp.concatenate(avc_parts, axis=-1).astype(MATMUL_DTYPE)  # (1, H*dh)
    wo = wo_ref[0]; bo = bo_ref[0]
    xp2 = xp + jnp.dot(av_all, wo, preferred_element_type=jnp.float32) + bo
    xc2 = xc + jnp.dot(avc_all, wo, preferred_element_type=jnp.float32) + bo

    # ---------------------- PreNorm + FeedForward (GELU) ---------------------
    g2 = g2_ref[0]; b2 = b2_ref[0]
    w1 = w1_ref[0]; c1 = c1_ref[0]; w2 = w2_ref[0]; c2 = c2_ref[0]

    def _ff(z):
        zn = _layernorm(z, g2, b2).astype(MATMUL_DTYPE)
        hdn = jnp.dot(zn, w1, preferred_element_type=jnp.float32) + c1
        hdn = _gelu(hdn).astype(MATMUL_DTYPE)
        return jnp.dot(hdn, w2, preferred_element_type=jnp.float32) + c2

    xp3 = xp2 + _ff(xp2)
    xc3 = xc2 + _ff(xc2)            # TODO(synk): could be merged into one slab

    xp_scr[...] = xp3
    xc_scr[...] = xc3

    @pl.when(l == pl.num_programs(1) - 1)
    def _():
        op_ref[0] = xp3
        oc_ref[0] = xc3


def _rep_spec(shape):
    """Parameter replicated across the whole (batch, depth) grid."""
    nd = len(shape)
    return pl.BlockSpec(shape, lambda b, l, _nd=nd: (0,) * _nd)


def _layer_spec(tail):
    """Per-layer weight stacked along a leading depth axis, indexed by l."""
    nd = len(tail)
    return pl.BlockSpec((1,) + tail, lambda b, l, _nd=nd: (l,) + (0,) * _nd)


def transm_encode(tokens, params, *, heads, dim_head):
    """tokens: (B, N, Cin) bf16 -> (patch tokens (B,N,D), cls (B,1,D)) f32."""
    B, N, Cin = tokens.shape
    D = params["embed_w"].shape[1]
    depth = params["wq"].shape[0]
    inner = heads * dim_head
    mlp = params["w1"].shape[2]

    kernel = functools.partial(_fused_kernel, heads=heads, dim_head=dim_head)
    out_p, out_c = pl.pallas_call(
        kernel,
        out_shape=(jax.ShapeDtypeStruct((B, N, D), jnp.float32),
                   jax.ShapeDtypeStruct((B, 1, D), jnp.float32)),
        grid=(B, depth),
        in_specs=[
            pl.BlockSpec((1, N, Cin), lambda b, l: (b, 0, 0)),   # raw tokens
            _rep_spec((Cin, D)), _rep_spec((1, D)),              # embed w, b
            _rep_spec((1, D)),                                   # cls token
            _layer_spec((1, D)), _layer_spec((1, D)),            # LN1 g, b
            _layer_spec((D, inner)), _layer_spec((D, inner)),    # wq, wk
            _layer_spec((D, inner)),                             # wv
            _layer_spec((inner, D)), _layer_spec((1, D)),        # wo, bo
            _layer_spec((1, D)), _layer_spec((1, D)),            # LN2 g, b
            _layer_spec((D, mlp)), _layer_spec((1, mlp)),        # MLP fc1
            _layer_spec((mlp, D)), _layer_spec((1, D)),          # MLP fc2
        ],
        out_specs=(pl.BlockSpec((1, N, D), lambda b, l: (b, 0, 0)),
                   pl.BlockSpec((1, 1, D), lambda b, l: (b, 0, 0))),
        scratch_shapes=[pltpu.VMEM((N, D), jnp.float32),   # resident patch acts
                        pltpu.VMEM((1, D), jnp.float32)],  # resident cls act
        compiler_params=pltpu.CompilerParams(
            dimension_semantics=("parallel", "arbitrary"),   # batch x depth
            vmem_limit_bytes=VMEM_LIMIT),
    )(tokens, params["embed_w"], params["embed_b"], params["cls"],
      params["g1"], params["b1"], params["wq"], params["wk"], params["wv"],
      params["wo"], params["bo"], params["g2"], params["b2"],
      params["w1"], params["c1"], params["w2"], params["c2"])
    return out_p, out_c


# ------------------------------- parameters ----------------------------------

def init_params(key, in_channel, out_channel, depth, heads, dim_head, mlp_dim):
    """Weights laid out, pre-split, pre-scaled and cast ONCE for the kernel."""
    inner = heads * dim_head
    D = out_channel
    scale = dim_head ** -0.5
    keys = jax.random.split(key, 2 + depth)
    params = {
        "embed_w": (0.02 * jax.random.normal(keys[0], (in_channel, D),
                                             jnp.float32)).astype(MATMUL_DTYPE),
        "embed_b": jnp.zeros((1, D), jnp.float32),
        "cls": jax.random.normal(keys[1], (1, D), jnp.float32),
    }
    acc = {n: [] for n in ("g1", "b1", "wq", "wk", "wv", "wo", "bo",
                           "g2", "b2", "w1", "c1", "w2", "c2")}
    for l in range(depth):
        lk = jax.random.split(keys[2 + l], 4)
        wqkv = 0.02 * jax.random.normal(lk[0], (D, 3 * inner), jnp.float32)
        wo = 0.02 * jax.random.normal(lk[1], (inner, D), jnp.float32)
        w1 = 0.02 * jax.random.normal(lk[2], (D, mlp_dim), jnp.float32)
        w2 = 0.02 * jax.random.normal(lk[3], (mlp_dim, D), jnp.float32)
        acc["g1"].append(jnp.ones((1, D), jnp.float32))
        acc["b1"].append(jnp.zeros((1, D), jnp.float32))
        # Pre-split QKV; fold the dh^-0.5 attention scale into Q's columns.
        acc["wq"].append((wqkv[:, 0 * inner:1 * inner] * scale).astype(MATMUL_DTYPE))
        acc["wk"].append(wqkv[:, 1 * inner:2 * inner].astype(MATMUL_DTYPE))
        acc["wv"].append(wqkv[:, 2 * inner:3 * inner].astype(MATMUL_DTYPE))
        acc["wo"].append(wo.astype(MATMUL_DTYPE))            # concat@Wo form
        acc["bo"].append(jnp.zeros((1, D), jnp.float32))
        acc["g2"].append(jnp.ones((1, D), jnp.float32))
        acc["b2"].append(jnp.zeros((1, D), jnp.float32))
        acc["w1"].append(w1.astype(MATMUL_DTYPE))
        acc["c1"].append(jnp.zeros((1, mlp_dim), jnp.float32))
        acc["w2"].append(w2.astype(MATMUL_DTYPE))
        acc["c2"].append(jnp.zeros((1, D), jnp.float32))
    for n, lst in acc.items():
        params[n] = jnp.stack(lst, axis=0)                    # (depth, ...)
    return params


# -------------------------------- forward ------------------------------------

def transm_forward(params, x, *, p_size, heads, dim_head):
    B, C, H, W = x.shape
    ph, pw = H // p_size, W // p_size

    # rearrange 'b c (h p1) (w p2) -> b (h w) (p1 p2 c)'
    t = x.reshape(B, C, ph, p_size, pw, p_size)
    t = jnp.transpose(t, (0, 2, 4, 3, 5, 1))                  # b h w p1 p2 c
    tokens = t.reshape(B, ph * pw, p_size * p_size * C).astype(MATMUL_DTYPE)

    # Fused patch-embed + all transformer layers; cls token carried separately
    # (full attention is permutation-equivariant and only x[:, 1:] is used).
    xp, _ = transm_encode(tokens, params, heads=heads, dim_head=dim_head)
    D = xp.shape[-1]

    # rearrange 'b (h w) (p1 p2 c) -> b c (h p1) (w p2)' with h=H, w=W as in
    # the reference (only consistent when p_size == 1, which the demo uses).
    # TODO(synk): reference rearrange itself is only shape-consistent for p_size==1.
    c_out = D // (p_size * p_size)
    out = xp.reshape(B, H, W, p_size, p_size, c_out)
    out = jnp.transpose(out, (0, 5, 1, 3, 2, 4)).reshape(
        B, c_out, H * p_size, W * p_size)
    return out


# ---------------------------------- main --------------------------------------

if __name__ == "__main__":
    key = jax.random.PRNGKey(0)
    kx, kp = jax.random.split(key)

    # Small, consistent config: p_size=1 => in_channel = p^2 * C = 4
    B, C, H, W = 2, 4, 16, 16
    p_size = 1
    in_channel = p_size * p_size * C
    out_channel = 32
    T_depth, heads, dim_head, mlp_dim = 2, 2, 16, 64

    x = jax.random.normal(kx, (B, C, H, W), jnp.float32)
    params = init_params(kp, in_channel, out_channel, T_depth, heads,
                         dim_head, mlp_dim)

    fwd = jax.jit(functools.partial(transm_forward, p_size=p_size,
                                    heads=heads, dim_head=dim_head))
    y = fwd(params, x)
    jax.block_until_ready(y)
    assert y.shape == (B, out_channel, H, W), y.shape
    assert bool(jnp.all(jnp.isfinite(y)))
    print("KERNEL_OK")
</pallas_src>

<mosaic_0001>
module attributes {stable_mosaic.version = 11 : i64} {
  func.func @_fused_kernel(%arg0: i32, %arg1: i32, %arg2: memref<1x256x4xbf16, #tpu.memory_space<vmem>>, %arg3: memref<4x32xbf16, #tpu.memory_space<vmem>>, %arg4: memref<1x32xf32, #tpu.memory_space<vmem>>, %arg5: memref<1x32xf32, #tpu.memory_space<vmem>>, %arg6: memref<1x1x32xf32, #tpu.memory_space<vmem>>, %arg7: memref<1x1x32xf32, #tpu.memory_space<vmem>>, %arg8: memref<1x32x32xbf16, #tpu.memory_space<vmem>>, %arg9: memref<1x32x32xbf16, #tpu.memory_space<vmem>>, %arg10: memref<1x32x32xbf16, #tpu.memory_space<vmem>>, %arg11: memref<1x32x32xbf16, #tpu.memory_space<vmem>>, %arg12: memref<1x1x32xf32, #tpu.memory_space<vmem>>, %arg13: memref<1x1x32xf32, #tpu.memory_space<vmem>>, %arg14: memref<1x1x32xf32, #tpu.memory_space<vmem>>, %arg15: memref<1x32x64xbf16, #tpu.memory_space<vmem>>, %arg16: memref<1x1x64xf32, #tpu.memory_space<vmem>>, %arg17: memref<1x64x32xbf16, #tpu.memory_space<vmem>>, %arg18: memref<1x1x32xf32, #tpu.memory_space<vmem>>, %arg19: memref<1x256x32xf32, #tpu.memory_space<vmem>>, %arg20: memref<1x1x32xf32, #tpu.memory_space<vmem>>, %arg21: memref<256x32xf32, #tpu.memory_space<vmem>>, %arg22: memref<1x32xf32, #tpu.memory_space<vmem>>) attributes {dimension_semantics = [#tpu.dimension_semantics<parallel>, #tpu.dimension_semantics<arbitrary>], iteration_bounds = array<i64: 2, 2>, scalar_prefetch = 0 : i64, scratch_operands = 2 : i64, tpu.core_type = #tpu.core_type<tc>, window_params = [{transform_indices = @transform_0, window_bounds = array<i64: 1, 256, 4>}, {pipeline_mode = #tpu.pipeline_mode<synchronous>, transform_indices = @transform_1, window_bounds = array<i64: 4, 32>}, {pipeline_mode = #tpu.pipeline_mode<synchronous>, transform_indices = @transform_2, window_bounds = array<i64: 1, 32>}, {pipeline_mode = #tpu.pipeline_mode<synchronous>, transform_indices = @transform_3, window_bounds = array<i64: 1, 32>}, {transform_indices = @transform_4, window_bounds = array<i64: 1, 1, 32>}, {transform_indices = @transform_5, window_bounds = array<i64: 1, 1, 32>}, {transform_indices = @transform_6, window_bounds = array<i64: 1, 32, 32>}, {transform_indices = @transform_7, window_bounds = array<i64: 1, 32, 32>}, {transform_indices = @transform_8, window_bounds = array<i64: 1, 32, 32>}, {transform_indices = @transform_9, window_bounds = array<i64: 1, 32, 32>}, {transform_indices = @transform_10, window_bounds = array<i64: 1, 1, 32>}, {transform_indices = @transform_11, window_bounds = array<i64: 1, 1, 32>}, {transform_indices = @transform_12, window_bounds = array<i64: 1, 1, 32>}, {transform_indices = @transform_13, window_bounds = array<i64: 1, 32, 64>}, {transform_indices = @transform_14, window_bounds = array<i64: 1, 1, 64>}, {transform_indices = @transform_15, window_bounds = array<i64: 1, 64, 32>}, {transform_indices = @transform_16, window_bounds = array<i64: 1, 1, 32>}, {transform_indices = @transform_17, window_bounds = array<i64: 1, 256, 32>}, {transform_indices = @transform_18, window_bounds = array<i64: 1, 1, 32>}]} {
    %c0_i32 = arith.constant 0 : i32
    %0 = arith.cmpi eq, %arg1, %c0_i32 : i32
    %1 = arith.extui %0 : i1 to i32
    %c0_i32_0 = arith.constant 0 : i32
    %2 = arith.cmpi ne, %1, %c0_i32_0 : i32
    scf.if %2 {
      %c0_107 = arith.constant 0 : index
      %c0_108 = arith.constant 0 : index
      %c0_109 = arith.constant 0 : index
      %308 = vector.load %arg2[%c0_107, %c0_108, %c0_109] : memref<1x256x4xbf16, #tpu.memory_space<vmem>>, vector<1x256x4xbf16>
      %309 = vector.shape_cast %308 : vector<1x256x4xbf16> to vector<256x4xbf16>
      %c0_110 = arith.constant 0 : index
      %c0_111 = arith.constant 0 : index
      %310 = vector.load %arg3[%c0_110, %c0_111] : memref<4x32xbf16, #tpu.memory_space<vmem>>, vector<4x32xbf16>
      %cst_112 = arith.constant dense<0.000000e+00> : vector<256x32xf32>
      %311 = tpu.matmul %309, %310, %cst_112 {dimension_numbers = #tpu.dot_dimension_numbers<[1], [0], [0], [1], [0, 0, 1, 1], [], []>} : vector<256x4xbf16>, vector<4x32xbf16>, vector<256x32xf32> -> vector<256x32xf32>
      %c0_113 = arith.constant 0 : index
      %c0_114 = arith.constant 0 : index
      %312 = vector.load %arg4[%c0_113, %c0_114] : memref<1x32xf32, #tpu.memory_space<vmem>>, vector<1x32xf32>
      %313 = vector.broadcast %312 : vector<1x32xf32> to vector<256x32xf32>
      %314 = arith.addf %311, %313 : vector<256x32xf32>
      %c0_115 = arith.constant 0 : index
      %c0_116 = arith.constant 0 : index
      %315 = vector.load %arg21[%c0_115, %c0_116] : memref<256x32xf32, #tpu.memory_space<vmem>>, vector<256x32xf32>
      tpu.vector_store %arg21[%c0_115, %c0_116], %314 {strides = array<i32>} : memref<256x32xf32, #tpu.memory_space<vmem>>, vector<256x32xf32>,
      %c0_117 = arith.constant 0 : index
      %c0_118 = arith.constant 0 : index
      %316 = vector.load %arg5[%c0_117, %c0_118] : memref<1x32xf32, #tpu.memory_space<vmem>>, vector<1x32xf32>
      %c0_119 = arith.constant 0 : index
      %c0_120 = arith.constant 0 : index
      %317 = vector.load %arg22[%c0_119, %c0_120] : memref<1x32xf32, #tpu.memory_space<vmem>>, vector<1x32xf32>
      tpu.vector_store %arg22[%c0_119, %c0_120], %316 {strides = array<i32>} : memref<1x32xf32, #tpu.memory_space<vmem>>, vector<1x32xf32>,
    } else {
    }
    %c0 = arith.constant 0 : index
    %c0_1 = arith.constant 0 : index
    %3 = vector.load %arg21[%c0, %c0_1] : memref<256x32xf32, #tpu.memory_space<vmem>>, vector<256x32xf32>
    %c0_2 = arith.constant 0 : index
    %c0_3 = arith.constant 0 : index
    %4 = vector.load %arg22[%c0_2, %c0_3] : memref<1x32xf32, #tpu.memory_space<vmem>>, vector<1x32xf32>
    %c0_4 = arith.constant 0 : index
    %c0_5 = arith.constant 0 : index
    %c0_6 = arith.constant 0 : index
    %5 = vector.load %arg6[%c0_4, %c0_5, %c0_6] : memref<1x1x32xf32, #tpu.memory_space<vmem>>, vector<1x1x32xf32>
    %6 = vector.shape_cast %5 : vector<1x1x32xf32> to vector<1x32xf32>
    %c0_7 = arith.constant 0 : index
    %c0_8 = arith.constant 0 : index
    %c0_9 = arith.constant 0 : index
    %7 = vector.load %arg7[%c0_7, %c0_8, %c0_9] : memref<1x1x32xf32, #tpu.memory_space<vmem>>, vector<1x1x32xf32>
    %8 = vector.shape_cast %7 : vector<1x1x32xf32> to vector<1x32xf32>
    %cst = arith.constant dense<0.000000e+00> : vector<256xf32>
    %9 = vector.multi_reduction <add>, %3, %cst [1] : vector<256x32xf32> to vector<256xf32>
    %10 = vector.shape_cast %9 : vector<256xf32> to vector<256x1xf32>
    %cst_10 = arith.constant 3.200000e+01 : f32
    %11 = vector.broadcast %cst_10 : f32 to vector<256x1xf32>
    %12 = arith.divf %10, %11 : vector<256x1xf32>
    %13 = vector.broadcast %12 : vector<256x1xf32> to vector<256x32xf32>
    %14 = arith.subf %3, %13 : vector<256x32xf32>
    %15 = arith.mulf %14, %14 : vector<256x32xf32>
    %cst_11 = arith.constant dense<0.000000e+00> : vector<256xf32>
    %16 = vector.multi_reduction <add>, %15, %cst_11 [1] : vector<256x32xf32> to vector<256xf32>
    %17 = vector.shape_cast %16 : vector<256xf32> to vector<256x1xf32>
    %cst_12 = arith.constant 3.200000e+01 : f32
    %18 = vector.broadcast %cst_12 : f32 to vector<256x1xf32>
    %19 = arith.divf %17, %18 : vector<256x1xf32>
    %20 = vector.broadcast %12 : vector<256x1xf32> to vector<256x32xf32>
    %21 = arith.subf %3, %20 : vector<256x32xf32>
    %cst_13 = arith.constant 9.99999974E-6 : f32
    %22 = vector.broadcast %cst_13 : f32 to vector<256x1xf32>
    %23 = arith.addf %19, %22 : vector<256x1xf32>
    %24 = math.rsqrt %23 : vector<256x1xf32>
    %25 = vector.broadcast %24 : vector<256x1xf32> to vector<256x32xf32>
    %26 = arith.mulf %21, %25 : vector<256x32xf32>
    %27 = vector.broadcast %6 : vector<1x32xf32> to vector<256x32xf32>
    %28 = arith.mulf %26, %27 : vector<256x32xf32>
    %29 = vector.broadcast %8 : vector<1x32xf32> to vector<256x32xf32>
    %30 = arith.addf %28, %29 : vector<256x32xf32>
    %31 = arith.truncf %30 : vector<256x32xf32> to vector<256x32xbf16>
    %cst_14 = arith.constant dense<0.000000e+00> : vector<1xf32>
    %32 = vector.multi_reduction <add>, %4, %cst_14 [1] : vector<1x32xf32> to vector<1xf32>
    %33 = vector.shape_cast %32 : vector<1xf32> to vector<1x1xf32>
    %cst_15 = arith.constant 3.200000e+01 : f32
    %34 = vector.broadcast %cst_15 : f32 to vector<1x1xf32>
    %35 = arith.divf %33, %34 : vector<1x1xf32>
    %36 = vector.broadcast %35 : vector<1x1xf32> to vector<1x32xf32>
    %37 = arith.subf %4, %36 : vector<1x32xf32>
    %38 = arith.mulf %37, %37 : vector<1x32xf32>
    %cst_16 = arith.constant dense<0.000000e+00> : vector<1xf32>
    %39 = vector.multi_reduction <add>, %38, %cst_16 [1] : vector<1x32xf32> to vector<1xf32>
    %40 = vector.shape_cast %39 : vector<1xf32> to vector<1x1xf32>
    %cst_17 = arith.constant 3.200000e+01 : f32
    %41 = vector.broadcast %cst_17 : f32 to vector<1x1xf32>
    %42 = arith.divf %40, %41 : vector<1x1xf32>
    %43 = vector.broadcast %35 : vector<1x1xf32> to vector<1x32xf32>
    %44 = arith.subf %4, %43 : vector<1x32xf32>
    %cst_18 = arith.constant 9.99999974E-6 : f32
    %45 = vector.broadcast %cst_18 : f32 to vector<1x1xf32>
    %46 = arith.addf %42, %45 : vector<1x1xf32>
    %47 = math.rsqrt %46 : vector<1x1xf32>
    %48 = vector.broadcast %47 : vector<1x1xf32> to vector<1x32xf32>
    %49 = arith.mulf %44, %48 : vector<1x32xf32>
    %50 = arith.mulf %49, %6 : vector<1x32xf32>
    %51 = arith.addf %50, %8 : vector<1x32xf32>
    %52 = arith.truncf %51 : vector<1x32xf32> to vector<1x32xbf16>
    %c0_19 = arith.constant 0 : index
    %c0_20 = arith.constant 0 : index
    %c0_21 = arith.constant 0 : index
    %53 = vector.load %arg8[%c0_19, %c0_20, %c0_21] : memref<1x32x32xbf16, #tpu.memory_space<vmem>>, vector<1x32x32xbf16>
    %54 = vector.shape_cast %53 : vector<1x32x32xbf16> to vector<32x32xbf16>
    %c0_22 = arith.constant 0 : index
    %c0_23 = arith.constant 0 : index
    %c0_24 = arith.constant 0 : index
    %55 = vector.load %arg9[%c0_22, %c0_23, %c0_24] : memref<1x32x32xbf16, #tpu.memory_space<vmem>>, vector<1x32x32xbf16>
    %56 = vector.shape_cast %55 : vector<1x32x32xbf16> to vector<32x32xbf16>
    %c0_25 = arith.constant 0 : index
    %c0_26 = arith.constant 0 : index
    %c0_27 = arith.constant 0 : index
    %57 = vector.load %arg10[%c0_25, %c0_26, %c0_27] : memref<1x32x32xbf16, #tpu.memory_space<vmem>>, vector<1x32x32xbf16>
    %58 = vector.shape_cast %57 : vector<1x32x32xbf16> to vector<32x32xbf16>
    %cst_28 = arith.constant dense<0.000000e+00> : vector<256x32xf32>
    %59 = tpu.matmul %31, %54, %cst_28 {dimension_numbers = #tpu.dot_dimension_numbers<[1], [0], [0], [1], [0, 0, 1, 1], [], []>} : vector<256x32xbf16>, vector<32x32xbf16>, vector<256x32xf32> -> vector<256x32xf32>
    %cst_29 = arith.constant dense<0.000000e+00> : vector<256x32xf32>
    %60 = tpu.matmul %31, %56, %cst_29 {dimension_numbers = #tpu.dot_dimension_numbers<[1], [0], [0], [1], [0, 0, 1, 1], [], []>} : vector<256x32xbf16>, vector<32x32xbf16>, vector<256x32xf32> -> vector<256x32xf32>
    %cst_30 = arith.constant dense<0.000000e+00> : vector<256x32xf32>
    %61 = tpu.matmul %31, %58, %cst_30 {dimension_numbers = #tpu.dot_dimension_numbers<[1], [0], [0], [1], [0, 0, 1, 1], [], []>} : vector<256x32xbf16>, vector<32x32xbf16>, vector<256x32xf32> -> vector<256x32xf32>
    %cst_31 = arith.constant dense<0.000000e+00> : vector<1x32xf32>
    %62 = tpu.matmul %52, %54, %cst_31 {dimension_numbers = #tpu.dot_dimension_numbers<[1], [0], [0], [1], [0, 0, 1, 1], [], []>} : vector<1x32xbf16>, vector<32x32xbf16>, vector<1x32xf32> -> vector<1x32xf32>
    %cst_32 = arith.constant dense<0.000000e+00> : vector<1x32xf32>
    %63 = tpu.matmul %52, %56, %cst_32 {dimension_numbers = #tpu.dot_dimension_numbers<[1], [0], [0], [1], [0, 0, 1, 1], [], []>} : vector<1x32xbf16>, vector<32x32xbf16>, vector<1x32xf32> -> vector<1x32xf32>
    %cst_33 = arith.constant dense<0.000000e+00> : vector<1x32xf32>
    %64 = tpu.matmul %52, %58, %cst_33 {dimension_numbers = #tpu.dot_dimension_numbers<[1], [0], [0], [1], [0, 0, 1, 1], [], []>} : vector<1x32xbf16>, vector<32x32xbf16>, vector<1x32xf32> -> vector<1x32xf32>
    %65 = arith.truncf %59 : vector<256x32xf32> to vector<256x32xbf16>
    %66 = arith.truncf %60 : vector<256x32xf32> to vector<256x32xbf16>
    %67 = arith.truncf %61 : vector<256x32xf32> to vector<256x32xbf16>
    %68 = vector.extract_strided_slice %65 {offsets = [0, 0], sizes = [256, 16], strides = [1, 1]} : vector<256x32xbf16> to vector<256x16xbf16>
    %69 = vector.extract_strided_slice %66 {offsets = [0, 0], sizes = [256, 16], strides = [1, 1]} : vector<256x32xbf16> to vector<256x16xbf16>
    %70 = vector.extract_strided_slice %67 {offsets = [0, 0], sizes = [256, 16], strides = [1, 1]} : vector<256x32xbf16> to vector<256x16xbf16>
    %71 = vector.extract_strided_slice %59 {offsets = [0, 0], sizes = [256, 16], strides = [1, 1]} : vector<256x32xf32> to vector<256x16xf32>
    %72 = vector.extract_strided_slice %60 {offsets = [0, 0], sizes = [256, 16], strides = [1, 1]} : vector<256x32xf32> to vector<256x16xf32>
    %73 = vector.extract_strided_slice %61 {offsets = [0, 0], sizes = [256, 16], strides = [1, 1]} : vector<256x32xf32> to vector<256x16xf32>
    %74 = vector.extract_strided_slice %62 {offsets = [0, 0], sizes = [1, 16], strides = [1, 1]} : vector<1x32xf32> to vector<1x16xf32>
    %75 = vector.extract_strided_slice %63 {offsets = [0, 0], sizes = [1, 16], strides = [1, 1]} : vector<1x32xf32> to vector<1x16xf32>
    %76 = vector.extract_strided_slice %64 {offsets = [0, 0], sizes = [1, 16], strides = [1, 1]} : vector<1x32xf32> to vector<1x16xf32>
    %cst_34 = arith.constant dense<0.000000e+00> : vector<256x256xf32>
    %77 = tpu.matmul %68, %69, %cst_34 {dimension_numbers = #tpu.dot_dimension_numbers<[1], [1], [0], [0], [0, 0, 1, 0], [], []>} : vector<256x16xbf16>, vector<256x16xbf16>, vector<256x256xf32> -> vector<256x256xf32>
    %78 = vector.broadcast %75 : vector<1x16xf32> to vector<256x16xf32>
    %79 = arith.mulf %71, %78 : vector<256x16xf32>
    %cst_35 = arith.constant dense<0.000000e+00> : vector<256xf32>
    %80 = vector.multi_reduction <add>, %79, %cst_35 [1] : vector<256x16xf32> to vector<256xf32>
    %81 = vector.shape_cast %80 : vector<256xf32> to vector<256x1xf32>
    %cst_36 = arith.constant dense<0xFF800000> : vector<256xf32>
    %82 = vector.multi_reduction <maximumf>, %77, %cst_36 [1] : vector<256x256xf32> to vector<256xf32>
    %83 = vector.shape_cast %82 : vector<256xf32> to vector<256x1xf32>
    %84 = arith.maximumf %83, %81 : vector<256x1xf32>
    %85 = vector.broadcast %84 : vector<256x1xf32> to vector<256x256xf32>
    %86 = arith.subf %77, %85 : vector<256x256xf32>
    %87 = math.exp %86 : vector<256x256xf32>
    %88 = arith.subf %81, %84 : vector<256x1xf32>
    %89 = math.exp %88 : vector<256x1xf32>
    %cst_37 = arith.constant dense<0.000000e+00> : vector<256xf32>
    %90 = vector.multi_reduction <add>, %87, %cst_37 [1] : vector<256x256xf32> to vector<256xf32>
    %91 = vector.shape_cast %90 : vector<256xf32> to vector<256x1xf32>
    %92 = arith.addf %91, %89 : vector<256x1xf32>
    %93 = tpu.reciprocal %92 {approx = true} : vector<256x1xf32> -> vector<256x1xf32>
    %94 = arith.truncf %87 : vector<256x256xf32> to vector<256x256xbf16>
    %cst_38 = arith.constant dense<0.000000e+00> : vector<256x16xf32>
    %95 = tpu.matmul %94, %70, %cst_38 {dimension_numbers = #tpu.dot_dimension_numbers<[1], [0], [0], [1], [0, 0, 1, 1], [], []>} : vector<256x256xbf16>, vector<256x16xbf16>, vector<256x16xf32> -> vector<256x16xf32>
    %96 = vector.broadcast %89 : vector<256x1xf32> to vector<256x16xf32>
    %97 = vector.broadcast %76 : vector<1x16xf32> to vector<256x16xf32>
    %98 = arith.mulf %96, %97 : vector<256x16xf32>
    %99 = arith.addf %95, %98 : vector<256x16xf32>
    %100 = vector.broadcast %93 : vector<256x1xf32> to vector<256x16xf32>
    %101 = arith.mulf %99, %100 : vector<256x16xf32>
    %102 = vector.broadcast %74 : vector<1x16xf32> to vector<256x16xf32>
    %103 = arith.mulf %102, %72 : vector<256x16xf32>
    %cst_39 = arith.constant dense<0.000000e+00> : vector<256xf32>
    %104 = vector.multi_reduction <add>, %103, %cst_39 [1] : vector<256x16xf32> to vector<256xf32>
    %105 = vector.shape_cast %104 : vector<256xf32> to vector<256x1xf32>
    %106 = arith.mulf %74, %75 : vector<1x16xf32>
    %cst_40 = arith.constant dense<0.000000e+00> : vector<1xf32>
    %107 = vector.multi_reduction <add>, %106, %cst_40 [1] : vector<1x16xf32> to vector<1xf32>
    %108 = vector.shape_cast %107 : vector<1xf32> to vector<1x1xf32>
    %cst_41 = arith.constant dense<0xFF800000> : vector<1xf32>
    %109 = vector.multi_reduction <maximumf>, %105, %cst_41 [0] : vector<256x1xf32> to vector<1xf32>
    %110 = vector.shape_cast %109 : vector<1xf32> to vector<1x1xf32>
    %111 = arith.maximumf %110, %108 : vector<1x1xf32>
    %112 = vector.broadcast %111 : vector<1x1xf32> to vector<256x1xf32>
    %113 = arith.subf %105, %112 : vector<256x1xf32>
    %114 = math.exp %113 : vector<256x1xf32>
    %115 = arith.subf %108, %111 : vector<1x1xf32>
    %116 = math.exp %115 : vector<1x1xf32>
    %cst_42 = arith.constant dense<0.000000e+00> : vector<1xf32>
    %117 = vector.multi_reduction <add>, %114, %cst_42 [0] : vector<256x1xf32> to vector<1xf32>
    %118 = vector.shape_cast %117 : vector<1xf32> to vector<1x1xf32>
    %119 = arith.addf %118, %116 : vector<1x1xf32>
    %120 = tpu.reciprocal %119 {approx = true} : vector<1x1xf32> -> vector<1x1xf32>
    %121 = vector.broadcast %114 : vector<256x1xf32> to vector<256x16xf32>
    %122 = arith.mulf %121, %73 : vector<256x16xf32>
    %cst_43 = arith.constant dense<0.000000e+00> : vector<16xf32>
    %123 = vector.multi_reduction <add>, %122, %cst_43 [0] : vector<256x16xf32> to vector<16xf32>
    %124 = vector.shape_cast %123 : vector<16xf32> to vector<1x16xf32>
    %125 = vector.broadcast %116 : vector<1x1xf32> to vector<1x16xf32>
    %126 = arith.mulf %125, %76 : vector<1x16xf32>
    %127 = arith.addf %124, %126 : vector<1x16xf32>
    %128 = vector.broadcast %120 : vector<1x1xf32> to vector<1x16xf32>
    %129 = arith.mulf %127, %128 : vector<1x16xf32>
    %130 = vector.extract_strided_slice %65 {offsets = [0, 16], sizes = [256, 16], strides = [1, 1]} : vector<256x32xbf16> to vector<256x16xbf16>
    %131 = vector.extract_strided_slice %66 {offsets = [0, 16], sizes = [256, 16], strides = [1, 1]} : vector<256x32xbf16> to vector<256x16xbf16>
    %132 = vector.extract_strided_slice %67 {offsets = [0, 16], sizes = [256, 16], strides = [1, 1]} : vector<256x32xbf16> to vector<256x16xbf16>
    %133 = vector.extract_strided_slice %59 {offsets = [0, 16], sizes = [256, 16], strides = [1, 1]} : vector<256x32xf32> to vector<256x16xf32>
    %134 = vector.extract_strided_slice %60 {offsets = [0, 16], sizes = [256, 16], strides = [1, 1]} : vector<256x32xf32> to vector<256x16xf32>
    %135 = vector.extract_strided_slice %61 {offsets = [0, 16], sizes = [256, 16], strides = [1, 1]} : vector<256x32xf32> to vector<256x16xf32>
    %136 = vector.extract_strided_slice %62 {offsets = [0, 16], sizes = [1, 16], strides = [1, 1]} : vector<1x32xf32> to vector<1x16xf32>
    %137 = vector.extract_strided_slice %63 {offsets = [0, 16], sizes = [1, 16], strides = [1, 1]} : vector<1x32xf32> to vector<1x16xf32>
    %138 = vector.extract_strided_slice %64 {offsets = [0, 16], sizes = [1, 16], strides = [1, 1]} : vector<1x32xf32> to vector<1x16xf32>
    %cst_44 = arith.constant dense<0.000000e+00> : vector<256x256xf32>
    %139 = tpu.matmul %130, %131, %cst_44 {dimension_numbers = #tpu.dot_dimension_numbers<[1], [1], [0], [0], [0, 0, 1, 0], [], []>} : vector<256x16xbf16>, vector<256x16xbf16>, vector<256x256xf32> -> vector<256x256xf32>
    %140 = vector.broadcast %137 : vector<1x16xf32> to vector<256x16xf32>
    %141 = arith.mulf %133, %140 : vector<256x16xf32>
    %cst_45 = arith.constant dense<0.000000e+00> : vector<256xf32>
    %142 = vector.multi_reduction <add>, %141, %cst_45 [1] : vector<256x16xf32> to vector<256xf32>
    %143 = vector.shape_cast %142 : vector<256xf32> to vector<256x1xf32>
    %cst_46 = arith.constant dense<0xFF800000> : vector<256xf32>
    %144 = vector.multi_reduction <maximumf>, %139, %cst_46 [1] : vector<256x256xf32> to vector<256xf32>
    %145 = vector.shape_cast %144 : vector<256xf32> to vector<256x1xf32>
    %146 = arith.maximumf %145, %143 : vector<256x1xf32>
    %147 = vector.broadcast %146 : vector<256x1xf32> to vector<256x256xf32>
    %148 = arith.subf %139, %147 : vector<256x256xf32>
    %149 = math.exp %148 : vector<256x256xf32>
    %150 = arith.subf %143, %146 : vector<256x1xf32>
    %151 = math.exp %150 : vector<256x1xf32>
    %cst_47 = arith.constant dense<0.000000e+00> : vector<256xf32>
    %152 = vector.multi_reduction <add>, %149, %cst_47 [1] : vector<256x256xf32> to vector<256xf32>
    %153 = vector.shape_cast %152 : vector<256xf32> to vector<256x1xf32>
    %154 = arith.addf %153, %151 : vector<256x1xf32>
    %155 = tpu.reciprocal %154 {approx = true} : vector<256x1xf32> -> vector<256x1xf32>
    %156 = arith.truncf %149 : vector<256x256xf32> to vector<256x256xbf16>
    %cst_48 = arith.constant dense<0.000000e+00> : vector<256x16xf32>
    %157 = tpu.matmul %156, %132, %cst_48 {dimension_numbers = #tpu.dot_dimension_numbers<[1], [0], [0], [1], [0, 0, 1, 1], [], []>} : vector<256x256xbf16>, vector<256x16xbf16>, vector<256x16xf32> -> vector<256x16xf32>
    %158 = vector.broadcast %151 : vector<256x1xf32> to vector<256x16xf32>
    %159 = vector.broadcast %138 : vector<1x16xf32> to vector<256x16xf32>
    %160 = arith.mulf %158, %159 : vector<256x16xf32>
    %161 = arith.addf %157, %160 : vector<256x16xf32>
    %162 = vector.broadcast %155 : vector<256x1xf32> to vector<256x16xf32>
    %163 = arith.mulf %161, %162 : vector<256x16xf32>
    %164 = vector.broadcast %136 : vector<1x16xf32> to vector<256x16xf32>
    %165 = arith.mulf %164, %134 : vector<256x16xf32>
    %cst_49 = arith.constant dense<0.000000e+00> : vector<256xf32>
    %166 = vector.multi_reduction <add>, %165, %cst_49 [1] : vector<256x16xf32> to vector<256xf32>
    %167 = vector.shape_cast %166 : vector<256xf32> to vector<256x1xf32>
    %168 = arith.mulf %136, %137 : vector<1x16xf32>
    %cst_50 = arith.constant dense<0.000000e+00> : vector<1xf32>
    %169 = vector.multi_reduction <add>, %168, %cst_50 [1] : vector<1x16xf32> to vector<1xf32>
    %170 = vector.shape_cast %169 : vector<1xf32> to vector<1x1xf32>
    %cst_51 = arith.constant dense<0xFF800000> : vector<1xf32>
    %171 = vector.multi_reduction <maximumf>, %167, %cst_51 [0] : vector<256x1xf32> to vector<1xf32>
    %172 = vector.shape_cast %171 : vector<1xf32> to vector<1x1xf32>
    %173 = arith.maximumf %172, %170 : vector<1x1xf32>
    %174 = vector.broadcast %173 : vector<1x1xf32> to vector<256x1xf32>
    %175 = arith.subf %167, %174 : vector<256x1xf32>
    %176 = math.exp %175 : vector<256x1xf32>
    %177 = arith.subf %170, %173 : vector<1x1xf32>
    %178 = math.exp %177 : vector<1x1xf32>
    %cst_52 = arith.constant dense<0.000000e+00> : vector<1xf32>
    %179 = vector.multi_reduction <add>, %176, %cst_52 [0] : vector<256x1xf32> to vector<1xf32>
    %180 = vector.shape_cast %179 : vector<1xf32> to vector<1x1xf32>
    %181 = arith.addf %180, %178 : vector<1x1xf32>
    %182 = tpu.reciprocal %181 {approx = true} : vector<1x1xf32> -> vector<1x1xf32>
    %183 = vector.broadcast %176 : vector<256x1xf32> to vector<256x16xf32>
    %184 = arith.mulf %183, %135 : vector<256x16xf32>
    %cst_53 = arith.constant dense<0.000000e+00> : vector<16xf32>
    %185 = vector.multi_reduction <add>, %184, %cst_53 [0] : vector<256x16xf32> to vector<16xf32>
    %186 = vector.shape_cast %185 : vector<16xf32> to vector<1x16xf32>
    %187 = vector.broadcast %178 : vector<1x1xf32> to vector<1x16xf32>
    %188 = arith.mulf %187, %138 : vector<1x16xf32>
    %189 = arith.addf %186, %188 : vector<1x16xf32>
    %190 = vector.broadcast %182 : vector<1x1xf32> to vector<1x16xf32>
    %191 = arith.mulf %189, %190 : vector<1x16xf32>
    %192 = tpu.concatenate %101, %163 in 1 : vector<256x16xf32>, vector<256x16xf32> -> vector<256x32xf32>
    %193 = arith.truncf %192 : vector<256x32xf32> to vector<256x32xbf16>
    %194 = tpu.concatenate %129, %191 in 1 : vector<1x16xf32>, vector<1x16xf32> -> vector<1x32xf32>
    %195 = arith.truncf %194 : vector<1x32xf32> to vector<1x32xbf16>
    %c0_54 = arith.constant 0 : index
    %c0_55 = arith.constant 0 : index
    %c0_56 = arith.constant 0 : index
    %196 = vector.load %arg11[%c0_54, %c0_55, %c0_56] : memref<1x32x32xbf16, #tpu.memory_space<vmem>>, vector<1x32x32xbf16>
    %197 = vector.shape_cast %196 : vector<1x32x32xbf16> to vector<32x32xbf16>
    %c0_57 = arith.constant 0 : index
    %c0_58 = arith.constant 0 : index
    %c0_59 = arith.constant 0 : index
    %198 = vector.load %arg12[%c0_57, %c0_58, %c0_59] : memref<1x1x32xf32, #tpu.memory_space<vmem>>, vector<1x1x32xf32>
    %199 = vector.shape_cast %198 : vector<1x1x32xf32> to vector<1x32xf32>
    %cst_60 = arith.constant dense<0.000000e+00> : vector<256x32xf32>
    %200 = tpu.matmul %193, %197, %cst_60 {dimension_numbers = #tpu.dot_dimension_numbers<[1], [0], [0], [1], [0, 0, 1, 1], [], []>} : vector<256x32xbf16>, vector<32x32xbf16>, vector<256x32xf32> -> vector<256x32xf32>
    %201 = arith.addf %3, %200 : vector<256x32xf32>
    %202 = vector.broadcast %199 : vector<1x32xf32> to vector<256x32xf32>
    %203 = arith.addf %201, %202 : vector<256x32xf32>
    %cst_61 = arith.constant dense<0.000000e+00> : vector<1x32xf32>
    %204 = tpu.matmul %195, %197, %cst_61 {dimension_numbers = #tpu.dot_dimension_numbers<[1], [0], [0], [1], [0, 0, 1, 1], [], []>} : vector<1x32xbf16>, vector<32x32xbf16>, vector<1x32xf32> -> vector<1x32xf32>
    %205 = arith.addf %4, %204 : vector<1x32xf32>
    %206 = arith.addf %205, %199 : vector<1x32xf32>
    %c0_62 = arith.constant 0 : index
    %c0_63 = arith.constant 0 : index
    %c0_64 = arith.constant 0 : index
    %207 = vector.load %arg13[%c0_62, %c0_63, %c0_64] : memref<1x1x32xf32, #tpu.memory_space<vmem>>, vector<1x1x32xf32>
    %208 = vector.shape_cast %207 : vector<1x1x32xf32> to vector<1x32xf32>
    %c0_65 = arith.constant 0 : index
    %c0_66 = arith.constant 0 : index
    %c0_67 = arith.constant 0 : index
    %209 = vector.load %arg14[%c0_65, %c0_66, %c0_67] : memref<1x1x32xf32, #tpu.memory_space<vmem>>, vector<1x1x32xf32>
    %210 = vector.shape_cast %209 : vector<1x1x32xf32> to vector<1x32xf32>
    %c0_68 = arith.constant 0 : index
    %c0_69 = arith.constant 0 : index
    %c0_70 = arith.constant 0 : index
    %211 = vector.load %arg15[%c0_68, %c0_69, %c0_70] : memref<1x32x64xbf16, #tpu.memory_space<vmem>>, vector<1x32x64xbf16>
    %212 = vector.shape_cast %211 : vector<1x32x64xbf16> to vector<32x64xbf16>
    %c0_71 = arith.constant 0 : index
    %c0_72 = arith.constant 0 : index
    %c0_73 = arith.constant 0 : index
    %213 = vector.load %arg16[%c0_71, %c0_72, %c0_73] : memref<1x1x64xf32, #tpu.memory_space<vmem>>, vector<1x1x64xf32>
    %214 = vector.shape_cast %213 : vector<1x1x64xf32> to vector<1x64xf32>
    %c0_74 = arith.constant 0 : index
    %c0_75 = arith.constant 0 : index
    %c0_76 = arith.constant 0 : index
    %215 = vector.load %arg17[%c0_74, %c0_75, %c0_76] : memref<1x64x32xbf16, #tpu.memory_space<vmem>>, vector<1x64x32xbf16>
    %216 = vector.shape_cast %215 : vector<1x64x32xbf16> to vector<64x32xbf16>
    %c0_77 = arith.constant 0 : index
    %c0_78 = arith.constant 0 : index
    %c0_79 = arith.constant 0 : index
    %217 = vector.load %arg18[%c0_77, %c0_78, %c0_79] : memref<1x1x32xf32, #tpu.memory_space<vmem>>, vector<1x1x32xf32>
    %218 = vector.shape_cast %217 : vector<1x1x32xf32> to vector<1x32xf32>
    %cst_80 = arith.constant dense<0.000000e+00> : vector<256xf32>
    %219 = vector.multi_reduction <add>, %203, %cst_80 [1] : vector<256x32xf32> to vector<256xf32>
    %220 = vector.shape_cast %219 : vector<256xf32> to vector<256x1xf32>
    %cst_81 = arith.constant 3.200000e+01 : f32
    %221 = vector.broadcast %cst_81 : f32 to vector<256x1xf32>
    %222 = arith.divf %220, %221 : vector<256x1xf32>
    %223 = vector.broadcast %222 : vector<256x1xf32> to vector<256x32xf32>
    %224 = arith.subf %203, %223 : vector<256x32xf32>
    %225 = arith.mulf %224, %224 : vector<256x32xf32>
    %cst_82 = arith.constant dense<0.000000e+00> : vector<256xf32>
    %226 = vector.multi_reduction <add>, %225, %cst_82 [1] : vector<256x32xf32> to vector<256xf32>
    %227 = vector.shape_cast %226 : vector<256xf32> to vector<256x1xf32>
    %cst_83 = arith.constant 3.200000e+01 : f32
    %228 = vector.broadcast %cst_83 : f32 to vector<256x1xf32>
    %229 = arith.divf %227, %228 : vector<256x1xf32>
    %230 = vector.broadcast %222 : vector<256x1xf32> to vector<256x32xf32>
    %231 = arith.subf %203, %230 : vector<256x32xf32>
    %cst_84 = arith.constant 9.99999974E-6 : f32
    %232 = vector.broadcast %cst_84 : f32 to vector<256x1xf32>
    %233 = arith.addf %229, %232 : vector<256x1xf32>
    %234 = math.rsqrt %233 : vector<256x1xf32>
    %235 = vector.broadcast %234 : vector<256x1xf32> to vector<256x32xf32>
    %236 = arith.mulf %231, %235 : vector<256x32xf32>
    %237 = vector.broadcast %208 : vector<1x32xf32> to vector<256x32xf32>
    %238 = arith.mulf %236, %237 : vector<256x32xf32>
    %239 = vector.broadcast %210 : vector<1x32xf32> to vector<256x32xf32>
    %240 = arith.addf %238, %239 : vector<256x32xf32>
    %241 = arith.truncf %240 : vector<256x32xf32> to vector<256x32xbf16>
    %cst_85 = arith.constant dense<0.000000e+00> : vector<256x64xf32>
    %242 = tpu.matmul %241, %212, %cst_85 {dimension_numbers = #tpu.dot_dimension_numbers<[1], [0], [0], [1], [0, 0, 1, 1], [], []>} : vector<256x32xbf16>, vector<32x64xbf16>, vector<256x64xf32> -> vector<256x64xf32>
    %243 = vector.broadcast %214 : vector<1x64xf32> to vector<256x64xf32>
    %244 = arith.addf %242, %243 : vector<256x64xf32>
    %cst_86 = arith.constant 5.000000e-01 : f32
    %245 = vector.broadcast %cst_86 : f32 to vector<256x64xf32>
    %246 = arith.mulf %245, %244 : vector<256x64xf32>
    %cst_87 = arith.constant 4.471500e-02 : f32
    %247 = vector.broadcast %cst_87 : f32 to vector<256x64xf32>
    %248 = arith.mulf %247, %244 : vector<256x64xf32>
    %249 = arith.mulf %248, %244 : vector<256x64xf32>
    %250 = arith.mulf %249, %244 : vector<256x64xf32>
    %251 = arith.addf %244, %250 : vector<256x64xf32>
    %cst_88 = arith.constant 0.797884583 : f32
    %252 = vector.broadcast %cst_88 : f32 to vector<256x64xf32>
    %253 = arith.mulf %252, %251 : vector<256x64xf32>
    %254 = math.tanh %253 : vector<256x64xf32>
    %cst_89 = arith.constant 1.000000e+00 : f32
    %255 = vector.broadcast %cst_89 : f32 to vector<256x64xf32>
    %256 = arith.addf %255, %254 : vector<256x64xf32>
    %257 = arith.mulf %246, %256 : vector<256x64xf32>
    %258 = arith.truncf %257 : vector<256x64xf32> to vector<256x64xbf16>
    %cst_90 = arith.constant dense<0.000000e+00> : vector<256x32xf32>
    %259 = tpu.matmul %258, %216, %cst_90 {dimension_numbers = #tpu.dot_dimension_numbers<[1], [0], [0], [1], [0, 0, 1, 1], [], []>} : vector<256x64xbf16>, vector<64x32xbf16>, vector<256x32xf32> -> vector<256x32xf32>
    %260 = vector.broadcast %218 : vector<1x32xf32> to vector<256x32xf32>
    %261 = arith.addf %259, %260 : vector<256x32xf32>
    %262 = arith.addf %203, %261 : vector<256x32xf32>
    %cst_91 = arith.constant dense<0.000000e+00> : vector<1xf32>
    %263 = vector.multi_reduction <add>, %206, %cst_91 [1] : vector<1x32xf32> to vector<1xf32>
    %264 = vector.shape_cast %263 : vector<1xf32> to vector<1x1xf32>
    %cst_92 = arith.constant 3.200000e+01 : f32
    %265 = vector.broadcast %cst_92 : f32 to vector<1x1xf32>
    %266 = arith.divf %264, %265 : vector<1x1xf32>
    %267 = vector.broadcast %266 : vector<1x1xf32> to vector<1x32xf32>
    %268 = arith.subf %206, %267 : vector<1x32xf32>
    %269 = arith.mulf %268, %268 : vector<1x32xf32>
    %cst_93 = arith.constant dense<0.000000e+00> : vector<1xf32>
    %270 = vector.multi_reduction <add>, %269, %cst_93 [1] : vector<1x32xf32> to vector<1xf32>
    %271 = vector.shape_cast %270 : vector<1xf32> to vector<1x1xf32>
    %cst_94 = arith.constant 3.200000e+01 : f32
    %272 = vector.broadcast %cst_94 : f32 to vector<1x1xf32>
    %273 = arith.divf %271, %272 : vector<1x1xf32>
    %274 = vector.broadcast %266 : vector<1x1xf32> to vector<1x32xf32>
    %275 = arith.subf %206, %274 : vector<1x32xf32>
    %cst_95 = arith.constant 9.99999974E-6 : f32
    %276 = vector.broadcast %cst_95 : f32 to vector<1x1xf32>
    %277 = arith.addf %273, %276 : vector<1x1xf32>
    %278 = math.rsqrt %277 : vector<1x1xf32>
    %279 = vector.broadcast %278 : vector<1x1xf32> to vector<1x32xf32>
    %280 = arith.mulf %275, %279 : vector<1x32xf32>
    %281 = arith.mulf %280, %208 : vector<1x32xf32>
    %282 = arith.addf %281, %210 : vector<1x32xf32>
    %283 = arith.truncf %282 : vector<1x32xf32> to vector<1x32xbf16>
    %cst_96 = arith.constant dense<0.000000e+00> : vector<1x64xf32>
    %284 = tpu.matmul %283, %212, %cst_96 {dimension_numbers = #tpu.dot_dimension_numbers<[1], [0], [0], [1], [0, 0, 1, 1], [], []>} : vector<1x32xbf16>, vector<32x64xbf16>, vector<1x64xf32> -> vector<1x64xf32>
    %285 = arith.addf %284, %214 : vector<1x64xf32>
    %cst_97 = arith.constant 5.000000e-01 : f32
    %286 = vector.broadcast %cst_97 : f32 to vector<1x64xf32>
    %287 = arith.mulf %286, %285 : vector<1x64xf32>
    %cst_98 = arith.constant 4.471500e-02 : f32
    %288 = vector.broadcast %cst_98 : f32 to vector<1x64xf32>
    %289 = arith.mulf %288, %285 : vector<1x64xf32>
    %290 = arith.mulf %289, %285 : vector<1x64xf32>
    %291 = arith.mulf %290, %285 : vector<1x64xf32>
    %292 = arith.addf %285, %291 : vector<1x64xf32>
    %cst_99 = arith.constant 0.797884583 : f32
    %293 = vector.broadcast %cst_99 : f32 to vector<1x64xf32>
    %294 = arith.mulf %293, %292 : vector<1x64xf32>
    %295 = math.tanh %294 : vector<1x64xf32>
    %cst_100 = arith.constant 1.000000e+00 : f32
    %296 = vector.broadcast %cst_100 : f32 to vector<1x64xf32>
    %297 = arith.addf %296, %295 : vector<1x64xf32>
    %298 = arith.mulf %287, %297 : vector<1x64xf32>
    %299 = arith.truncf %298 : vector<1x64xf32> to vector<1x64xbf16>
    %cst_101 = arith.constant dense<0.000000e+00> : vector<1x32xf32>
    %300 = tpu.matmul %299, %216, %cst_101 {dimension_numbers = #tpu.dot_dimension_numbers<[1], [0], [0], [1], [0, 0, 1, 1], [], []>} : vector<1x64xbf16>, vector<64x32xbf16>, vector<1x32xf32> -> vector<1x32xf32>
    %301 = arith.addf %300, %218 : vector<1x32xf32>
    %302 = arith.addf %206, %301 : vector<1x32xf32>
    %c0_102 = arith.constant 0 : index
    %c0_103 = arith.constant 0 : index
    %303 = vector.load %arg21[%c0_102, %c0_103] : memref<256x32xf32, #tpu.memory_space<vmem>>, vector<256x32xf32>
    tpu.vector_store %arg21[%c0_102, %c0_103], %262 {strides = array<i32>} : memref<256x32xf32, #tpu.memory_space<vmem>>, vector<256x32xf32>,
    %c0_104 = arith.constant 0 : index
    %c0_105 = arith.constant 0 : index
    %304 = vector.load %arg22[%c0_104, %c0_105] : memref<1x32xf32, #tpu.memory_space<vmem>>, vector<1x32xf32>
    tpu.vector_store %arg22[%c0_104, %c0_105], %302 {strides = array<i32>} : memref<1x32xf32, #tpu.memory_space<vmem>>, vector<1x32xf32>,
    %c1_i32 = arith.constant 1 : i32
    %305 = arith.cmpi eq, %arg1, %c1_i32 : i32
    %306 = arith.extui %305 : i1 to i32
    %c0_i32_106 = arith.constant 0 : i32
    %307 = arith.cmpi ne, %306, %c0_i32_106 : i32
    scf.if %307 {
      %c0_107 = arith.constant 0 : index
      %c0_108 = arith.constant 0 : index
      %c0_109 = arith.constant 0 : index
      %308 = vector.load %arg19[%c0_107, %c0_108, %c0_109] : memref<1x256x32xf32, #tpu.memory_space<vmem>>, vector<1x256x32xf32>
      %309 = vector.shape_cast %308 : vector<1x256x32xf32> to vector<256x32xf32>
      %310 = vector.shape_cast %262 : vector<256x32xf32> to vector<1x256x32xf32>
      tpu.vector_store %arg19[%c0_107, %c0_108, %c0_109], %310 {strides = array<i32>} : memref<1x256x32xf32, #tpu.memory_space<vmem>>, vector<1x256x32xf32>,
      %c0_110 = arith.constant 0 : index
      %c0_111 = arith.constant 0 : index
      %c0_112 = arith.constant 0 : index
      %311 = vector.load %arg20[%c0_110, %c0_111, %c0_112] : memref<1x1x32xf32, #tpu.memory_space<vmem>>, vector<1x1x32xf32>
      %312 = vector.shape_cast %311 : vector<1x1x32xf32> to vector<1x32xf32>
      %313 = vector.shape_cast %302 : vector<1x32xf32> to vector<1x1x32xf32>
      tpu.vector_store %arg20[%c0_110, %c0_111, %c0_112], %313 {strides = array<i32>} : memref<1x1x32xf32, #tpu.memory_space<vmem>>, vector<1x1x32xf32>,
    } else {
    }
    return
  }
  func.func @transform_0(%arg0: i32, %arg1: i32) -> (i32, i32, i32) {
    %c0_i32 = arith.constant 0 : i32
    %c0_i32_0 = arith.constant 0 : i32
    %c0_i32_1 = arith.constant 0 : i32
    return %arg0, %c0_i32, %c0_i32_0 : i32, i32, i32
  }
  func.func @transform_1(%arg0: i32, %arg1: i32) -> (i32, i32) {
    %c0_i32 = arith.constant 0 : i32
    %c0_i32_0 = arith.constant 0 : i32
    %c0_i32_1 = arith.constant 0 : i32
    return %c0_i32, %c0_i32_0 : i32, i32
  }
  func.func @transform_2(%arg0: i32, %arg1: i32) -> (i32, i32) {
    %c0_i32 = arith.constant 0 : i32
    %c0_i32_0 = arith.constant 0 : i32
    %c0_i32_1 = arith.constant 0 : i32
    return %c0_i32, %c0_i32_0 : i32, i32
  }
  func.func @transform_3(%arg0: i32, %arg1: i32) -> (i32, i32) {
    %c0_i32 = arith.constant 0 : i32
    %c0_i32_0 = arith.constant 0 : i32
    %c0_i32_1 = arith.constant 0 : i32
    return %c0_i32, %c0_i32_0 : i32, i32
  }
  func.func @transform_4(%arg0: i32, %arg1: i32) -> (i32, i32, i32) {
    %c0_i32 = arith.constant 0 : i32
    %c0_i32_0 = arith.constant 0 : i32
    %c0_i32_1 = arith.constant 0 : i32
    return %arg1, %c0_i32, %c0_i32_0 : i32, i32, i32
  }
  func.func @transform_5(%arg0: i32, %arg1: i32) -> (i32, i32, i32) {
    %c0_i32 = arith.constant 0 : i32
    %c0_i32_0 = arith.constant 0 : i32
    %c0_i32_1 = arith.constant 0 : i32
    return %arg1, %c0_i32, %c0_i32_0 : i32, i32, i32
  }
  func.func @transform_6(%arg0: i32, %arg1: i32) -> (i32, i32, i32) {
    %c0_i32 = arith.constant 0 : i32
    %c0_i32_0 = arith.constant 0 : i32
    %c0_i32_1 = arith.constant 0 : i32
    return %arg1, %c0_i32, %c0_i32_0 : i32, i32, i32
  }
  func.func @transform_7(%arg0: i32, %arg1: i32) -> (i32, i32, i32) {
    %c0_i32 = arith.constant 0 : i32
    %c0_i32_0 = arith.constant 0 : i32
    %c0_i32_1 = arith.constant 0 : i32
    return %arg1, %c0_i32, %c0_i32_0 : i32, i32, i32
  }
  func.func @transform_8(%arg0: i32, %arg1: i32) -> (i32, i32, i32) {
    %c0_i32 = arith.constant 0 : i32
    %c0_i32_0 = arith.constant 0 : i32
    %c0_i32_1 = arith.constant 0 : i32
    return %arg1, %c0_i32, %c0_i32_0 : i32, i32, i32
  }
  func.func @transform_9(%arg0: i32, %arg1: i32) -> (i32, i32, i32) {
    %c0_i32 = arith.constant 0 : i32
    %c0_i32_0 = arith.constant 0 : i32
    %c0_i32_1 = arith.constant 0 : i32
    return %arg1, %c0_i32, %c0_i32_0 : i32, i32, i32
  }
  func.func @transform_10(%arg0: i32, %arg1: i32) -> (i32, i32, i32) {
    %c0_i32 = arith.constant 0 : i32
    %c0_i32_0 = arith.constant 0 : i32
    %c0_i32_1 = arith.constant 0 : i32
    return %arg1, %c0_i32, %c0_i32_0 : i32, i32, i32
  }
  func.func @transform_11(%arg0: i32, %arg1: i32) -> (i32, i32, i32) {
    %c0_i32 = arith.constant 0 : i32
    %c0_i32_0 = arith.constant 0 : i32
    %c0_i32_1 = arith.constant 0 : i32
    return %arg1, %c0_i32, %c0_i32_0 : i32, i32, i32
  }
  func.func @transform_12(%arg0: i32, %arg1: i32) -> (i32, i32, i32) {
    %c0_i32 = arith.constant 0 : i32
    %c0_i32_0 = arith.constant 0 : i32
    %c0_i32_1 = arith.constant 0 : i32
    return %arg1, %c0_i32, %c0_i32_0 : i32, i32, i32
  }
  func.func @transform_13(%arg0: i32, %arg1: i32) -> (i32, i32, i32) {
    %c0_i32 = arith.constant 0 : i32
    %c0_i32_0 = arith.constant 0 : i32
    %c0_i32_1 = arith.constant 0 : i32
    return %arg1, %c0_i32, %c0_i32_0 : i32, i32, i32
  }
  func.func @transform_14(%arg0: i32, %arg1: i32) -> (i32, i32, i32) {
    %c0_i32 = arith.constant 0 : i32
    %c0_i32_0 = arith.constant 0 : i32
    %c0_i32_1 = arith.constant 0 : i32
    return %arg1, %c0_i32, %c0_i32_0 : i32, i32, i32
  }
  func.func @transform_15(%arg0: i32, %arg1: i32) -> (i32, i32, i32) {
    %c0_i32 = arith.constant 0 : i32
    %c0_i32_0 = arith.constant 0 : i32
    %c0_i32_1 = arith.constant 0 : i32
    return %arg1, %c0_i32, %c0_i32_0 : i32, i32, i32
  }
  func.func @transform_16(%arg0: i32, %arg1: i32) -> (i32, i32, i32) {
    %c0_i32 = arith.constant 0 : i32
    %c0_i32_0 = arith.constant 0 : i32
    %c0_i32_1 = arith.constant 0 : i32
    return %arg1, %c0_i32, %c0_i32_0 : i32, i32, i32
  }
  func.func @transform_17(%arg0: i32, %arg1: i32) -> (i32, i32, i32) {
    %c0_i32 = arith.constant 0 : i32
    %c0_i32_0 = arith.constant 0 : i32
    %c0_i32_1 = arith.constant 0 : i32
    return %arg0, %c0_i32, %c0_i32_0 : i32, i32, i32
  }
  func.func @transform_18(%arg0: i32, %arg1: i32) -> (i32, i32, i32) {
    %c0_i32 = arith.constant 0 : i32
    %c0_i32_0 = arith.constant 0 : i32
    %c0_i32_1 = arith.constant 0 : i32
    return %arg0, %c0_i32, %c0_i32_0 : i32, i32, i32
  }
}

</mosaic_0001>

<llo_original>
// kernel: transm_forward.1
$region0: #{transm_forward.1}
  #allocation0 [shape = 'u32[]', space=smem, size = 0x4, offset = 0x4, fixed_abs, tag = 'smem constant byte address 0x4 - core index']
  #allocation1 [shape = 'u32[72,128]{1,0:T(1,128)}', space=vmem, size = 0x9000, scoped, tag = 'internal scratch']
  #allocation2 [shape = 'f32[256,32]{1,0:T(8,128)}', space=vmem, size = 0x20000, scoped, tag = 'scratch operand']
  #allocation3 [shape = 'f32[1,32]{1,0:T(1,128)}', space=vmem, size = 0x200, scoped, tag = 'scratch operand']
  %s0 = inlined_call_operand.vmem [shape: bf16[2,256,4], index: 0, kind: input, shape index: {}]
  %s1 = inlined_call_operand.vmem [shape: bf16[4,32], index: 1, kind: input, shape index: {}]
  %s2 = inlined_call_operand.vmem [shape: f32[1,32], index: 2, kind: input, shape index: {}]
  %s3 = inlined_call_operand.vmem [shape: f32[1,32], index: 3, kind: input, shape index: {}]
  %s4 = inlined_call_operand.vmem [shape: f32[2,1,32], index: 4, kind: input, shape index: {}]
  %s5 = inlined_call_operand.vmem [shape: f32[2,1,32], index: 5, kind: input, shape index: {}]
  %s6 = inlined_call_operand.vmem [shape: bf16[2,32,32], index: 6, kind: input, shape index: {}]
  %s7 = inlined_call_operand.vmem [shape: bf16[2,32,32], index: 7, kind: input, shape index: {}]
  %s8 = inlined_call_operand.vmem [shape: bf16[2,32,32], index: 8, kind: input, shape index: {}]
  %s9 = inlined_call_operand.vmem [shape: bf16[2,32,32], index: 9, kind: input, shape index: {}]
  %s10 = inlined_call_operand.vmem [shape: f32[2,1,32], index: 10, kind: input, shape index: {}]
  %s11 = inlined_call_operand.vmem [shape: f32[2,1,32], index: 11, kind: input, shape index: {}]
  %s12 = inlined_call_operand.vmem [shape: f32[2,1,32], index: 12, kind: input, shape index: {}]
  %s13 = inlined_call_operand.vmem [shape: bf16[2,32,64], index: 13, kind: input, shape index: {}]
  %s14 = inlined_call_operand.vmem [shape: f32[2,1,64], index: 14, kind: input, shape index: {}]
  %s15 = inlined_call_operand.vmem [shape: bf16[2,64,32], index: 15, kind: input, shape index: {}]
  %s16 = inlined_call_operand.vmem [shape: f32[2,1,32], index: 16, kind: input, shape index: {}]
  %s17 = inlined_call_operand.hbm [shape: f32[2,256,32], index: 17, kind: output, shape index: {0}]
  %s18 = inlined_call_operand.hbm [shape: f32[2,1,32], index: 18, kind: output, shape index: {1}]
  %19 = xla_tuple %s17, %s18
  %s20 = sld [smem:[#allocation0]]
  $region117: #{transm_forward.1} parent=0
    _
  %s22 = ssub.s32 1, %s20
  %s23 = scalar_select 0, %s22, %s20
  $region1: #{transm_forward.1} parent=0
    #allocation4 [shape = 'u8[262144]{0}', space=vmem, size = 0x40000, scoped, tag = 'output window, operand 0']
    #allocation5 [shape = 's32[2]{0}', space=sflag, size = 0x8, scoped, tag = 'scoped memory for transm_forward.1']
    #allocation6 [shape = 'u8[1024]{0}', space=vmem, size = 0x400, scoped, tag = 'output window, operand 1']
    #allocation7 [shape = 's32[2]{0}', space=sflag, size = 0x8, scoped, tag = 'scoped memory for transm_forward.1']
    %24 = vsyncpa [#allocation5], 0
    %s25 = scalar_lea.sflag [#allocation5], 1
    %26 = vsyncpa %s25, 0
    %27 = vsyncpa [#allocation7], 0
    %s28 = scalar_lea.sflag [#allocation7], 1
    %29 = vsyncpa %s28, 0
    loop: start=0, step=1, limit=6
    $region2: #{transm_forward.1} parent=1 // loop_pre_header
      _
    $region3: #{transm_forward.1} parent=1 // loop_header
      %s31 = sphi 0, %s35
      %p32 = scmp.ge.s32.totalorder %s31, 6
      %s38 = sphi 0, %s50
      %s39 = sphi 0, %s46
      %s40 = sphi 0, %s38
      %s41 = sphi 0, %s39
      %s42 = sphi 0, %s40
      %s43 = sphi 0, %s41
      %s53 = sphi 0, %s55
      %s56 = sphi 0, %s53
      %s57 = sphi 0, %s56
      %s73 = sphi 0, %s57
      %s77 = sphi 0, %s77
      %s79 = sphi 0, %s77
      %s80 = sphi 0, %s79
      %s94 = sphi 0, %s80
      %s98 = sphi 0, %s98
      %s100 = sphi 0, %s98
      %s101 = sphi 0, %s100
      %s115 = sphi 0, %s101
      %s119 = sphi 0, %s119
      %s121 = sphi 0, %s119
      %s122 = sphi 0, %s121
      %s136 = sphi 0, %s122
      %s142 = sphi 0, %s144
      %s145 = sphi 0, %s142
      %s146 = sphi 0, %s145
      %s162 = sphi 0, %s146
      %s168 = sphi 0, %s170
      %s171 = sphi 0, %s168
      %s172 = sphi 0, %s171
      %s188 = sphi 0, %s172
      %s194 = sphi 0, %s196
      %s197 = sphi 0, %s194
      %s198 = sphi 0, %s197
      %s214 = sphi 0, %s198
      %s220 = sphi 0, %s222
      %s223 = sphi 0, %s220
      %s224 = sphi 0, %s223
      %s240 = sphi 0, %s224
      %s246 = sphi 0, %s248
      %s249 = sphi 0, %s246
      %s250 = sphi 0, %s249
      %s266 = sphi 0, %s250
      %s272 = sphi 0, %s274
      %s275 = sphi 0, %s272
      %s276 = sphi 0, %s275
      %s292 = sphi 0, %s276
      %s298 = sphi 0, %s300
      %s301 = sphi 0, %s298
      %s302 = sphi 0, %s301
      %s318 = sphi 0, %s302
      %s324 = sphi 0, %s326
      %s327 = sphi 0, %s324
      %s328 = sphi 0, %s327
      %s344 = sphi 0, %s328
      %s350 = sphi 0, %s352
      %s353 = sphi 0, %s350
      %s354 = sphi 0, %s353
      %s370 = sphi 0, %s354
      %s376 = sphi 0, %s378
      %s379 = sphi 0, %s376
      %s380 = sphi 0, %s379
      %s396 = sphi 0, %s380
      %s402 = sphi 0, %s404
      %s405 = sphi 0, %s402
      %s406 = sphi 0, %s405
      %s422 = sphi 0, %s406
      %s428 = sphi 0, %s430
      %s431 = sphi 0, %s428
      %s432 = sphi 0, %s431
      %s448 = sphi 0, %s432
      %s454 = sphi 0, %s456
      %s457 = sphi 0, %s454
      %s458 = sphi 0, %s457
      %s474 = sphi 0, %s458
      %s480 = sphi 0, %s482
      %s483 = sphi 0, %s480
      %s484 = sphi 0, %s483
      %s500 = sphi 0, %s484
      %s506 = sphi 0, %s508
      %s509 = sphi 0, %s506
      %s510 = sphi 0, %s509
      %s526 = sphi 0, %s510
    $region4: #{transm_forward.1} parent=1 // loop_header_branch
      %34 = sbr.rel (%p32) target = $region8
    $region5: #{transm_forward.1} parent=1 // loop_body
      %s36 = ssub.s32 %s31, 1
      %s37 = ssub.s32 %s31, 2
      %s44 = sadd.s32 1, %s39
      %p45 = scmp.ge.s32.totalorder %s44, 2
      %s46 = scalar_select %p45, 0, %s44
      %s47 = sadd.s32 1, %s38
      %s48 = scalar_select %p45, %s47, %s38
      %p49 = scmp.ge.s32.totalorder %s48, 2
      %s50 = scalar_select %p49, 0, %s48
      %s51 = ssub.s32 %s38, %s50
      %p52 = scmp.eq.s32.totalorder %s51, 0
      %s54 = sadd.s32 %s53, 1
      %s55 = scalar_select %p52, %s53, %s54
      %p58 = pneg %p52
      %p59 = scmp.eq.s32.totalorder %s31, 3
      %p60 = por %p58, %p59
      %p61 = scmp.ne.s32.totalorder %s53, %s56
      %p62 = scmp.eq.s32.totalorder %s31, 0
      %p63 = por %p61, %p62
      %p64 = scmp.ne.s32.totalorder %s53, %s56
      %p65 = scmp.eq.s32.totalorder %s36, 3
      %p66 = por %p64, %p65
      %p67 = scmp.ne.s32.totalorder %s56, %s57
      %p68 = scmp.eq.s32.totalorder %s36, 0
      %p69 = por %p67, %p68
      %p70 = scmp.ne.s32.totalorder %s56, %s57
      %p71 = scmp.eq.s32.totalorder %s37, 3
      %p72 = por %p70, %p71
      %p74 = scmp.ne.s32.totalorder %s57, %s73
      %p75 = scmp.eq.s32.totalorder %s37, 0
      %p76 = por %p74, %p75
      %s78 = sadd.s32 %s77, 1
      %p81 = scmp.eq.s32.totalorder %s31, 3
      %p82 = scmp.ne.s32.totalorder %s77, %s79
      %p83 = scmp.eq.s32.totalorder %s31, 0
      %p84 = por %p82, %p83
      %p85 = scmp.ne.s32.totalorder %s77, %s79
      %p86 = scmp.eq.s32.totalorder %s36, 3
      %p87 = por %p85, %p86
      %p88 = scmp.ne.s32.totalorder %s79, %s80
      %p89 = scmp.eq.s32.totalorder %s36, 0
      %p90 = por %p88, %p89
      %p91 = scmp.ne.s32.totalorder %s79, %s80
      %p92 = scmp.eq.s32.totalorder %s37, 3
      %p93 = por %p91, %p92
      %p95 = scmp.ne.s32.totalorder %s80, %s94
      %p96 = scmp.eq.s32.totalorder %s37, 0
      %p97 = por %p95, %p96
      %s99 = sadd.s32 %s98, 1
      %p102 = scmp.eq.s32.totalorder %s31, 3
      %p103 = scmp.ne.s32.totalorder %s98, %s100
      %p104 = scmp.eq.s32.totalorder %s31, 0
      %p105 = por %p103, %p104
      %p106 = scmp.ne.s32.totalorder %s98, %s100
      %p107 = scmp.eq.s32.totalorder %s36, 3
      %p108 = por %p106, %p107
      %p109 = scmp.ne.s32.totalorder %s100, %s101
      %p110 = scmp.eq.s32.totalorder %s36, 0
      %p111 = por %p109, %p110
      %p112 = scmp.ne.s32.totalorder %s100, %s101
      %p113 = scmp.eq.s32.totalorder %s37, 3
      %p114 = por %p112, %p113
      %p116 = scmp.ne.s32.totalorder %s101, %s115
      %p117 = scmp.eq.s32.totalorder %s37, 0
      %p118 = por %p116, %p117
      %s120 = sadd.s32 %s119, 1
      %p123 = scmp.eq.s32.totalorder %s31, 3
      %p124 = scmp.ne.s32.totalorder %s119, %s121
      %p125 = scmp.eq.s32.totalorder %s31, 0
      %p126 = por %p124, %p125
      %p127 = scmp.ne.s32.totalorder %s119, %s121
      %p128 = scmp.eq.s32.totalorder %s36, 3
      %p129 = por %p127, %p128
      %p130 = scmp.ne.s32.totalorder %s121, %s122
      %p131 = scmp.eq.s32.totalorder %s36, 0
      %p132 = por %p130, %p131
      %p133 = scmp.ne.s32.totalorder %s121, %s122
      %p134 = scmp.eq.s32.totalorder %s37, 3
      %p135 = por %p133, %p134
      %p137 = scmp.ne.s32.totalorder %s122, %s136
      %p138 = scmp.eq.s32.totalorder %s37, 0
      %p139 = por %p137, %p138
      %s140 = ssub.s32 %s39, %s46
      %p141 = scmp.eq.s32.totalorder %s140, 0
      %s143 = sadd.s32 %s142, 1
      %s144 = scalar_select %p141, %s142, %s143
      %p147 = pneg %p141
      %p148 = scmp.eq.s32.totalorder %s31, 3
      %p149 = por %p147, %p148
      %p150 = scmp.ne.s32.totalorder %s142, %s145
      %p151 = scmp.eq.s32.totalorder %s31, 0
      %p152 = por %p150, %p151
      %p153 = scmp.ne.s32.totalorder %s142, %s145
      %p154 = scmp.eq.s32.totalorder %s36, 3
      %p155 = por %p153, %p154
      %p156 = scmp.ne.s32.totalorder %s145, %s146
      %p157 = scmp.eq.s32.totalorder %s36, 0
      %p158 = por %p156, %p157
      %p159 = scmp.ne.s32.totalorder %s145, %s146
      %p160 = scmp.eq.s32.totalorder %s37, 3
      %p161 = por %p159, %p160
      %p163 = scmp.ne.s32.totalorder %s146, %s162
      %p164 = scmp.eq.s32.totalorder %s37, 0
      %p165 = por %p163, %p164
      %s166 = ssub.s32 %s39, %s46
      %p167 = scmp.eq.s32.totalorder %s166, 0
      %s169 = sadd.s32 %s168, 1
      %s170 = scalar_select %p167, %s168, %s169
      %p173 = pneg %p167
      %p174 = scmp.eq.s32.totalorder %s31, 3
      %p175 = por %p173, %p174
      %p176 = scmp.ne.s32.totalorder %s168, %s171
      %p177 = scmp.eq.s32.totalorder %s31, 0
      %p178 = por %p176, %p177
      %p179 = scmp.ne.s32.totalorder %s168, %s171
      %p180 = scmp.eq.s32.totalorder %s36, 3
      %p181 = por %p179, %p180
      %p182 = scmp.ne.s32.totalorder %s171, %s172
      %p183 = scmp.eq.s32.totalorder %s36, 0
      %p184 = por %p182, %p183
      %p185 = scmp.ne.s32.totalorder %s171, %s172
      %p186 = scmp.eq.s32.totalorder %s37, 3
      %p187 = por %p185, %p186
      %p189 = scmp.ne.s32.totalorder %s172, %s188
      %p190 = scmp.eq.s32.totalorder %s37, 0
      %p191 = por %p189, %p190
      %s192 = ssub.s32 %s39, %s46
      %p193 = scmp.eq.s32.totalorder %s192, 0
      %s195 = sadd.s32 %s194, 1
      %s196 = scalar_select %p193, %s194, %s195
      %p199 = pneg %p193
      %p200 = scmp.eq.s32.totalorder %s31, 3
      %p201 = por %p199, %p200
      %p202 = scmp.ne.s32.totalorder %s194, %s197
      %p203 = scmp.eq.s32.totalorder %s31, 0
      %p204 = por %p202, %p203
      %p205 = scmp.ne.s32.totalorder %s194, %s197
      %p206 = scmp.eq.s32.totalorder %s36, 3
      %p207 = por %p205, %p206
      %p208 = scmp.ne.s32.totalorder %s197, %s198
      %p209 = scmp.eq.s32.totalorder %s36, 0
      %p210 = por %p208, %p209
      %p211 = scmp.ne.s32.totalorder %s197, %s198
      %p212 = scmp.eq.s32.totalorder %s37, 3
      %p213 = por %p211, %p212
      %p215 = scmp.ne.s32.totalorder %s198, %s214
      %p216 = scmp.eq.s32.totalorder %s37, 0
      %p217 = por %p215, %p216
      %s218 = ssub.s32 %s39, %s46
      %p219 = scmp.eq.s32.totalorder %s218, 0
      %s221 = sadd.s32 %s220, 1
      %s222 = scalar_select %p219, %s220, %s221
      %p225 = pneg %p219
      %p226 = scmp.eq.s32.totalorder %s31, 3
      %p227 = por %p225, %p226
      %p228 = scmp.ne.s32.totalorder %s220, %s223
      %p229 = scmp.eq.s32.totalorder %s31, 0
      %p230 = por %p228, %p229
      %p231 = scmp.ne.s32.totalorder %s220, %s223
      %p232 = scmp.eq.s32.totalorder %s36, 3
      %p233 = por %p231, %p232
      %p234 = scmp.ne.s32.totalorder %s223, %s224
      %p235 = scmp.eq.s32.totalorder %s36, 0
      %p236 = por %p234, %p235
      %p237 = scmp.ne.s32.totalorder %s223, %s224
      %p238 = scmp.eq.s32.totalorder %s37, 3
      %p239 = por %p237, %p238
      %p241 = scmp.ne.s32.totalorder %s224, %s240
      %p242 = scmp.eq.s32.totalorder %s37, 0
      %p243 = por %p241, %p242
      %s244 = ssub.s32 %s39, %s46
      %p245 = scmp.eq.s32.totalorder %s244, 0
      %s247 = sadd.s32 %s246, 1
      %s248 = scalar_select %p245, %s246, %s247
      %p251 = pneg %p245
      %p252 = scmp.eq.s32.totalorder %s31, 3
      %p253 = por %p251, %p252
      %p254 = scmp.ne.s32.totalorder %s246, %s249
      %p255 = scmp.eq.s32.totalorder %s31, 0
      %p256 = por %p254, %p255
      %p257 = scmp.ne.s32.totalorder %s246, %s249
      %p258 = scmp.eq.s32.totalorder %s36, 3
      %p259 = por %p257, %p258
      %p260 = scmp.ne.s32.totalorder %s249, %s250
      %p261 = scmp.eq.s32.totalorder %s36, 0
      %p262 = por %p260, %p261
      %p263 = scmp.ne.s32.totalorder %s249, %s250
      %p264 = scmp.eq.s32.totalorder %s37, 3
      %p265 = por %p263, %p264
      %p267 = scmp.ne.s32.totalorder %s250, %s266
      %p268 = scmp.eq.s32.totalorder %s37, 0
      %p269 = por %p267, %p268
      %s270 = ssub.s32 %s39, %s46
      %p271 = scmp.eq.s32.totalorder %s270, 0
      %s273 = sadd.s32 %s272, 1
      %s274 = scalar_select %p271, %s272, %s273
      %p277 = pneg %p271
      %p278 = scmp.eq.s32.totalorder %s31, 3
      %p279 = por %p277, %p278
      %p280 = scmp.ne.s32.totalorder %s272, %s275
      %p281 = scmp.eq.s32.totalorder %s31, 0
      %p282 = por %p280, %p281
      %p283 = scmp.ne.s32.totalorder %s272, %s275
      %p284 = scmp.eq.s32.totalorder %s36, 3
      %p285 = por %p283, %p284
      %p286 = scmp.ne.s32.totalorder %s275, %s276
      %p287 = scmp.eq.s32.totalorder %s36, 0
      %p288 = por %p286, %p287
      %p289 = scmp.ne.s32.totalorder %s275, %s276
      %p290 = scmp.eq.s32.totalorder %s37, 3
      %p291 = por %p289, %p290
      %p293 = scmp.ne.s32.totalorder %s276, %s292
      %p294 = scmp.eq.s32.totalorder %s37, 0
      %p295 = por %p293, %p294
      %s296 = ssub.s32 %s39, %s46
      %p297 = scmp.eq.s32.totalorder %s296, 0
      %s299 = sadd.s32 %s298, 1
      %s300 = scalar_select %p297, %s298, %s299
      %p303 = pneg %p297
      %p304 = scmp.eq.s32.totalorder %s31, 3
      %p305 = por %p303, %p304
      %p306 = scmp.ne.s32.totalorder %s298, %s301
      %p307 = scmp.eq.s32.totalorder %s31, 0
      %p308 = por %p306, %p307
      %p309 = scmp.ne.s32.totalorder %s298, %s301
      %p310 = scmp.eq.s32.totalorder %s36, 3
      %p311 = por %p309, %p310
      %p312 = scmp.ne.s32.totalorder %s301, %s302
      %p313 = scmp.eq.s32.totalorder %s36, 0
      %p314 = por %p312, %p313
      %p315 = scmp.ne.s32.totalorder %s301, %s302
      %p316 = scmp.eq.s32.totalorder %s37, 3
      %p317 = por %p315, %p316
      %p319 = scmp.ne.s32.totalorder %s302, %s318
      %p320 = scmp.eq.s32.totalorder %s37, 0
      %p321 = por %p319, %p320
      %s322 = ssub.s32 %s39, %s46
      %p323 = scmp.eq.s32.totalorder %s322, 0
      %s325 = sadd.s32 %s324, 1
      %s326 = scalar_select %p323, %s324, %s325
      %p329 = pneg %p323
      %p330 = scmp.eq.s32.totalorder %s31, 3
      %p331 = por %p329, %p330
      %p332 = scmp.ne.s32.totalorder %s324, %s327
      %p333 = scmp.eq.s32.totalorder %s31, 0
      %p334 = por %p332, %p333
      %p335 = scmp.ne.s32.totalorder %s324, %s327
      %p336 = scmp.eq.s32.totalorder %s36, 3
      %p337 = por %p335, %p336
      %p338 = scmp.ne.s32.totalorder %s327, %s328
      %p339 = scmp.eq.s32.totalorder %s36, 0
      %p340 = por %p338, %p339
      %p341 = scmp.ne.s32.totalorder %s327, %s328
      %p342 = scmp.eq.s32.totalorder %s37, 3
      %p343 = por %p341, %p342
      %p345 = scmp.ne.s32.totalorder %s328, %s344
      %p346 = scmp.eq.s32.totalorder %s37, 0
      %p347 = por %p345, %p346
      %s348 = ssub.s32 %s39, %s46
      %p349 = scmp.eq.s32.totalorder %s348, 0
      %s351 = sadd.s32 %s350, 1
      %s352 = scalar_select %p349, %s350, %s351
      %p355 = pneg %p349
      %p356 = scmp.eq.s32.totalorder %s31, 3
      %p357 = por %p355, %p356
      %p358 = scmp.ne.s32.totalorder %s350, %s353
      %p359 = scmp.eq.s32.totalorder %s31, 0
      %p360 = por %p358, %p359
      %p361 = scmp.ne.s32.totalorder %s350, %s353
      %p362 = scmp.eq.s32.totalorder %s36, 3
      %p363 = por %p361, %p362
      %p364 = scmp.ne.s32.totalorder %s353, %s354
      %p365 = scmp.eq.s32.totalorder %s36, 0
      %p366 = por %p364, %p365
      %p367 = scmp.ne.s32.totalorder %s353, %s354
      %p368 = scmp.eq.s32.totalorder %s37, 3
      %p369 = por %p367, %p368
      %p371 = scmp.ne.s32.totalorder %s354, %s370
      %p372 = scmp.eq.s32.totalorder %s37, 0
      %p373 = por %p371, %p372
      %s374 = ssub.s32 %s39, %s46
      %p375 = scmp.eq.s32.totalorder %s374, 0
      %s377 = sadd.s32 %s376, 1
      %s378 = scalar_select %p375, %s376, %s377
      %p381 = pneg %p375
      %p382 = scmp.eq.s32.totalorder %s31, 3
      %p383 = por %p381, %p382
      %p384 = scmp.ne.s32.totalorder %s376, %s379
      %p385 = scmp.eq.s32.totalorder %s31, 0
      %p386 = por %p384, %p385
      %p387 = scmp.ne.s32.totalorder %s376, %s379
      %p388 = scmp.eq.s32.totalorder %s36, 3
      %p389 = por %p387, %p388
      %p390 = scmp.ne.s32.totalorder %s379, %s380
      %p391 = scmp.eq.s32.totalorder %s36, 0
      %p392 = por %p390, %p391
      %p393 = scmp.ne.s32.totalorder %s379, %s380
      %p394 = scmp.eq.s32.totalorder %s37, 3
      %p395 = por %p393, %p394
      %p397 = scmp.ne.s32.totalorder %s380, %s396
      %p398 = scmp.eq.s32.totalorder %s37, 0
      %p399 = por %p397, %p398
      %s400 = ssub.s32 %s39, %s46
      %p401 = scmp.eq.s32.totalorder %s400, 0
      %s403 = sadd.s32 %s402, 1
      %s404 = scalar_select %p401, %s402, %s403
      %p407 = pneg %p401
      %p408 = scmp.eq.s32.totalorder %s31, 3
      %p409 = por %p407, %p408
      %p410 = scmp.ne.s32.totalorder %s402, %s405
      %p411 = scmp.eq.s32.totalorder %s31, 0
      %p412 = por %p410, %p411
      %p413 = scmp.ne.s32.totalorder %s402, %s405
      %p414 = scmp.eq.s32.totalorder %s36, 3
      %p415 = por %p413, %p414
      %p416 = scmp.ne.s32.totalorder %s405, %s406
      %p417 = scmp.eq.s32.totalorder %s36, 0
      %p418 = por %p416, %p417
      %p419 = scmp.ne.s32.totalorder %s405, %s406
      %p420 = scmp.eq.s32.totalorder %s37, 3
      %p421 = por %p419, %p420
      %p423 = scmp.ne.s32.totalorder %s406, %s422
      %p424 = scmp.eq.s32.totalorder %s37, 0
      %p425 = por %p423, %p424
      %s426 = ssub.s32 %s39, %s46
      %p427 = scmp.eq.s32.totalorder %s426, 0
      %s429 = sadd.s32 %s428, 1
      %s430 = scalar_select %p427, %s428, %s429
      %p433 = pneg %p427
      %p434 = scmp.eq.s32.totalorder %s31, 3
      %p435 = por %p433, %p434
      %p436 = scmp.ne.s32.totalorder %s428, %s431
      %p437 = scmp.eq.s32.totalorder %s31, 0
      %p438 = por %p436, %p437
      %p439 = scmp.ne.s32.totalorder %s428, %s431
      %p440 = scmp.eq.s32.totalorder %s36, 3
      %p441 = por %p439, %p440
      %p442 = scmp.ne.s32.totalorder %s431, %s432
      %p443 = scmp.eq.s32.totalorder %s36, 0
      %p444 = por %p442, %p443
      %p445 = scmp.ne.s32.totalorder %s431, %s432
      %p446 = scmp.eq.s32.totalorder %s37, 3
      %p447 = por %p445, %p446
      %p449 = scmp.ne.s32.totalorder %s432, %s448
      %p450 = scmp.eq.s32.totalorder %s37, 0
      %p451 = por %p449, %p450
      %s452 = ssub.s32 %s39, %s46
      %p453 = scmp.eq.s32.totalorder %s452, 0
      %s455 = sadd.s32 %s454, 1
      %s456 = scalar_select %p453, %s454, %s455
      %p459 = pneg %p453
      %p460 = scmp.eq.s32.totalorder %s31, 3
      %p461 = por %p459, %p460
      %p462 = scmp.ne.s32.totalorder %s454, %s457
      %p463 = scmp.eq.s32.totalorder %s31, 0
      %p464 = por %p462, %p463
      %p465 = scmp.ne.s32.totalorder %s454, %s457
      %p466 = scmp.eq.s32.totalorder %s36, 3
      %p467 = por %p465, %p466
      %p468 = scmp.ne.s32.totalorder %s457, %s458
      %p469 = scmp.eq.s32.totalorder %s36, 0
      %p470 = por %p468, %p469
      %p471 = scmp.ne.s32.totalorder %s457, %s458
      %p472 = scmp.eq.s32.totalorder %s37, 3
      %p473 = por %p471, %p472
      %p475 = scmp.ne.s32.totalorder %s458, %s474
      %p476 = scmp.eq.s32.totalorder %s37, 0
      %p477 = por %p475, %p476
      %s478 = ssub.s32 %s38, %s50
      %p479 = scmp.eq.s32.totalorder %s478, 0
      %s481 = sadd.s32 %s480, 1
      %s482 = scalar_select %p479, %s480, %s481
      %p485 = pneg %p479
      %p486 = scmp.eq.s32.totalorder %s31, 3
      %p487 = por %p485, %p486
      %p488 = scmp.ne.s32.totalorder %s480, %s483
      %p489 = scmp.eq.s32.totalorder %s31, 0
      %p490 = por %p488, %p489
      %p491 = scmp.ne.s32.totalorder %s480, %s483
      %p492 = scmp.eq.s32.totalorder %s36, 3
      %p493 = por %p491, %p492
      %p494 = scmp.ne.s32.totalorder %s483, %s484
      %p495 = scmp.eq.s32.totalorder %s36, 0
      %p496 = por %p494, %p495
      %p497 = scmp.ne.s32.totalorder %s483, %s484
      %p498 = scmp.eq.s32.totalorder %s37, 3
      %p499 = por %p497, %p498
      %p501 = scmp.ne.s32.totalorder %s484, %s500
      %p502 = scmp.eq.s32.totalorder %s37, 0
      %p503 = por %p501, %p502
      %s504 = ssub.s32 %s38, %s50
      %p505 = scmp.eq.s32.totalorder %s504, 0
      %s507 = sadd.s32 %s506, 1
      %s508 = scalar_select %p505, %s506, %s507
      %p511 = pneg %p505
      %p512 = scmp.eq.s32.totalorder %s31, 3
      %p513 = por %p511, %p512
      %p514 = scmp.ne.s32.totalorder %s506, %s509
      %p515 = scmp.eq.s32.totalorder %s31, 0
      %p516 = por %p514, %p515
      %p517 = scmp.ne.s32.totalorder %s506, %s509
      %p518 = scmp.eq.s32.totalorder %s36, 3
      %p519 = por %p517, %p518
      %p520 = scmp.ne.s32.totalorder %s509, %s510
      %p521 = scmp.eq.s32.totalorder %s36, 0
      %p522 = por %p520, %p521
      %p523 = scmp.ne.s32.totalorder %s509, %s510
      %p524 = scmp.eq.s32.totalorder %s37, 3
      %p525 = por %p523, %p524
      %p527 = scmp.ne.s32.totalorder %s510, %s526
      %p528 = scmp.eq.s32.totalorder %s37, 0
      %p529 = por %p527, %p528
      %p530 = scmp.le.s32.totalorder 1, %s31
      %p531 = scmp.lt.s32.totalorder %s31, 5
      %p532 = pnand %p530, %p531
      %p533 = pneg %p532
      // Predicated region
      $region9: #{transm_forward.1} parent=5 // pred_check
        _
      $region10: #{transm_forward.1} parent=5 // pred_check_branch
        %535 = sbr.rel (%p532) target = $region12
      $region11: #{transm_forward.1} parent=5 // pred_region
        %s536 = ssub.s32 %s31, 1
        // Predicated region
        $region13: #{transm_forward.1} parent=11 // pred_check
          %p537 = pneg %p90
        $region14: #{transm_forward.1} parent=11 // pred_check_branch
          %539 = sbr.rel (%p537) target = $region16
        $region15: #{transm_forward.1} parent=11 // pred_region
          _
        $region16: #{transm_forward.1} parent=11 // pred_fallthru
          _
        // Predicated region
        $region17: #{transm_forward.1} parent=11 // pred_check
          %p540 = pneg %p111
        $region18: #{transm_forward.1} parent=11 // pred_check_branch
          %542 = sbr.rel (%p540) target = $region20
        $region19: #{transm_forward.1} parent=11 // pred_region
          _
        $region20: #{transm_forward.1} parent=11 // pred_fallthru
          _
        // Predicated region
        $region21: #{transm_forward.1} parent=11 // pred_check
          %p543 = pneg %p132
        $region22: #{transm_forward.1} parent=11 // pred_check_branch
          %545 = sbr.rel (%p543) target = $region24
        $region23: #{transm_forward.1} parent=11 // pred_region
          _
        $region24: #{transm_forward.1} parent=11 // pred_fallthru
          _
      $region12: #{transm_forward.1} parent=5 // pred_fallthru
        _
      %p546 = scmp.lt.s32.totalorder %s31, 4
      // Predicated region
      $region25: #{transm_forward.1} parent=5 // pred_check
        %p547 = pneg %p546
      $region26: #{transm_forward.1} parent=5 // pred_check_branch
        %549 = sbr.rel (%p547) target = $region28
      $region27: #{transm_forward.1} parent=5 // pred_region
        // Predicated region
        $region29: #{transm_forward.1} parent=27 // pred_check
          %p550 = pneg %p63
        $region30: #{transm_forward.1} parent=27 // pred_check_branch
          %552 = sbr.rel (%p550) target = $region32
        $region31: #{transm_forward.1} parent=27 // pred_region
          %p553 = scmp.lt.s32.totalorder %s38, 1
          %s554 = scalar_select %p553, %s38, 1
          %s555 = smul.addr %s554, 32
          %s556 = smul.addr %s555, 4
          %s557 = scalar_lea.vmem %s0, %s556
        $region32: #{transm_forward.1} parent=27 // pred_fallthru
          _
        // Predicated region
        $region33: #{transm_forward.1} parent=27 // pred_check
          %p558 = pneg %p152
        $region34: #{transm_forward.1} parent=27 // pred_check_branch
          %560 = sbr.rel (%p558) target = $region36
        $region35: #{transm_forward.1} parent=27 // pred_region
          %p561 = scmp.lt.s32.totalorder %s39, 1
          %s562 = scalar_select %p561, %s39, 1
          %s563 = scalar_lea.vmem %s4, %s562
        $region36: #{transm_forward.1} parent=27 // pred_fallthru
          _
        // Predicated region
        $region37: #{transm_forward.1} parent=27 // pred_check
          %p564 = pneg %p178
        $region38: #{transm_forward.1} parent=27 // pred_check_branch
          %566 = sbr.rel (%p564) target = $region40
        $region39: #{transm_forward.1} parent=27 // pred_region
          %p567 = scmp.lt.s32.totalorder %s39, 1
          %s568 = scalar_select %p567, %s39, 1
          %s569 = scalar_lea.vmem %s5, %s568
        $region40: #{transm_forward.1} parent=27 // pred_fallthru
          _
        // Predicated region
        $region41: #{transm_forward.1} parent=27 // pred_check
          %p570 = pneg %p204
        $region42: #{transm_forward.1} parent=27 // pred_check_branch
          %572 = sbr.rel (%p570) target = $region44
        $region43: #{transm_forward.1} parent=27 // pred_region
          %p573 = scmp.lt.s32.totalorder %s39, 1
          %s574 = scalar_select %p573, %s39, 1
          %s575 = smul.addr %s574, 4
          %s576 = smul.addr %s575, 4
          %s577 = scalar_lea.vmem %s6, %s576
        $region44: #{transm_forward.1} parent=27 // pred_fallthru
          _
        // Predicated region
        $region45: #{transm_forward.1} parent=27 // pred_check
          %p578 = pneg %p230
        $region46: #{transm_forward.1} parent=27 // pred_check_branch
          %580 = sbr.rel (%p578) target = $region48
        $region47: #{transm_forward.1} parent=27 // pred_region
          %p581 = scmp.lt.s32.totalorder %s39, 1
          %s582 = scalar_select %p581, %s39, 1
          %s583 = smul.addr %s582, 4
          %s584 = smul.addr %s583, 4
          %s585 = scalar_lea.vmem %s7, %s584
        $region48: #{transm_forward.1} parent=27 // pred_fallthru
          _
        // Predicated region
        $region49: #{transm_forward.1} parent=27 // pred_check
          %p586 = pneg %p256
        $region50: #{transm_forward.1} parent=27 // pred_check_branch
          %588 = sbr.rel (%p586) target = $region52
        $region51: #{transm_forward.1} parent=27 // pred_region
          %p589 = scmp.lt.s32.totalorder %s39, 1
          %s590 = scalar_select %p589, %s39, 1
          %s591 = smul.addr %s590, 4
          %s592 = smul.addr %s591, 4
          %s593 = scalar_lea.vmem %s8, %s592
        $region52: #{transm_forward.1} parent=27 // pred_fallthru
          _
        // Predicated region
        $region53: #{transm_forward.1} parent=27 // pred_check
          %p594 = pneg %p282
        $region54: #{transm_forward.1} parent=27 // pred_check_branch
          %596 = sbr.rel (%p594) target = $region56
        $region55: #{transm_forward.1} parent=27 // pred_region
          %p597 = scmp.lt.s32.totalorder %s39, 1
          %s598 = scalar_select %p597, %s39, 1
          %s599 = smul.addr %s598, 4
          %s600 = smul.addr %s599, 4
          %s601 = scalar_lea.vmem %s9, %s600
        $region56: #{transm_forward.1} parent=27 // pred_fallthru
          _
        // Predicated region
        $region57: #{transm_forward.1} parent=27 // pred_check
          %p602 = pneg %p308
        $region58: #{transm_forward.1} parent=27 // pred_check_branch
          %604 = sbr.rel (%p602) target = $region60
        $region59: #{transm_forward.1} parent=27 // pred_region
          %p605 = scmp.lt.s32.totalorder %s39, 1
          %s606 = scalar_select %p605, %s39, 1
          %s607 = scalar_lea.vmem %s10, %s606
        $region60: #{transm_forward.1} parent=27 // pred_fallthru
          _
        // Predicated region
        $region61: #{transm_forward.1} parent=27 // pred_check
          %p608 = pneg %p334
        $region62: #{transm_forward.1} parent=27 // pred_check_branch
          %610 = sbr.rel (%p608) target = $region64
        $region63: #{transm_forward.1} parent=27 // pred_region
          %p611 = scmp.lt.s32.totalorder %s39, 1
          %s612 = scalar_select %p611, %s39, 1
          %s613 = scalar_lea.vmem %s11, %s612
        $region64: #{transm_forward.1} parent=27 // pred_fallthru
          _
        // Predicated region
        $region65: #{transm_forward.1} parent=27 // pred_check
          %p614 = pneg %p360
        $region66: #{transm_forward.1} parent=27 // pred_check_branch
          %616 = sbr.rel (%p614) target = $region68
        $region67: #{transm_forward.1} parent=27 // pred_region
          %p617 = scmp.lt.s32.totalorder %s39, 1
          %s618 = scalar_select %p617, %s39, 1
          %s619 = scalar_lea.vmem %s12, %s618
        $region68: #{transm_forward.1} parent=27 // pred_fallthru
          _
        // Predicated region
        $region69: #{transm_forward.1} parent=27 // pred_check
          %p620 = pneg %p386
        $region70: #{transm_forward.1} parent=27 // pred_check_branch
          %622 = sbr.rel (%p620) target = $region72
        $region71: #{transm_forward.1} parent=27 // pred_region
          %p623 = scmp.lt.s32.totalorder %s39, 1
          %s624 = scalar_select %p623, %s39, 1
          %s625 = smul.addr %s624, 4
          %s626 = smul.addr %s625, 4
          %s627 = scalar_lea.vmem %s13, %s626
        $region72: #{transm_forward.1} parent=27 // pred_fallthru
          _
        // Predicated region
        $region73: #{transm_forward.1} parent=27 // pred_check
          %p628 = pneg %p412
        $region74: #{transm_forward.1} parent=27 // pred_check_branch
          %630 = sbr.rel (%p628) target = $region76
        $region75: #{transm_forward.1} parent=27 // pred_region
          %p631 = scmp.lt.s32.totalorder %s39, 1
          %s632 = scalar_select %p631, %s39, 1
          %s633 = scalar_lea.vmem %s14, %s632
        $region76: #{transm_forward.1} parent=27 // pred_fallthru
          _
        // Predicated region
        $region77: #{transm_forward.1} parent=27 // pred_check
          %p634 = pneg %p438
        $region78: #{transm_forward.1} parent=27 // pred_check_branch
          %636 = sbr.rel (%p634) target = $region80
        $region79: #{transm_forward.1} parent=27 // pred_region
          %p637 = scmp.lt.s32.totalorder %s39, 1
          %s638 = scalar_select %p637, %s39, 1
          %s639 = smul.addr %s638, 8
          %s640 = smul.addr %s639, 4
          %s641 = scalar_lea.vmem %s15, %s640
        $region80: #{transm_forward.1} parent=27 // pred_fallthru
          _
        // Predicated region
        $region81: #{transm_forward.1} parent=27 // pred_check
          %p642 = pneg %p464
        $region82: #{transm_forward.1} parent=27 // pred_check_branch
          %644 = sbr.rel (%p642) target = $region84
        $region83: #{transm_forward.1} parent=27 // pred_region
          %p645 = scmp.lt.s32.totalorder %s39, 1
          %s646 = scalar_select %p645, %s39, 1
          %s647 = scalar_lea.vmem %s16, %s646
        $region84: #{transm_forward.1} parent=27 // pred_fallthru
          _
      $region28: #{transm_forward.1} parent=5 // pred_fallthru
        _
      %p648 = scmp.le.s32.totalorder 1, %s31
      %p649 = scmp.lt.s32.totalorder %s31, 5
      %p650 = pnand %p648, %p649
      %p651 = pneg %p650
      // Predicated region
      $region85: #{transm_forward.1} parent=5 // pred_check
        _
      $region86: #{transm_forward.1} parent=5 // pred_check_branch
        %653 = sbr.rel (%p650) target = $region88
      $region87: #{transm_forward.1} parent=5 // pred_region
        %s654 = ssub.s32 %s31, 1
        %p655 = scmp.lt.s32.totalorder %s40, 1
        %s656 = scalar_select %p655, %s40, 1
        %s657 = smul.addr %s656, 32
        %s658 = smul.addr %s657, 4
        %s659 = scalar_lea.vmem %s0, %s658
        %p660 = pneg %p69
        %p661 = pneg %p66
        %p662 = pneg %p90
        %p663 = pneg %p87
        %p664 = pneg %p111
        %p665 = pneg %p108
        %p666 = pneg %p132
        %p667 = pneg %p129
        %p668 = scmp.lt.s32.totalorder %s41, 1
        %s669 = scalar_select %p668, %s41, 1
        %s670 = scalar_lea.vmem %s4, %s669
        %p671 = pneg %p158
        %p672 = pneg %p155
        %p673 = scmp.lt.s32.totalorder %s41, 1
        %s674 = scalar_select %p673, %s41, 1
        %s675 = scalar_lea.vmem %s5, %s674
        %p676 = pneg %p184
        %p677 = pneg %p181
        %p678 = scmp.lt.s32.totalorder %s41, 1
        %s679 = scalar_select %p678, %s41, 1
        %s680 = smul.addr %s679, 4
        %s681 = smul.addr %s680, 4
        %s682 = scalar_lea.vmem %s6, %s681
        %p683 = pneg %p210
        %p684 = pneg %p207
        %p685 = scmp.lt.s32.totalorder %s41, 1
        %s686 = scalar_select %p685, %s41, 1
        %s687 = smul.addr %s686, 4
        %s688 = smul.addr %s687, 4
        %s689 = scalar_lea.vmem %s7, %s688
        %p690 = pneg %p236
        %p691 = pneg %p233
        %p692 = scmp.lt.s32.totalorder %s41, 1
        %s693 = scalar_select %p692, %s41, 1
        %s694 = smul.addr %s693, 4
        %s695 = smul.addr %s694, 4
        %s696 = scalar_lea.vmem %s8, %s695
        %p697 = pneg %p262
        %p698 = pneg %p259
        %p699 = scmp.lt.s32.totalorder %s41, 1
        %s700 = scalar_select %p699, %s41, 1
        %s701 = smul.addr %s700, 4
        %s702 = smul.addr %s701, 4
        %s703 = scalar_lea.vmem %s9, %s702
        %p704 = pneg %p288
        %p705 = pneg %p285
        %p706 = scmp.lt.s32.totalorder %s41, 1
        %s707 = scalar_select %p706, %s41, 1
        %s708 = scalar_lea.vmem %s10, %s707
        %p709 = pneg %p314
        %p710 = pneg %p311
        %p711 = scmp.lt.s32.totalorder %s41, 1
        %s712 = scalar_select %p711, %s41, 1
        %s713 = scalar_lea.vmem %s11, %s712
        %p714 = pneg %p340
        %p715 = pneg %p337
        %p716 = scmp.lt.s32.totalorder %s41, 1
        %s717 = scalar_select %p716, %s41, 1
        %s718 = scalar_lea.vmem %s12, %s717
        %p719 = pneg %p366
        %p720 = pneg %p363
        %p721 = scmp.lt.s32.totalorder %s41, 1
        %s722 = scalar_select %p721, %s41, 1
        %s723 = smul.addr %s722, 4
        %s724 = smul.addr %s723, 4
        %s725 = scalar_lea.vmem %s13, %s724
        %p726 = pneg %p392
        %p727 = pneg %p389
        %p728 = scmp.lt.s32.totalorder %s41, 1
        %s729 = scalar_select %p728, %s41, 1
        %s730 = scalar_lea.vmem %s14, %s729
        %p731 = pneg %p418
        %p732 = pneg %p415
        %p733 = scmp.lt.s32.totalorder %s41, 1
        %s734 = scalar_select %p733, %s41, 1
        %s735 = smul.addr %s734, 8
        %s736 = smul.addr %s735, 4
        %s737 = scalar_lea.vmem %s15, %s736
        %p738 = pneg %p444
        %p739 = pneg %p441
        %p740 = scmp.lt.s32.totalorder %s41, 1
        %s741 = scalar_select %p740, %s41, 1
        %s742 = scalar_lea.vmem %s16, %s741
        %p743 = pneg %p470
        %p744 = pneg %p467
        %p745 = pneg %p496
        %p746 = pneg %p493
        %s747 = sand.u32 %s483, 1
        %s748 = scalar_lea.sflag [#allocation5], %s747
        %s749 = sand.u32 %s483, 1
        %s750 = smul.addr %s749, 256
        %s751 = scalar_lea.vmem [#allocation4], %s750
        %p752 = pneg %p522
        %p753 = pneg %p519
        %s754 = sand.u32 %s509, 1
        %s755 = scalar_lea.sflag [#allocation7], %s754
        %s756 = sand.u32 %s509, 1
        %s757 = scalar_lea.vmem [#allocation6], %s756
        %p758 = scmp.lt.s32.totalorder %s40, 1
        %s759 = scalar_select %p758, %s40, 1
        %s760 = smul.addr %s759, 32
        %s761 = smul.addr %s760, 4
        %s762 = scalar_lea.vmem %s0, %s761
        %p763 = scmp.lt.s32.totalorder %s41, 1
        %s764 = scalar_select %p763, %s41, 1
        %s765 = scalar_lea.vmem %s4, %s764
        %p766 = scmp.lt.s32.totalorder %s41, 1
        %s767 = scalar_select %p766, %s41, 1
        %s768 = scalar_lea.vmem %s5, %s767
        %p769 = scmp.lt.s32.totalorder %s41, 1
        %s770 = scalar_select %p769, %s41, 1
        %s771 = smul.addr %s770, 4
        %s772 = smul.addr %s771, 4
        %s773 = scalar_lea.vmem %s6, %s772
        %p774 = scmp.lt.s32.totalorder %s41, 1
        %s775 = scalar_select %p774, %s41, 1
        %s776 = smul.addr %s775, 4
        %s777 = smul.addr %s776, 4
        %s778 = scalar_lea.vmem %s7, %s777
        %p779 = scmp.lt.s32.totalorder %s41, 1
        %s780 = scalar_select %p779, %s41, 1
        %s781 = smul.addr %s780, 4
        %s782 = smul.addr %s781, 4
        %s783 = scalar_lea.vmem %s8, %s782
        %p784 = scmp.lt.s32.totalorder %s41, 1
        %s785 = scalar_select %p784, %s41, 1
        %s786 = smul.addr %s785, 4
        %s787 = smul.addr %s786, 4
        %s788 = scalar_lea.vmem %s9, %s787
        %p789 = scmp.lt.s32.totalorder %s41, 1
        %s790 = scalar_select %p789, %s41, 1
        %s791 = scalar_lea.vmem %s10, %s790
        %p792 = scmp.lt.s32.totalorder %s41, 1
        %s793 = scalar_select %p792, %s41, 1
        %s794 = scalar_lea.vmem %s11, %s793
        %p795 = scmp.lt.s32.totalorder %s41, 1
        %s796 = scalar_select %p795, %s41, 1
        %s797 = scalar_lea.vmem %s12, %s796
        %p798 = scmp.lt.s32.totalorder %s41, 1
        %s799 = scalar_select %p798, %s41, 1
        %s800 = smul.addr %s799, 4
        %s801 = smul.addr %s800, 4
        %s802 = scalar_lea.vmem %s13, %s801
        %p803 = scmp.lt.s32.totalorder %s41, 1
        %s804 = scalar_select %p803, %s41, 1
        %s805 = scalar_lea.vmem %s14, %s804
        %p806 = scmp.lt.s32.totalorder %s41, 1
        %s807 = scalar_select %p806, %s41, 1
        %s808 = smul.addr %s807, 8
        %s809 = smul.addr %s808, 4
        %s810 = scalar_lea.vmem %s15, %s809
        %p811 = scmp.lt.s32.totalorder %s41, 1
        %s812 = scalar_select %p811, %s41, 1
        %s813 = scalar_lea.vmem %s16, %s812
        %p815 = scmp.eq.s32.totalorder %s41, 0
        // Predicated region
        $region89: #{transm_forward.1} parent=87 // pred_check
          %p816 = pneg %p815
        $region90: #{transm_forward.1} parent=87 // pred_check_branch
          %818 = sbr.rel (%p816) target = $region92
        $region91: #{transm_forward.1} parent=87 // pred_region
          %v819 = vld [vmem:[%s762] sm:$0xf]
          %v820 = vld [vmem:[%s762 + $0x4] sm:$0xf]
          %v821 = vld [vmem:[%s762 + $0x8] sm:$0xf]
          %v822 = vld [vmem:[%s762 + $0xc] sm:$0xf]
          %v823 = vld [vmem:[%s762 + $0x10] sm:$0xf]
          %v824 = vld [vmem:[%s762 + $0x14] sm:$0xf]
          %v825 = vld [vmem:[%s762 + $0x18] sm:$0xf]
          %v826 = vld [vmem:[%s762 + $0x1c] sm:$0xf]
          %v827 = vld [vmem:[%s762 + $0x20] sm:$0xf]
          %v828 = vld [vmem:[%s762 + $0x24] sm:$0xf]
          %v829 = vld [vmem:[%s762 + $0x28] sm:$0xf]
          %v830 = vld [vmem:[%s762 + $0x2c] sm:$0xf]
          %v831 = vld [vmem:[%s762 + $0x30] sm:$0xf]
          %v832 = vld [vmem:[%s762 + $0x34] sm:$0xf]
          %v833 = vld [vmem:[%s762 + $0x38] sm:$0xf]
          %v834 = vld [vmem:[%s762 + $0x3c] sm:$0xf]
          %v835 = vld [vmem:[%s762 + $0x40] sm:$0xf]
          %v836 = vld [vmem:[%s762 + $0x44] sm:$0xf]
          %v837 = vld [vmem:[%s762 + $0x48] sm:$0xf]
          %v838 = vld [vmem:[%s762 + $0x4c] sm:$0xf]
          %v839 = vld [vmem:[%s762 + $0x50] sm:$0xf]
          %v840 = vld [vmem:[%s762 + $0x54] sm:$0xf]
          %v841 = vld [vmem:[%s762 + $0x58] sm:$0xf]
          %v842 = vld [vmem:[%s762 + $0x5c] sm:$0xf]
          %v843 = vld [vmem:[%s762 + $0x60] sm:$0xf]
          %v844 = vld [vmem:[%s762 + $0x64] sm:$0xf]
          %v845 = vld [vmem:[%s762 + $0x68] sm:$0xf]
          %v846 = vld [vmem:[%s762 + $0x6c] sm:$0xf]
          %v847 = vld [vmem:[%s762 + $0x70] sm:$0xf]
          %v848 = vld [vmem:[%s762 + $0x74] sm:$0xf]
          %v849 = vld [vmem:[%s762 + $0x78] sm:$0xf]
          %v850 = vld [vmem:[%s762 + $0x7c] sm:$0xf]
          %v851 = vld [vmem:[%s1] sm:$0x3]
          %v852 = vld [vmem:[%s2] sm:$0x1]
          %v854 = vperm.slane %v852, 0
          %v888 = vunpack.c.l.b16 %v819
          %v889 = vunpack.c.l.b16 %v820
          %v890 = vunpack.c.l.b16 %v821
          %v891 = vunpack.c.l.b16 %v822
          %v892 = vunpack.c.l.b16 %v823
          %v893 = vunpack.c.l.b16 %v824
          %v894 = vunpack.c.l.b16 %v825
          %v895 = vunpack.c.l.b16 %v826
          %v896 = vunpack.c.l.b16 %v827
          %v897 = vunpack.c.l.b16 %v828
          %v898 = vunpack.c.l.b16 %v829
          %v899 = vunpack.c.l.b16 %v830
          %v900 = vunpack.c.l.b16 %v831
          %v901 = vunpack.c.l.b16 %v832
          %v902 = vunpack.c.l.b16 %v833
          %v903 = vunpack.c.l.b16 %v834
          %v904 = vunpack.c.l.b16 %v835
          %v905 = vunpack.c.l.b16 %v836
          %v906 = vunpack.c.l.b16 %v837
          %v907 = vunpack.c.l.b16 %v838
          %v908 = vunpack.c.l.b16 %v839
          %v909 = vunpack.c.l.b16 %v840
          %v910 = vunpack.c.l.b16 %v841
          %v911 = vunpack.c.l.b16 %v842
          %v912 = vunpack.c.l.b16 %v843
          %v913 = vunpack.c.l.b16 %v844
          %v914 = vunpack.c.l.b16 %v845
          %v915 = vunpack.c.l.b16 %v846
          %v916 = vunpack.c.l.b16 %v847
          %v917 = vunpack.c.l.b16 %v848
          %v918 = vunpack.c.l.b16 %v849
          %v919 = vunpack.c.l.b16 %v850
          %v920 = vpack.c.b16 %v889, %v888
          %v921 = vpack.c.b16 %v891, %v890
          %v922 = vpack.c.b16 %v893, %v892
          %v923 = vpack.c.b16 %v895, %v894
          %v924 = vpack.c.b16 %v897, %v896
          %v925 = vpack.c.b16 %v899, %v898
          %v926 = vpack.c.b16 %v901, %v900
          %v927 = vpack.c.b16 %v903, %v902
          %v928 = vpack.c.b16 %v905, %v904
          %v929 = vpack.c.b16 %v907, %v906
          %v930 = vpack.c.b16 %v909, %v908
          %v931 = vpack.c.b16 %v911, %v910
          %v932 = vpack.c.b16 %v913, %v912
          %v933 = vpack.c.b16 %v915, %v914
          %v934 = vpack.c.b16 %v917, %v916
          %v935 = vpack.c.b16 %v919, %v918
          %vm936 = vcmask 31744
          %v938 = vsel %vm936, %v920, 0
          %v941 = vsel %vm936, %v921, 0
          %v944 = vsel %vm936, %v922, 0
          %v947 = vsel %vm936, %v923, 0
          %v950 = vsel %vm936, %v924, 0
          %v953 = vsel %vm936, %v925, 0
          %v956 = vsel %vm936, %v926, 0
          %v959 = vsel %vm936, %v927, 0
          %v962 = vsel %vm936, %v928, 0
          %v965 = vsel %vm936, %v929, 0
          %v968 = vsel %vm936, %v930, 0
          %v971 = vsel %vm936, %v931, 0
          %v974 = vsel %vm936, %v932, 0
          %v977 = vsel %vm936, %v933, 0
          %v980 = vsel %vm936, %v934, 0
          %v983 = vsel %vm936, %v935, 0
          %vm985 = vcmask 1041408
          %v987 = vsel %vm985, %v851, 0
          %989 = vmatpush.bf16.msra.mxu0 0
          %990 = vmatpush.bf16.msra.mxu0 0
          %991 = vmatpush.bf16.msra.mxu0 0
          %992 = vmatpush.bf16.msra.mxu0 0
          %993 = vmatpush.bf16.msra.mxu0 0
          %994 = vmatpush.bf16.msra.mxu0 0
          %995 = vmatpush.bf16.msra.mxu0 0
          %996 = vmatpush.bf16.msra.mxu0 %v987
          %997 = vmatmul.bf16.gmra.mxu0 %v938
          %v998 = vpop.f32.mrf.mxu0
          %v999 = vadd.f32 %v854, %v998
          %v1000 = vpop.f32.mrf.mxu0
          %v1001 = vadd.f32 %v854, %v1000
          %1002 = vmatmul.bf16.gmra.mxu0 %v941
          %v1003 = vpop.f32.mrf.mxu0
          %v1004 = vadd.f32 %v854, %v1003
          %v1005 = vpop.f32.mrf.mxu0
          %v1006 = vadd.f32 %v854, %v1005
          %1007 = vmatmul.bf16.gmra.mxu0 %v944
          %v1008 = vpop.f32.mrf.mxu0
          %v1009 = vadd.f32 %v854, %v1008
          %v1010 = vpop.f32.mrf.mxu0
          %v1011 = vadd.f32 %v854, %v1010
          %1012 = vmatmul.bf16.gmra.mxu0 %v947
          %v1013 = vpop.f32.mrf.mxu0
          %v1014 = vadd.f32 %v854, %v1013
          %v1015 = vpop.f32.mrf.mxu0
          %v1016 = vadd.f32 %v854, %v1015
          %1017 = vmatmul.bf16.gmra.mxu0 %v950
          %v1018 = vpop.f32.mrf.mxu0
          %v1019 = vadd.f32 %v854, %v1018
          %v1020 = vpop.f32.mrf.mxu0
          %v1021 = vadd.f32 %v854, %v1020
          %1022 = vmatmul.bf16.gmra.mxu0 %v953
          %v1023 = vpop.f32.mrf.mxu0
          %v1024 = vadd.f32 %v854, %v1023
          %v1025 = vpop.f32.mrf.mxu0
          %v1026 = vadd.f32 %v854, %v1025
          %1027 = vmatmul.bf16.gmra.mxu0 %v956
          %v1028 = vpop.f32.mrf.mxu0
          %v1029 = vadd.f32 %v854, %v1028
          %v1030 = vpop.f32.mrf.mxu0
          %v1031 = vadd.f32 %v854, %v1030
          %1032 = vmatmul.bf16.gmra.mxu0 %v959
          %v1033 = vpop.f32.mrf.mxu0
          %v1034 = vadd.f32 %v854, %v1033
          %v1035 = vpop.f32.mrf.mxu0
          %v1036 = vadd.f32 %v854, %v1035
          %1037 = vmatmul.bf16.gmra.mxu0 %v962
          %v1038 = vpop.f32.mrf.mxu0
          %v1039 = vadd.f32 %v854, %v1038
          %v1040 = vpop.f32.mrf.mxu0
          %v1041 = vadd.f32 %v854, %v1040
          %1042 = vmatmul.bf16.gmra.mxu0 %v965
          %v1043 = vpop.f32.mrf.mxu0
          %v1044 = vadd.f32 %v854, %v1043
          %v1045 = vpop.f32.mrf.mxu0
          %v1046 = vadd.f32 %v854, %v1045
          %1047 = vmatmul.bf16.gmra.mxu0 %v968
          %v1048 = vpop.f32.mrf.mxu0
          %v1049 = vadd.f32 %v854, %v1048
          %v1050 = vpop.f32.mrf.mxu0
          %v1051 = vadd.f32 %v854, %v1050
          %1052 = vmatmul.bf16.gmra.mxu0 %v971
          %v1053 = vpop.f32.mrf.mxu0
          %v1054 = vadd.f32 %v854, %v1053
          %v1055 = vpop.f32.mrf.mxu0
          %v1056 = vadd.f32 %v854, %v1055
          %1057 = vmatmul.bf16.gmra.mxu0 %v974
          %v1058 = vpop.f32.mrf.mxu0
          %v1059 = vadd.f32 %v854, %v1058
          %v1060 = vpop.f32.mrf.mxu0
          %v1061 = vadd.f32 %v854, %v1060
          %1062 = vmatmul.bf16.gmra.mxu0 %v977
          %v1063 = vpop.f32.mrf.mxu0
          %v1064 = vadd.f32 %v854, %v1063
          %v1065 = vpop.f32.mrf.mxu0
          %v1066 = vadd.f32 %v854, %v1065
          %1067 = vmatmul.bf16.gmra.mxu0 %v980
          %v1068 = vpop.f32.mrf.mxu0
          %v1069 = vadd.f32 %v854, %v1068
          %v1070 = vpop.f32.mrf.mxu0
          %v1071 = vadd.f32 %v854, %v1070
          %1072 = vmatmul.bf16.gmra.mxu0 %v983
          %v1073 = vpop.f32.mrf.mxu0
          %v1074 = vadd.f32 %v854, %v1073
          %v1075 = vpop.f32.mrf.mxu0
          %v1076 = vadd.f32 %v854, %v1075
          %1077 = vdwg.mxu0
          %vm1078 = vcmask 261120
          %1079 = vst.msk [vmem:[#allocation2] sm:$0xff] %vm1078, %v999
          %1080 = vst.msk [vmem:[#allocation2 + $0x8] sm:$0xff] %vm1078, %v1001
          %1081 = vst.msk [vmem:[#allocation2 + $0x10] sm:$0xff] %vm1078, %v1004
          %1082 = vst.msk [vmem:[#allocation2 + $0x18] sm:$0xff] %vm1078, %v1006
          %1083 = vst.msk [vmem:[#allocation2 + $0x20] sm:$0xff] %vm1078, %v1009
          %1084 = vst.msk [vmem:[#allocation2 + $0x28] sm:$0xff] %vm1078, %v1011
          %1085 = vst.msk [vmem:[#allocation2 + $0x30] sm:$0xff] %vm1078, %v1014
          %1086 = vst.msk [vmem:[#allocation2 + $0x38] sm:$0xff] %vm1078, %v1016
          %1087 = vst.msk [vmem:[#allocation2 + $0x40] sm:$0xff] %vm1078, %v1019
          %1088 = vst.msk [vmem:[#allocation2 + $0x48] sm:$0xff] %vm1078, %v1021
          %1089 = vst.msk [vmem:[#allocation2 + $0x50] sm:$0xff] %vm1078, %v1024
          %1090 = vst.msk [vmem:[#allocation2 + $0x58] sm:$0xff] %vm1078, %v1026
          %1091 = vst.msk [vmem:[#allocation2 + $0x60] sm:$0xff] %vm1078, %v1029
          %1092 = vst.msk [vmem:[#allocation2 + $0x68] sm:$0xff] %vm1078, %v1031
          %1093 = vst.msk [vmem:[#allocation2 + $0x70] sm:$0xff] %vm1078, %v1034
          %1094 = vst.msk [vmem:[#allocation2 + $0x78] sm:$0xff] %vm1078, %v1036
          %1095 = vst.msk [vmem:[#allocation2 + $0x80] sm:$0xff] %vm1078, %v1039
          %1096 = vst.msk [vmem:[#allocation2 + $0x88] sm:$0xff] %vm1078, %v1041
          %1097 = vst.msk [vmem:[#allocation2 + $0x90] sm:$0xff] %vm1078, %v1044
          %1098 = vst.msk [vmem:[#allocation2 + $0x98] sm:$0xff] %vm1078, %v1046
          %1099 = vst.msk [vmem:[#allocation2 + $0xa0] sm:$0xff] %vm1078, %v1049
          %1100 = vst.msk [vmem:[#allocation2 + $0xa8] sm:$0xff] %vm1078, %v1051
          %1101 = vst.msk [vmem:[#allocation2 + $0xb0] sm:$0xff] %vm1078, %v1054
          %1102 = vst.msk [vmem:[#allocation2 + $0xb8] sm:$0xff] %vm1078, %v1056
          %1103 = vst.msk [vmem:[#allocation2 + $0xc0] sm:$0xff] %vm1078, %v1059
          %1104 = vst.msk [vmem:[#allocation2 + $0xc8] sm:$0xff] %vm1078, %v1061
          %1105 = vst.msk [vmem:[#allocation2 + $0xd0] sm:$0xff] %vm1078, %v1064
          %1106 = vst.msk [vmem:[#allocation2 + $0xd8] sm:$0xff] %vm1078, %v1066
          %1107 = vst.msk [vmem:[#allocation2 + $0xe0] sm:$0xff] %vm1078, %v1069
          %1108 = vst.msk [vmem:[#allocation2 + $0xe8] sm:$0xff] %vm1078, %v1071
          %1109 = vst.msk [vmem:[#allocation2 + $0xf0] sm:$0xff] %vm1078, %v1074
          %1110 = vst.msk [vmem:[#allocation2 + $0xf8] sm:$0xff] %vm1078, %v1076
          %v1111 = vld [vmem:[%s3] sm:$0x1]
          %vm1112 = vcmask 253952
          %1113 = vst.msk [vmem:[#allocation3] sm:$0x1] %vm1112, %v1111
        $region92: #{transm_forward.1} parent=87 // pred_fallthru
          _
        %v1114 = vld [vmem:[#allocation2] sm:$0xff]
        %v1115 = vld [vmem:[#allocation2 + $0x8] sm:$0xff]
        %v1116 = vld [vmem:[#allocation2 + $0x10] sm:$0xff]
        %v1117 = vld [vmem:[#allocation2 + $0x18] sm:$0xff]
        %v1118 = vld [vmem:[#allocation2 + $0x20] sm:$0xff]
        %v1119 = vld [vmem:[#allocation2 + $0x28] sm:$0xff]
        %v1120 = vld [vmem:[#allocation2 + $0x30] sm:$0xff]
        %v1121 = vld [vmem:[#allocation2 + $0x38] sm:$0xff]
        %v1122 = vld [vmem:[#allocation2 + $0x40] sm:$0xff]
        %v1123 = vld [vmem:[#allocation2 + $0x48] sm:$0xff]
        %v1124 = vld [vmem:[#allocation2 + $0x50] sm:$0xff]
        %v1125 = vld [vmem:[#allocation2 + $0x58] sm:$0xff]
        %v1126 = vld [vmem:[#allocation2 + $0x60] sm:$0xff]
        %v1127 = vld [vmem:[#allocation2 + $0x68] sm:$0xff]
        %v1128 = vld [vmem:[#allocation2 + $0x70] sm:$0xff]
        %v1129 = vld [vmem:[#allocation2 + $0x78] sm:$0xff]
        %v1130 = vld [vmem:[#allocation2 + $0x80] sm:$0xff]
        %v1131 = vld [vmem:[#allocation2 + $0x88] sm:$0xff]
        %v1132 = vld [vmem:[#allocation2 + $0x90] sm:$0xff]
        %v1133 = vld [vmem:[#allocation2 + $0x98] sm:$0xff]
        %v1134 = vld [vmem:[#allocation2 + $0xa0] sm:$0xff]
        %v1135 = vld [vmem:[#allocation2 + $0xa8] sm:$0xff]
        %v1136 = vld [vmem:[#allocation2 + $0xb0] sm:$0xff]
        %v1137 = vld [vmem:[#allocation2 + $0xb8] sm:$0xff]
        %v1138 = vld [vmem:[#allocation2 + $0xc0] sm:$0xff]
        %v1139 = vld [vmem:[#allocation2 + $0xc8] sm:$0xff]
        %v1140 = vld [vmem:[#allocation2 + $0xd0] sm:$0xff]
        %v1141 = vld [vmem:[#allocation2 + $0xd8] sm:$0xff]
        %v1142 = vld [vmem:[#allocation2 + $0xe0] sm:$0xff]
        %v1143 = vld [vmem:[#allocation2 + $0xe8] sm:$0xff]
        %v1144 = vld [vmem:[#allocation2 + $0xf0] sm:$0xff]
        %v1145 = vld [vmem:[#allocation2 + $0xf8] sm:$0xff]
        %v1146 = vld [vmem:[#allocation3] sm:$0x1]
        %v1147 = vld [vmem:[%s765] sm:$0x1]
        %v1148 = vld [vmem:[%s768] sm:$0x1]
        %vm1149 = vcmask 261120
        %v1150 = vsel %vm1149, %v1114, 0.0
        %1151 = vadd.xlane.f32.xlu0 %v1150
        %v1152 = vpop.xlane.xlu0 %1151
        %v1153 = vsel %vm1149, %v1115, 0.0
        %1154 = vadd.xlane.f32.xlu0 %v1153
        %v1155 = vpop.xlane.xlu0 %1154
        %v1156 = vsel %vm1149, %v1116, 0.0
        %1157 = vadd.xlane.f32.xlu0 %v1156
        %v1158 = vpop.xlane.xlu0 %1157
        %v1159 = vsel %vm1149, %v1117, 0.0
        %1160 = vadd.xlane.f32.xlu0 %v1159
        %v1161 = vpop.xlane.xlu0 %1160
        %v1162 = vsel %vm1149, %v1118, 0.0
        %1163 = vadd.xlane.f32.xlu0 %v1162
        %v1164 = vpop.xlane.xlu0 %1163
        %v1165 = vsel %vm1149, %v1119, 0.0
        %1166 = vadd.xlane.f32.xlu0 %v1165
        %v1167 = vpop.xlane.xlu0 %1166
        %v1168 = vsel %vm1149, %v1120, 0.0
        %1169 = vadd.xlane.f32.xlu0 %v1168
        %v1170 = vpop.xlane.xlu0 %1169
        %v1171 = vsel %vm1149, %v1121, 0.0
        %1172 = vadd.xlane.f32.xlu0 %v1171
        %v1173 = vpop.xlane.xlu0 %1172
        %v1174 = vsel %vm1149, %v1122, 0.0
        %1175 = vadd.xlane.f32.xlu0 %v1174
        %v1176 = vpop.xlane.xlu0 %1175
        %v1177 = vsel %vm1149, %v1123, 0.0
        %1178 = vadd.xlane.f32.xlu0 %v1177
        %v1179 = vpop.xlane.xlu0 %1178
        %v1180 = vsel %vm1149, %v1124, 0.0
        %1181 = vadd.xlane.f32.xlu0 %v1180
        %v1182 = vpop.xlane.xlu0 %1181
        %v1183 = vsel %vm1149, %v1125, 0.0
        %1184 = vadd.xlane.f32.xlu0 %v1183
        %v1185 = vpop.xlane.xlu0 %1184
        %v1186 = vsel %vm1149, %v1126, 0.0
        %1187 = vadd.xlane.f32.xlu0 %v1186
        %v1188 = vpop.xlane.xlu0 %1187
        %v1189 = vsel %vm1149, %v1127, 0.0
        %1190 = vadd.xlane.f32.xlu0 %v1189
        %v1191 = vpop.xlane.xlu0 %1190
        %v1192 = vsel %vm1149, %v1128, 0.0
        %1193 = vadd.xlane.f32.xlu0 %v1192
        %v1194 = vpop.xlane.xlu0 %1193
        %v1195 = vsel %vm1149, %v1129, 0.0
        %1196 = vadd.xlane.f32.xlu0 %v1195
        %v1197 = vpop.xlane.xlu0 %1196
        %v1198 = vsel %vm1149, %v1130, 0.0
        %1199 = vadd.xlane.f32.xlu0 %v1198
        %v1200 = vpop.xlane.xlu0 %1199
        %v1201 = vsel %vm1149, %v1131, 0.0
        %1202 = vadd.xlane.f32.xlu0 %v1201
        %v1203 = vpop.xlane.xlu0 %1202
        %v1204 = vsel %vm1149, %v1132, 0.0
        %1205 = vadd.xlane.f32.xlu0 %v1204
        %v1206 = vpop.xlane.xlu0 %1205
        %v1207 = vsel %vm1149, %v1133, 0.0
        %1208 = vadd.xlane.f32.xlu0 %v1207
        %v1209 = vpop.xlane.xlu0 %1208
        %v1210 = vsel %vm1149, %v1134, 0.0
        %1211 = vadd.xlane.f32.xlu0 %v1210
        %v1212 = vpop.xlane.xlu0 %1211
        %v1213 = vsel %vm1149, %v1135, 0.0
        %1214 = vadd.xlane.f32.xlu0 %v1213
        %v1215 = vpop.xlane.xlu0 %1214
        %v1216 = vsel %vm1149, %v1136, 0.0
        %1217 = vadd.xlane.f32.xlu0 %v1216
        %v1218 = vpop.xlane.xlu0 %1217
        %v1219 = vsel %vm1149, %v1137, 0.0
        %1220 = vadd.xlane.f32.xlu0 %v1219
        %v1221 = vpop.xlane.xlu0 %1220
        %v1222 = vsel %vm1149, %v1138, 0.0
        %1223 = vadd.xlane.f32.xlu0 %v1222
        %v1224 = vpop.xlane.xlu0 %1223
        %v1225 = vsel %vm1149, %v1139, 0.0
        %1226 = vadd.xlane.f32.xlu0 %v1225
        %v1227 = vpop.xlane.xlu0 %1226
        %v1228 = vsel %vm1149, %v1140, 0.0
        %1229 = vadd.xlane.f32.xlu0 %v1228
        %v1230 = vpop.xlane.xlu0 %1229
        %v1231 = vsel %vm1149, %v1141, 0.0
        %1232 = vadd.xlane.f32.xlu0 %v1231
        %v1233 = vpop.xlane.xlu0 %1232
        %v1234 = vsel %vm1149, %v1142, 0.0
        %1235 = vadd.xlane.f32.xlu0 %v1234
        %v1236 = vpop.xlane.xlu0 %1235
        %v1237 = vsel %vm1149, %v1143, 0.0
        %1238 = vadd.xlane.f32.xlu0 %v1237
        %v1239 = vpop.xlane.xlu0 %1238
        %v1240 = vsel %vm1149, %v1144, 0.0
        %1241 = vadd.xlane.f32.xlu0 %v1240
        %v1242 = vpop.xlane.xlu0 %1241
        %v1243 = vsel %vm1149, %v1145, 0.0
        %1244 = vadd.xlane.f32.xlu0 %v1243
        %v1245 = vpop.xlane.xlu0 %1244
        %v1246 = vrcp.pop 32.0
        %v1247 = vmul.f32 32.0, %v1246
        %v1248 = vsub.f32 1.0, %v1247
        %v1249 = vmul.f32 %v1246, %v1248
        %v1250 = vadd.f32 %v1246, %v1249
        %vm1251 = vweird.f32 %v1246
        %v1252 = vsel %vm1251, %v1246, %v1250
        %v1253 = vmul.f32 %v1152, %v1252
        %v1254 = vmul.f32 %v1155, %v1252
        %v1255 = vmul.f32 %v1158, %v1252
        %v1256 = vmul.f32 %v1161, %v1252
        %v1257 = vmul.f32 %v1164, %v1252
        %v1258 = vmul.f32 %v1167, %v1252
        %v1259 = vmul.f32 %v1170, %v1252
        %v1260 = vmul.f32 %v1173, %v1252
        %v1261 = vmul.f32 %v1176, %v1252
        %v1262 = vmul.f32 %v1179, %v1252
        %v1263 = vmul.f32 %v1182, %v1252
        %v1264 = vmul.f32 %v1185, %v1252
        %v1265 = vmul.f32 %v1188, %v1252
        %v1266 = vmul.f32 %v1191, %v1252
        %v1267 = vmul.f32 %v1194, %v1252
        %v1268 = vmul.f32 %v1197, %v1252
        %v1269 = vmul.f32 %v1200, %v1252
        %v1270 = vmul.f32 %v1203, %v1252
        %v1271 = vmul.f32 %v1206, %v1252
        %v1272 = vmul.f32 %v1209, %v1252
        %v1273 = vmul.f32 %v1212, %v1252
        %v1274 = vmul.f32 %v1215, %v1252
        %v1275 = vmul.f32 %v1218, %v1252
        %v1276 = vmul.f32 %v1221, %v1252
        %v1277 = vmul.f32 %v1224, %v1252
        %v1278 = vmul.f32 %v1227, %v1252
        %v1279 = vmul.f32 %v1230, %v1252
        %v1280 = vmul.f32 %v1233, %v1252
        %v1281 = vmul.f32 %v1236, %v1252
        %v1282 = vmul.f32 %v1239, %v1252
        %v1283 = vmul.f32 %v1242, %v1252
        %v1284 = vmul.f32 %v1245, %v1252
        %v1285 = vsub.f32 %v1114, %v1253
        %v1286 = vsub.f32 %v1115, %v1254
        %v1287 = vsub.f32 %v1116, %v1255
        %v1288 = vsub.f32 %v1117, %v1256
        %v1289 = vsub.f32 %v1118, %v1257
        %v1290 = vsub.f32 %v1119, %v1258
        %v1291 = vsub.f32 %v1120, %v1259
        %v1292 = vsub.f32 %v1121, %v1260
        %v1293 = vsub.f32 %v1122, %v1261
        %v1294 = vsub.f32 %v1123, %v1262
        %v1295 = vsub.f32 %v1124, %v1263
        %v1296 = vsub.f32 %v1125, %v1264
        %v1297 = vsub.f32 %v1126, %v1265
        %v1298 = vsub.f32 %v1127, %v1266
        %v1299 = vsub.f32 %v1128, %v1267
        %v1300 = vsub.f32 %v1129, %v1268
        %v1301 = vsub.f32 %v1130, %v1269
        %v1302 = vsub.f32 %v1131, %v1270
        %v1303 = vsub.f32 %v1132, %v1271
        %v1304 = vsub.f32 %v1133, %v1272
        %v1305 = vsub.f32 %v1134, %v1273
        %v1306 = vsub.f32 %v1135, %v1274
        %v1307 = vsub.f32 %v1136, %v1275
        %v1308 = vsub.f32 %v1137, %v1276
        %v1309 = vsub.f32 %v1138, %v1277
        %v1310 = vsub.f32 %v1139, %v1278
        %v1311 = vsub.f32 %v1140, %v1279
        %v1312 = vsub.f32 %v1141, %v1280
        %v1313 = vsub.f32 %v1142, %v1281
        %v1314 = vsub.f32 %v1143, %v1282
        %v1315 = vsub.f32 %v1144, %v1283
        %v1316 = vsub.f32 %v1145, %v1284
        %v1317 = vmul.f32 %v1285, %v1285
        %v1318 = vmul.f32 %v1286, %v1286
        %v1319 = vmul.f32 %v1287, %v1287
        %v1320 = vmul.f32 %v1288, %v1288
        %v1321 = vmul.f32 %v1289, %v1289
        %v1322 = vmul.f32 %v1290, %v1290
        %v1323 = vmul.f32 %v1291, %v1291
        %v1324 = vmul.f32 %v1292, %v1292
        %v1325 = vmul.f32 %v1293, %v1293
        %v1326 = vmul.f32 %v1294, %v1294
        %v1327 = vmul.f32 %v1295, %v1295
        %v1328 = vmul.f32 %v1296, %v1296
        %v1329 = vmul.f32 %v1297, %v1297
        %v1330 = vmul.f32 %v1298, %v1298
        %v1331 = vmul.f32 %v1299, %v1299
        %v1332 = vmul.f32 %v1300, %v1300
        %v1333 = vmul.f32 %v1301, %v1301
        %v1334 = vmul.f32 %v1302, %v1302
        %v1335 = vmul.f32 %v1303, %v1303
        %v1336 = vmul.f32 %v1304, %v1304
        %v1337 = vmul.f32 %v1305, %v1305
        %v1338 = vmul.f32 %v1306, %v1306
        %v1339 = vmul.f32 %v1307, %v1307
        %v1340 = vmul.f32 %v1308, %v1308
        %v1341 = vmul.f32 %v1309, %v1309
        %v1342 = vmul.f32 %v1310, %v1310
        %v1343 = vmul.f32 %v1311, %v1311
        %v1344 = vmul.f32 %v1312, %v1312
        %v1345 = vmul.f32 %v1313, %v1313
        %v1346 = vmul.f32 %v1314, %v1314
        %v1347 = vmul.f32 %v1315, %v1315
        %v1348 = vmul.f32 %v1316, %v1316
        %v1349 = vsel %vm1149, %v1317, 0.0
        %1350 = vadd.xlane.f32.xlu0 %v1349
        %v1351 = vpop.xlane.xlu0 %1350
        %v1352 = vsel %vm1149, %v1318, 0.0
        %1353 = vadd.xlane.f32.xlu0 %v1352
        %v1354 = vpop.xlane.xlu0 %1353
        %v1355 = vsel %vm1149, %v1319, 0.0
        %1356 = vadd.xlane.f32.xlu0 %v1355
        %v1357 = vpop.xlane.xlu0 %1356
        %v1358 = vsel %vm1149, %v1320, 0.0
        %1359 = vadd.xlane.f32.xlu0 %v1358
        %v1360 = vpop.xlane.xlu0 %1359
        %v1361 = vsel %vm1149, %v1321, 0.0
        %1362 = vadd.xlane.f32.xlu0 %v1361
        %v1363 = vpop.xlane.xlu0 %1362
        %v1364 = vsel %vm1149, %v1322, 0.0
        %1365 = vadd.xlane.f32.xlu0 %v1364
        %v1366 = vpop.xlane.xlu0 %1365
        %v1367 = vsel %vm1149, %v1323, 0.0
        %1368 = vadd.xlane.f32.xlu0 %v1367
        %v1369 = vpop.xlane.xlu0 %1368
        %v1370 = vsel %vm1149, %v1324, 0.0
        %1371 = vadd.xlane.f32.xlu0 %v1370
        %v1372 = vpop.xlane.xlu0 %1371
        %v1373 = vsel %vm1149, %v1325, 0.0
        %1374 = vadd.xlane.f32.xlu0 %v1373
        %v1375 = vpop.xlane.xlu0 %1374
        %v1376 = vsel %vm1149, %v1326, 0.0
        %1377 = vadd.xlane.f32.xlu0 %v1376
        %v1378 = vpop.xlane.xlu0 %1377
        %v1379 = vsel %vm1149, %v1327, 0.0
        %1380 = vadd.xlane.f32.xlu0 %v1379
        %v1381 = vpop.xlane.xlu0 %1380
        %v1382 = vsel %vm1149, %v1328, 0.0
        %1383 = vadd.xlane.f32.xlu0 %v1382
        %v1384 = vpop.xlane.xlu0 %1383
        %v1385 = vsel %vm1149, %v1329, 0.0
        %1386 = vadd.xlane.f32.xlu0 %v1385
        %v1387 = vpop.xlane.xlu0 %1386
        %v1388 = vsel %vm1149, %v1330, 0.0
        %1389 = vadd.xlane.f32.xlu0 %v1388
        %v1390 = vpop.xlane.xlu0 %1389
        %v1391 = vsel %vm1149, %v1331, 0.0
        %1392 = vadd.xlane.f32.xlu0 %v1391
        %v1393 = vpop.xlane.xlu0 %1392
        %v1394 = vsel %vm1149, %v1332, 0.0
        %1395 = vadd.xlane.f32.xlu0 %v1394
        %v1396 = vpop.xlane.xlu0 %1395
        %v1397 = vsel %vm1149, %v1333, 0.0
        %1398 = vadd.xlane.f32.xlu0 %v1397
        %v1399 = vpop.xlane.xlu0 %1398
        %v1400 = vsel %vm1149, %v1334, 0.0
        %1401 = vadd.xlane.f32.xlu0 %v1400
        %v1402 = vpop.xlane.xlu0 %1401
        %v1403 = vsel %vm1149, %v1335, 0.0
        %1404 = vadd.xlane.f32.xlu0 %v1403
        %v1405 = vpop.xlane.xlu0 %1404
        %v1406 = vsel %vm1149, %v1336, 0.0
        %1407 = vadd.xlane.f32.xlu0 %v1406
        %v1408 = vpop.xlane.xlu0 %1407
        %v1409 = vsel %vm1149, %v1337, 0.0
        %1410 = vadd.xlane.f32.xlu0 %v1409
        %v1411 = vpop.xlane.xlu0 %1410
        %v1412 = vsel %vm1149, %v1338, 0.0
        %1413 = vadd.xlane.f32.xlu0 %v1412
        %v1414 = vpop.xlane.xlu0 %1413
        %v1415 = vsel %vm1149, %v1339, 0.0
        %1416 = vadd.xlane.f32.xlu0 %v1415
        %v1417 = vpop.xlane.xlu0 %1416
        %v1418 = vsel %vm1149, %v1340, 0.0
        %1419 = vadd.xlane.f32.xlu0 %v1418
        %v1420 = vpop.xlane.xlu0 %1419
        %v1421 = vsel %vm1149, %v1341, 0.0
        %1422 = vadd.xlane.f32.xlu0 %v1421
        %v1423 = vpop.xlane.xlu0 %1422
        %v1424 = vsel %vm1149, %v1342, 0.0
        %1425 = vadd.xlane.f32.xlu0 %v1424
        %v1426 = vpop.xlane.xlu0 %1425
        %v1427 = vsel %vm1149, %v1343, 0.0
        %1428 = vadd.xlane.f32.xlu0 %v1427
        %v1429 = vpop.xlane.xlu0 %1428
        %v1430 = vsel %vm1149, %v1344, 0.0
        %1431 = vadd.xlane.f32.xlu0 %v1430
        %v1432 = vpop.xlane.xlu0 %1431
        %v1433 = vsel %vm1149, %v1345, 0.0
        %1434 = vadd.xlane.f32.xlu0 %v1433
        %v1435 = vpop.xlane.xlu0 %1434
        %v1436 = vsel %vm1149, %v1346, 0.0
        %1437 = vadd.xlane.f32.xlu0 %v1436
        %v1438 = vpop.xlane.xlu0 %1437
        %v1439 = vsel %vm1149, %v1347, 0.0
        %1440 = vadd.xlane.f32.xlu0 %v1439
        %v1441 = vpop.xlane.xlu0 %1440
        %v1442 = vsel %vm1149, %v1348, 0.0
        %1443 = vadd.xlane.f32.xlu0 %v1442
        %v1444 = vpop.xlane.xlu0 %1443
        %v1445 = vmul.f32 %v1351, %v1252
        %v1446 = vmul.f32 %v1354, %v1252
        %v1447 = vmul.f32 %v1357, %v1252
        %v1448 = vmul.f32 %v1360, %v1252
        %v1449 = vmul.f32 %v1363, %v1252
        %v1450 = vmul.f32 %v1366, %v1252
        %v1451 = vmul.f32 %v1369, %v1252
        %v1452 = vmul.f32 %v1372, %v1252
        %v1453 = vmul.f32 %v1375, %v1252
        %v1454 = vmul.f32 %v1378, %v1252
        %v1455 = vmul.f32 %v1381, %v1252
        %v1456 = vmul.f32 %v1384, %v1252
        %v1457 = vmul.f32 %v1387, %v1252
        %v1458 = vmul.f32 %v1390, %v1252
        %v1459 = vmul.f32 %v1393, %v1252
        %v1460 = vmul.f32 %v1396, %v1252
        %v1461 = vmul.f32 %v1399, %v1252
        %v1462 = vmul.f32 %v1402, %v1252
        %v1463 = vmul.f32 %v1405, %v1252
        %v1464 = vmul.f32 %v1408, %v1252
        %v1465 = vmul.f32 %v1411, %v1252
        %v1466 = vmul.f32 %v1414, %v1252
        %v1467 = vmul.f32 %v1417, %v1252
        %v1468 = vmul.f32 %v1420, %v1252
        %v1469 = vmul.f32 %v1423, %v1252
        %v1470 = vmul.f32 %v1426, %v1252
        %v1471 = vmul.f32 %v1429, %v1252
        %v1472 = vmul.f32 %v1432, %v1252
        %v1473 = vmul.f32 %v1435, %v1252
        %v1474 = vmul.f32 %v1438, %v1252
        %v1475 = vmul.f32 %v1441, %v1252
        %v1476 = vmul.f32 %v1444, %v1252
        %v1477 = vadd.f32 %v1445, 1e-05
        %v1478 = vadd.f32 %v1446, 1e-05
        %v1479 = vadd.f32 %v1447, 1e-05
        %v1480 = vadd.f32 %v1448, 1e-05
        %v1481 = vadd.f32 %v1449, 1e-05
        %v1482 = vadd.f32 %v1450, 1e-05
        %v1483 = vadd.f32 %v1451, 1e-05
        %v1484 = vadd.f32 %v1452, 1e-05
        %v1485 = vadd.f32 %v1453, 1e-05
        %v1486 = vadd.f32 %v1454, 1e-05
        %v1487 = vadd.f32 %v1455, 1e-05
        %v1488 = vadd.f32 %v1456, 1e-05
        %v1489 = vadd.f32 %v1457, 1e-05
        %v1490 = vadd.f32 %v1458, 1e-05
        %v1491 = vadd.f32 %v1459, 1e-05
        %v1492 = vadd.f32 %v1460, 1e-05
        %v1493 = vadd.f32 %v1461, 1e-05
        %v1494 = vadd.f32 %v1462, 1e-05
        %v1495 = vadd.f32 %v1463, 1e-05
        %v1496 = vadd.f32 %v1464, 1e-05
        %v1497 = vadd.f32 %v1465, 1e-05
        %v1498 = vadd.f32 %v1466, 1e-05
        %v1499 = vadd.f32 %v1467, 1e-05
        %v1500 = vadd.f32 %v1468, 1e-05
        %v1501 = vadd.f32 %v1469, 1e-05
        %v1502 = vadd.f32 %v1470, 1e-05
        %v1503 = vadd.f32 %v1471, 1e-05
        %v1504 = vadd.f32 %v1472, 1e-05
        %v1505 = vadd.f32 %v1473, 1e-05
        %v1506 = vadd.f32 %v1474, 1e-05
        %v1507 = vadd.f32 %v1475, 1e-05
        %v1508 = vadd.f32 %v1476, 1e-05
        %v1509 = vrsqrt.pop %v1477
        %v1510 = vmul.f32 %v1509, %v1477
        %v1511 = vmul.f32 %v1510, %v1509
        %v1512 = vmul.f32 0.5, %v1511
        %v1513 = vsub.f32 1.5, %v1512
        %v1514 = vmul.f32 %v1509, %v1513
        %vm1515 = vweird.f32 %v1477
        %vm1516 = vweird.f32 %v1509
        %vm1517 = vmor %vm1515, %vm1516
        %v1518 = vsel %vm1517, %v1509, %v1514
        %v1519 = vrsqrt.pop %v1478
        %v1520 = vmul.f32 %v1519, %v1478
        %v1521 = vmul.f32 %v1520, %v1519
        %v1522 = vmul.f32 0.5, %v1521
        %v1523 = vsub.f32 1.5, %v1522
        %v1524 = vmul.f32 %v1519, %v1523
        %vm1525 = vweird.f32 %v1478
        %vm1526 = vweird.f32 %v1519
        %vm1527 = vmor %vm1525, %vm1526
        %v1528 = vsel %vm1527, %v1519, %v1524
        %v1529 = vrsqrt.pop %v1479
        %v1530 = vmul.f32 %v1529, %v1479
        %v1531 = vmul.f32 %v1530, %v1529
        %v1532 = vmul.f32 0.5, %v1531
        %v1533 = vsub.f32 1.5, %v1532
        %v1534 = vmul.f32 %v1529, %v1533
        %vm1535 = vweird.f32 %v1479
        %vm1536 = vweird.f32 %v1529
        %vm1537 = vmor %vm1535, %vm1536
        %v1538 = vsel %vm1537, %v1529, %v1534
        %v1539 = vrsqrt.pop %v1480
        %v1540 = vmul.f32 %v1539, %v1480
        %v1541 = vmul.f32 %v1540, %v1539
        %v1542 = vmul.f32 0.5, %v1541
        %v1543 = vsub.f32 1.5, %v1542
        %v1544 = vmul.f32 %v1539, %v1543
        %vm1545 = vweird.f32 %v1480
        %vm1546 = vweird.f32 %v1539
        %vm1547 = vmor %vm1545, %vm1546
        %v1548 = vsel %vm1547, %v1539, %v1544
        %v1549 = vrsqrt.pop %v1481
        %v1550 = vmul.f32 %v1549, %v1481
        %v1551 = vmul.f32 %v1550, %v1549
        %v1552 = vmul.f32 0.5, %v1551
        %v1553 = vsub.f32 1.5, %v1552
        %v1554 = vmul.f32 %v1549, %v1553
        %vm1555 = vweird.f32 %v1481
        %vm1556 = vweird.f32 %v1549
        %vm1557 = vmor %vm1555, %vm1556
        %v1558 = vsel %vm1557, %v1549, %v1554
        %v1559 = vrsqrt.pop %v1482
        %v1560 = vmul.f32 %v1559, %v1482
        %v1561 = vmul.f32 %v1560, %v1559
        %v1562 = vmul.f32 0.5, %v1561
        %v1563 = vsub.f32 1.5, %v1562
        %v1564 = vmul.f32 %v1559, %v1563
        %vm1565 = vweird.f32 %v1482
        %vm1566 = vweird.f32 %v1559
        %vm1567 = vmor %vm1565, %vm1566
        %v1568 = vsel %vm1567, %v1559, %v1564
        %v1569 = vrsqrt.pop %v1483
        %v1570 = vmul.f32 %v1569, %v1483
        %v1571 = vmul.f32 %v1570, %v1569
        %v1572 = vmul.f32 0.5, %v1571
        %v1573 = vsub.f32 1.5, %v1572
        %v1574 = vmul.f32 %v1569, %v1573
        %vm1575 = vweird.f32 %v1483
        %vm1576 = vweird.f32 %v1569
        %vm1577 = vmor %vm1575, %vm1576
        %v1578 = vsel %vm1577, %v1569, %v1574
        %v1579 = vrsqrt.pop %v1484
        %v1580 = vmul.f32 %v1579, %v1484
        %v1581 = vmul.f32 %v1580, %v1579
        %v1582 = vmul.f32 0.5, %v1581
        %v1583 = vsub.f32 1.5, %v1582
        %v1584 = vmul.f32 %v1579, %v1583
        %vm1585 = vweird.f32 %v1484
        %vm1586 = vweird.f32 %v1579
        %vm1587 = vmor %vm1585, %vm1586
        %v1588 = vsel %vm1587, %v1579, %v1584
        %v1589 = vrsqrt.pop %v1485
        %v1590 = vmul.f32 %v1589, %v1485
        %v1591 = vmul.f32 %v1590, %v1589
        %v1592 = vmul.f32 0.5, %v1591
        %v1593 = vsub.f32 1.5, %v1592
        %v1594 = vmul.f32 %v1589, %v1593
        %vm1595 = vweird.f32 %v1485
        %vm1596 = vweird.f32 %v1589
        %vm1597 = vmor %vm1595, %vm1596
        %v1598 = vsel %vm1597, %v1589, %v1594
        %v1599 = vrsqrt.pop %v1486
        %v1600 = vmul.f32 %v1599, %v1486
        %v1601 = vmul.f32 %v1600, %v1599
        %v1602 = vmul.f32 0.5, %v1601
        %v1603 = vsub.f32 1.5, %v1602
        %v1604 = vmul.f32 %v1599, %v1603
        %vm1605 = vweird.f32 %v1486
        %vm1606 = vweird.f32 %v1599
        %vm1607 = vmor %vm1605, %vm1606
        %v1608 = vsel %vm1607, %v1599, %v1604
        %v1609 = vrsqrt.pop %v1487
        %v1610 = vmul.f32 %v1609, %v1487
        %v1611 = vmul.f32 %v1610, %v1609
        %v1612 = vmul.f32 0.5, %v1611
        %v1613 = vsub.f32 1.5, %v1612
        %v1614 = vmul.f32 %v1609, %v1613
        %vm1615 = vweird.f32 %v1487
        %vm1616 = vweird.f32 %v1609
        %vm1617 = vmor %vm1615, %vm1616
        %v1618 = vsel %vm1617, %v1609, %v1614
        %v1619 = vrsqrt.pop %v1488
        %v1620 = vmul.f32 %v1619, %v1488
        %v1621 = vmul.f32 %v1620, %v1619
        %v1622 = vmul.f32 0.5, %v1621
        %v1623 = vsub.f32 1.5, %v1622
        %v1624 = vmul.f32 %v1619, %v1623
        %vm1625 = vweird.f32 %v1488
        %vm1626 = vweird.f32 %v1619
        %vm1627 = vmor %vm1625, %vm1626
        %v1628 = vsel %vm1627, %v1619, %v1624
        %v1629 = vrsqrt.pop %v1489
        %v1630 = vmul.f32 %v1629, %v1489
        %v1631 = vmul.f32 %v1630, %v1629
        %v1632 = vmul.f32 0.5, %v1631
        %v1633 = vsub.f32 1.5, %v1632
        %v1634 = vmul.f32 %v1629, %v1633
        %vm1635 = vweird.f32 %v1489
        %vm1636 = vweird.f32 %v1629
        %vm1637 = vmor %vm1635, %vm1636
        %v1638 = vsel %vm1637, %v1629, %v1634
        %v1639 = vrsqrt.pop %v1490
        %v1640 = vmul.f32 %v1639, %v1490
        %v1641 = vmul.f32 %v1640, %v1639
        %v1642 = vmul.f32 0.5, %v1641
        %v1643 = vsub.f32 1.5, %v1642
        %v1644 = vmul.f32 %v1639, %v1643
        %vm1645 = vweird.f32 %v1490
        %vm1646 = vweird.f32 %v1639
        %vm1647 = vmor %vm1645, %vm1646
        %v1648 = vsel %vm1647, %v1639, %v1644
        %v1649 = vrsqrt.pop %v1491
        %v1650 = vmul.f32 %v1649, %v1491
        %v1651 = vmul.f32 %v1650, %v1649
        %v1652 = vmul.f32 0.5, %v1651
        %v1653 = vsub.f32 1.5, %v1652
        %v1654 = vmul.f32 %v1649, %v1653
        %vm1655 = vweird.f32 %v1491
        %vm1656 = vweird.f32 %v1649
        %vm1657 = vmor %vm1655, %vm1656
        %v1658 = vsel %vm1657, %v1649, %v1654
        %v1659 = vrsqrt.pop %v1492
        %v1660 = vmul.f32 %v1659, %v1492
        %v1661 = vmul.f32 %v1660, %v1659
        %v1662 = vmul.f32 0.5, %v1661
        %v1663 = vsub.f32 1.5, %v1662
        %v1664 = vmul.f32 %v1659, %v1663
        %vm1665 = vweird.f32 %v1492
        %vm1666 = vweird.f32 %v1659
        %vm1667 = vmor %vm1665, %vm1666
        %v1668 = vsel %vm1667, %v1659, %v1664
        %v1669 = vrsqrt.pop %v1493
        %v1670 = vmul.f32 %v1669, %v1493
        %v1671 = vmul.f32 %v1670, %v1669
        %v1672 = vmul.f32 0.5, %v1671
        %v1673 = vsub.f32 1.5, %v1672
        %v1674 = vmul.f32 %v1669, %v1673
        %vm1675 = vweird.f32 %v1493
        %vm1676 = vweird.f32 %v1669
        %vm1677 = vmor %vm1675, %vm1676
        %v1678 = vsel %vm1677, %v1669, %v1674
        %v1679 = vrsqrt.pop %v1494
        %v1680 = vmul.f32 %v1679, %v1494
        %v1681 = vmul.f32 %v1680, %v1679
        %v1682 = vmul.f32 0.5, %v1681
        %v1683 = vsub.f32 1.5, %v1682
        %v1684 = vmul.f32 %v1679, %v1683
        %vm1685 = vweird.f32 %v1494
        %vm1686 = vweird.f32 %v1679
        %vm1687 = vmor %vm1685, %vm1686
        %v1688 = vsel %vm1687, %v1679, %v1684
        %v1689 = vrsqrt.pop %v1495
        %v1690 = vmul.f32 %v1689, %v1495
        %v1691 = vmul.f32 %v1690, %v1689
        %v1692 = vmul.f32 0.5, %v1691
        %v1693 = vsub.f32 1.5, %v1692
        %v1694 = vmul.f32 %v1689, %v1693
        %vm1695 = vweird.f32 %v1495
        %vm1696 = vweird.f32 %v1689
        %vm1697 = vmor %vm1695, %vm1696
        %v1698 = vsel %vm1697, %v1689, %v1694
        %v1699 = vrsqrt.pop %v1496
        %v1700 = vmul.f32 %v1699, %v1496
        %v1701 = vmul.f32 %v1700, %v1699
        %v1702 = vmul.f32 0.5, %v1701
        %v1703 = vsub.f32 1.5, %v1702
        %v1704 = vmul.f32 %v1699, %v1703
        %vm1705 = vweird.f32 %v1496
        %vm1706 = vweird.f32 %v1699
        %vm1707 = vmor %vm1705, %vm1706
        %v1708 = vsel %vm1707, %v1699, %v1704
        %v1709 = vrsqrt.pop %v1497
        %v1710 = vmul.f32 %v1709, %v1497
        %v1711 = vmul.f32 %v1710, %v1709
        %v1712 = vmul.f32 0.5, %v1711
        %v1713 = vsub.f32 1.5, %v1712
        %v1714 = vmul.f32 %v1709, %v1713
        %vm1715 = vweird.f32 %v1497
        %vm1716 = vweird.f32 %v1709
        %vm1717 = vmor %vm1715, %vm1716
        %v1718 = vsel %vm1717, %v1709, %v1714
        %v1719 = vrsqrt.pop %v1498
        %v1720 = vmul.f32 %v1719, %v1498
        %v1721 = vmul.f32 %v1720, %v1719
        %v1722 = vmul.f32 0.5, %v1721
        %v1723 = vsub.f32 1.5, %v1722
        %v1724 = vmul.f32 %v1719, %v1723
        %vm1725 = vweird.f32 %v1498
        %vm1726 = vweird.f32 %v1719
        %vm1727 = vmor %vm1725, %vm1726
        %v1728 = vsel %vm1727, %v1719, %v1724
        %v1729 = vrsqrt.pop %v1499
        %v1730 = vmul.f32 %v1729, %v1499
        %v1731 = vmul.f32 %v1730, %v1729
        %v1732 = vmul.f32 0.5, %v1731
        %v1733 = vsub.f32 1.5, %v1732
        %v1734 = vmul.f32 %v1729, %v1733
        %vm1735 = vweird.f32 %v1499
        %vm1736 = vweird.f32 %v1729
        %vm1737 = vmor %vm1735, %vm1736
        %v1738 = vsel %vm1737, %v1729, %v1734
        %v1739 = vrsqrt.pop %v1500
        %v1740 = vmul.f32 %v1739, %v1500
        %v1741 = vmul.f32 %v1740, %v1739
        %v1742 = vmul.f32 0.5, %v1741
        %v1743 = vsub.f32 1.5, %v1742
        %v1744 = vmul.f32 %v1739, %v1743
        %vm1745 = vweird.f32 %v1500
        %vm1746 = vweird.f32 %v1739
        %vm1747 = vmor %vm1745, %vm1746
        %v1748 = vsel %vm1747, %v1739, %v1744
        %v1749 = vrsqrt.pop %v1501
        %v1750 = vmul.f32 %v1749, %v1501
        %v1751 = vmul.f32 %v1750, %v1749
        %v1752 = vmul.f32 0.5, %v1751
        %v1753 = vsub.f32 1.5, %v1752
        %v1754 = vmul.f32 %v1749, %v1753
        %vm1755 = vweird.f32 %v1501
        %vm1756 = vweird.f32 %v1749
        %vm1757 = vmor %vm1755, %vm1756
        %v1758 = vsel %vm1757, %v1749, %v1754
        %v1759 = vrsqrt.pop %v1502
        %v1760 = vmul.f32 %v1759, %v1502
        %v1761 = vmul.f32 %v1760, %v1759
        %v1762 = vmul.f32 0.5, %v1761
        %v1763 = vsub.f32 1.5, %v1762
        %v1764 = vmul.f32 %v1759, %v1763
        %vm1765 = vweird.f32 %v1502
        %vm1766 = vweird.f32 %v1759
        %vm1767 = vmor %vm1765, %vm1766
        %v1768 = vsel %vm1767, %v1759, %v1764
        %v1769 = vrsqrt.pop %v1503
        %v1770 = vmul.f32 %v1769, %v1503
        %v1771 = vmul.f32 %v1770, %v1769
        %v1772 = vmul.f32 0.5, %v1771
        %v1773 = vsub.f32 1.5, %v1772
        %v1774 = vmul.f32 %v1769, %v1773
        %vm1775 = vweird.f32 %v1503
        %vm1776 = vweird.f32 %v1769
        %vm1777 = vmor %vm1775, %vm1776
        %v1778 = vsel %vm1777, %v1769, %v1774
        %v1779 = vrsqrt.pop %v1504
        %v1780 = vmul.f32 %v1779, %v1504
        %v1781 = vmul.f32 %v1780, %v1779
        %v1782 = vmul.f32 0.5, %v1781
        %v1783 = vsub.f32 1.5, %v1782
        %v1784 = vmul.f32 %v1779, %v1783
        %vm1785 = vweird.f32 %v1504
        %vm1786 = vweird.f32 %v1779
        %vm1787 = vmor %vm1785, %vm1786
        %v1788 = vsel %vm1787, %v1779, %v1784
        %v1789 = vrsqrt.pop %v1505
        %v1790 = vmul.f32 %v1789, %v1505
        %v1791 = vmul.f32 %v1790, %v1789
        %v1792 = vmul.f32 0.5, %v1791
        %v1793 = vsub.f32 1.5, %v1792
        %v1794 = vmul.f32 %v1789, %v1793
        %vm1795 = vweird.f32 %v1505
        %vm1796 = vweird.f32 %v1789
        %vm1797 = vmor %vm1795, %vm1796
        %v1798 = vsel %vm1797, %v1789, %v1794
        %v1799 = vrsqrt.pop %v1506
        %v1800 = vmul.f32 %v1799, %v1506
        %v1801 = vmul.f32 %v1800, %v1799
        %v1802 = vmul.f32 0.5, %v1801
        %v1803 = vsub.f32 1.5, %v1802
        %v1804 = vmul.f32 %v1799, %v1803
        %vm1805 = vweird.f32 %v1506
        %vm1806 = vweird.f32 %v1799
        %vm1807 = vmor %vm1805, %vm1806
        %v1808 = vsel %vm1807, %v1799, %v1804
        %v1809 = vrsqrt.pop %v1507
        %v1810 = vmul.f32 %v1809, %v1507
        %v1811 = vmul.f32 %v1810, %v1809
        %v1812 = vmul.f32 0.5, %v1811
        %v1813 = vsub.f32 1.5, %v1812
        %v1814 = vmul.f32 %v1809, %v1813
        %vm1815 = vweird.f32 %v1507
        %vm1816 = vweird.f32 %v1809
        %vm1817 = vmor %vm1815, %vm1816
        %v1818 = vsel %vm1817, %v1809, %v1814
        %v1819 = vrsqrt.pop %v1508
        %v1820 = vmul.f32 %v1819, %v1508
        %v1821 = vmul.f32 %v1820, %v1819
        %v1822 = vmul.f32 0.5, %v1821
        %v1823 = vsub.f32 1.5, %v1822
        %v1824 = vmul.f32 %v1819, %v1823
        %vm1825 = vweird.f32 %v1508
        %vm1826 = vweird.f32 %v1819
        %vm1827 = vmor %vm1825, %vm1826
        %v1828 = vsel %vm1827, %v1819, %v1824
        %v1829 = vmul.f32 %v1285, %v1518
        %v1830 = vmul.f32 %v1286, %v1528
        %v1831 = vmul.f32 %v1287, %v1538
        %v1832 = vmul.f32 %v1288, %v1548
        %v1833 = vmul.f32 %v1289, %v1558
        %v1834 = vmul.f32 %v1290, %v1568
        %v1835 = vmul.f32 %v1291, %v1578
        %v1836 = vmul.f32 %v1292, %v1588
        %v1837 = vmul.f32 %v1293, %v1598
        %v1838 = vmul.f32 %v1294, %v1608
        %v1839 = vmul.f32 %v1295, %v1618
        %v1840 = vmul.f32 %v1296, %v1628
        %v1841 = vmul.f32 %v1297, %v1638
        %v1842 = vmul.f32 %v1298, %v1648
        %v1843 = vmul.f32 %v1299, %v1658
        %v1844 = vmul.f32 %v1300, %v1668
        %v1845 = vmul.f32 %v1301, %v1678
        %v1846 = vmul.f32 %v1302, %v1688
        %v1847 = vmul.f32 %v1303, %v1698
        %v1848 = vmul.f32 %v1304, %v1708
        %v1849 = vmul.f32 %v1305, %v1718
        %v1850 = vmul.f32 %v1306, %v1728
        %v1851 = vmul.f32 %v1307, %v1738
        %v1852 = vmul.f32 %v1308, %v1748
        %v1853 = vmul.f32 %v1309, %v1758
        %v1854 = vmul.f32 %v1310, %v1768
        %v1855 = vmul.f32 %v1311, %v1778
        %v1856 = vmul.f32 %v1312, %v1788
        %v1857 = vmul.f32 %v1313, %v1798
        %v1858 = vmul.f32 %v1314, %v1808
        %v1859 = vmul.f32 %v1315, %v1818
        %v1860 = vmul.f32 %v1316, %v1828
        %v1862 = vperm.slane %v1147, 0
        %v1864 = vmul.f32 %v1829, %v1862
        %v1865 = vmul.f32 %v1830, %v1862
        %v1866 = vmul.f32 %v1831, %v1862
        %v1867 = vmul.f32 %v1832, %v1862
        %v1868 = vmul.f32 %v1833, %v1862
        %v1869 = vmul.f32 %v1834, %v1862
        %v1870 = vmul.f32 %v1835, %v1862
        %v1871 = vmul.f32 %v1836, %v1862
        %v1872 = vmul.f32 %v1837, %v1862
        %v1873 = vmul.f32 %v1838, %v1862
        %v1874 = vmul.f32 %v1839, %v1862
        %v1875 = vmul.f32 %v1840, %v1862
        %v1876 = vmul.f32 %v1841, %v1862
        %v1877 = vmul.f32 %v1842, %v1862
        %v1878 = vmul.f32 %v1843, %v1862
        %v1879 = vmul.f32 %v1844, %v1862
        %v1880 = vmul.f32 %v1845, %v1862
        %v1881 = vmul.f32 %v1846, %v1862
        %v1882 = vmul.f32 %v1847, %v1862
        %v1883 = vmul.f32 %v1848, %v1862
        %v1884 = vmul.f32 %v1849, %v1862
        %v1885 = vmul.f32 %v1850, %v1862
        %v1886 = vmul.f32 %v1851, %v1862
        %v1887 = vmul.f32 %v1852, %v1862
        %v1888 = vmul.f32 %v1853, %v1862
        %v1889 = vmul.f32 %v1854, %v1862
        %v1890 = vmul.f32 %v1855, %v1862
        %v1891 = vmul.f32 %v1856, %v1862
        %v1892 = vmul.f32 %v1857, %v1862
        %v1893 = vmul.f32 %v1858, %v1862
        %v1894 = vmul.f32 %v1859, %v1862
        %v1895 = vmul.f32 %v1860, %v1862
        %v1897 = vperm.slane %v1148, 0
        %v1899 = vadd.f32 %v1864, %v1897
        %v1900 = vadd.f32 %v1865, %v1897
        %v1901 = vadd.f32 %v1866, %v1897
        %v1902 = vadd.f32 %v1867, %v1897
        %v1903 = vadd.f32 %v1868, %v1897
        %v1904 = vadd.f32 %v1869, %v1897
        %v1905 = vadd.f32 %v1870, %v1897
        %v1906 = vadd.f32 %v1871, %v1897
        %v1907 = vadd.f32 %v1872, %v1897
        %v1908 = vadd.f32 %v1873, %v1897
        %v1909 = vadd.f32 %v1874, %v1897
        %v1910 = vadd.f32 %v1875, %v1897
        %v1911 = vadd.f32 %v1876, %v1897
        %v1912 = vadd.f32 %v1877, %v1897
        %v1913 = vadd.f32 %v1878, %v1897
        %v1914 = vadd.f32 %v1879, %v1897
        %v1915 = vadd.f32 %v1880, %v1897
        %v1916 = vadd.f32 %v1881, %v1897
        %v1917 = vadd.f32 %v1882, %v1897
        %v1918 = vadd.f32 %v1883, %v1897
        %v1919 = vadd.f32 %v1884, %v1897
        %v1920 = vadd.f32 %v1885, %v1897
        %v1921 = vadd.f32 %v1886, %v1897
        %v1922 = vadd.f32 %v1887, %v1897
        %v1923 = vadd.f32 %v1888, %v1897
        %v1924 = vadd.f32 %v1889, %v1897
        %v1925 = vadd.f32 %v1890, %v1897
        %v1926 = vadd.f32 %v1891, %v1897
        %v1927 = vadd.f32 %v1892, %v1897
        %v1928 = vadd.f32 %v1893, %v1897
        %v1929 = vadd.f32 %v1894, %v1897
        %v1930 = vadd.f32 %v1895, %v1897
        %v1931 = vpack.c.bf16 %v1900, %v1899
        %v1932 = vpack.c.bf16 %v1902, %v1901
        %v1933 = vpack.c.bf16 %v1904, %v1903
        %v1934 = vpack.c.bf16 %v1906, %v1905
        %v1935 = vpack.c.bf16 %v1908, %v1907
        %v1936 = vpack.c.bf16 %v1910, %v1909
        %v1937 = vpack.c.bf16 %v1912, %v1911
        %v1938 = vpack.c.bf16 %v1914, %v1913
        %v1939 = vpack.c.bf16 %v1916, %v1915
        %v1940 = vpack.c.bf16 %v1918, %v1917
        %v1941 = vpack.c.bf16 %v1920, %v1919
        %v1942 = vpack.c.bf16 %v1922, %v1921
        %v1943 = vpack.c.bf16 %v1924, %v1923
        %v1944 = vpack.c.bf16 %v1926, %v1925
        %v1945 = vpack.c.bf16 %v1928, %v1927
        %v1946 = vpack.c.bf16 %v1930, %v1929
        %vm1947 = vcmask 253952
        %v1948 = vsel %vm1947, %v1146, 0.0
        %1949 = vadd.xlane.f32.xlu0 %v1948
        %v1950 = vpop.xlane.xlu0 %1949
        %v1951 = vmul.f32 %v1950, %v1252
        %v1952 = vsub.f32 %v1146, %v1951
        %v1953 = vmul.f32 %v1952, %v1952
        %v1954 = vsel %vm1947, %v1953, 0.0
        %1955 = vadd.xlane.f32.xlu0 %v1954
        %v1956 = vpop.xlane.xlu0 %1955
        %v1957 = vmul.f32 %v1956, %v1252
        %v1958 = vadd.f32 %v1957, 1e-05
        %v1959 = vrsqrt.pop %v1958
        %v1960 = vmul.f32 %v1959, %v1958
        %v1961 = vmul.f32 %v1960, %v1959
        %v1962 = vmul.f32 0.5, %v1961
        %v1963 = vsub.f32 1.5, %v1962
        %v1964 = vmul.f32 %v1959, %v1963
        %vm1965 = vweird.f32 %v1958
        %vm1966 = vweird.f32 %v1959
        %vm1967 = vmor %vm1965, %vm1966
        %v1968 = vsel %vm1967, %v1959, %v1964
        %v1969 = vmul.f32 %v1952, %v1968
        %v1970 = vmul.f32 %v1969, %v1147
        %v1971 = vadd.f32 %v1970, %v1148
        %v1972 = vpack.c.bf16 %v1971, %v1971
        %v1973 = vld [vmem:[%s773] sm:$0xf]
        %v1974 = vld [vmem:[%s773 + $0x4] sm:$0xf]
        %v1975 = vld [vmem:[%s773 + $0x8] sm:$0xf]
        %v1976 = vld [vmem:[%s773 + $0xc] sm:$0xf]
        %v1977 = vld [vmem:[%s778] sm:$0xf]
        %v1978 = vld [vmem:[%s778 + $0x4] sm:$0xf]
        %v1979 = vld [vmem:[%s778 + $0x8] sm:$0xf]
        %v1980 = vld [vmem:[%s778 + $0xc] sm:$0xf]
        %v1981 = vld [vmem:[%s783] sm:$0xf]
        %v1982 = vld [vmem:[%s783 + $0x4] sm:$0xf]
        %v1983 = vld [vmem:[%s783 + $0x8] sm:$0xf]
        %v1984 = vld [vmem:[%s783 + $0xc] sm:$0xf]
        %v1989 = vunpack.c.l.b16 %v1973
        %v1990 = vunpack.c.l.b16 %v1974
        %v1991 = vunpack.c.l.b16 %v1975
        %v1992 = vunpack.c.l.b16 %v1976
        %v1993 = vpack.c.b16 %v1990, %v1989
        %v1994 = vpack.c.b16 %v1992, %v1991
        %v1998 = vsel %vm1149, %v1931, 0
        %v2001 = vsel %vm1149, %v1932, 0
        %v2004 = vsel %vm1149, %v1933, 0
        %v2007 = vsel %vm1149, %v1934, 0
        %v2010 = vsel %vm1149, %v1935, 0
        %v2013 = vsel %vm1149, %v1936, 0
        %v2016 = vsel %vm1149, %v1937, 0
        %v2019 = vsel %vm1149, %v1938, 0
        %v2022 = vsel %vm1149, %v1939, 0
        %v2025 = vsel %vm1149, %v1940, 0
        %v2028 = vsel %vm1149, %v1941, 0
        %v2031 = vsel %vm1149, %v1942, 0
        %v2034 = vsel %vm1149, %v1943, 0
        %v2037 = vsel %vm1149, %v1944, 0
        %v2040 = vsel %vm1149, %v1945, 0
        %v2043 = vsel %vm1149, %v1946, 0
        %2045 = vmatpush.bf16.msra.mxu0 0
        %2046 = vmatpush.bf16.msra.mxu0 0
        %2047 = vmatpush.bf16.msra.mxu0 0
        %2048 = vmatpush.bf16.msra.mxu0 0
        %2049 = vmatpush.bf16.msra.mxu0 0
        %2050 = vmatpush.bf16.msra.mxu0 0
        %2051 = vmatpush.bf16.msra.mxu0 %v1994
        %2052 = vmatpush.bf16.msra.mxu0 %v1993
        %2053 = vmatmul.bf16.gmra.mxu0 %v1998
        %v2054 = vpop.f32.mrf.mxu0
        %v2055 = vadd.f32 0.0, %v2054
        %v2056 = vpop.f32.mrf.mxu0
        %v2057 = vadd.f32 0.0, %v2056
        %2058 = vmatmul.bf16.gmra.mxu0 %v2001
        %v2059 = vpop.f32.mrf.mxu0
        %v2060 = vadd.f32 0.0, %v2059
        %v2061 = vpop.f32.mrf.mxu0
        %v2062 = vadd.f32 0.0, %v2061
        %2063 = vmatmul.bf16.gmra.mxu0 %v2004
        %v2064 = vpop.f32.mrf.mxu0
        %v2065 = vadd.f32 0.0, %v2064
        %v2066 = vpop.f32.mrf.mxu0
        %v2067 = vadd.f32 0.0, %v2066
        %2068 = vmatmul.bf16.gmra.mxu0 %v2007
        %v2069 = vpop.f32.mrf.mxu0
        %v2070 = vadd.f32 0.0, %v2069
        %v2071 = vpop.f32.mrf.mxu0
        %v2072 = vadd.f32 0.0, %v2071
        %2073 = vmatmul.bf16.gmra.mxu0 %v2010
        %v2074 = vpop.f32.mrf.mxu0
        %v2075 = vadd.f32 0.0, %v2074
        %v2076 = vpop.f32.mrf.mxu0
        %v2077 = vadd.f32 0.0, %v2076
        %2078 = vmatmul.bf16.gmra.mxu0 %v2013
        %v2079 = vpop.f32.mrf.mxu0
        %v2080 = vadd.f32 0.0, %v2079
        %v2081 = vpop.f32.mrf.mxu0
        %v2082 = vadd.f32 0.0, %v2081
        %2083 = vmatmul.bf16.gmra.mxu0 %v2016
        %v2084 = vpop.f32.mrf.mxu0
        %v2085 = vadd.f32 0.0, %v2084
        %v2086 = vpop.f32.mrf.mxu0
        %v2087 = vadd.f32 0.0, %v2086
        %2088 = vmatmul.bf16.gmra.mxu0 %v2019
        %v2089 = vpop.f32.mrf.mxu0
        %v2090 = vadd.f32 0.0, %v2089
        %v2091 = vpop.f32.mrf.mxu0
        %v2092 = vadd.f32 0.0, %v2091
        %2093 = vmatmul.bf16.gmra.mxu0 %v2022
        %v2094 = vpop.f32.mrf.mxu0
        %v2095 = vadd.f32 0.0, %v2094
        %v2096 = vpop.f32.mrf.mxu0
        %v2097 = vadd.f32 0.0, %v2096
        %2098 = vmatmul.bf16.gmra.mxu0 %v2025
        %v2099 = vpop.f32.mrf.mxu0
        %v2100 = vadd.f32 0.0, %v2099
        %v2101 = vpop.f32.mrf.mxu0
        %v2102 = vadd.f32 0.0, %v2101
        %2103 = vmatmul.bf16.gmra.mxu0 %v2028
        %v2104 = vpop.f32.mrf.mxu0
        %v2105 = vadd.f32 0.0, %v2104
        %v2106 = vpop.f32.mrf.mxu0
        %v2107 = vadd.f32 0.0, %v2106
        %2108 = vmatmul.bf16.gmra.mxu0 %v2031
        %v2109 = vpop.f32.mrf.mxu0
        %v2110 = vadd.f32 0.0, %v2109
        %v2111 = vpop.f32.mrf.mxu0
        %v2112 = vadd.f32 0.0, %v2111
        %2113 = vmatmul.bf16.gmra.mxu0 %v2034
        %v2114 = vpop.f32.mrf.mxu0
        %v2115 = vadd.f32 0.0, %v2114
        %v2116 = vpop.f32.mrf.mxu0
        %v2117 = vadd.f32 0.0, %v2116
        %2118 = vmatmul.bf16.gmra.mxu0 %v2037
        %v2119 = vpop.f32.mrf.mxu0
        %v2120 = vadd.f32 0.0, %v2119
        %v2121 = vpop.f32.mrf.mxu0
        %v2122 = vadd.f32 0.0, %v2121
        %2123 = vmatmul.bf16.gmra.mxu0 %v2040
        %v2124 = vpop.f32.mrf.mxu0
        %v2125 = vadd.f32 0.0, %v2124
        %v2126 = vpop.f32.mrf.mxu0
        %v2127 = vadd.f32 0.0, %v2126
        %2128 = vmatmul.bf16.gmra.mxu0 %v2043
        %v2129 = vpop.f32.mrf.mxu0
        %v2130 = vadd.f32 0.0, %v2129
        %v2131 = vpop.f32.mrf.mxu0
        %v2132 = vadd.f32 0.0, %v2131
        %2133 = vdwg.mxu0
        %v2138 = vunpack.c.l.b16 %v1977
        %v2139 = vunpack.c.l.b16 %v1978
        %v2140 = vunpack.c.l.b16 %v1979
        %v2141 = vunpack.c.l.b16 %v1980
        %v2142 = vpack.c.b16 %v2139, %v2138
        %v2143 = vpack.c.b16 %v2141, %v2140
        %2146 = vmatpush.bf16.msra.mxu0 0
        %2147 = vmatpush.bf16.msra.mxu0 0
        %2148 = vmatpush.bf16.msra.mxu0 0
        %2149 = vmatpush.bf16.msra.mxu0 0
        %2150 = vmatpush.bf16.msra.mxu0 0
        %2151 = vmatpush.bf16.msra.mxu0 0
        %2152 = vmatpush.bf16.msra.mxu0 %v2143
        %2153 = vmatpush.bf16.msra.mxu0 %v2142
        %2154 = vmatmul.bf16.gmra.mxu0 %v1998
        %v2155 = vpop.f32.mrf.mxu0
        %v2156 = vadd.f32 0.0, %v2155
        %v2157 = vpop.f32.mrf.mxu0
        %v2158 = vadd.f32 0.0, %v2157
        %2159 = vmatmul.bf16.gmra.mxu0 %v2001
        %v2160 = vpop.f32.mrf.mxu0
        %v2161 = vadd.f32 0.0, %v2160
        %v2162 = vpop.f32.mrf.mxu0
        %v2163 = vadd.f32 0.0, %v2162
        %2164 = vmatmul.bf16.gmra.mxu0 %v2004
        %v2165 = vpop.f32.mrf.mxu0
        %v2166 = vadd.f32 0.0, %v2165
        %v2167 = vpop.f32.mrf.mxu0
        %v2168 = vadd.f32 0.0, %v2167
        %2169 = vmatmul.bf16.gmra.mxu0 %v2007
        %v2170 = vpop.f32.mrf.mxu0
        %v2171 = vadd.f32 0.0, %v2170
        %v2172 = vpop.f32.mrf.mxu0
        %v2173 = vadd.f32 0.0, %v2172
        %2174 = vmatmul.bf16.gmra.mxu0 %v2010
        %v2175 = vpop.f32.mrf.mxu0
        %v2176 = vadd.f32 0.0, %v2175
        %v2177 = vpop.f32.mrf.mxu0
        %v2178 = vadd.f32 0.0, %v2177
        %2179 = vmatmul.bf16.gmra.mxu0 %v2013
        %v2180 = vpop.f32.mrf.mxu0
        %v2181 = vadd.f32 0.0, %v2180
        %v2182 = vpop.f32.mrf.mxu0
        %v2183 = vadd.f32 0.0, %v2182
        %2184 = vmatmul.bf16.gmra.mxu0 %v2016
        %v2185 = vpop.f32.mrf.mxu0
        %v2186 = vadd.f32 0.0, %v2185
        %v2187 = vpop.f32.mrf.mxu0
        %v2188 = vadd.f32 0.0, %v2187
        %2189 = vmatmul.bf16.gmra.mxu0 %v2019
        %v2190 = vpop.f32.mrf.mxu0
        %v2191 = vadd.f32 0.0, %v2190
        %v2192 = vpop.f32.mrf.mxu0
        %v2193 = vadd.f32 0.0, %v2192
        %2194 = vmatmul.bf16.gmra.mxu0 %v2022
        %v2195 = vpop.f32.mrf.mxu0
        %v2196 = vadd.f32 0.0, %v2195
        %v2197 = vpop.f32.mrf.mxu0
        %v2198 = vadd.f32 0.0, %v2197
        %2199 = vmatmul.bf16.gmra.mxu0 %v2025
        %v2200 = vpop.f32.mrf.mxu0
        %v2201 = vadd.f32 0.0, %v2200
        %v2202 = vpop.f32.mrf.mxu0
        %v2203 = vadd.f32 0.0, %v2202
        %2204 = vmatmul.bf16.gmra.mxu0 %v2028
        %v2205 = vpop.f32.mrf.mxu0
        %v2206 = vadd.f32 0.0, %v2205
        %v2207 = vpop.f32.mrf.mxu0
        %v2208 = vadd.f32 0.0, %v2207
        %2209 = vmatmul.bf16.gmra.mxu0 %v2031
        %v2210 = vpop.f32.mrf.mxu0
        %v2211 = vadd.f32 0.0, %v2210
        %v2212 = vpop.f32.mrf.mxu0
        %v2213 = vadd.f32 0.0, %v2212
        %2214 = vmatmul.bf16.gmra.mxu0 %v2034
        %v2215 = vpop.f32.mrf.mxu0
        %v2216 = vadd.f32 0.0, %v2215
        %v2217 = vpop.f32.mrf.mxu0
        %v2218 = vadd.f32 0.0, %v2217
        %2219 = vmatmul.bf16.gmra.mxu0 %v2037
        %v2220 = vpop.f32.mrf.mxu0
        %v2221 = vadd.f32 0.0, %v2220
        %v2222 = vpop.f32.mrf.mxu0
        %v2223 = vadd.f32 0.0, %v2222
        %2224 = vmatmul.bf16.gmra.mxu0 %v2040
        %v2225 = vpop.f32.mrf.mxu0
        %v2226 = vadd.f32 0.0, %v2225
        %v2227 = vpop.f32.mrf.mxu0
        %v2228 = vadd.f32 0.0, %v2227
        %2229 = vmatmul.bf16.gmra.mxu0 %v2043
        %v2230 = vpop.f32.mrf.mxu0
        %v2231 = vadd.f32 0.0, %v2230
        %v2232 = vpop.f32.mrf.mxu0
        %v2233 = vadd.f32 0.0, %v2232
        %2234 = vdwg.mxu0
        %v2239 = vunpack.c.l.b16 %v1981
        %v2240 = vunpack.c.l.b16 %v1982
        %v2241 = vunpack.c.l.b16 %v1983
        %v2242 = vunpack.c.l.b16 %v1984
        %v2243 = vpack.c.b16 %v2240, %v2239
        %v2244 = vpack.c.b16 %v2242, %v2241
        %2247 = vmatpush.bf16.msra.mxu0 0
        %2248 = vmatpush.bf16.msra.mxu0 0
        %2249 = vmatpush.bf16.msra.mxu0 0
        %2250 = vmatpush.bf16.msra.mxu0 0
        %2251 = vmatpush.bf16.msra.mxu0 0
        %2252 = vmatpush.bf16.msra.mxu0 0
        %2253 = vmatpush.bf16.msra.mxu0 %v2244
        %2254 = vmatpush.bf16.msra.mxu0 %v2243
        %2255 = vmatmul.bf16.gmra.mxu0 %v1998
        %v2256 = vpop.f32.mrf.mxu0
        %v2257 = vadd.f32 0.0, %v2256
        %v2258 = vpop.f32.mrf.mxu0
        %v2259 = vadd.f32 0.0, %v2258
        %2260 = vmatmul.bf16.gmra.mxu0 %v2001
        %v2261 = vpop.f32.mrf.mxu0
        %v2262 = vadd.f32 0.0, %v2261
        %v2263 = vpop.f32.mrf.mxu0
        %v2264 = vadd.f32 0.0, %v2263
        %2265 = vmatmul.bf16.gmra.mxu0 %v2004
        %v2266 = vpop.f32.mrf.mxu0
        %v2267 = vadd.f32 0.0, %v2266
        %v2268 = vpop.f32.mrf.mxu0
        %v2269 = vadd.f32 0.0, %v2268
        %2270 = vmatmul.bf16.gmra.mxu0 %v2007
        %v2271 = vpop.f32.mrf.mxu0
        %v2272 = vadd.f32 0.0, %v2271
        %v2273 = vpop.f32.mrf.mxu0
        %v2274 = vadd.f32 0.0, %v2273
        %2275 = vmatmul.bf16.gmra.mxu0 %v2010
        %v2276 = vpop.f32.mrf.mxu0
        %v2277 = vadd.f32 0.0, %v2276
        %v2278 = vpop.f32.mrf.mxu0
        %v2279 = vadd.f32 0.0, %v2278
        %2280 = vmatmul.bf16.gmra.mxu0 %v2013
        %v2281 = vpop.f32.mrf.mxu0
        %v2282 = vadd.f32 0.0, %v2281
        %v2283 = vpop.f32.mrf.mxu0
        %v2284 = vadd.f32 0.0, %v2283
        %2285 = vmatmul.bf16.gmra.mxu0 %v2016
        %v2286 = vpop.f32.mrf.mxu0
        %v2287 = vadd.f32 0.0, %v2286
        %v2288 = vpop.f32.mrf.mxu0
        %v2289 = vadd.f32 0.0, %v2288
        %2290 = vmatmul.bf16.gmra.mxu0 %v2019
        %v2291 = vpop.f32.mrf.mxu0
        %v2292 = vadd.f32 0.0, %v2291
        %v2293 = vpop.f32.mrf.mxu0
        %v2294 = vadd.f32 0.0, %v2293
        %2295 = vmatmul.bf16.gmra.mxu0 %v2022
        %v2296 = vpop.f32.mrf.mxu0
        %v2297 = vadd.f32 0.0, %v2296
        %v2298 = vpop.f32.mrf.mxu0
        %v2299 = vadd.f32 0.0, %v2298
        %2300 = vmatmul.bf16.gmra.mxu0 %v2025
        %v2301 = vpop.f32.mrf.mxu0
        %v2302 = vadd.f32 0.0, %v2301
        %v2303 = vpop.f32.mrf.mxu0
        %v2304 = vadd.f32 0.0, %v2303
        %2305 = vmatmul.bf16.gmra.mxu0 %v2028
        %v2306 = vpop.f32.mrf.mxu0
        %v2307 = vadd.f32 0.0, %v2306
        %v2308 = vpop.f32.mrf.mxu0
        %v2309 = vadd.f32 0.0, %v2308
        %2310 = vmatmul.bf16.gmra.mxu0 %v2031
        %v2311 = vpop.f32.mrf.mxu0
        %v2312 = vadd.f32 0.0, %v2311
        %v2313 = vpop.f32.mrf.mxu0
        %v2314 = vadd.f32 0.0, %v2313
        %2315 = vmatmul.bf16.gmra.mxu0 %v2034
        %v2316 = vpop.f32.mrf.mxu0
        %v2317 = vadd.f32 0.0, %v2316
        %v2318 = vpop.f32.mrf.mxu0
        %v2319 = vadd.f32 0.0, %v2318
        %2320 = vmatmul.bf16.gmra.mxu0 %v2037
        %v2321 = vpop.f32.mrf.mxu0
        %v2322 = vadd.f32 0.0, %v2321
        %v2323 = vpop.f32.mrf.mxu0
        %v2324 = vadd.f32 0.0, %v2323
        %2325 = vmatmul.bf16.gmra.mxu0 %v2040
        %v2326 = vpop.f32.mrf.mxu0
        %v2327 = vadd.f32 0.0, %v2326
        %v2328 = vpop.f32.mrf.mxu0
        %v2329 = vadd.f32 0.0, %v2328
        %2330 = vmatmul.bf16.gmra.mxu0 %v2043
        %v2331 = vpop.f32.mrf.mxu0
        %v2332 = vadd.f32 0.0, %v2331
        %v2333 = vpop.f32.mrf.mxu0
        %v2334 = vadd.f32 0.0, %v2333
        %2335 = vdwg.mxu0
        %v2337 = vsel %vm1149, %v1972, 0
        %2339 = vmatpush.bf16.msra.mxu0 0
        %2340 = vmatpush.bf16.msra.mxu0 0
        %2341 = vmatpush.bf16.msra.mxu0 0
        %2342 = vmatpush.bf16.msra.mxu0 0
        %2343 = vmatpush.bf16.msra.mxu0 0
        %2344 = vmatpush.bf16.msra.mxu0 0
        %2345 = vmatpush.bf16.msra.mxu0 %v1994
        %2346 = vmatpush.bf16.msra.mxu0 %v1993
        %2347 = vmatmul.bf16.gmra.mxu0 %v2337
        %v2348 = vpop.f32.mrf.mxu0
        %v2349 = vadd.f32 0.0, %v2348
        %v2350 = vpop.f32.mrf.mxu0
        %2351 = vdwg.mxu0
        %2352 = vmatpush.bf16.msra.mxu0 0
        %2353 = vmatpush.bf16.msra.mxu0 0
        %2354 = vmatpush.bf16.msra.mxu0 0
        %2355 = vmatpush.bf16.msra.mxu0 0
        %2356 = vmatpush.bf16.msra.mxu0 0
        %2357 = vmatpush.bf16.msra.mxu0 0
        %2358 = vmatpush.bf16.msra.mxu0 %v2143
        %2359 = vmatpush.bf16.msra.mxu0 %v2142
        %2360 = vmatmul.bf16.gmra.mxu0 %v2337
        %v2361 = vpop.f32.mrf.mxu0
        %v2362 = vadd.f32 0.0, %v2361
        %v2363 = vpop.f32.mrf.mxu0
        %2364 = vdwg.mxu0
        %2365 = vmatpush.bf16.msra.mxu0 0
        %2366 = vmatpush.bf16.msra.mxu0 0
        %2367 = vmatpush.bf16.msra.mxu0 0
        %2368 = vmatpush.bf16.msra.mxu0 0
        %2369 = vmatpush.bf16.msra.mxu0 0
        %2370 = vmatpush.bf16.msra.mxu0 0
        %2371 = vmatpush.bf16.msra.mxu0 %v2244
        %2372 = vmatpush.bf16.msra.mxu0 %v2243
        %2373 = vmatmul.bf16.gmra.mxu0 %v2337
        %v2374 = vpop.f32.mrf.mxu0
        %v2375 = vadd.f32 0.0, %v2374
        %v2376 = vpop.f32.mrf.mxu0
        %2377 = vdwg.mxu0
        %v2378 = vpack.c.bf16 %v2055, %v2055
        %v2379 = vpack.c.bf16 %v2057, %v2057
        %v2380 = vpack.c.bf16 %v2060, %v2060
        %v2381 = vpack.c.bf16 %v2062, %v2062
        %v2382 = vpack.c.bf16 %v2065, %v2065
        %v2383 = vpack.c.bf16 %v2067, %v2067
        %v2384 = vpack.c.bf16 %v2070, %v2070
        %v2385 = vpack.c.bf16 %v2072, %v2072
        %v2386 = vpack.c.bf16 %v2075, %v2075
        %v2387 = vpack.c.bf16 %v2077, %v2077
        %v2388 = vpack.c.bf16 %v2080, %v2080
        %v2389 = vpack.c.bf16 %v2082, %v2082
        %v2390 = vpack.c.bf16 %v2085, %v2085
        %v2391 = vpack.c.bf16 %v2087, %v2087
        %v2392 = vpack.c.bf16 %v2090, %v2090
        %v2393 = vpack.c.bf16 %v2092, %v2092
        %v2394 = vpack.c.bf16 %v2095, %v2095
        %v2395 = vpack.c.bf16 %v2097, %v2097
        %v2396 = vpack.c.bf16 %v2100, %v2100
        %v2397 = vpack.c.bf16 %v2102, %v2102
        %v2398 = vpack.c.bf16 %v2105, %v2105
        %v2399 = vpack.c.bf16 %v2107, %v2107
        %v2400 = vpack.c.bf16 %v2110, %v2110
        %v2401 = vpack.c.bf16 %v2112, %v2112
        %v2402 = vpack.c.bf16 %v2115, %v2115
        %v2403 = vpack.c.bf16 %v2117, %v2117
        %v2404 = vpack.c.bf16 %v2120, %v2120
        %v2405 = vpack.c.bf16 %v2122, %v2122
        %v2406 = vpack.c.bf16 %v2125, %v2125
        %v2407 = vpack.c.bf16 %v2127, %v2127
        %v2408 = vpack.c.bf16 %v2130, %v2130
        %v2409 = vpack.c.bf16 %v2132, %v2132
        %v2410 = vpack.c.bf16 %v2156, %v2156
        %v2411 = vpack.c.bf16 %v2158, %v2158
        %v2412 = vpack.c.bf16 %v2161, %v2161
        %v2413 = vpack.c.bf16 %v2163, %v2163
        %v2414 = vpack.c.bf16 %v2166, %v2166
        %v2415 = vpack.c.bf16 %v2168, %v2168
        %v2416 = vpack.c.bf16 %v2171, %v2171
        %v2417 = vpack.c.bf16 %v2173, %v2173
        %v2418 = vpack.c.bf16 %v2176, %v2176
        %v2419 = vpack.c.bf16 %v2178, %v2178
        %v2420 = vpack.c.bf16 %v2181, %v2181
        %v2421 = vpack.c.bf16 %v2183, %v2183
        %v2422 = vpack.c.bf16 %v2186, %v2186
        %v2423 = vpack.c.bf16 %v2188, %v2188
        %v2424 = vpack.c.bf16 %v2191, %v2191
        %v2425 = vpack.c.bf16 %v2193, %v2193
        %v2426 = vpack.c.bf16 %v2196, %v2196
        %v2427 = vpack.c.bf16 %v2198, %v2198
        %v2428 = vpack.c.bf16 %v2201, %v2201
        %v2429 = vpack.c.bf16 %v2203, %v2203
        %v2430 = vpack.c.bf16 %v2206, %v2206
        %v2431 = vpack.c.bf16 %v2208, %v2208
        %v2432 = vpack.c.bf16 %v2211, %v2211
        %v2433 = vpack.c.bf16 %v2213, %v2213
        %v2434 = vpack.c.bf16 %v2216, %v2216
        %v2435 = vpack.c.bf16 %v2218, %v2218
        %v2436 = vpack.c.bf16 %v2221, %v2221
        %v2437 = vpack.c.bf16 %v2223, %v2223
        %v2438 = vpack.c.bf16 %v2226, %v2226
        %v2439 = vpack.c.bf16 %v2228, %v2228
        %v2440 = vpack.c.bf16 %v2231, %v2231
        %v2441 = vpack.c.bf16 %v2233, %v2233
        %v2442 = vpack.c.bf16 %v2257, %v2257
        %v2443 = vpack.c.bf16 %v2259, %v2259
        %v2444 = vpack.c.bf16 %v2262, %v2262
        %v2445 = vpack.c.bf16 %v2264, %v2264
        %v2446 = vpack.c.bf16 %v2267, %v2267
        %v2447 = vpack.c.bf16 %v2269, %v2269
        %v2448 = vpack.c.bf16 %v2272, %v2272
        %v2449 = vpack.c.bf16 %v2274, %v2274
        %v2450 = vpack.c.bf16 %v2277, %v2277
        %v2451 = vpack.c.bf16 %v2279, %v2279
        %v2452 = vpack.c.bf16 %v2282, %v2282
        %v2453 = vpack.c.bf16 %v2284, %v2284
        %v2454 = vpack.c.bf16 %v2287, %v2287
        %v2455 = vpack.c.bf16 %v2289, %v2289
        %v2456 = vpack.c.bf16 %v2292, %v2292
        %v2457 = vpack.c.bf16 %v2294, %v2294
        %v2458 = vpack.c.bf16 %v2297, %v2297
        %v2459 = vpack.c.bf16 %v2299, %v2299
        %v2460 = vpack.c.bf16 %v2302, %v2302
        %v2461 = vpack.c.bf16 %v2304, %v2304
        %v2462 = vpack.c.bf16 %v2307, %v2307
        %v2463 = vpack.c.bf16 %v2309, %v2309
        %v2464 = vpack.c.bf16 %v2312, %v2312
        %v2465 = vpack.c.bf16 %v2314, %v2314
        %v2466 = vpack.c.bf16 %v2317, %v2317
        %v2467 = vpack.c.bf16 %v2319, %v2319
        %v2468 = vpack.c.bf16 %v2322, %v2322
        %v2469 = vpack.c.bf16 %v2324, %v2324
        %v2470 = vpack.c.bf16 %v2327, %v2327
        %v2471 = vpack.c.bf16 %v2329, %v2329
        %v2472 = vpack.c.bf16 %v2332, %v2332
        %v2473 = vpack.c.bf16 %v2334, %v2334
        %v2506 = vunpack.c.l.b16 %v2378
        %v2507 = vunpack.c.l.b16 %v2379
        %v2508 = vunpack.c.l.b16 %v2380
        %v2509 = vunpack.c.l.b16 %v2381
        %v2510 = vunpack.c.l.b16 %v2382
        %v2511 = vunpack.c.l.b16 %v2383
        %v2512 = vunpack.c.l.b16 %v2384
        %v2513 = vunpack.c.l.b16 %v2385
        %v2514 = vunpack.c.l.b16 %v2386
        %v2515 = vunpack.c.l.b16 %v2387
        %v2516 = vunpack.c.l.b16 %v2388
        %v2517 = vunpack.c.l.b16 %v2389
        %v2518 = vunpack.c.l.b16 %v2390
        %v2519 = vunpack.c.l.b16 %v2391
        %v2520 = vunpack.c.l.b16 %v2392
        %v2521 = vunpack.c.l.b16 %v2393
        %v2522 = vunpack.c.l.b16 %v2394
        %v2523 = vunpack.c.l.b16 %v2395
        %v2524 = vunpack.c.l.b16 %v2396
        %v2525 = vunpack.c.l.b16 %v2397
        %v2526 = vunpack.c.l.b16 %v2398
        %v2527 = vunpack.c.l.b16 %v2399
        %v2528 = vunpack.c.l.b16 %v2400
        %v2529 = vunpack.c.l.b16 %v2401
        %v2530 = vunpack.c.l.b16 %v2402
        %v2531 = vunpack.c.l.b16 %v2403
        %v2532 = vunpack.c.l.b16 %v2404
        %v2533 = vunpack.c.l.b16 %v2405
        %v2534 = vunpack.c.l.b16 %v2406
        %v2535 = vunpack.c.l.b16 %v2407
        %v2536 = vunpack.c.l.b16 %v2408
        %v2537 = vunpack.c.l.b16 %v2409
        %v2538 = vpack.c.b16 %v2507, %v2506
        %v2539 = vpack.c.b16 %v2509, %v2508
        %v2540 = vpack.c.b16 %v2511, %v2510
        %v2541 = vpack.c.b16 %v2513, %v2512
        %v2542 = vpack.c.b16 %v2515, %v2514
        %v2543 = vpack.c.b16 %v2517, %v2516
        %v2544 = vpack.c.b16 %v2519, %v2518
        %v2545 = vpack.c.b16 %v2521, %v2520
        %v2546 = vpack.c.b16 %v2523, %v2522
        %v2547 = vpack.c.b16 %v2525, %v2524
        %v2548 = vpack.c.b16 %v2527, %v2526
        %v2549 = vpack.c.b16 %v2529, %v2528
        %v2550 = vpack.c.b16 %v2531, %v2530
        %v2551 = vpack.c.b16 %v2533, %v2532
        %v2552 = vpack.c.b16 %v2535, %v2534
        %v2553 = vpack.c.b16 %v2537, %v2536
        %v2586 = vunpack.c.l.b16 %v2410
        %v2587 = vunpack.c.l.b16 %v2411
        %v2588 = vunpack.c.l.b16 %v2412
        %v2589 = vunpack.c.l.b16 %v2413
        %v2590 = vunpack.c.l.b16 %v2414
        %v2591 = vunpack.c.l.b16 %v2415
        %v2592 = vunpack.c.l.b16 %v2416
        %v2593 = vunpack.c.l.b16 %v2417
        %v2594 = vunpack.c.l.b16 %v2418
        %v2595 = vunpack.c.l.b16 %v2419
        %v2596 = vunpack.c.l.b16 %v2420
        %v2597 = vunpack.c.l.b16 %v2421
        %v2598 = vunpack.c.l.b16 %v2422
        %v2599 = vunpack.c.l.b16 %v2423
        %v2600 = vunpack.c.l.b16 %v2424
        %v2601 = vunpack.c.l.b16 %v2425
        %v2602 = vunpack.c.l.b16 %v2426
        %v2603 = vunpack.c.l.b16 %v2427
        %v2604 = vunpack.c.l.b16 %v2428
        %v2605 = vunpack.c.l.b16 %v2429
        %v2606 = vunpack.c.l.b16 %v2430
        %v2607 = vunpack.c.l.b16 %v2431
        %v2608 = vunpack.c.l.b16 %v2432
        %v2609 = vunpack.c.l.b16 %v2433
        %v2610 = vunpack.c.l.b16 %v2434
        %v2611 = vunpack.c.l.b16 %v2435
        %v2612 = vunpack.c.l.b16 %v2436
        %v2613 = vunpack.c.l.b16 %v2437
        %v2614 = vunpack.c.l.b16 %v2438
        %v2615 = vunpack.c.l.b16 %v2439
        %v2616 = vunpack.c.l.b16 %v2440
        %v2617 = vunpack.c.l.b16 %v2441
        %v2618 = vpack.c.b16 %v2587, %v2586
        %v2619 = vpack.c.b16 %v2589, %v2588
        %v2620 = vpack.c.b16 %v2591, %v2590
        %v2621 = vpack.c.b16 %v2593, %v2592
        %v2622 = vpack.c.b16 %v2595, %v2594
        %v2623 = vpack.c.b16 %v2597, %v2596
        %v2624 = vpack.c.b16 %v2599, %v2598
        %v2625 = vpack.c.b16 %v2601, %v2600
        %v2626 = vpack.c.b16 %v2603, %v2602
        %v2627 = vpack.c.b16 %v2605, %v2604
        %v2628 = vpack.c.b16 %v2607, %v2606
        %v2629 = vpack.c.b16 %v2609, %v2608
        %v2630 = vpack.c.b16 %v2611, %v2610
        %v2631 = vpack.c.b16 %v2613, %v2612
        %v2632 = vpack.c.b16 %v2615, %v2614
        %v2633 = vpack.c.b16 %v2617, %v2616
        %vm2634 = vcmask 130048
        %v2636 = vsel %vm2634, %v2538, 0
        %v2639 = vsel %vm2634, %v2539, 0
        %v2642 = vsel %vm2634, %v2540, 0
        %v2645 = vsel %vm2634, %v2541, 0
        %v2648 = vsel %vm2634, %v2542, 0
        %v2651 = vsel %vm2634, %v2543, 0
        %v2654 = vsel %vm2634, %v2544, 0
        %v2657 = vsel %vm2634, %v2545, 0
        %v2660 = vsel %vm2634, %v2546, 0
        %v2663 = vsel %vm2634, %v2547, 0
        %v2666 = vsel %vm2634, %v2548, 0
        %v2669 = vsel %vm2634, %v2549, 0
        %v2672 = vsel %vm2634, %v2550, 0
        %v2675 = vsel %vm2634, %v2551, 0
        %v2678 = vsel %vm2634, %v2552, 0
        %v2681 = vsel %vm2634, %v2553, 0
        %v2684 = vsel %vm2634, %v2618, 0
        %v2687 = vsel %vm2634, %v2619, 0
        %v2690 = vsel %vm2634, %v2620, 0
        %v2693 = vsel %vm2634, %v2621, 0
        %v2696 = vsel %vm2634, %v2622, 0
        %v2699 = vsel %vm2634, %v2623, 0
        %v2702 = vsel %vm2634, %v2624, 0
        %v2705 = vsel %vm2634, %v2625, 0
        %v2708 = vsel %vm2634, %v2626, 0
        %v2711 = vsel %vm2634, %v2627, 0
        %v2714 = vsel %vm2634, %v2628, 0
        %v2717 = vsel %vm2634, %v2629, 0
        %v2720 = vsel %vm2634, %v2630, 0
        %v2723 = vsel %vm2634, %v2631, 0
        %v2726 = vsel %vm2634, %v2632, 0
        %v2729 = vsel %vm2634, %v2633, 0
        %2731 = vmatpush.bf16.xpose.msra.mxu0 %v2705
        %2732 = vmatpush.bf16.xpose.msra.mxu0 %v2702
        %2733 = vmatpush.bf16.xpose.msra.mxu0 %v2699
        %2734 = vmatpush.bf16.xpose.msra.mxu0 %v2696
        %2735 = vmatpush.bf16.xpose.msra.mxu0 %v2693
        %2736 = vmatpush.bf16.xpose.msra.mxu0 %v2690
        %2737 = vmatpush.bf16.xpose.msra.mxu0 %v2687
        %2738 = vmatpush.bf16.xpose.msra.mxu0 %v2684
        %2739 = vmatmul.bf16.gmra.mxu0 %v2636
        %v2740 = vpop.f32.mrf.mxu0
        %v2741 = vadd.f32 0.0, %v2740
        %v2742 = vpop.f32.mrf.mxu0
        %v2743 = vadd.f32 0.0, %v2742
        %2744 = vmatmul.bf16.gmra.mxu0 %v2639
        %v2745 = vpop.f32.mrf.mxu0
        %v2746 = vadd.f32 0.0, %v2745
        %v2747 = vpop.f32.mrf.mxu0
        %v2748 = vadd.f32 0.0, %v2747
        %2749 = vmatmul.bf16.gmra.mxu0 %v2642
        %v2750 = vpop.f32.mrf.mxu0
        %v2751 = vadd.f32 0.0, %v2750
        %v2752 = vpop.f32.mrf.mxu0
        %v2753 = vadd.f32 0.0, %v2752
        %2754 = vmatmul.bf16.gmra.mxu0 %v2645
        %v2755 = vpop.f32.mrf.mxu0
        %v2756 = vadd.f32 0.0, %v2755
        %v2757 = vpop.f32.mrf.mxu0
        %v2758 = vadd.f32 0.0, %v2757
        %2759 = vmatmul.bf16.gmra.mxu0 %v2648
        %v2760 = vpop.f32.mrf.mxu0
        %v2761 = vadd.f32 0.0, %v2760
        %v2762 = vpop.f32.mrf.mxu0
        %v2763 = vadd.f32 0.0, %v2762
        %2764 = vmatmul.bf16.gmra.mxu0 %v2651
        %v2765 = vpop.f32.mrf.mxu0
        %v2766 = vadd.f32 0.0, %v2765
        %v2767 = vpop.f32.mrf.mxu0
        %v2768 = vadd.f32 0.0, %v2767
        %2769 = vmatmul.bf16.gmra.mxu0 %v2654
        %v2770 = vpop.f32.mrf.mxu0
        %v2771 = vadd.f32 0.0, %v2770
        %v2772 = vpop.f32.mrf.mxu0
        %v2773 = vadd.f32 0.0, %v2772
        %2774 = vmatmul.bf16.gmra.mxu0 %v2657
        %v2775 = vpop.f32.mrf.mxu0
        %v2776 = vadd.f32 0.0, %v2775
        %v2777 = vpop.f32.mrf.mxu0
        %v2778 = vadd.f32 0.0, %v2777
        %2779 = vmatmul.bf16.gmra.mxu0 %v2660
        %v2780 = vpop.f32.mrf.mxu0
        %v2781 = vadd.f32 0.0, %v2780
        %v2782 = vpop.f32.mrf.mxu0
        %v2783 = vadd.f32 0.0, %v2782
        %2784 = vmatmul.bf16.gmra.mxu0 %v2663
        %v2785 = vpop.f32.mrf.mxu0
        %v2786 = vadd.f32 0.0, %v2785
        %v2787 = vpop.f32.mrf.mxu0
        %v2788 = vadd.f32 0.0, %v2787
        %2789 = vmatmul.bf16.gmra.mxu0 %v2666
        %v2790 = vpop.f32.mrf.mxu0
        %v2791 = vadd.f32 0.0, %v2790
        %v2792 = vpop.f32.mrf.mxu0
        %v2793 = vadd.f32 0.0, %v2792
        %2794 = vmatmul.bf16.gmra.mxu0 %v2669
        %v2795 = vpop.f32.mrf.mxu0
        %v2796 = vadd.f32 0.0, %v2795
        %v2797 = vpop.f32.mrf.mxu0
        %v2798 = vadd.f32 0.0, %v2797
        %2799 = vmatmul.bf16.gmra.mxu0 %v2672
        %v2800 = vpop.f32.mrf.mxu0
        %v2801 = vadd.f32 0.0, %v2800
        %v2802 = vpop.f32.mrf.mxu0
        %v2803 = vadd.f32 0.0, %v2802
        %2804 = vmatmul.bf16.gmra.mxu0 %v2675
        %v2805 = vpop.f32.mrf.mxu0
        %v2806 = vadd.f32 0.0, %v2805
        %v2807 = vpop.f32.mrf.mxu0
        %v2808 = vadd.f32 0.0, %v2807
        %2809 = vmatmul.bf16.gmra.mxu0 %v2678
        %v2810 = vpop.f32.mrf.mxu0
        %v2811 = vadd.f32 0.0, %v2810
        %v2812 = vpop.f32.mrf.mxu0
        %v2813 = vadd.f32 0.0, %v2812
        %2814 = vmatmul.bf16.gmra.mxu0 %v2681
        %v2815 = vpop.f32.mrf.mxu0
        %v2816 = vadd.f32 0.0, %v2815
        %v2817 = vpop.f32.mrf.mxu0
        %v2818 = vadd.f32 0.0, %v2817
        %2819 = vdwg.mxu0
        %2820 = vmatpush.bf16.xpose.msra.mxu0 %v2729
        %2821 = vmatpush.bf16.xpose.msra.mxu0 %v2726
        %2822 = vmatpush.bf16.xpose.msra.mxu0 %v2723
        %2823 = vmatpush.bf16.xpose.msra.mxu0 %v2720
        %2824 = vmatpush.bf16.xpose.msra.mxu0 %v2717
        %2825 = vmatpush.bf16.xpose.msra.mxu0 %v2714
        %2826 = vmatpush.bf16.xpose.msra.mxu0 %v2711
        %2827 = vmatpush.bf16.xpose.msra.mxu0 %v2708
        %2828 = vmatmul.bf16.gmra.mxu0 %v2636
        %v2829 = vpop.f32.mrf.mxu0
        %v2830 = vadd.f32 0.0, %v2829
        %v2831 = vpop.f32.mrf.mxu0
        %v2832 = vadd.f32 0.0, %v2831
        %2833 = vmatmul.bf16.gmra.mxu0 %v2639
        %v2834 = vpop.f32.mrf.mxu0
        %v2835 = vadd.f32 0.0, %v2834
        %v2836 = vpop.f32.mrf.mxu0
        %v2837 = vadd.f32 0.0, %v2836
        %2838 = vmatmul.bf16.gmra.mxu0 %v2642
        %v2839 = vpop.f32.mrf.mxu0
        %v2840 = vadd.f32 0.0, %v2839
        %v2841 = vpop.f32.mrf.mxu0
        %v2842 = vadd.f32 0.0, %v2841
        %2843 = vmatmul.bf16.gmra.mxu0 %v2645
        %v2844 = vpop.f32.mrf.mxu0
        %v2845 = vadd.f32 0.0, %v2844
        %v2846 = vpop.f32.mrf.mxu0
        %v2847 = vadd.f32 0.0, %v2846
        %2848 = vmatmul.bf16.gmra.mxu0 %v2648
        %v2849 = vpop.f32.mrf.mxu0
        %v2850 = vadd.f32 0.0, %v2849
        %v2851 = vpop.f32.mrf.mxu0
        %v2852 = vadd.f32 0.0, %v2851
        %2853 = vmatmul.bf16.gmra.mxu0 %v2651
        %v2854 = vpop.f32.mrf.mxu0
        %v2855 = vadd.f32 0.0, %v2854
        %v2856 = vpop.f32.mrf.mxu0
        %v2857 = vadd.f32 0.0, %v2856
        %2858 = vmatmul.bf16.gmra.mxu0 %v2654
        %v2859 = vpop.f32.mrf.mxu0
        %v2860 = vadd.f32 0.0, %v2859
        %v2861 = vpop.f32.mrf.mxu0
        %v2862 = vadd.f32 0.0, %v2861
        %2863 = vmatmul.bf16.gmra.mxu0 %v2657
        %v2864 = vpop.f32.mrf.mxu0
        %v2865 = vadd.f32 0.0, %v2864
        %v2866 = vpop.f32.mrf.mxu0
        %v2867 = vadd.f32 0.0, %v2866
        %2868 = vmatmul.bf16.gmra.mxu0 %v2660
        %v2869 = vpop.f32.mrf.mxu0
        %v2870 = vadd.f32 0.0, %v2869
        %v2871 = vpop.f32.mrf.mxu0
        %v2872 = vadd.f32 0.0, %v2871
        %2873 = vmatmul.bf16.gmra.mxu0 %v2663
        %v2874 = vpop.f32.mrf.mxu0
        %v2875 = vadd.f32 0.0, %v2874
        %v2876 = vpop.f32.mrf.mxu0
        %v2877 = vadd.f32 0.0, %v2876
        %2878 = vmatmul.bf16.gmra.mxu0 %v2666
        %v2879 = vpop.f32.mrf.mxu0
        %v2880 = vadd.f32 0.0, %v2879
        %v2881 = vpop.f32.mrf.mxu0
        %v2882 = vadd.f32 0.0, %v2881
        %2883 = vmatmul.bf16.gmra.mxu0 %v2669
        %v2884 = vpop.f32.mrf.mxu0
        %v2885 = vadd.f32 0.0, %v2884
        %v2886 = vpop.f32.mrf.mxu0
        %v2887 = vadd.f32 0.0, %v2886
        %2888 = vmatmul.bf16.gmra.mxu0 %v2672
        %v2889 = vpop.f32.mrf.mxu0
        %v2890 = vadd.f32 0.0, %v2889
        %v2891 = vpop.f32.mrf.mxu0
        %v2892 = vadd.f32 0.0, %v2891
        %2893 = vmatmul.bf16.gmra.mxu0 %v2675
        %v2894 = vpop.f32.mrf.mxu0
        %v2895 = vadd.f32 0.0, %v2894
        %v2896 = vpop.f32.mrf.mxu0
        %v2897 = vadd.f32 0.0, %v2896
        %2898 = vmatmul.bf16.gmra.mxu0 %v2678
        %v2899 = vpop.f32.mrf.mxu0
        %v2900 = vadd.f32 0.0, %v2899
        %v2901 = vpop.f32.mrf.mxu0
        %v2902 = vadd.f32 0.0, %v2901
        %2903 = vmatmul.bf16.gmra.mxu0 %v2681
        %v2904 = vpop.f32.mrf.mxu0
        %v2905 = vadd.f32 0.0, %v2904
        %v2906 = vpop.f32.mrf.mxu0
        %v2907 = vadd.f32 0.0, %v2906
        %2908 = vdwg.mxu0
        %v2909 = vperm.slane %v2362, 0
        %v2910 = vmul.f32 %v2055, %v2909
        %v2911 = vmul.f32 %v2057, %v2909
        %v2912 = vmul.f32 %v2060, %v2909
        %v2913 = vmul.f32 %v2062, %v2909
        %v2914 = vmul.f32 %v2065, %v2909
        %v2915 = vmul.f32 %v2067, %v2909
        %v2916 = vmul.f32 %v2070, %v2909
        %v2917 = vmul.f32 %v2072, %v2909
        %v2918 = vmul.f32 %v2075, %v2909
        %v2919 = vmul.f32 %v2077, %v2909
        %v2920 = vmul.f32 %v2080, %v2909
        %v2921 = vmul.f32 %v2082, %v2909
        %v2922 = vmul.f32 %v2085, %v2909
        %v2923 = vmul.f32 %v2087, %v2909
        %v2924 = vmul.f32 %v2090, %v2909
        %v2925 = vmul.f32 %v2092, %v2909
        %v2926 = vmul.f32 %v2095, %v2909
        %v2927 = vmul.f32 %v2097, %v2909
        %v2928 = vmul.f32 %v2100, %v2909
        %v2929 = vmul.f32 %v2102, %v2909
        %v2930 = vmul.f32 %v2105, %v2909
        %v2931 = vmul.f32 %v2107, %v2909
        %v2932 = vmul.f32 %v2110, %v2909
        %v2933 = vmul.f32 %v2112, %v2909
        %v2934 = vmul.f32 %v2115, %v2909
        %v2935 = vmul.f32 %v2117, %v2909
        %v2936 = vmul.f32 %v2120, %v2909
        %v2937 = vmul.f32 %v2122, %v2909
        %v2938 = vmul.f32 %v2125, %v2909
        %v2939 = vmul.f32 %v2127, %v2909
        %v2940 = vmul.f32 %v2130, %v2909
        %v2941 = vmul.f32 %v2132, %v2909
        %v2942 = vsel %vm2634, %v2910, 0.0
        %2943 = vadd.xlane.f32.xlu0 %v2942
        %v2944 = vpop.xlane.xlu0 %2943
        %v2945 = vsel %vm2634, %v2911, 0.0
        %2946 = vadd.xlane.f32.xlu0 %v2945
        %v2947 = vpop.xlane.xlu0 %2946
        %v2948 = vsel %vm2634, %v2912, 0.0
        %2949 = vadd.xlane.f32.xlu0 %v2948
        %v2950 = vpop.xlane.xlu0 %2949
        %v2951 = vsel %vm2634, %v2913, 0.0
        %2952 = vadd.xlane.f32.xlu0 %v2951
        %v2953 = vpop.xlane.xlu0 %2952
        %v2954 = vsel %vm2634, %v2914, 0.0
        %2955 = vadd.xlane.f32.xlu0 %v2954
        %v2956 = vpop.xlane.xlu0 %2955
        %v2957 = vsel %vm2634, %v2915, 0.0
        %2958 = vadd.xlane.f32.xlu0 %v2957
        %v2959 = vpop.xlane.xlu0 %2958
        %v2960 = vsel %vm2634, %v2916, 0.0
        %2961 = vadd.xlane.f32.xlu0 %v2960
        %v2962 = vpop.xlane.xlu0 %2961
        %v2963 = vsel %vm2634, %v2917, 0.0
        %2964 = vadd.xlane.f32.xlu0 %v2963
        %v2965 = vpop.xlane.xlu0 %2964
        %v2966 = vsel %vm2634, %v2918, 0.0
        %2967 = vadd.xlane.f32.xlu0 %v2966
        %v2968 = vpop.xlane.xlu0 %2967
        %v2969 = vsel %vm2634, %v2919, 0.0
        %2970 = vadd.xlane.f32.xlu0 %v2969
        %v2971 = vpop.xlane.xlu0 %2970
        %v2972 = vsel %vm2634, %v2920, 0.0
        %2973 = vadd.xlane.f32.xlu0 %v2972
        %v2974 = vpop.xlane.xlu0 %2973
        %v2975 = vsel %vm2634, %v2921, 0.0
        %2976 = vadd.xlane.f32.xlu0 %v2975
        %v2977 = vpop.xlane.xlu0 %2976
        %v2978 = vsel %vm2634, %v2922, 0.0
        %2979 = vadd.xlane.f32.xlu0 %v2978
        %v2980 = vpop.xlane.xlu0 %2979
        %v2981 = vsel %vm2634, %v2923, 0.0
        %2982 = vadd.xlane.f32.xlu0 %v2981
        %v2983 = vpop.xlane.xlu0 %2982
        %v2984 = vsel %vm2634, %v2924, 0.0
        %2985 = vadd.xlane.f32.xlu0 %v2984
        %v2986 = vpop.xlane.xlu0 %2985
        %v2987 = vsel %vm2634, %v2925, 0.0
        %2988 = vadd.xlane.f32.xlu0 %v2987
        %v2989 = vpop.xlane.xlu0 %2988
        %v2990 = vsel %vm2634, %v2926, 0.0
        %2991 = vadd.xlane.f32.xlu0 %v2990
        %v2992 = vpop.xlane.xlu0 %2991
        %v2993 = vsel %vm2634, %v2927, 0.0
        %2994 = vadd.xlane.f32.xlu0 %v2993
        %v2995 = vpop.xlane.xlu0 %2994
        %v2996 = vsel %vm2634, %v2928, 0.0
        %2997 = vadd.xlane.f32.xlu0 %v2996
        %v2998 = vpop.xlane.xlu0 %2997
        %v2999 = vsel %vm2634, %v2929, 0.0
        %3000 = vadd.xlane.f32.xlu0 %v2999
        %v3001 = vpop.xlane.xlu0 %3000
        %v3002 = vsel %vm2634, %v2930, 0.0
        %3003 = vadd.xlane.f32.xlu0 %v3002
        %v3004 = vpop.xlane.xlu0 %3003
        %v3005 = vsel %vm2634, %v2931, 0.0
        %3006 = vadd.xlane.f32.xlu0 %v3005
        %v3007 = vpop.xlane.xlu0 %3006
        %v3008 = vsel %vm2634, %v2932, 0.0
        %3009 = vadd.xlane.f32.xlu0 %v3008
        %v3010 = vpop.xlane.xlu0 %3009
        %v3011 = vsel %vm2634, %v2933, 0.0
        %3012 = vadd.xlane.f32.xlu0 %v3011
        %v3013 = vpop.xlane.xlu0 %3012
        %v3014 = vsel %vm2634, %v2934, 0.0
        %3015 = vadd.xlane.f32.xlu0 %v3014
        %v3016 = vpop.xlane.xlu0 %3015
        %v3017 = vsel %vm2634, %v2935, 0.0
        %3018 = vadd.xlane.f32.xlu0 %v3017
        %v3019 = vpop.xlane.xlu0 %3018
        %v3020 = vsel %vm2634, %v2936, 0.0
        %3021 = vadd.xlane.f32.xlu0 %v3020
        %v3022 = vpop.xlane.xlu0 %3021
        %v3023 = vsel %vm2634, %v2937, 0.0
        %3024 = vadd.xlane.f32.xlu0 %v3023
        %v3025 = vpop.xlane.xlu0 %3024
        %v3026 = vsel %vm2634, %v2938, 0.0
        %3027 = vadd.xlane.f32.xlu0 %v3026
        %v3028 = vpop.xlane.xlu0 %3027
        %v3029 = vsel %vm2634, %v2939, 0.0
        %3030 = vadd.xlane.f32.xlu0 %v3029
        %v3031 = vpop.xlane.xlu0 %3030
        %v3032 = vsel %vm2634, %v2940, 0.0
        %3033 = vadd.xlane.f32.xlu0 %v3032
        %v3034 = vpop.xlane.xlu0 %3033
        %v3035 = vsel %vm2634, %v2941, 0.0
        %3036 = vadd.xlane.f32.xlu0 %v3035
        %v3037 = vpop.xlane.xlu0 %3036
        %v3038 = vmax.f32 %v2741, %v2830
        %3039 = vmax.xlane.f32.xlu0 %v3038
        %v3040 = vpop.xlane.xlu0 %3039
        %v3041 = vmax.f32 %v2743, %v2832
        %3042 = vmax.xlane.f32.xlu0 %v3041
        %v3043 = vpop.xlane.xlu0 %3042
        %v3044 = vmax.f32 %v2746, %v2835
        %3045 = vmax.xlane.f32.xlu0 %v3044
        %v3046 = vpop.xlane.xlu0 %3045
        %v3047 = vmax.f32 %v2748, %v2837
        %3048 = vmax.xlane.f32.xlu0 %v3047
        %v3049 = vpop.xlane.xlu0 %3048
        %v3050 = vmax.f32 %v2751, %v2840
        %3051 = vmax.xlane.f32.xlu0 %v3050
        %v3052 = vpop.xlane.xlu0 %3051
        %v3053 = vmax.f32 %v2753, %v2842
        %3054 = vmax.xlane.f32.xlu0 %v3053
        %v3055 = vpop.xlane.xlu0 %3054
        %v3056 = vmax.f32 %v2756, %v2845
        %3057 = vmax.xlane.f32.xlu0 %v3056
        %v3058 = vpop.xlane.xlu0 %3057
        %v3059 = vmax.f32 %v2758, %v2847
        %3060 = vmax.xlane.f32.xlu0 %v3059
        %v3061 = vpop.xlane.xlu0 %3060
        %v3062 = vmax.f32 %v2761, %v2850
        %3063 = vmax.xlane.f32.xlu0 %v3062
        %v3064 = vpop.xlane.xlu0 %3063
        %v3065 = vmax.f32 %v2763, %v2852
        %3066 = vmax.xlane.f32.xlu0 %v3065
        %v3067 = vpop.xlane.xlu0 %3066
        %v3068 = vmax.f32 %v2766, %v2855
        %3069 = vmax.xlane.f32.xlu0 %v3068
        %v3070 = vpop.xlane.xlu0 %3069
        %v3071 = vmax.f32 %v2768, %v2857
        %3072 = vmax.xlane.f32.xlu0 %v3071
        %v3073 = vpop.xlane.xlu0 %3072
        %v3074 = vmax.f32 %v2771, %v2860
        %3075 = vmax.xlane.f32.xlu0 %v3074
        %v3076 = vpop.xlane.xlu0 %3075
        %v3077 = vmax.f32 %v2773, %v2862
        %3078 = vmax.xlane.f32.xlu0 %v3077
        %v3079 = vpop.xlane.xlu0 %3078
        %v3080 = vmax.f32 %v2776, %v2865
        %3081 = vmax.xlane.f32.xlu0 %v3080
        %v3082 = vpop.xlane.xlu0 %3081
        %v3083 = vmax.f32 %v2778, %v2867
        %3084 = vmax.xlane.f32.xlu0 %v3083
        %v3085 = vpop.xlane.xlu0 %3084
        %v3086 = vmax.f32 %v2781, %v2870
        %3087 = vmax.xlane.f32.xlu0 %v3086
        %v3088 = vpop.xlane.xlu0 %3087
        %v3089 = vmax.f32 %v2783, %v2872
        %3090 = vmax.xlane.f32.xlu0 %v3089
        %v3091 = vpop.xlane.xlu0 %3090
        %v3092 = vmax.f32 %v2786, %v2875
        %3093 = vmax.xlane.f32.xlu0 %v3092
        %v3094 = vpop.xlane.xlu0 %3093
        %v3095 = vmax.f32 %v2788, %v2877
        %3096 = vmax.xlane.f32.xlu0 %v3095
        %v3097 = vpop.xlane.xlu0 %3096
        %v3098 = vmax.f32 %v2791, %v2880
        %3099 = vmax.xlane.f32.xlu0 %v3098
        %v3100 = vpop.xlane.xlu0 %3099
        %v3101 = vmax.f32 %v2793, %v2882
        %3102 = vmax.xlane.f32.xlu0 %v3101
        %v3103 = vpop.xlane.xlu0 %3102
        %v3104 = vmax.f32 %v2796, %v2885
        %3105 = vmax.xlane.f32.xlu0 %v3104
        %v3106 = vpop.xlane.xlu0 %3105
        %v3107 = vmax.f32 %v2798, %v2887
        %3108 = vmax.xlane.f32.xlu0 %v3107
        %v3109 = vpop.xlane.xlu0 %3108
        %v3110 = vmax.f32 %v2801, %v2890
        %3111 = vmax.xlane.f32.xlu0 %v3110
        %v3112 = vpop.xlane.xlu0 %3111
        %v3113 = vmax.f32 %v2803, %v2892
        %3114 = vmax.xlane.f32.xlu0 %v3113
        %v3115 = vpop.xlane.xlu0 %3114
        %v3116 = vmax.f32 %v2806, %v2895
        %3117 = vmax.xlane.f32.xlu0 %v3116
        %v3118 = vpop.xlane.xlu0 %3117
        %v3119 = vmax.f32 %v2808, %v2897
        %3120 = vmax.xlane.f32.xlu0 %v3119
        %v3121 = vpop.xlane.xlu0 %3120
        %v3122 = vmax.f32 %v2811, %v2900
        %3123 = vmax.xlane.f32.xlu0 %v3122
        %v3124 = vpop.xlane.xlu0 %3123
        %v3125 = vmax.f32 %v2813, %v2902
        %3126 = vmax.xlane.f32.xlu0 %v3125
        %v3127 = vpop.xlane.xlu0 %3126
        %v3128 = vmax.f32 %v2816, %v2905
        %3129 = vmax.xlane.f32.xlu0 %v3128
        %v3130 = vpop.xlane.xlu0 %3129
        %v3131 = vmax.f32 %v2818, %v2907
        %3132 = vmax.xlane.f32.xlu0 %v3131
        %v3133 = vpop.xlane.xlu0 %3132
        %v3134 = vmax.f32 %v3040, %v2944
        %v3135 = vmax.f32 %v3043, %v2947
        %v3136 = vmax.f32 %v3046, %v2950
        %v3137 = vmax.f32 %v3049, %v2953
        %v3138 = vmax.f32 %v3052, %v2956
        %v3139 = vmax.f32 %v3055, %v2959
        %v3140 = vmax.f32 %v3058, %v2962
        %v3141 = vmax.f32 %v3061, %v2965
        %v3142 = vmax.f32 %v3064, %v2968
        %v3143 = vmax.f32 %v3067, %v2971
        %v3144 = vmax.f32 %v3070, %v2974
        %v3145 = vmax.f32 %v3073, %v2977
        %v3146 = vmax.f32 %v3076, %v2980
        %v3147 = vmax.f32 %v3079, %v2983
        %v3148 = vmax.f32 %v3082, %v2986
        %v3149 = vmax.f32 %v3085, %v2989
        %v3150 = vmax.f32 %v3088, %v2992
        %v3151 = vmax.f32 %v3091, %v2995
        %v3152 = vmax.f32 %v3094, %v2998
        %v3153 = vmax.f32 %v3097, %v3001
        %v3154 = vmax.f32 %v3100, %v3004
        %v3155 = vmax.f32 %v3103, %v3007
        %v3156 = vmax.f32 %v3106, %v3010
        %v3157 = vmax.f32 %v3109, %v3013
        %v3158 = vmax.f32 %v3112, %v3016
        %v3159 = vmax.f32 %v3115, %v3019
        %v3160 = vmax.f32 %v3118, %v3022
        %v3161 = vmax.f32 %v3121, %v3025
        %v3162 = vmax.f32 %v3124, %v3028
        %v3163 = vmax.f32 %v3127, %v3031
        %v3164 = vmax.f32 %v3130, %v3034
        %v3165 = vmax.f32 %v3133, %v3037
        %v3166 = vsub.f32 %v2741, %v3134
        %v3167 = vsub.f32 %v2830, %v3134
        %v3168 = vsub.f32 %v2743, %v3135
        %v3169 = vsub.f32 %v2832, %v3135
        %v3170 = vsub.f32 %v2746, %v3136
        %v3171 = vsub.f32 %v2835, %v3136
        %v3172 = vsub.f32 %v2748, %v3137
        %v3173 = vsub.f32 %v2837, %v3137
        %v3174 = vsub.f32 %v2751, %v3138
        %v3175 = vsub.f32 %v2840, %v3138
        %v3176 = vsub.f32 %v2753, %v3139
        %v3177 = vsub.f32 %v2842, %v3139
        %v3178 = vsub.f32 %v2756, %v3140
        %v3179 = vsub.f32 %v2845, %v3140
        %v3180 = vsub.f32 %v2758, %v3141
        %v3181 = vsub.f32 %v2847, %v3141
        %v3182 = vsub.f32 %v2761, %v3142
        %v3183 = vsub.f32 %v2850, %v3142
        %v3184 = vsub.f32 %v2763, %v3143
        %v3185 = vsub.f32 %v2852, %v3143
        %v3186 = vsub.f32 %v2766, %v3144
        %v3187 = vsub.f32 %v2855, %v3144
        %v3188 = vsub.f32 %v2768, %v3145
        %v3189 = vsub.f32 %v2857, %v3145
        %v3190 = vsub.f32 %v2771, %v3146
        %v3191 = vsub.f32 %v2860, %v3146
        %v3192 = vsub.f32 %v2773, %v3147
        %v3193 = vsub.f32 %v2862, %v3147
        %v3194 = vsub.f32 %v2776, %v3148
        %v3195 = vsub.f32 %v2865, %v3148
        %v3196 = vsub.f32 %v2778, %v3149
        %v3197 = vsub.f32 %v2867, %v3149
        %v3198 = vsub.f32 %v2781, %v3150
        %v3199 = vsub.f32 %v2870, %v3150
        %v3200 = vsub.f32 %v2783, %v3151
        %v3201 = vsub.f32 %v2872, %v3151
        %v3202 = vsub.f32 %v2786, %v3152
        %v3203 = vsub.f32 %v2875, %v3152
        %v3204 = vsub.f32 %v2788, %v3153
        %v3205 = vsub.f32 %v2877, %v3153
        %v3206 = vsub.f32 %v2791, %v3154
        %v3207 = vsub.f32 %v2880, %v3154
        %v3208 = vsub.f32 %v2793, %v3155
        %v3209 = vsub.f32 %v2882, %v3155
        %v3210 = vsub.f32 %v2796, %v3156
        %v3211 = vsub.f32 %v2885, %v3156
        %v3212 = vsub.f32 %v2798, %v3157
        %v3213 = vsub.f32 %v2887, %v3157
        %v3214 = vsub.f32 %v2801, %v3158
        %v3215 = vsub.f32 %v2890, %v3158
        %v3216 = vsub.f32 %v2803, %v3159
        %v3217 = vsub.f32 %v2892, %v3159
        %v3218 = vsub.f32 %v2806, %v3160
        %v3219 = vsub.f32 %v2895, %v3160
        %v3220 = vsub.f32 %v2808, %v3161
        %v3221 = vsub.f32 %v2897, %v3161
        %v3222 = vsub.f32 %v2811, %v3162
        %v3223 = vsub.f32 %v2900, %v3162
        %v3224 = vsub.f32 %v2813, %v3163
        %v3225 = vsub.f32 %v2902, %v3163
        %v3226 = vsub.f32 %v2816, %v3164
        %v3227 = vsub.f32 %v2905, %v3164
        %v3228 = vsub.f32 %v2818, %v3165
        %v3229 = vsub.f32 %v2907, %v3165
        %v3230 = vmul.f32 %v3166, 1.442695
        %v3231 = vpow.pop %v3230
        %v3232 = vmul.f32 %v3167, 1.442695
        %v3233 = vpow.pop %v3232
        %v3234 = vmul.f32 %v3168, 1.442695
        %v3235 = vpow.pop %v3234
        %v3236 = vmul.f32 %v3169, 1.442695
        %v3237 = vpow.pop %v3236
        %v3238 = vmul.f32 %v3170, 1.442695
        %v3239 = vpow.pop %v3238
        %v3240 = vmul.f32 %v3171, 1.442695
        %v3241 = vpow.pop %v3240
        %v3242 = vmul.f32 %v3172, 1.442695
        %v3243 = vpow.pop %v3242
        %v3244 = vmul.f32 %v3173, 1.442695
        %v3245 = vpow.pop %v3244
        %v3246 = vmul.f32 %v3174, 1.442695
        %v3247 = vpow.pop %v3246
        %v3248 = vmul.f32 %v3175, 1.442695
        %v3249 = vpow.pop %v3248
        %v3250 = vmul.f32 %v3176, 1.442695
        %v3251 = vpow.pop %v3250
        %v3252 = vmul.f32 %v3177, 1.442695
        %v3253 = vpow.pop %v3252
        %v3254 = vmul.f32 %v3178, 1.442695
        %v3255 = vpow.pop %v3254
        %v3256 = vmul.f32 %v3179, 1.442695
        %v3257 = vpow.pop %v3256
        %v3258 = vmul.f32 %v3180, 1.442695
        %v3259 = vpow.pop %v3258
        %v3260 = vmul.f32 %v3181, 1.442695
        %v3261 = vpow.pop %v3260
        %v3262 = vmul.f32 %v3182, 1.442695
        %v3263 = vpow.pop %v3262
        %v3264 = vmul.f32 %v3183, 1.442695
        %v3265 = vpow.pop %v3264
        %v3266 = vmul.f32 %v3184, 1.442695
        %v3267 = vpow.pop %v3266
        %v3268 = vmul.f32 %v3185, 1.442695
        %v3269 = vpow.pop %v3268
        %v3270 = vmul.f32 %v3186, 1.442695
        %v3271 = vpow.pop %v3270
        %v3272 = vmul.f32 %v3187, 1.442695
        %v3273 = vpow.pop %v3272
        %v3274 = vmul.f32 %v3188, 1.442695
        %v3275 = vpow.pop %v3274
        %v3276 = vmul.f32 %v3189, 1.442695
        %v3277 = vpow.pop %v3276
        %v3278 = vmul.f32 %v3190, 1.442695
        %v3279 = vpow.pop %v3278
        %v3280 = vmul.f32 %v3191, 1.442695
        %v3281 = vpow.pop %v3280
        %v3282 = vmul.f32 %v3192, 1.442695
        %v3283 = vpow.pop %v3282
        %v3284 = vmul.f32 %v3193, 1.442695
        %v3285 = vpow.pop %v3284
        %v3286 = vmul.f32 %v3194, 1.442695
        %v3287 = vpow.pop %v3286
        %v3288 = vmul.f32 %v3195, 1.442695
        %v3289 = vpow.pop %v3288
        %v3290 = vmul.f32 %v3196, 1.442695
        %v3291 = vpow.pop %v3290
        %v3292 = vmul.f32 %v3197, 1.442695
        %v3293 = vpow.pop %v3292
        %v3294 = vmul.f32 %v3198, 1.442695
        %v3295 = vpow.pop %v3294
        %v3296 = vmul.f32 %v3199, 1.442695
        %v3297 = vpow.pop %v3296
        %v3298 = vmul.f32 %v3200, 1.442695
        %v3299 = vpow.pop %v3298
        %v3300 = vmul.f32 %v3201, 1.442695
        %v3301 = vpow.pop %v3300
        %v3302 = vmul.f32 %v3202, 1.442695
        %v3303 = vpow.pop %v3302
        %v3304 = vmul.f32 %v3203, 1.442695
        %v3305 = vpow.pop %v3304
        %v3306 = vmul.f32 %v3204, 1.442695
        %v3307 = vpow.pop %v3306
        %v3308 = vmul.f32 %v3205, 1.442695
        %v3309 = vpow.pop %v3308
        %v3310 = vmul.f32 %v3206, 1.442695
        %v3311 = vpow.pop %v3310
        %v3312 = vmul.f32 %v3207, 1.442695
        %v3313 = vpow.pop %v3312
        %v3314 = vmul.f32 %v3208, 1.442695
        %v3315 = vpow.pop %v3314
        %v3316 = vmul.f32 %v3209, 1.442695
        %v3317 = vpow.pop %v3316
        %v3318 = vmul.f32 %v3210, 1.442695
        %v3319 = vpow.pop %v3318
        %v3320 = vmul.f32 %v3211, 1.442695
        %v3321 = vpow.pop %v3320
        %v3322 = vmul.f32 %v3212, 1.442695
        %v3323 = vpow.pop %v3322
        %v3324 = vmul.f32 %v3213, 1.442695
        %v3325 = vpow.pop %v3324
        %v3326 = vmul.f32 %v3214, 1.442695
        %v3327 = vpow.pop %v3326
        %v3328 = vmul.f32 %v3215, 1.442695
        %v3329 = vpow.pop %v3328
        %v3330 = vmul.f32 %v3216, 1.442695
        %v3331 = vpow.pop %v3330
        %v3332 = vmul.f32 %v3217, 1.442695
        %v3333 = vpow.pop %v3332
        %v3334 = vmul.f32 %v3218, 1.442695
        %v3335 = vpow.pop %v3334
        %v3336 = vmul.f32 %v3219, 1.442695
        %v3337 = vpow.pop %v3336
        %v3338 = vmul.f32 %v3220, 1.442695
        %v3339 = vpow.pop %v3338
        %v3340 = vmul.f32 %v3221, 1.442695
        %v3341 = vpow.pop %v3340
        %v3342 = vmul.f32 %v3222, 1.442695
        %v3343 = vpow.pop %v3342
        %v3344 = vmul.f32 %v3223, 1.442695
        %v3345 = vpow.pop %v3344
        %v3346 = vmul.f32 %v3224, 1.442695
        %v3347 = vpow.pop %v3346
        %v3348 = vmul.f32 %v3225, 1.442695
        %v3349 = vpow.pop %v3348
        %v3350 = vmul.f32 %v3226, 1.442695
        %v3351 = vpow.pop %v3350
        %v3352 = vmul.f32 %v3227, 1.442695
        %v3353 = vpow.pop %v3352
        %v3354 = vmul.f32 %v3228, 1.442695
        %v3355 = vpow.pop %v3354
        %v3356 = vmul.f32 %v3229, 1.442695
        %v3357 = vpow.pop %v3356
        %v3358 = vsub.f32 %v2944, %v3134
        %v3359 = vsub.f32 %v2947, %v3135
        %v3360 = vsub.f32 %v2950, %v3136
        %v3361 = vsub.f32 %v2953, %v3137
        %v3362 = vsub.f32 %v2956, %v3138
        %v3363 = vsub.f32 %v2959, %v3139
        %v3364 = vsub.f32 %v2962, %v3140
        %v3365 = vsub.f32 %v2965, %v3141
        %v3366 = vsub.f32 %v2968, %v3142
        %v3367 = vsub.f32 %v2971, %v3143
        %v3368 = vsub.f32 %v2974, %v3144
        %v3369 = vsub.f32 %v2977, %v3145
        %v3370 = vsub.f32 %v2980, %v3146
        %v3371 = vsub.f32 %v2983, %v3147
        %v3372 = vsub.f32 %v2986, %v3148
        %v3373 = vsub.f32 %v2989, %v3149
        %v3374 = vsub.f32 %v2992, %v3150
        %v3375 = vsub.f32 %v2995, %v3151
        %v3376 = vsub.f32 %v2998, %v3152
        %v3377 = vsub.f32 %v3001, %v3153
        %v3378 = vsub.f32 %v3004, %v3154
        %v3379 = vsub.f32 %v3007, %v3155
        %v3380 = vsub.f32 %v3010, %v3156
        %v3381 = vsub.f32 %v3013, %v3157
        %v3382 = vsub.f32 %v3016, %v3158
        %v3383 = vsub.f32 %v3019, %v3159
        %v3384 = vsub.f32 %v3022, %v3160
        %v3385 = vsub.f32 %v3025, %v3161
        %v3386 = vsub.f32 %v3028, %v3162
        %v3387 = vsub.f32 %v3031, %v3163
        %v3388 = vsub.f32 %v3034, %v3164
        %v3389 = vsub.f32 %v3037, %v3165
        %v3390 = vmul.f32 %v3358, 1.442695
        %v3391 = vpow.pop %v3390
        %v3392 = vmul.f32 %v3359, 1.442695
        %v3393 = vpow.pop %v3392
        %v3394 = vmul.f32 %v3360, 1.442695
        %v3395 = vpow.pop %v3394
        %v3396 = vmul.f32 %v3361, 1.442695
        %v3397 = vpow.pop %v3396
        %v3398 = vmul.f32 %v3362, 1.442695
        %v3399 = vpow.pop %v3398
        %v3400 = vmul.f32 %v3363, 1.442695
        %v3401 = vpow.pop %v3400
        %v3402 = vmul.f32 %v3364, 1.442695
        %v3403 = vpow.pop %v3402
        %v3404 = vmul.f32 %v3365, 1.442695
        %v3405 = vpow.pop %v3404
        %v3406 = vmul.f32 %v3366, 1.442695
        %v3407 = vpow.pop %v3406
        %v3408 = vmul.f32 %v3367, 1.442695
        %v3409 = vpow.pop %v3408
        %v3410 = vmul.f32 %v3368, 1.442695
        %v3411 = vpow.pop %v3410
        %v3412 = vmul.f32 %v3369, 1.442695
        %v3413 = vpow.pop %v3412
        %v3414 = vmul.f32 %v3370, 1.442695
        %v3415 = vpow.pop %v3414
        %v3416 = vmul.f32 %v3371, 1.442695
        %v3417 = vpow.pop %v3416
        %v3418 = vmul.f32 %v3372, 1.442695
        %v3419 = vpow.pop %v3418
        %v3420 = vmul.f32 %v3373, 1.442695
        %v3421 = vpow.pop %v3420
        %v3422 = vmul.f32 %v3374, 1.442695
        %v3423 = vpow.pop %v3422
        %v3424 = vmul.f32 %v3375, 1.442695
        %v3425 = vpow.pop %v3424
        %v3426 = vmul.f32 %v3376, 1.442695
        %v3427 = vpow.pop %v3426
        %v3428 = vmul.f32 %v3377, 1.442695
        %v3429 = vpow.pop %v3428
        %v3430 = vmul.f32 %v3378, 1.442695
        %v3431 = vpow.pop %v3430
        %v3432 = vmul.f32 %v3379, 1.442695
        %v3433 = vpow.pop %v3432
        %v3434 = vmul.f32 %v3380, 1.442695
        %v3435 = vpow.pop %v3434
        %v3436 = vmul.f32 %v3381, 1.442695
        %v3437 = vpow.pop %v3436
        %v3438 = vmul.f32 %v3382, 1.442695
        %v3439 = vpow.pop %v3438
        %v3440 = vmul.f32 %v3383, 1.442695
        %v3441 = vpow.pop %v3440
        %v3442 = vmul.f32 %v3384, 1.442695
        %v3443 = vpow.pop %v3442
        %v3444 = vmul.f32 %v3385, 1.442695
        %v3445 = vpow.pop %v3444
        %v3446 = vmul.f32 %v3386, 1.442695
        %v3447 = vpow.pop %v3446
        %v3448 = vmul.f32 %v3387, 1.442695
        %v3449 = vpow.pop %v3448
        %v3450 = vmul.f32 %v3388, 1.442695
        %v3451 = vpow.pop %v3450
        %v3452 = vmul.f32 %v3389, 1.442695
        %v3453 = vpow.pop %v3452
        %v3454 = vadd.f32 %v3231, %v3233
        %3455 = vadd.xlane.f32.xlu0 %v3454
        %v3456 = vpop.xlane.xlu0 %3455
        %v3457 = vadd.f32 %v3235, %v3237
        %3458 = vadd.xlane.f32.xlu0 %v3457
        %v3459 = vpop.xlane.xlu0 %3458
        %v3460 = vadd.f32 %v3239, %v3241
        %3461 = vadd.xlane.f32.xlu0 %v3460
        %v3462 = vpop.xlane.xlu0 %3461
        %v3463 = vadd.f32 %v3243, %v3245
        %3464 = vadd.xlane.f32.xlu0 %v3463
        %v3465 = vpop.xlane.xlu0 %3464
        %v3466 = vadd.f32 %v3247, %v3249
        %3467 = vadd.xlane.f32.xlu0 %v3466
        %v3468 = vpop.xlane.xlu0 %3467
        %v3469 = vadd.f32 %v3251, %v3253
        %3470 = vadd.xlane.f32.xlu0 %v3469
        %v3471 = vpop.xlane.xlu0 %3470
        %v3472 = vadd.f32 %v3255, %v3257
        %3473 = vadd.xlane.f32.xlu0 %v3472
        %v3474 = vpop.xlane.xlu0 %3473
        %v3475 = vadd.f32 %v3259, %v3261
        %3476 = vadd.xlane.f32.xlu0 %v3475
        %v3477 = vpop.xlane.xlu0 %3476
        %v3478 = vadd.f32 %v3263, %v3265
        %3479 = vadd.xlane.f32.xlu0 %v3478
        %v3480 = vpop.xlane.xlu0 %3479
        %v3481 = vadd.f32 %v3267, %v3269
        %3482 = vadd.xlane.f32.xlu0 %v3481
        %v3483 = vpop.xlane.xlu0 %3482
        %v3484 = vadd.f32 %v3271, %v3273
        %3485 = vadd.xlane.f32.xlu0 %v3484
        %v3486 = vpop.xlane.xlu0 %3485
        %v3487 = vadd.f32 %v3275, %v3277
        %3488 = vadd.xlane.f32.xlu0 %v3487
        %v3489 = vpop.xlane.xlu0 %3488
        %v3490 = vadd.f32 %v3279, %v3281
        %3491 = vadd.xlane.f32.xlu0 %v3490
        %v3492 = vpop.xlane.xlu0 %3491
        %v3493 = vadd.f32 %v3283, %v3285
        %3494 = vadd.xlane.f32.xlu0 %v3493
        %v3495 = vpop.xlane.xlu0 %3494
        %v3496 = vadd.f32 %v3287, %v3289
        %3497 = vadd.xlane.f32.xlu0 %v3496
        %v3498 = vpop.xlane.xlu0 %3497
        %v3499 = vadd.f32 %v3291, %v3293
        %3500 = vadd.xlane.f32.xlu0 %v3499
        %v3501 = vpop.xlane.xlu0 %3500
        %v3502 = vadd.f32 %v3295, %v3297
        %3503 = vadd.xlane.f32.xlu0 %v3502
        %v3504 = vpop.xlane.xlu0 %3503
        %v3505 = vadd.f32 %v3299, %v3301
        %3506 = vadd.xlane.f32.xlu0 %v3505
        %v3507 = vpop.xlane.xlu0 %3506
        %v3508 = vadd.f32 %v3303, %v3305
        %3509 = vadd.xlane.f32.xlu0 %v3508
        %v3510 = vpop.xlane.xlu0 %3509
        %v3511 = vadd.f32 %v3307, %v3309
        %3512 = vadd.xlane.f32.xlu0 %v3511
        %v3513 = vpop.xlane.xlu0 %3512
        %v3514 = vadd.f32 %v3311, %v3313
        %3515 = vadd.xlane.f32.xlu0 %v3514
        %v3516 = vpop.xlane.xlu0 %3515
        %v3517 = vadd.f32 %v3315, %v3317
        %3518 = vadd.xlane.f32.xlu0 %v3517
        %v3519 = vpop.xlane.xlu0 %3518
        %v3520 = vadd.f32 %v3319, %v3321
        %3521 = vadd.xlane.f32.xlu0 %v3520
        %v3522 = vpop.xlane.xlu0 %3521
        %v3523 = vadd.f32 %v3323, %v3325
        %3524 = vadd.xlane.f32.xlu0 %v3523
        %v3525 = vpop.xlane.xlu0 %3524
        %v3526 = vadd.f32 %v3327, %v3329
        %3527 = vadd.xlane.f32.xlu0 %v3526
        %v3528 = vpop.xlane.xlu0 %3527
        %v3529 = vadd.f32 %v3331, %v3333
        %3530 = vadd.xlane.f32.xlu0 %v3529
        %v3531 = vpop.xlane.xlu0 %3530
        %v3532 = vadd.f32 %v3335, %v3337
        %3533 = vadd.xlane.f32.xlu0 %v3532
        %v3534 = vpop.xlane.xlu0 %3533
        %v3535 = vadd.f32 %v3339, %v3341
        %3536 = vadd.xlane.f32.xlu0 %v3535
        %v3537 = vpop.xlane.xlu0 %3536
        %v3538 = vadd.f32 %v3343, %v3345
        %3539 = vadd.xlane.f32.xlu0 %v3538
        %v3540 = vpop.xlane.xlu0 %3539
        %v3541 = vadd.f32 %v3347, %v3349
        %3542 = vadd.xlane.f32.xlu0 %v3541
        %v3543 = vpop.xlane.xlu0 %3542
        %v3544 = vadd.f32 %v3351, %v3353
        %3545 = vadd.xlane.f32.xlu0 %v3544
        %v3546 = vpop.xlane.xlu0 %3545
        %v3547 = vadd.f32 %v3355, %v3357
        %3548 = vadd.xlane.f32.xlu0 %v3547
        %v3549 = vpop.xlane.xlu0 %3548
        %v3550 = vadd.f32 %v3456, %v3391
        %v3551 = vadd.f32 %v3459, %v3393
        %v3552 = vadd.f32 %v3462, %v3395
        %v3553 = vadd.f32 %v3465, %v3397
        %v3554 = vadd.f32 %v3468, %v3399
        %v3555 = vadd.f32 %v3471, %v3401
        %v3556 = vadd.f32 %v3474, %v3403
        %v3557 = vadd.f32 %v3477, %v3405
        %v3558 = vadd.f32 %v3480, %v3407
        %v3559 = vadd.f32 %v3483, %v3409
        %v3560 = vadd.f32 %v3486, %v3411
        %v3561 = vadd.f32 %v3489, %v3413
        %v3562 = vadd.f32 %v3492, %v3415
        %v3563 = vadd.f32 %v3495, %v3417
        %v3564 = vadd.f32 %v3498, %v3419
        %v3565 = vadd.f32 %v3501, %v3421
        %v3566 = vadd.f32 %v3504, %v3423
        %v3567 = vadd.f32 %v3507, %v3425
        %v3568 = vadd.f32 %v3510, %v3427
        %v3569 = vadd.f32 %v3513, %v3429
        %v3570 = vadd.f32 %v3516, %v3431
        %v3571 = vadd.f32 %v3519, %v3433
        %v3572 = vadd.f32 %v3522, %v3435
        %v3573 = vadd.f32 %v3525, %v3437
        %v3574 = vadd.f32 %v3528, %v3439
        %v3575 = vadd.f32 %v3531, %v3441
        %v3576 = vadd.f32 %v3534, %v3443
        %v3577 = vadd.f32 %v3537, %v3445
        %v3578 = vadd.f32 %v3540, %v3447
        %v3579 = vadd.f32 %v3543, %v3449
        %v3580 = vadd.f32 %v3546, %v3451
        %v3581 = vadd.f32 %v3549, %v3453
        %v3582 = vrcp.pop %v3550
        %v3583 = vrcp.pop %v3551
        %v3584 = vrcp.pop %v3552
        %v3585 = vrcp.pop %v3553
        %v3586 = vrcp.pop %v3554
        %v3587 = vrcp.pop %v3555
        %v3588 = vrcp.pop %v3556
        %v3589 = vrcp.pop %v3557
        %v3590 = vrcp.pop %v3558
        %v3591 = vrcp.pop %v3559
        %v3592 = vrcp.pop %v3560
        %v3593 = vrcp.pop %v3561
        %v3594 = vrcp.pop %v3562
        %v3595 = vrcp.pop %v3563
        %v3596 = vrcp.pop %v3564
        %v3597 = vrcp.pop %v3565
        %v3598 = vrcp.pop %v3566
        %v3599 = vrcp.pop %v3567
        %v3600 = vrcp.pop %v3568
        %v3601 = vrcp.pop %v3569
        %v3602 = vrcp.pop %v3570
        %v3603 = vrcp.pop %v3571
        %v3604 = vrcp.pop %v3572
        %v3605 = vrcp.pop %v3573
        %v3606 = vrcp.pop %v3574
        %v3607 = vrcp.pop %v3575
        %v3608 = vrcp.pop %v3576
        %v3609 = vrcp.pop %v3577
        %v3610 = vrcp.pop %v3578
        %v3611 = vrcp.pop %v3579
        %v3612 = vrcp.pop %v3580
        %v3613 = vrcp.pop %v3581
        %v3614 = vpack.c.bf16 %v3235, %v3231
        %v3615 = vpack.c.bf16 %v3237, %v3233
        %v3616 = vpack.c.bf16 %v3243, %v3239
        %v3617 = vpack.c.bf16 %v3245, %v3241
        %v3618 = vpack.c.bf16 %v3251, %v3247
        %v3619 = vpack.c.bf16 %v3253, %v3249
        %v3620 = vpack.c.bf16 %v3259, %v3255
        %v3621 = vpack.c.bf16 %v3261, %v3257
        %v3622 = vpack.c.bf16 %v3267, %v3263
        %v3623 = vpack.c.bf16 %v3269, %v3265
        %v3624 = vpack.c.bf16 %v3275, %v3271
        %v3625 = vpack.c.bf16 %v3277, %v3273
        %v3626 = vpack.c.bf16 %v3283, %v3279
        %v3627 = vpack.c.bf16 %v3285, %v3281
        %v3628 = vpack.c.bf16 %v3291, %v3287
        %v3629 = vpack.c.bf16 %v3293, %v3289
        %v3630 = vpack.c.bf16 %v3299, %v3295
        %v3631 = vpack.c.bf16 %v3301, %v3297
        %v3632 = vpack.c.bf16 %v3307, %v3303
        %v3633 = vpack.c.bf16 %v3309, %v3305
        %v3634 = vpack.c.bf16 %v3315, %v3311
        %v3635 = vpack.c.bf16 %v3317, %v3313
        %v3636 = vpack.c.bf16 %v3323, %v3319
        %v3637 = vpack.c.bf16 %v3325, %v3321
        %v3638 = vpack.c.bf16 %v3331, %v3327
        %v3639 = vpack.c.bf16 %v3333, %v3329
        %v3640 = vpack.c.bf16 %v3339, %v3335
        %v3641 = vpack.c.bf16 %v3341, %v3337
        %v3642 = vpack.c.bf16 %v3347, %v3343
        %v3643 = vpack.c.bf16 %v3349, %v3345
        %v3644 = vpack.c.bf16 %v3355, %v3351
        %v3645 = vpack.c.bf16 %v3357, %v3353
        %v3646 = vperm.slane %v2375, 0
        %v3647 = vmul.f32 %v3391, %v3646
        %v3648 = vmul.f32 %v3393, %v3646
        %v3649 = vmul.f32 %v3395, %v3646
        %v3650 = vmul.f32 %v3397, %v3646
        %v3651 = vmul.f32 %v3399, %v3646
        %v3652 = vmul.f32 %v3401, %v3646
        %v3653 = vmul.f32 %v3403, %v3646
        %v3654 = vmul.f32 %v3405, %v3646
        %v3655 = vmul.f32 %v3407, %v3646
        %v3656 = vmul.f32 %v3409, %v3646
        %v3657 = vmul.f32 %v3411, %v3646
        %v3658 = vmul.f32 %v3413, %v3646
        %v3659 = vmul.f32 %v3415, %v3646
        %v3660 = vmul.f32 %v3417, %v3646
        %v3661 = vmul.f32 %v3419, %v3646
        %v3662 = vmul.f32 %v3421, %v3646
        %v3663 = vmul.f32 %v3423, %v3646
        %v3664 = vmul.f32 %v3425, %v3646
        %v3665 = vmul.f32 %v3427, %v3646
        %v3666 = vmul.f32 %v3429, %v3646
        %v3667 = vmul.f32 %v3431, %v3646
        %v3668 = vmul.f32 %v3433, %v3646
        %v3669 = vmul.f32 %v3435, %v3646
        %v3670 = vmul.f32 %v3437, %v3646
        %v3671 = vmul.f32 %v3439, %v3646
        %v3672 = vmul.f32 %v3441, %v3646
        %v3673 = vmul.f32 %v3443, %v3646
        %v3674 = vmul.f32 %v3445, %v3646
        %v3675 = vmul.f32 %v3447, %v3646
        %v3676 = vmul.f32 %v3449, %v3646
        %v3677 = vmul.f32 %v3451, %v3646
        %v3678 = vmul.f32 %v3453, %v3646
        %v3711 = vunpack.c.l.b16 %v2442
        %v3712 = vunpack.c.l.b16 %v2443
        %v3713 = vunpack.c.l.b16 %v2444
        %v3714 = vunpack.c.l.b16 %v2445
        %v3715 = vunpack.c.l.b16 %v2446
        %v3716 = vunpack.c.l.b16 %v2447
        %v3717 = vunpack.c.l.b16 %v2448
        %v3718 = vunpack.c.l.b16 %v2449
        %v3719 = vunpack.c.l.b16 %v2450
        %v3720 = vunpack.c.l.b16 %v2451
        %v3721 = vunpack.c.l.b16 %v2452
        %v3722 = vunpack.c.l.b16 %v2453
        %v3723 = vunpack.c.l.b16 %v2454
        %v3724 = vunpack.c.l.b16 %v2455
        %v3725 = vunpack.c.l.b16 %v2456
        %v3726 = vunpack.c.l.b16 %v2457
        %v3727 = vunpack.c.l.b16 %v2458
        %v3728 = vunpack.c.l.b16 %v2459
        %v3729 = vunpack.c.l.b16 %v2460
        %v3730 = vunpack.c.l.b16 %v2461
        %v3731 = vunpack.c.l.b16 %v2462
        %v3732 = vunpack.c.l.b16 %v2463
        %v3733 = vunpack.c.l.b16 %v2464
        %v3734 = vunpack.c.l.b16 %v2465
        %v3735 = vunpack.c.l.b16 %v2466
        %v3736 = vunpack.c.l.b16 %v2467
        %v3737 = vunpack.c.l.b16 %v2468
        %v3738 = vunpack.c.l.b16 %v2469
        %v3739 = vunpack.c.l.b16 %v2470
        %v3740 = vunpack.c.l.b16 %v2471
        %v3741 = vunpack.c.l.b16 %v2472
        %v3742 = vunpack.c.l.b16 %v2473
        %v3743 = vpack.c.b16 %v3712, %v3711
        %v3744 = vpack.c.b16 %v3714, %v3713
        %v3745 = vpack.c.b16 %v3716, %v3715
        %v3746 = vpack.c.b16 %v3718, %v3717
        %v3747 = vpack.c.b16 %v3720, %v3719
        %v3748 = vpack.c.b16 %v3722, %v3721
        %v3749 = vpack.c.b16 %v3724, %v3723
        %v3750 = vpack.c.b16 %v3726, %v3725
        %v3751 = vpack.c.b16 %v3728, %v3727
        %v3752 = vpack.c.b16 %v3730, %v3729
        %v3753 = vpack.c.b16 %v3732, %v3731
        %v3754 = vpack.c.b16 %v3734, %v3733
        %v3755 = vpack.c.b16 %v3736, %v3735
        %v3756 = vpack.c.b16 %v3738, %v3737
        %v3757 = vpack.c.b16 %v3740, %v3739
        %v3758 = vpack.c.b16 %v3742, %v3741
        %3775 = vmatpush.bf16.msra.mxu0 %v3750
        %3776 = vmatpush.bf16.msra.mxu0 %v3749
        %3777 = vmatpush.bf16.msra.mxu0 %v3748
        %3778 = vmatpush.bf16.msra.mxu0 %v3747
        %3779 = vmatpush.bf16.msra.mxu0 %v3746
        %3780 = vmatpush.bf16.msra.mxu0 %v3745
        %3781 = vmatpush.bf16.msra.mxu0 %v3744
        %3782 = vmatpush.bf16.msra.mxu0 %v3743
        %3783 = vmatmul.bf16.gmra.mxu0 %v3614
        %v3784 = vpop.f32.mrf.mxu0
        %v3785 = vadd.f32 %v3647, %v3784
        %v3786 = vpop.f32.mrf.mxu0
        %v3787 = vadd.f32 %v3648, %v3786
        %3788 = vmatmul.bf16.gmra.mxu0 %v3616
        %v3789 = vpop.f32.mrf.mxu0
        %v3790 = vadd.f32 %v3649, %v3789
        %v3791 = vpop.f32.mrf.mxu0
        %v3792 = vadd.f32 %v3650, %v3791
        %3793 = vmatmul.bf16.gmra.mxu0 %v3618
        %v3794 = vpop.f32.mrf.mxu0
        %v3795 = vadd.f32 %v3651, %v3794
        %v3796 = vpop.f32.mrf.mxu0
        %v3797 = vadd.f32 %v3652, %v3796
        %3798 = vmatmul.bf16.gmra.mxu0 %v3620
        %v3799 = vpop.f32.mrf.mxu0
        %v3800 = vadd.f32 %v3653, %v3799
        %v3801 = vpop.f32.mrf.mxu0
        %v3802 = vadd.f32 %v3654, %v3801
        %3803 = vmatmul.bf16.gmra.mxu0 %v3622
        %v3804 = vpop.f32.mrf.mxu0
        %v3805 = vadd.f32 %v3655, %v3804
        %v3806 = vpop.f32.mrf.mxu0
        %v3807 = vadd.f32 %v3656, %v3806
        %3808 = vmatmul.bf16.gmra.mxu0 %v3624
        %v3809 = vpop.f32.mrf.mxu0
        %v3810 = vadd.f32 %v3657, %v3809
        %v3811 = vpop.f32.mrf.mxu0
        %v3812 = vadd.f32 %v3658, %v3811
        %3813 = vmatmul.bf16.gmra.mxu0 %v3626
        %v3814 = vpop.f32.mrf.mxu0
        %v3815 = vadd.f32 %v3659, %v3814
        %v3816 = vpop.f32.mrf.mxu0
        %v3817 = vadd.f32 %v3660, %v3816
        %3818 = vmatmul.bf16.gmra.mxu0 %v3628
        %v3819 = vpop.f32.mrf.mxu0
        %v3820 = vadd.f32 %v3661, %v3819
        %v3821 = vpop.f32.mrf.mxu0
        %v3822 = vadd.f32 %v3662, %v3821
        %3823 = vmatmul.bf16.gmra.mxu0 %v3630
        %v3824 = vpop.f32.mrf.mxu0
        %v3825 = vadd.f32 %v3663, %v3824
        %v3826 = vpop.f32.mrf.mxu0
        %v3827 = vadd.f32 %v3664, %v3826
        %3828 = vmatmul.bf16.gmra.mxu0 %v3632
        %v3829 = vpop.f32.mrf.mxu0
        %v3830 = vadd.f32 %v3665, %v3829
        %v3831 = vpop.f32.mrf.mxu0
        %v3832 = vadd.f32 %v3666, %v3831
        %3833 = vmatmul.bf16.gmra.mxu0 %v3634
        %v3834 = vpop.f32.mrf.mxu0
        %v3835 = vadd.f32 %v3667, %v3834
        %v3836 = vpop.f32.mrf.mxu0
        %v3837 = vadd.f32 %v3668, %v3836
        %3838 = vmatmul.bf16.gmra.mxu0 %v3636
        %v3839 = vpop.f32.mrf.mxu0
        %v3840 = vadd.f32 %v3669, %v3839
        %v3841 = vpop.f32.mrf.mxu0
        %v3842 = vadd.f32 %v3670, %v3841
        %3843 = vmatmul.bf16.gmra.mxu0 %v3638
        %v3844 = vpop.f32.mrf.mxu0
        %v3845 = vadd.f32 %v3671, %v3844
        %v3846 = vpop.f32.mrf.mxu0
        %v3847 = vadd.f32 %v3672, %v3846
        %3848 = vmatmul.bf16.gmra.mxu0 %v3640
        %v3849 = vpop.f32.mrf.mxu0
        %v3850 = vadd.f32 %v3673, %v3849
        %v3851 = vpop.f32.mrf.mxu0
        %v3852 = vadd.f32 %v3674, %v3851
        %3853 = vmatmul.bf16.gmra.mxu0 %v3642
        %v3854 = vpop.f32.mrf.mxu0
        %v3855 = vadd.f32 %v3675, %v3854
        %v3856 = vpop.f32.mrf.mxu0
        %v3857 = vadd.f32 %v3676, %v3856
        %3858 = vmatmul.bf16.gmra.mxu0 %v3644
        %v3859 = vpop.f32.mrf.mxu0
        %v3860 = vadd.f32 %v3677, %v3859
        %v3861 = vpop.f32.mrf.mxu0
        %v3862 = vadd.f32 %v3678, %v3861
        %3863 = vdwg.mxu0
        %3864 = vmatpush.bf16.msra.mxu0 %v3758
        %3865 = vmatpush.bf16.msra.mxu0 %v3757
        %3866 = vmatpush.bf16.msra.mxu0 %v3756
        %3867 = vmatpush.bf16.msra.mxu0 %v3755
        %3868 = vmatpush.bf16.msra.mxu0 %v3754
        %3869 = vmatpush.bf16.msra.mxu0 %v3753
        %3870 = vmatpush.bf16.msra.mxu0 %v3752
        %3871 = vmatpush.bf16.msra.mxu0 %v3751
        %3872 = vmatmul.bf16.gmra.mxu0 %v3615
        %v3873 = vpop.f32.mrf.mxu0
        %v3874 = vadd.f32 %v3785, %v3873
        %v3875 = vpop.f32.mrf.mxu0
        %v3876 = vadd.f32 %v3787, %v3875
        %3877 = vmatmul.bf16.gmra.mxu0 %v3617
        %v3878 = vpop.f32.mrf.mxu0
        %v3879 = vadd.f32 %v3790, %v3878
        %v3880 = vpop.f32.mrf.mxu0
        %v3881 = vadd.f32 %v3792, %v3880
        %3882 = vmatmul.bf16.gmra.mxu0 %v3619
        %v3883 = vpop.f32.mrf.mxu0
        %v3884 = vadd.f32 %v3795, %v3883
        %v3885 = vpop.f32.mrf.mxu0
        %v3886 = vadd.f32 %v3797, %v3885
        %3887 = vmatmul.bf16.gmra.mxu0 %v3621
        %v3888 = vpop.f32.mrf.mxu0
        %v3889 = vadd.f32 %v3800, %v3888
        %v3890 = vpop.f32.mrf.mxu0
        %v3891 = vadd.f32 %v3802, %v3890
        %3892 = vmatmul.bf16.gmra.mxu0 %v3623
        %v3893 = vpop.f32.mrf.mxu0
        %v3894 = vadd.f32 %v3805, %v3893
        %v3895 = vpop.f32.mrf.mxu0
        %v3896 = vadd.f32 %v3807, %v3895
        %3897 = vmatmul.bf16.gmra.mxu0 %v3625
        %v3898 = vpop.f32.mrf.mxu0
        %v3899 = vadd.f32 %v3810, %v3898
        %v3900 = vpop.f32.mrf.mxu0
        %v3901 = vadd.f32 %v3812, %v3900
        %3902 = vmatmul.bf16.gmra.mxu0 %v3627
        %v3903 = vpop.f32.mrf.mxu0
        %v3904 = vadd.f32 %v3815, %v3903
        %v3905 = vpop.f32.mrf.mxu0
        %v3906 = vadd.f32 %v3817, %v3905
        %3907 = vmatmul.bf16.gmra.mxu0 %v3629
        %v3908 = vpop.f32.mrf.mxu0
        %v3909 = vadd.f32 %v3820, %v3908
        %v3910 = vpop.f32.mrf.mxu0
        %v3911 = vadd.f32 %v3822, %v3910
        %3912 = vmatmul.bf16.gmra.mxu0 %v3631
        %v3913 = vpop.f32.mrf.mxu0
        %v3914 = vadd.f32 %v3825, %v3913
        %v3915 = vpop.f32.mrf.mxu0
        %v3916 = vadd.f32 %v3827, %v3915
        %3917 = vmatmul.bf16.gmra.mxu0 %v3633
        %v3918 = vpop.f32.mrf.mxu0
        %v3919 = vadd.f32 %v3830, %v3918
        %v3920 = vpop.f32.mrf.mxu0
        %v3921 = vadd.f32 %v3832, %v3920
        %3922 = vmatmul.bf16.gmra.mxu0 %v3635
        %v3923 = vpop.f32.mrf.mxu0
        %v3924 = vadd.f32 %v3835, %v3923
        %v3925 = vpop.f32.mrf.mxu0
        %v3926 = vadd.f32 %v3837, %v3925
        %3927 = vmatmul.bf16.gmra.mxu0 %v3637
        %v3928 = vpop.f32.mrf.mxu0
        %v3929 = vadd.f32 %v3840, %v3928
        %v3930 = vpop.f32.mrf.mxu0
        %v3931 = vadd.f32 %v3842, %v3930
        %3932 = vmatmul.bf16.gmra.mxu0 %v3639
        %v3933 = vpop.f32.mrf.mxu0
        %v3934 = vadd.f32 %v3845, %v3933
        %v3935 = vpop.f32.mrf.mxu0
        %v3936 = vadd.f32 %v3847, %v3935
        %3937 = vmatmul.bf16.gmra.mxu0 %v3641
        %v3938 = vpop.f32.mrf.mxu0
        %v3939 = vadd.f32 %v3850, %v3938
        %v3940 = vpop.f32.mrf.mxu0
        %v3941 = vadd.f32 %v3852, %v3940
        %3942 = vmatmul.bf16.gmra.mxu0 %v3643
        %v3943 = vpop.f32.mrf.mxu0
        %v3944 = vadd.f32 %v3855, %v3943
        %v3945 = vpop.f32.mrf.mxu0
        %v3946 = vadd.f32 %v3857, %v3945
        %3947 = vmatmul.bf16.gmra.mxu0 %v3645
        %v3948 = vpop.f32.mrf.mxu0
        %v3949 = vadd.f32 %v3860, %v3948
        %v3950 = vpop.f32.mrf.mxu0
        %v3951 = vadd.f32 %v3862, %v3950
        %3952 = vdwg.mxu0
        %v3953 = vmul.f32 %v3874, %v3582
        %v3954 = vmul.f32 %v3876, %v3583
        %v3955 = vmul.f32 %v3879, %v3584
        %v3956 = vmul.f32 %v3881, %v3585
        %v3957 = vmul.f32 %v3884, %v3586
        %v3958 = vmul.f32 %v3886, %v3587
        %v3959 = vmul.f32 %v3889, %v3588
        %v3960 = vmul.f32 %v3891, %v3589
        %v3961 = vmul.f32 %v3894, %v3590
        %v3962 = vmul.f32 %v3896, %v3591
        %v3963 = vmul.f32 %v3899, %v3592
        %v3964 = vmul.f32 %v3901, %v3593
        %v3965 = vmul.f32 %v3904, %v3594
        %v3966 = vmul.f32 %v3906, %v3595
        %v3967 = vmul.f32 %v3909, %v3596
        %v3968 = vmul.f32 %v3911, %v3597
        %v3969 = vmul.f32 %v3914, %v3598
        %v3970 = vmul.f32 %v3916, %v3599
        %v3971 = vmul.f32 %v3919, %v3600
        %v3972 = vmul.f32 %v3921, %v3601
        %v3973 = vmul.f32 %v3924, %v3602
        %v3974 = vmul.f32 %v3926, %v3603
        %v3975 = vmul.f32 %v3929, %v3604
        %v3976 = vmul.f32 %v3931, %v3605
        %v3977 = vmul.f32 %v3934, %v3606
        %v3978 = vmul.f32 %v3936, %v3607
        %v3979 = vmul.f32 %v3939, %v3608
        %v3980 = vmul.f32 %v3941, %v3609
        %v3981 = vmul.f32 %v3944, %v3610
        %v3982 = vmul.f32 %v3946, %v3611
        %v3983 = vmul.f32 %v3949, %v3612
        %v3984 = vmul.f32 %v3951, %v3613
        %v3985 = vperm.slane %v2349, 0
        %v3986 = vmul.f32 %v3985, %v2156
        %v3987 = vmul.f32 %v3985, %v2158
        %v3988 = vmul.f32 %v3985, %v2161
        %v3989 = vmul.f32 %v3985, %v2163
        %v3990 = vmul.f32 %v3985, %v2166
        %v3991 = vmul.f32 %v3985, %v2168
        %v3992 = vmul.f32 %v3985, %v2171
        %v3993 = vmul.f32 %v3985, %v2173
        %v3994 = vmul.f32 %v3985, %v2176
        %v3995 = vmul.f32 %v3985, %v2178
        %v3996 = vmul.f32 %v3985, %v2181
        %v3997 = vmul.f32 %v3985, %v2183
        %v3998 = vmul.f32 %v3985, %v2186
        %v3999 = vmul.f32 %v3985, %v2188
        %v4000 = vmul.f32 %v3985, %v2191
        %v4001 = vmul.f32 %v3985, %v2193
        %v4002 = vmul.f32 %v3985, %v2196
        %v4003 = vmul.f32 %v3985, %v2198
        %v4004 = vmul.f32 %v3985, %v2201
        %v4005 = vmul.f32 %v3985, %v2203
        %v4006 = vmul.f32 %v3985, %v2206
        %v4007 = vmul.f32 %v3985, %v2208
        %v4008 = vmul.f32 %v3985, %v2211
        %v4009 = vmul.f32 %v3985, %v2213
        %v4010 = vmul.f32 %v3985, %v2216
        %v4011 = vmul.f32 %v3985, %v2218
        %v4012 = vmul.f32 %v3985, %v2221
        %v4013 = vmul.f32 %v3985, %v2223
        %v4014 = vmul.f32 %v3985, %v2226
        %v4015 = vmul.f32 %v3985, %v2228
        %v4016 = vmul.f32 %v3985, %v2231
        %v4017 = vmul.f32 %v3985, %v2233
        %v4018 = vsel %vm2634, %v3986, 0.0
        %4019 = vadd.xlane.f32.xlu0 %v4018
        %v4020 = vpop.xlane.xlu0 %4019
        %v4021 = vsel %vm2634, %v3987, 0.0
        %4022 = vadd.xlane.f32.xlu0 %v4021
        %v4023 = vpop.xlane.xlu0 %4022
        %v4024 = vsel %vm2634, %v3988, 0.0
        %4025 = vadd.xlane.f32.xlu0 %v4024
        %v4026 = vpop.xlane.xlu0 %4025
        %v4027 = vsel %vm2634, %v3989, 0.0
        %4028 = vadd.xlane.f32.xlu0 %v4027
        %v4029 = vpop.xlane.xlu0 %4028
        %v4030 = vsel %vm2634, %v3990, 0.0
        %4031 = vadd.xlane.f32.xlu0 %v4030
        %v4032 = vpop.xlane.xlu0 %4031
        %v4033 = vsel %vm2634, %v3991, 0.0
        %4034 = vadd.xlane.f32.xlu0 %v4033
        %v4035 = vpop.xlane.xlu0 %4034
        %v4036 = vsel %vm2634, %v3992, 0.0
        %4037 = vadd.xlane.f32.xlu0 %v4036
        %v4038 = vpop.xlane.xlu0 %4037
        %v4039 = vsel %vm2634, %v3993, 0.0
        %4040 = vadd.xlane.f32.xlu0 %v4039
        %v4041 = vpop.xlane.xlu0 %4040
        %v4042 = vsel %vm2634, %v3994, 0.0
        %4043 = vadd.xlane.f32.xlu0 %v4042
        %v4044 = vpop.xlane.xlu0 %4043
        %v4045 = vsel %vm2634, %v3995, 0.0
        %4046 = vadd.xlane.f32.xlu0 %v4045
        %v4047 = vpop.xlane.xlu0 %4046
        %v4048 = vsel %vm2634, %v3996, 0.0
        %4049 = vadd.xlane.f32.xlu0 %v4048
        %v4050 = vpop.xlane.xlu0 %4049
        %v4051 = vsel %vm2634, %v3997, 0.0
        %4052 = vadd.xlane.f32.xlu0 %v4051
        %v4053 = vpop.xlane.xlu0 %4052
        %v4054 = vsel %vm2634, %v3998, 0.0
        %4055 = vadd.xlane.f32.xlu0 %v4054
        %v4056 = vpop.xlane.xlu0 %4055
        %v4057 = vsel %vm2634, %v3999, 0.0
        %4058 = vadd.xlane.f32.xlu0 %v4057
        %v4059 = vpop.xlane.xlu0 %4058
        %v4060 = vsel %vm2634, %v4000, 0.0
        %4061 = vadd.xlane.f32.xlu0 %v4060
        %v4062 = vpop.xlane.xlu0 %4061
        %v4063 = vsel %vm2634, %v4001, 0.0
        %4064 = vadd.xlane.f32.xlu0 %v4063
        %v4065 = vpop.xlane.xlu0 %4064
        %v4066 = vsel %vm2634, %v4002, 0.0
        %4067 = vadd.xlane.f32.xlu0 %v4066
        %v4068 = vpop.xlane.xlu0 %4067
        %v4069 = vsel %vm2634, %v4003, 0.0
        %4070 = vadd.xlane.f32.xlu0 %v4069
        %v4071 = vpop.xlane.xlu0 %4070
        %v4072 = vsel %vm2634, %v4004, 0.0
        %4073 = vadd.xlane.f32.xlu0 %v4072
        %v4074 = vpop.xlane.xlu0 %4073
        %v4075 = vsel %vm2634, %v4005, 0.0
        %4076 = vadd.xlane.f32.xlu0 %v4075
        %v4077 = vpop.xlane.xlu0 %4076
        %v4078 = vsel %vm2634, %v4006, 0.0
        %4079 = vadd.xlane.f32.xlu0 %v4078
        %v4080 = vpop.xlane.xlu0 %4079
        %v4081 = vsel %vm2634, %v4007, 0.0
        %4082 = vadd.xlane.f32.xlu0 %v4081
        %v4083 = vpop.xlane.xlu0 %4082
        %v4084 = vsel %vm2634, %v4008, 0.0
        %4085 = vadd.xlane.f32.xlu0 %v4084
        %v4086 = vpop.xlane.xlu0 %4085
        %v4087 = vsel %vm2634, %v4009, 0.0
        %4088 = vadd.xlane.f32.xlu0 %v4087
        %v4089 = vpop.xlane.xlu0 %4088
        %v4090 = vsel %vm2634, %v4010, 0.0
        %4091 = vadd.xlane.f32.xlu0 %v4090
        %v4092 = vpop.xlane.xlu0 %4091
        %v4093 = vsel %vm2634, %v4011, 0.0
        %4094 = vadd.xlane.f32.xlu0 %v4093
        %v4095 = vpop.xlane.xlu0 %4094
        %v4096 = vsel %vm2634, %v4012, 0.0
        %4097 = vadd.xlane.f32.xlu0 %v4096
        %v4098 = vpop.xlane.xlu0 %4097
        %v4099 = vsel %vm2634, %v4013, 0.0
        %4100 = vadd.xlane.f32.xlu0 %v4099
        %v4101 = vpop.xlane.xlu0 %4100
        %v4102 = vsel %vm2634, %v4014, 0.0
        %4103 = vadd.xlane.f32.xlu0 %v4102
        %v4104 = vpop.xlane.xlu0 %4103
        %v4105 = vsel %vm2634, %v4015, 0.0
        %4106 = vadd.xlane.f32.xlu0 %v4105
        %v4107 = vpop.xlane.xlu0 %4106
        %v4108 = vsel %vm2634, %v4016, 0.0
        %4109 = vadd.xlane.f32.xlu0 %v4108
        %v4110 = vpop.xlane.xlu0 %4109
        %v4111 = vsel %vm2634, %v4017, 0.0
        %4112 = vadd.xlane.f32.xlu0 %v4111
        %v4113 = vpop.xlane.xlu0 %4112
        %v4114 = vmul.f32 %v2349, %v2362
        %vm4115 = vcmask 122880
        %v4116 = vsel %vm4115, %v4114, 0.0
        %4117 = vadd.xlane.f32.xlu0 %v4116
        %v4118 = vpop.xlane.xlu0 %4117
        %v4119 = vmax.f32 %v4020, %v4032
        %v4120 = vmax.f32 %v4023, %v4035
        %v4121 = vmax.f32 %v4026, %v4038
        %v4122 = vmax.f32 %v4029, %v4041
        %v4123 = vmax.f32 %v4119, %v4044
        %v4124 = vmax.f32 %v4120, %v4047
        %v4125 = vmax.f32 %v4121, %v4050
        %v4126 = vmax.f32 %v4122, %v4053
        %v4127 = vmax.f32 %v4123, %v4056
        %v4128 = vmax.f32 %v4124, %v4059
        %v4129 = vmax.f32 %v4125, %v4062
        %v4130 = vmax.f32 %v4126, %v4065
        %v4131 = vmax.f32 %v4127, %v4068
        %v4132 = vmax.f32 %v4128, %v4071
        %v4133 = vmax.f32 %v4129, %v4074
        %v4134 = vmax.f32 %v4130, %v4077
        %v4135 = vmax.f32 %v4131, %v4080
        %v4136 = vmax.f32 %v4132, %v4083
        %v4137 = vmax.f32 %v4133, %v4086
        %v4138 = vmax.f32 %v4134, %v4089
        %v4139 = vmax.f32 %v4135, %v4092
        %v4140 = vmax.f32 %v4136, %v4095
        %v4141 = vmax.f32 %v4137, %v4098
        %v4142 = vmax.f32 %v4138, %v4101
        %v4143 = vmax.f32 %v4139, %v4104
        %v4144 = vmax.f32 %v4140, %v4107
        %v4145 = vmax.f32 %v4141, %v4110
        %v4146 = vmax.f32 %v4142, %v4113
        %v4147 = vmax.f32 %v4143, %v4144
        %v4148 = vmax.f32 %v4145, %v4146
        %v4149 = vmax.f32 %v4147, %v4148
        %v4150 = vrot.slane %v4149, 4
        %v4151 = vmax.f32 %v4149, %v4150
        %v4152 = vrot.slane %v4151, 2
        %v4153 = vmax.f32 %v4151, %v4152
        %v4154 = vrot.slane %v4153, 1
        %v4155 = vmax.f32 %v4153, %v4154
        %v4156 = vmax.f32 %v4155, %v4118
        %v4157 = vperm.slane %v4156, 0
        %v4158 = vsub.f32 %v4020, %v4157
        %v4159 = vsub.f32 %v4023, %v4157
        %v4160 = vsub.f32 %v4026, %v4157
        %v4161 = vsub.f32 %v4029, %v4157
        %v4162 = vsub.f32 %v4032, %v4157
        %v4163 = vsub.f32 %v4035, %v4157
        %v4164 = vsub.f32 %v4038, %v4157
        %v4165 = vsub.f32 %v4041, %v4157
        %v4166 = vsub.f32 %v4044, %v4157
        %v4167 = vsub.f32 %v4047, %v4157
        %v4168 = vsub.f32 %v4050, %v4157
        %v4169 = vsub.f32 %v4053, %v4157
        %v4170 = vsub.f32 %v4056, %v4157
        %v4171 = vsub.f32 %v4059, %v4157
        %v4172 = vsub.f32 %v4062, %v4157
        %v4173 = vsub.f32 %v4065, %v4157
        %v4174 = vsub.f32 %v4068, %v4157
        %v4175 = vsub.f32 %v4071, %v4157
        %v4176 = vsub.f32 %v4074, %v4157
        %v4177 = vsub.f32 %v4077, %v4157
        %v4178 = vsub.f32 %v4080, %v4157
        %v4179 = vsub.f32 %v4083, %v4157
        %v4180 = vsub.f32 %v4086, %v4157
        %v4181 = vsub.f32 %v4089, %v4157
        %v4182 = vsub.f32 %v4092, %v4157
        %v4183 = vsub.f32 %v4095, %v4157
        %v4184 = vsub.f32 %v4098, %v4157
        %v4185 = vsub.f32 %v4101, %v4157
        %v4186 = vsub.f32 %v4104, %v4157
        %v4187 = vsub.f32 %v4107, %v4157
        %v4188 = vsub.f32 %v4110, %v4157
        %v4189 = vsub.f32 %v4113, %v4157
        %v4190 = vmul.f32 %v4158, 1.442695
        %v4191 = vpow.pop %v4190
        %v4192 = vmul.f32 %v4159, 1.442695
        %v4193 = vpow.pop %v4192
        %v4194 = vmul.f32 %v4160, 1.442695
        %v4195 = vpow.pop %v4194
        %v4196 = vmul.f32 %v4161, 1.442695
        %v4197 = vpow.pop %v4196
        %v4198 = vmul.f32 %v4162, 1.442695
        %v4199 = vpow.pop %v4198
        %v4200 = vmul.f32 %v4163, 1.442695
        %v4201 = vpow.pop %v4200
        %v4202 = vmul.f32 %v4164, 1.442695
        %v4203 = vpow.pop %v4202
        %v4204 = vmul.f32 %v4165, 1.442695
        %v4205 = vpow.pop %v4204
        %v4206 = vmul.f32 %v4166, 1.442695
        %v4207 = vpow.pop %v4206
        %v4208 = vmul.f32 %v4167, 1.442695
        %v4209 = vpow.pop %v4208
        %v4210 = vmul.f32 %v4168, 1.442695
        %v4211 = vpow.pop %v4210
        %v4212 = vmul.f32 %v4169, 1.442695
        %v4213 = vpow.pop %v4212
        %v4214 = vmul.f32 %v4170, 1.442695
        %v4215 = vpow.pop %v4214
        %v4216 = vmul.f32 %v4171, 1.442695
        %v4217 = vpow.pop %v4216
        %v4218 = vmul.f32 %v4172, 1.442695
        %v4219 = vpow.pop %v4218
        %v4220 = vmul.f32 %v4173, 1.442695
        %v4221 = vpow.pop %v4220
        %v4222 = vmul.f32 %v4174, 1.442695
        %v4223 = vpow.pop %v4222
        %v4224 = vmul.f32 %v4175, 1.442695
        %v4225 = vpow.pop %v4224
        %v4226 = vmul.f32 %v4176, 1.442695
        %v4227 = vpow.pop %v4226
        %v4228 = vmul.f32 %v4177, 1.442695
        %v4229 = vpow.pop %v4228
        %v4230 = vmul.f32 %v4178, 1.442695
        %v4231 = vpow.pop %v4230
        %v4232 = vmul.f32 %v4179, 1.442695
        %v4233 = vpow.pop %v4232
        %v4234 = vmul.f32 %v4180, 1.442695
        %v4235 = vpow.pop %v4234
        %v4236 = vmul.f32 %v4181, 1.442695
        %v4237 = vpow.pop %v4236
        %v4238 = vmul.f32 %v4182, 1.442695
        %v4239 = vpow.pop %v4238
        %v4240 = vmul.f32 %v4183, 1.442695
        %v4241 = vpow.pop %v4240
        %v4242 = vmul.f32 %v4184, 1.442695
        %v4243 = vpow.pop %v4242
        %v4244 = vmul.f32 %v4185, 1.442695
        %v4245 = vpow.pop %v4244
        %v4246 = vmul.f32 %v4186, 1.442695
        %v4247 = vpow.pop %v4246
        %v4248 = vmul.f32 %v4187, 1.442695
        %v4249 = vpow.pop %v4248
        %v4250 = vmul.f32 %v4188, 1.442695
        %v4251 = vpow.pop %v4250
        %v4252 = vmul.f32 %v4189, 1.442695
        %v4253 = vpow.pop %v4252
        %v4254 = vsub.f32 %v4118, %v4156
        %v4255 = vmul.f32 %v4254, 1.442695
        %v4256 = vpow.pop %v4255
        %v4257 = vadd.f32 %v4191, %v4193
        %v4258 = vadd.f32 %v4257, %v4195
        %v4259 = vadd.f32 %v4258, %v4197
        %v4260 = vadd.f32 %v4259, %v4199
        %v4261 = vadd.f32 %v4260, %v4201
        %v4262 = vadd.f32 %v4261, %v4203
        %v4263 = vadd.f32 %v4262, %v4205
        %v4264 = vadd.f32 %v4263, %v4207
        %v4265 = vadd.f32 %v4264, %v4209
        %v4266 = vadd.f32 %v4265, %v4211
        %v4267 = vadd.f32 %v4266, %v4213
        %v4268 = vadd.f32 %v4267, %v4215
        %v4269 = vadd.f32 %v4268, %v4217
        %v4270 = vadd.f32 %v4269, %v4219
        %v4271 = vadd.f32 %v4270, %v4221
        %v4272 = vadd.f32 %v4271, %v4223
        %v4273 = vadd.f32 %v4272, %v4225
        %v4274 = vadd.f32 %v4273, %v4227
        %v4275 = vadd.f32 %v4274, %v4229
        %v4276 = vadd.f32 %v4275, %v4231
        %v4277 = vadd.f32 %v4276, %v4233
        %v4278 = vadd.f32 %v4277, %v4235
        %v4279 = vadd.f32 %v4278, %v4237
        %v4280 = vadd.f32 %v4279, %v4239
        %v4281 = vadd.f32 %v4280, %v4241
        %v4282 = vadd.f32 %v4281, %v4243
        %v4283 = vadd.f32 %v4282, %v4245
        %v4284 = vadd.f32 %v4283, %v4247
        %v4285 = vadd.f32 %v4284, %v4249
        %v4286 = vadd.f32 %v4285, %v4251
        %v4287 = vadd.f32 %v4286, %v4253
        %v4288 = vrot.slane %v4287, 4
        %v4289 = vadd.f32 %v4287, %v4288
        %v4290 = vrot.slane %v4289, 2
        %v4291 = vadd.f32 %v4289, %v4290
        %v4292 = vrot.slane %v4291, 1
        %v4293 = vadd.f32 %v4291, %v4292
        %v4294 = vadd.f32 %v4293, %v4256
        %v4295 = vrcp.pop %v4294
        %v4296 = vmul.f32 %v4191, %v2257
        %v4297 = vmul.f32 %v4193, %v2259
        %v4298 = vmul.f32 %v4195, %v2262
        %v4299 = vmul.f32 %v4197, %v2264
        %v4300 = vmul.f32 %v4199, %v2267
        %v4301 = vmul.f32 %v4201, %v2269
        %v4302 = vmul.f32 %v4203, %v2272
        %v4303 = vmul.f32 %v4205, %v2274
        %v4304 = vmul.f32 %v4207, %v2277
        %v4305 = vmul.f32 %v4209, %v2279
        %v4306 = vmul.f32 %v4211, %v2282
        %v4307 = vmul.f32 %v4213, %v2284
        %v4308 = vmul.f32 %v4215, %v2287
        %v4309 = vmul.f32 %v4217, %v2289
        %v4310 = vmul.f32 %v4219, %v2292
        %v4311 = vmul.f32 %v4221, %v2294
        %v4312 = vmul.f32 %v4223, %v2297
        %v4313 = vmul.f32 %v4225, %v2299
        %v4314 = vmul.f32 %v4227, %v2302
        %v4315 = vmul.f32 %v4229, %v2304
        %v4316 = vmul.f32 %v4231, %v2307
        %v4317 = vmul.f32 %v4233, %v2309
        %v4318 = vmul.f32 %v4235, %v2312
        %v4319 = vmul.f32 %v4237, %v2314
        %v4320 = vmul.f32 %v4239, %v2317
        %v4321 = vmul.f32 %v4241, %v2319
        %v4322 = vmul.f32 %v4243, %v2322
        %v4323 = vmul.f32 %v4245, %v2324
        %v4324 = vmul.f32 %v4247, %v2327
        %v4325 = vmul.f32 %v4249, %v2329
        %v4326 = vmul.f32 %v4251, %v2332
        %v4327 = vmul.f32 %v4253, %v2334
        %v4328 = vsel %vm2634, %v4296, 0.0
        %v4329 = vsel %vm2634, %v4297, 0.0
        %v4330 = vadd.f32 %v4328, %v4329
        %v4331 = vsel %vm2634, %v4298, 0.0
        %v4332 = vadd.f32 %v4330, %v4331
        %v4333 = vsel %vm2634, %v4299, 0.0
        %v4334 = vadd.f32 %v4332, %v4333
        %v4335 = vsel %vm2634, %v4300, 0.0
        %v4336 = vadd.f32 %v4334, %v4335
        %v4337 = vsel %vm2634, %v4301, 0.0
        %v4338 = vadd.f32 %v4336, %v4337
        %v4339 = vsel %vm2634, %v4302, 0.0
        %v4340 = vadd.f32 %v4338, %v4339
        %v4341 = vsel %vm2634, %v4303, 0.0
        %v4342 = vadd.f32 %v4340, %v4341
        %v4343 = vsel %vm2634, %v4304, 0.0
        %v4344 = vadd.f32 %v4342, %v4343
        %v4345 = vsel %vm2634, %v4305, 0.0
        %v4346 = vadd.f32 %v4344, %v4345
        %v4347 = vsel %vm2634, %v4306, 0.0
        %v4348 = vadd.f32 %v4346, %v4347
        %v4349 = vsel %vm2634, %v4307, 0.0
        %v4350 = vadd.f32 %v4348, %v4349
        %v4351 = vsel %vm2634, %v4308, 0.0
        %v4352 = vadd.f32 %v4350, %v4351
        %v4353 = vsel %vm2634, %v4309, 0.0
        %v4354 = vadd.f32 %v4352, %v4353
        %v4355 = vsel %vm2634, %v4310, 0.0
        %v4356 = vadd.f32 %v4354, %v4355
        %v4357 = vsel %vm2634, %v4311, 0.0
        %v4358 = vadd.f32 %v4356, %v4357
        %v4359 = vsel %vm2634, %v4312, 0.0
        %v4360 = vadd.f32 %v4358, %v4359
        %v4361 = vsel %vm2634, %v4313, 0.0
        %v4362 = vadd.f32 %v4360, %v4361
        %v4363 = vsel %vm2634, %v4314, 0.0
        %v4364 = vadd.f32 %v4362, %v4363
        %v4365 = vsel %vm2634, %v4315, 0.0
        %v4366 = vadd.f32 %v4364, %v4365
        %v4367 = vsel %vm2634, %v4316, 0.0
        %v4368 = vadd.f32 %v4366, %v4367
        %v4369 = vsel %vm2634, %v4317, 0.0
        %v4370 = vadd.f32 %v4368, %v4369
        %v4371 = vsel %vm2634, %v4318, 0.0
        %v4372 = vadd.f32 %v4370, %v4371
        %v4373 = vsel %vm2634, %v4319, 0.0
        %v4374 = vadd.f32 %v4372, %v4373
        %v4375 = vsel %vm2634, %v4320, 0.0
        %v4376 = vadd.f32 %v4374, %v4375
        %v4377 = vsel %vm2634, %v4321, 0.0
        %v4378 = vadd.f32 %v4376, %v4377
        %v4379 = vsel %vm2634, %v4322, 0.0
        %v4380 = vadd.f32 %v4378, %v4379
        %v4381 = vsel %vm2634, %v4323, 0.0
        %v4382 = vadd.f32 %v4380, %v4381
        %v4383 = vsel %vm2634, %v4324, 0.0
        %v4384 = vadd.f32 %v4382, %v4383
        %v4385 = vsel %vm2634, %v4325, 0.0
        %v4386 = vadd.f32 %v4384, %v4385
        %v4387 = vsel %vm2634, %v4326, 0.0
        %v4388 = vadd.f32 %v4386, %v4387
        %v4389 = vsel %vm2634, %v4327, 0.0
        %v4390 = vadd.f32 %v4388, %v4389
        %v4391 = vrot.slane %v4390, 4
        %v4392 = vadd.f32 %v4390, %v4391
        %v4393 = vrot.slane %v4392, 2
        %v4394 = vadd.f32 %v4392, %v4393
        %v4395 = vrot.slane %v4394, 1
        %v4396 = vadd.f32 %v4394, %v4395
        %v4397 = vmul.f32 %v4256, %v2375
        %v4398 = vadd.f32 %v4396, %v4397
        %v4399 = vmul.f32 %v4398, %v4295
        %4400 = vrot.lane.b32.xlu0 %v2538, 112
        %v4401 = vpop.permute.xlu0 %4400
        %4402 = vrot.lane.b32.xlu0 %v2539, 112
        %v4403 = vpop.permute.xlu0 %4402
        %4404 = vrot.lane.b32.xlu0 %v2540, 112
        %v4405 = vpop.permute.xlu0 %4404
        %4406 = vrot.lane.b32.xlu0 %v2541, 112
        %v4407 = vpop.permute.xlu0 %4406
        %4408 = vrot.lane.b32.xlu0 %v2542, 112
        %v4409 = vpop.permute.xlu0 %4408
        %4410 = vrot.lane.b32.xlu0 %v2543, 112
        %v4411 = vpop.permute.xlu0 %4410
        %4412 = vrot.lane.b32.xlu0 %v2544, 112
        %v4413 = vpop.permute.xlu0 %4412
        %4414 = vrot.lane.b32.xlu0 %v2545, 112
        %v4415 = vpop.permute.xlu0 %4414
        %4416 = vrot.lane.b32.xlu0 %v2546, 112
        %v4417 = vpop.permute.xlu0 %4416
        %4418 = vrot.lane.b32.xlu0 %v2547, 112
        %v4419 = vpop.permute.xlu0 %4418
        %4420 = vrot.lane.b32.xlu0 %v2548, 112
        %v4421 = vpop.permute.xlu0 %4420
        %4422 = vrot.lane.b32.xlu0 %v2549, 112
        %v4423 = vpop.permute.xlu0 %4422
        %4424 = vrot.lane.b32.xlu0 %v2550, 112
        %v4425 = vpop.permute.xlu0 %4424
        %4426 = vrot.lane.b32.xlu0 %v2551, 112
        %v4427 = vpop.permute.xlu0 %4426
        %4428 = vrot.lane.b32.xlu0 %v2552, 112
        %v4429 = vpop.permute.xlu0 %4428
        %4430 = vrot.lane.b32.xlu0 %v2553, 112
        %v4431 = vpop.permute.xlu0 %4430
        %4432 = vrot.lane.b32.xlu0 %v2618, 112
        %v4433 = vpop.permute.xlu0 %4432
        %4434 = vrot.lane.b32.xlu0 %v2619, 112
        %v4435 = vpop.permute.xlu0 %4434
        %4436 = vrot.lane.b32.xlu0 %v2620, 112
        %v4437 = vpop.permute.xlu0 %4436
        %4438 = vrot.lane.b32.xlu0 %v2621, 112
        %v4439 = vpop.permute.xlu0 %4438
        %4440 = vrot.lane.b32.xlu0 %v2622, 112
        %v4441 = vpop.permute.xlu0 %4440
        %4442 = vrot.lane.b32.xlu0 %v2623, 112
        %v4443 = vpop.permute.xlu0 %4442
        %4444 = vrot.lane.b32.xlu0 %v2624, 112
        %v4445 = vpop.permute.xlu0 %4444
        %4446 = vrot.lane.b32.xlu0 %v2625, 112
        %v4447 = vpop.permute.xlu0 %4446
        %4448 = vrot.lane.b32.xlu0 %v2626, 112
        %v4449 = vpop.permute.xlu0 %4448
        %4450 = vrot.lane.b32.xlu0 %v2627, 112
        %v4451 = vpop.permute.xlu0 %4450
        %4452 = vrot.lane.b32.xlu0 %v2628, 112
        %v4453 = vpop.permute.xlu0 %4452
        %4454 = vrot.lane.b32.xlu0 %v2629, 112
        %v4455 = vpop.permute.xlu0 %4454
        %4456 = vrot.lane.b32.xlu0 %v2630, 112
        %v4457 = vpop.permute.xlu0 %4456
        %4458 = vrot.lane.b32.xlu0 %v2631, 112
        %v4459 = vpop.permute.xlu0 %4458
        %4460 = vrot.lane.b32.xlu0 %v2632, 112
        %v4461 = vpop.permute.xlu0 %4460
        %4462 = vrot.lane.b32.xlu0 %v2633, 112
        %v4463 = vpop.permute.xlu0 %4462
        %v4465 = vsel %vm2634, %v4401, 0
        %v4468 = vsel %vm2634, %v4403, 0
        %v4471 = vsel %vm2634, %v4405, 0
        %v4474 = vsel %vm2634, %v4407, 0
        %v4477 = vsel %vm2634, %v4409, 0
        %v4480 = vsel %vm2634, %v4411, 0
        %v4483 = vsel %vm2634, %v4413, 0
        %v4486 = vsel %vm2634, %v4415, 0
        %v4489 = vsel %vm2634, %v4417, 0
        %v4492 = vsel %vm2634, %v4419, 0
        %v4495 = vsel %vm2634, %v4421, 0
        %v4498 = vsel %vm2634, %v4423, 0
        %v4501 = vsel %vm2634, %v4425, 0
        %v4504 = vsel %vm2634, %v4427, 0
        %v4507 = vsel %vm2634, %v4429, 0
        %v4510 = vsel %vm2634, %v4431, 0
        %v4513 = vsel %vm2634, %v4433, 0
        %v4516 = vsel %vm2634, %v4435, 0
        %v4519 = vsel %vm2634, %v4437, 0
        %v4522 = vsel %vm2634, %v4439, 0
        %v4525 = vsel %vm2634, %v4441, 0
        %v4528 = vsel %vm2634, %v4443, 0
        %v4531 = vsel %vm2634, %v4445, 0
        %v4534 = vsel %vm2634, %v4447, 0
        %v4537 = vsel %vm2634, %v4449, 0
        %v4540 = vsel %vm2634, %v4451, 0
        %v4543 = vsel %vm2634, %v4453, 0
        %v4546 = vsel %vm2634, %v4455, 0
        %v4549 = vsel %vm2634, %v4457, 0
        %v4552 = vsel %vm2634, %v4459, 0
        %v4555 = vsel %vm2634, %v4461, 0
        %v4558 = vsel %vm2634, %v4463, 0
        %4560 = vmatpush.bf16.xpose.msra.mxu0 %v4534
        %4561 = vmatpush.bf16.xpose.msra.mxu0 %v4531
        %4562 = vmatpush.bf16.xpose.msra.mxu0 %v4528
        %4563 = vmatpush.bf16.xpose.msra.mxu0 %v4525
        %4564 = vmatpush.bf16.xpose.msra.mxu0 %v4522
        %4565 = vmatpush.bf16.xpose.msra.mxu0 %v4519
        %4566 = vmatpush.bf16.xpose.msra.mxu0 %v4516
        %4567 = vmatpush.bf16.xpose.msra.mxu0 %v4513
        %4568 = vmatmul.bf16.gmra.mxu0 %v4465
        %v4569 = vpop.f32.mrf.mxu0
        %v4570 = vadd.f32 0.0, %v4569
        %v4571 = vpop.f32.mrf.mxu0
        %v4572 = vadd.f32 0.0, %v4571
        %4573 = vmatmul.bf16.gmra.mxu0 %v4468
        %v4574 = vpop.f32.mrf.mxu0
        %v4575 = vadd.f32 0.0, %v4574
        %v4576 = vpop.f32.mrf.mxu0
        %v4577 = vadd.f32 0.0, %v4576
        %4578 = vmatmul.bf16.gmra.mxu0 %v4471
        %v4579 = vpop.f32.mrf.mxu0
        %v4580 = vadd.f32 0.0, %v4579
        %v4581 = vpop.f32.mrf.mxu0
        %v4582 = vadd.f32 0.0, %v4581
        %4583 = vmatmul.bf16.gmra.mxu0 %v4474
        %v4584 = vpop.f32.mrf.mxu0
        %v4585 = vadd.f32 0.0, %v4584
        %v4586 = vpop.f32.mrf.mxu0
        %v4587 = vadd.f32 0.0, %v4586
        %4588 = vmatmul.bf16.gmra.mxu0 %v4477
        %v4589 = vpop.f32.mrf.mxu0
        %v4590 = vadd.f32 0.0, %v4589
        %v4591 = vpop.f32.mrf.mxu0
        %v4592 = vadd.f32 0.0, %v4591
        %4593 = vmatmul.bf16.gmra.mxu0 %v4480
        %v4594 = vpop.f32.mrf.mxu0
        %v4595 = vadd.f32 0.0, %v4594
        %v4596 = vpop.f32.mrf.mxu0
        %v4597 = vadd.f32 0.0, %v4596
        %4598 = vmatmul.bf16.gmra.mxu0 %v4483
        %v4599 = vpop.f32.mrf.mxu0
        %v4600 = vadd.f32 0.0, %v4599
        %v4601 = vpop.f32.mrf.mxu0
        %v4602 = vadd.f32 0.0, %v4601
        %4603 = vmatmul.bf16.gmra.mxu0 %v4486
        %v4604 = vpop.f32.mrf.mxu0
        %v4605 = vadd.f32 0.0, %v4604
        %v4606 = vpop.f32.mrf.mxu0
        %v4607 = vadd.f32 0.0, %v4606
        %4608 = vmatmul.bf16.gmra.mxu0 %v4489
        %v4609 = vpop.f32.mrf.mxu0
        %v4610 = vadd.f32 0.0, %v4609
        %v4611 = vpop.f32.mrf.mxu0
        %v4612 = vadd.f32 0.0, %v4611
        %4613 = vmatmul.bf16.gmra.mxu0 %v4492
        %v4614 = vpop.f32.mrf.mxu0
        %v4615 = vadd.f32 0.0, %v4614
        %v4616 = vpop.f32.mrf.mxu0
        %v4617 = vadd.f32 0.0, %v4616
        %4618 = vmatmul.bf16.gmra.mxu0 %v4495
        %v4619 = vpop.f32.mrf.mxu0
        %v4620 = vadd.f32 0.0, %v4619
        %v4621 = vpop.f32.mrf.mxu0
        %v4622 = vadd.f32 0.0, %v4621
        %4623 = vmatmul.bf16.gmra.mxu0 %v4498
        %v4624 = vpop.f32.mrf.mxu0
        %v4625 = vadd.f32 0.0, %v4624
        %v4626 = vpop.f32.mrf.mxu0
        %v4627 = vadd.f32 0.0, %v4626
        %4628 = vmatmul.bf16.gmra.mxu0 %v4501
        %v4629 = vpop.f32.mrf.mxu0
        %v4630 = vadd.f32 0.0, %v4629
        %v4631 = vpop.f32.mrf.mxu0
        %v4632 = vadd.f32 0.0, %v4631
        %4633 = vmatmul.bf16.gmra.mxu0 %v4504
        %v4634 = vpop.f32.mrf.mxu0
        %v4635 = vadd.f32 0.0, %v4634
        %v4636 = vpop.f32.mrf.mxu0
        %v4637 = vadd.f32 0.0, %v4636
        %4638 = vmatmul.bf16.gmra.mxu0 %v4507
        %v4639 = vpop.f32.mrf.mxu0
        %v4640 = vadd.f32 0.0, %v4639
        %v4641 = vpop.f32.mrf.mxu0
        %v4642 = vadd.f32 0.0, %v4641
        %4643 = vmatmul.bf16.gmra.mxu0 %v4510
        %v4644 = vpop.f32.mrf.mxu0
        %v4645 = vadd.f32 0.0, %v4644
        %v4646 = vpop.f32.mrf.mxu0
        %v4647 = vadd.f32 0.0, %v4646
        %4648 = vdwg.mxu0
        %4649 = vmatpush.bf16.xpose.msra.mxu0 %v4558
        %4650 = vmatpush.bf16.xpose.msra.mxu0 %v4555
        %4651 = vmatpush.bf16.xpose.msra.mxu0 %v4552
        %4652 = vmatpush.bf16.xpose.msra.mxu0 %v4549
        %4653 = vmatpush.bf16.xpose.msra.mxu0 %v4546
        %4654 = vmatpush.bf16.xpose.msra.mxu0 %v4543
        %4655 = vmatpush.bf16.xpose.msra.mxu0 %v4540
        %4656 = vmatpush.bf16.xpose.msra.mxu0 %v4537
        %4657 = vmatmul.bf16.gmra.mxu0 %v4465
        %v4658 = vpop.f32.mrf.mxu0
        %v4659 = vadd.f32 0.0, %v4658
        %v4660 = vpop.f32.mrf.mxu0
        %v4661 = vadd.f32 0.0, %v4660
        %4662 = vmatmul.bf16.gmra.mxu0 %v4468
        %v4663 = vpop.f32.mrf.mxu0
        %v4664 = vadd.f32 0.0, %v4663
        %v4665 = vpop.f32.mrf.mxu0
        %v4666 = vadd.f32 0.0, %v4665
        %4667 = vmatmul.bf16.gmra.mxu0 %v4471
        %v4668 = vpop.f32.mrf.mxu0
        %v4669 = vadd.f32 0.0, %v4668
        %v4670 = vpop.f32.mrf.mxu0
        %v4671 = vadd.f32 0.0, %v4670
        %4672 = vmatmul.bf16.gmra.mxu0 %v4474
        %v4673 = vpop.f32.mrf.mxu0
        %v4674 = vadd.f32 0.0, %v4673
        %v4675 = vpop.f32.mrf.mxu0
        %v4676 = vadd.f32 0.0, %v4675
        %4677 = vmatmul.bf16.gmra.mxu0 %v4477
        %v4678 = vpop.f32.mrf.mxu0
        %v4679 = vadd.f32 0.0, %v4678
        %v4680 = vpop.f32.mrf.mxu0
        %v4681 = vadd.f32 0.0, %v4680
        %4682 = vmatmul.bf16.gmra.mxu0 %v4480
        %v4683 = vpop.f32.mrf.mxu0
        %v4684 = vadd.f32 0.0, %v4683
        %v4685 = vpop.f32.mrf.mxu0
        %v4686 = vadd.f32 0.0, %v4685
        %4687 = vmatmul.bf16.gmra.mxu0 %v4483
        %v4688 = vpop.f32.mrf.mxu0
        %v4689 = vadd.f32 0.0, %v4688
        %v4690 = vpop.f32.mrf.mxu0
        %v4691 = vadd.f32 0.0, %v4690
        %4692 = vmatmul.bf16.gmra.mxu0 %v4486
        %v4693 = vpop.f32.mrf.mxu0
        %v4694 = vadd.f32 0.0, %v4693
        %v4695 = vpop.f32.mrf.mxu0
        %v4696 = vadd.f32 0.0, %v4695
        %4697 = vmatmul.bf16.gmra.mxu0 %v4489
        %v4698 = vpop.f32.mrf.mxu0
        %v4699 = vadd.f32 0.0, %v4698
        %v4700 = vpop.f32.mrf.mxu0
        %v4701 = vadd.f32 0.0, %v4700
        %4702 = vmatmul.bf16.gmra.mxu0 %v4492
        %v4703 = vpop.f32.mrf.mxu0
        %v4704 = vadd.f32 0.0, %v4703
        %v4705 = vpop.f32.mrf.mxu0
        %v4706 = vadd.f32 0.0, %v4705
        %4707 = vmatmul.bf16.gmra.mxu0 %v4495
        %v4708 = vpop.f32.mrf.mxu0
        %v4709 = vadd.f32 0.0, %v4708
        %v4710 = vpop.f32.mrf.mxu0
        %v4711 = vadd.f32 0.0, %v4710
        %4712 = vmatmul.bf16.gmra.mxu0 %v4498
        %v4713 = vpop.f32.mrf.mxu0
        %v4714 = vadd.f32 0.0, %v4713
        %v4715 = vpop.f32.mrf.mxu0
        %v4716 = vadd.f32 0.0, %v4715
        %4717 = vmatmul.bf16.gmra.mxu0 %v4501
        %v4718 = vpop.f32.mrf.mxu0
        %v4719 = vadd.f32 0.0, %v4718
        %v4720 = vpop.f32.mrf.mxu0
        %v4721 = vadd.f32 0.0, %v4720
        %4722 = vmatmul.bf16.gmra.mxu0 %v4504
        %v4723 = vpop.f32.mrf.mxu0
        %v4724 = vadd.f32 0.0, %v4723
        %v4725 = vpop.f32.mrf.mxu0
        %v4726 = vadd.f32 0.0, %v4725
        %4727 = vmatmul.bf16.gmra.mxu0 %v4507
        %v4728 = vpop.f32.mrf.mxu0
        %v4729 = vadd.f32 0.0, %v4728
        %v4730 = vpop.f32.mrf.mxu0
        %v4731 = vadd.f32 0.0, %v4730
        %4732 = vmatmul.bf16.gmra.mxu0 %v4510
        %v4733 = vpop.f32.mrf.mxu0
        %v4734 = vadd.f32 0.0, %v4733
        %v4735 = vpop.f32.mrf.mxu0
        %v4736 = vadd.f32 0.0, %v4735
        %4737 = vdwg.mxu0
        %4770 = vrot.lane.b32.xlu0 %v2910, 112
        %v4771 = vpop.permute.xlu0 %4770
        %4772 = vrot.lane.b32.xlu0 %v2911, 112
        %v4773 = vpop.permute.xlu0 %4772
        %4774 = vrot.lane.b32.xlu0 %v2912, 112
        %v4775 = vpop.permute.xlu0 %4774
        %4776 = vrot.lane.b32.xlu0 %v2913, 112
        %v4777 = vpop.permute.xlu0 %4776
        %4778 = vrot.lane.b32.xlu0 %v2914, 112
        %v4779 = vpop.permute.xlu0 %4778
        %4780 = vrot.lane.b32.xlu0 %v2915, 112
        %v4781 = vpop.permute.xlu0 %4780
        %4782 = vrot.lane.b32.xlu0 %v2916, 112
        %v4783 = vpop.permute.xlu0 %4782
        %4784 = vrot.lane.b32.xlu0 %v2917, 112
        %v4785 = vpop.permute.xlu0 %4784
        %4786 = vrot.lane.b32.xlu0 %v2918, 112
        %v4787 = vpop.permute.xlu0 %4786
        %4788 = vrot.lane.b32.xlu0 %v2919, 112
        %v4789 = vpop.permute.xlu0 %4788
        %4790 = vrot.lane.b32.xlu0 %v2920, 112
        %v4791 = vpop.permute.xlu0 %4790
        %4792 = vrot.lane.b32.xlu0 %v2921, 112
        %v4793 = vpop.permute.xlu0 %4792
        %4794 = vrot.lane.b32.xlu0 %v2922, 112
        %v4795 = vpop.permute.xlu0 %4794
        %4796 = vrot.lane.b32.xlu0 %v2923, 112
        %v4797 = vpop.permute.xlu0 %4796
        %4798 = vrot.lane.b32.xlu0 %v2924, 112
        %v4799 = vpop.permute.xlu0 %4798
        %4800 = vrot.lane.b32.xlu0 %v2925, 112
        %v4801 = vpop.permute.xlu0 %4800
        %4802 = vrot.lane.b32.xlu0 %v2926, 112
        %v4803 = vpop.permute.xlu0 %4802
        %4804 = vrot.lane.b32.xlu0 %v2927, 112
        %v4805 = vpop.permute.xlu0 %4804
        %4806 = vrot.lane.b32.xlu0 %v2928, 112
        %v4807 = vpop.permute.xlu0 %4806
        %4808 = vrot.lane.b32.xlu0 %v2929, 112
        %v4809 = vpop.permute.xlu0 %4808
        %4810 = vrot.lane.b32.xlu0 %v2930, 112
        %v4811 = vpop.permute.xlu0 %4810
        %4812 = vrot.lane.b32.xlu0 %v2931, 112
        %v4813 = vpop.permute.xlu0 %4812
        %4814 = vrot.lane.b32.xlu0 %v2932, 112
        %v4815 = vpop.permute.xlu0 %4814
        %4816 = vrot.lane.b32.xlu0 %v2933, 112
        %v4817 = vpop.permute.xlu0 %4816
        %4818 = vrot.lane.b32.xlu0 %v2934, 112
        %v4819 = vpop.permute.xlu0 %4818
        %4820 = vrot.lane.b32.xlu0 %v2935, 112
        %v4821 = vpop.permute.xlu0 %4820
        %4822 = vrot.lane.b32.xlu0 %v2936, 112
        %v4823 = vpop.permute.xlu0 %4822
        %4824 = vrot.lane.b32.xlu0 %v2937, 112
        %v4825 = vpop.permute.xlu0 %4824
        %4826 = vrot.lane.b32.xlu0 %v2938, 112
        %v4827 = vpop.permute.xlu0 %4826
        %4828 = vrot.lane.b32.xlu0 %v2939, 112
        %v4829 = vpop.permute.xlu0 %4828
        %4830 = vrot.lane.b32.xlu0 %v2940, 112
        %v4831 = vpop.permute.xlu0 %4830
        %4832 = vrot.lane.b32.xlu0 %v2941, 112
        %v4833 = vpop.permute.xlu0 %4832
        %v4866 = vsel %vm2634, %v4771, 0.0
        %4867 = vadd.xlane.f32.xlu0 %v4866
        %v4868 = vpop.xlane.xlu0 %4867
        %v4869 = vsel %vm2634, %v4773, 0.0
        %4870 = vadd.xlane.f32.xlu0 %v4869
        %v4871 = vpop.xlane.xlu0 %4870
        %v4872 = vsel %vm2634, %v4775, 0.0
        %4873 = vadd.xlane.f32.xlu0 %v4872
        %v4874 = vpop.xlane.xlu0 %4873
        %v4875 = vsel %vm2634, %v4777, 0.0
        %4876 = vadd.xlane.f32.xlu0 %v4875
        %v4877 = vpop.xlane.xlu0 %4876
        %v4878 = vsel %vm2634, %v4779, 0.0
        %4879 = vadd.xlane.f32.xlu0 %v4878
        %v4880 = vpop.xlane.xlu0 %4879
        %v4881 = vsel %vm2634, %v4781, 0.0
        %4882 = vadd.xlane.f32.xlu0 %v4881
        %v4883 = vpop.xlane.xlu0 %4882
        %v4884 = vsel %vm2634, %v4783, 0.0
        %4885 = vadd.xlane.f32.xlu0 %v4884
        %v4886 = vpop.xlane.xlu0 %4885
        %v4887 = vsel %vm2634, %v4785, 0.0
        %4888 = vadd.xlane.f32.xlu0 %v4887
        %v4889 = vpop.xlane.xlu0 %4888
        %v4890 = vsel %vm2634, %v4787, 0.0
        %4891 = vadd.xlane.f32.xlu0 %v4890
        %v4892 = vpop.xlane.xlu0 %4891
        %v4893 = vsel %vm2634, %v4789, 0.0
        %4894 = vadd.xlane.f32.xlu0 %v4893
        %v4895 = vpop.xlane.xlu0 %4894
        %v4896 = vsel %vm2634, %v4791, 0.0
        %4897 = vadd.xlane.f32.xlu0 %v4896
        %v4898 = vpop.xlane.xlu0 %4897
        %v4899 = vsel %vm2634, %v4793, 0.0
        %4900 = vadd.xlane.f32.xlu0 %v4899
        %v4901 = vpop.xlane.xlu0 %4900
        %v4902 = vsel %vm2634, %v4795, 0.0
        %4903 = vadd.xlane.f32.xlu0 %v4902
        %v4904 = vpop.xlane.xlu0 %4903
        %v4905 = vsel %vm2634, %v4797, 0.0
        %4906 = vadd.xlane.f32.xlu0 %v4905
        %v4907 = vpop.xlane.xlu0 %4906
        %v4908 = vsel %vm2634, %v4799, 0.0
        %4909 = vadd.xlane.f32.xlu0 %v4908
        %v4910 = vpop.xlane.xlu0 %4909
        %v4911 = vsel %vm2634, %v4801, 0.0
        %4912 = vadd.xlane.f32.xlu0 %v4911
        %v4913 = vpop.xlane.xlu0 %4912
        %v4914 = vsel %vm2634, %v4803, 0.0
        %4915 = vadd.xlane.f32.xlu0 %v4914
        %v4916 = vpop.xlane.xlu0 %4915
        %v4917 = vsel %vm2634, %v4805, 0.0
        %4918 = vadd.xlane.f32.xlu0 %v4917
        %v4919 = vpop.xlane.xlu0 %4918
        %v4920 = vsel %vm2634, %v4807, 0.0
        %4921 = vadd.xlane.f32.xlu0 %v4920
        %v4922 = vpop.xlane.xlu0 %4921
        %v4923 = vsel %vm2634, %v4809, 0.0
        %4924 = vadd.xlane.f32.xlu0 %v4923
        %v4925 = vpop.xlane.xlu0 %4924
        %v4926 = vsel %vm2634, %v4811, 0.0
        %4927 = vadd.xlane.f32.xlu0 %v4926
        %v4928 = vpop.xlane.xlu0 %4927
        %v4929 = vsel %vm2634, %v4813, 0.0
        %4930 = vadd.xlane.f32.xlu0 %v4929
        %v4931 = vpop.xlane.xlu0 %4930
        %v4932 = vsel %vm2634, %v4815, 0.0
        %4933 = vadd.xlane.f32.xlu0 %v4932
        %v4934 = vpop.xlane.xlu0 %4933
        %v4935 = vsel %vm2634, %v4817, 0.0
        %4936 = vadd.xlane.f32.xlu0 %v4935
        %v4937 = vpop.xlane.xlu0 %4936
        %v4938 = vsel %vm2634, %v4819, 0.0
        %4939 = vadd.xlane.f32.xlu0 %v4938
        %v4940 = vpop.xlane.xlu0 %4939
        %v4941 = vsel %vm2634, %v4821, 0.0
        %4942 = vadd.xlane.f32.xlu0 %v4941
        %v4943 = vpop.xlane.xlu0 %4942
        %v4944 = vsel %vm2634, %v4823, 0.0
        %4945 = vadd.xlane.f32.xlu0 %v4944
        %v4946 = vpop.xlane.xlu0 %4945
        %v4947 = vsel %vm2634, %v4825, 0.0
        %4948 = vadd.xlane.f32.xlu0 %v4947
        %v4949 = vpop.xlane.xlu0 %4948
        %v4950 = vsel %vm2634, %v4827, 0.0
        %4951 = vadd.xlane.f32.xlu0 %v4950
        %v4952 = vpop.xlane.xlu0 %4951
        %v4953 = vsel %vm2634, %v4829, 0.0
        %4954 = vadd.xlane.f32.xlu0 %v4953
        %v4955 = vpop.xlane.xlu0 %4954
        %v4956 = vsel %vm2634, %v4831, 0.0
        %4957 = vadd.xlane.f32.xlu0 %v4956
        %v4958 = vpop.xlane.xlu0 %4957
        %v4959 = vsel %vm2634, %v4833, 0.0
        %4960 = vadd.xlane.f32.xlu0 %v4959
        %v4961 = vpop.xlane.xlu0 %4960
        %v4962 = vmax.f32 %v4570, %v4659
        %4963 = vmax.xlane.f32.xlu0 %v4962
        %v4964 = vpop.xlane.xlu0 %4963
        %v4965 = vmax.f32 %v4572, %v4661
        %4966 = vmax.xlane.f32.xlu0 %v4965
        %v4967 = vpop.xlane.xlu0 %4966
        %v4968 = vmax.f32 %v4575, %v4664
        %4969 = vmax.xlane.f32.xlu0 %v4968
        %v4970 = vpop.xlane.xlu0 %4969
        %v4971 = vmax.f32 %v4577, %v4666
        %4972 = vmax.xlane.f32.xlu0 %v4971
        %v4973 = vpop.xlane.xlu0 %4972
        %v4974 = vmax.f32 %v4580, %v4669
        %4975 = vmax.xlane.f32.xlu0 %v4974
        %v4976 = vpop.xlane.xlu0 %4975
        %v4977 = vmax.f32 %v4582, %v4671
        %4978 = vmax.xlane.f32.xlu0 %v4977
        %v4979 = vpop.xlane.xlu0 %4978
        %v4980 = vmax.f32 %v4585, %v4674
        %4981 = vmax.xlane.f32.xlu0 %v4980
        %v4982 = vpop.xlane.xlu0 %4981
        %v4983 = vmax.f32 %v4587, %v4676
        %4984 = vmax.xlane.f32.xlu0 %v4983
        %v4985 = vpop.xlane.xlu0 %4984
        %v4986 = vmax.f32 %v4590, %v4679
        %4987 = vmax.xlane.f32.xlu0 %v4986
        %v4988 = vpop.xlane.xlu0 %4987
        %v4989 = vmax.f32 %v4592, %v4681
        %4990 = vmax.xlane.f32.xlu0 %v4989
        %v4991 = vpop.xlane.xlu0 %4990
        %v4992 = vmax.f32 %v4595, %v4684
        %4993 = vmax.xlane.f32.xlu0 %v4992
        %v4994 = vpop.xlane.xlu0 %4993
        %v4995 = vmax.f32 %v4597, %v4686
        %4996 = vmax.xlane.f32.xlu0 %v4995
        %v4997 = vpop.xlane.xlu0 %4996
        %v4998 = vmax.f32 %v4600, %v4689
        %4999 = vmax.xlane.f32.xlu0 %v4998
        %v5000 = vpop.xlane.xlu0 %4999
        %v5001 = vmax.f32 %v4602, %v4691
        %5002 = vmax.xlane.f32.xlu0 %v5001
        %v5003 = vpop.xlane.xlu0 %5002
        %v5004 = vmax.f32 %v4605, %v4694
        %5005 = vmax.xlane.f32.xlu0 %v5004
        %v5006 = vpop.xlane.xlu0 %5005
        %v5007 = vmax.f32 %v4607, %v4696
        %5008 = vmax.xlane.f32.xlu0 %v5007
        %v5009 = vpop.xlane.xlu0 %5008
        %v5010 = vmax.f32 %v4610, %v4699
        %5011 = vmax.xlane.f32.xlu0 %v5010
        %v5012 = vpop.xlane.xlu0 %5011
        %v5013 = vmax.f32 %v4612, %v4701
        %5014 = vmax.xlane.f32.xlu0 %v5013
        %v5015 = vpop.xlane.xlu0 %5014
        %v5016 = vmax.f32 %v4615, %v4704
        %5017 = vmax.xlane.f32.xlu0 %v5016
        %v5018 = vpop.xlane.xlu0 %5017
        %v5019 = vmax.f32 %v4617, %v4706
        %5020 = vmax.xlane.f32.xlu0 %v5019
        %v5021 = vpop.xlane.xlu0 %5020
        %v5022 = vmax.f32 %v4620, %v4709
        %5023 = vmax.xlane.f32.xlu0 %v5022
        %v5024 = vpop.xlane.xlu0 %5023
        %v5025 = vmax.f32 %v4622, %v4711
        %5026 = vmax.xlane.f32.xlu0 %v5025
        %v5027 = vpop.xlane.xlu0 %5026
        %v5028 = vmax.f32 %v4625, %v4714
        %5029 = vmax.xlane.f32.xlu0 %v5028
        %v5030 = vpop.xlane.xlu0 %5029
        %v5031 = vmax.f32 %v4627, %v4716
        %5032 = vmax.xlane.f32.xlu0 %v5031
        %v5033 = vpop.xlane.xlu0 %5032
        %v5034 = vmax.f32 %v4630, %v4719
        %5035 = vmax.xlane.f32.xlu0 %v5034
        %v5036 = vpop.xlane.xlu0 %5035
        %v5037 = vmax.f32 %v4632, %v4721
        %5038 = vmax.xlane.f32.xlu0 %v5037
        %v5039 = vpop.xlane.xlu0 %5038
        %v5040 = vmax.f32 %v4635, %v4724
        %5041 = vmax.xlane.f32.xlu0 %v5040
        %v5042 = vpop.xlane.xlu0 %5041
        %v5043 = vmax.f32 %v4637, %v4726
        %5044 = vmax.xlane.f32.xlu0 %v5043
        %v5045 = vpop.xlane.xlu0 %5044
        %v5046 = vmax.f32 %v4640, %v4729
        %5047 = vmax.xlane.f32.xlu0 %v5046
        %v5048 = vpop.xlane.xlu0 %5047
        %v5049 = vmax.f32 %v4642, %v4731
        %5050 = vmax.xlane.f32.xlu0 %v5049
        %v5051 = vpop.xlane.xlu0 %5050
        %v5052 = vmax.f32 %v4645, %v4734
        %5053 = vmax.xlane.f32.xlu0 %v5052
        %v5054 = vpop.xlane.xlu0 %5053
        %v5055 = vmax.f32 %v4647, %v4736
        %5056 = vmax.xlane.f32.xlu0 %v5055
        %v5057 = vpop.xlane.xlu0 %5056
        %v5058 = vmax.f32 %v4964, %v4868
        %v5059 = vmax.f32 %v4967, %v4871
        %v5060 = vmax.f32 %v4970, %v4874
        %v5061 = vmax.f32 %v4973, %v4877
        %v5062 = vmax.f32 %v4976, %v4880
        %v5063 = vmax.f32 %v4979, %v4883
        %v5064 = vmax.f32 %v4982, %v4886
        %v5065 = vmax.f32 %v4985, %v4889
        %v5066 = vmax.f32 %v4988, %v4892
        %v5067 = vmax.f32 %v4991, %v4895
        %v5068 = vmax.f32 %v4994, %v4898
        %v5069 = vmax.f32 %v4997, %v4901
        %v5070 = vmax.f32 %v5000, %v4904
        %v5071 = vmax.f32 %v5003, %v4907
        %v5072 = vmax.f32 %v5006, %v4910
        %v5073 = vmax.f32 %v5009, %v4913
        %v5074 = vmax.f32 %v5012, %v4916
        %v5075 = vmax.f32 %v5015, %v4919
        %v5076 = vmax.f32 %v5018, %v4922
        %v5077 = vmax.f32 %v5021, %v4925
        %v5078 = vmax.f32 %v5024, %v4928
        %v5079 = vmax.f32 %v5027, %v4931
        %v5080 = vmax.f32 %v5030, %v4934
        %v5081 = vmax.f32 %v5033, %v4937
        %v5082 = vmax.f32 %v5036, %v4940
        %v5083 = vmax.f32 %v5039, %v4943
        %v5084 = vmax.f32 %v5042, %v4946
        %v5085 = vmax.f32 %v5045, %v4949
        %v5086 = vmax.f32 %v5048, %v4952
        %v5087 = vmax.f32 %v5051, %v4955
        %v5088 = vmax.f32 %v5054, %v4958
        %v5089 = vmax.f32 %v5057, %v4961
        %v5090 = vsub.f32 %v4570, %v5058
        %v5091 = vsub.f32 %v4659, %v5058
        %v5092 = vsub.f32 %v4572, %v5059
        %v5093 = vsub.f32 %v4661, %v5059
        %v5094 = vsub.f32 %v4575, %v5060
        %v5095 = vsub.f32 %v4664, %v5060
        %v5096 = vsub.f32 %v4577, %v5061
        %v5097 = vsub.f32 %v4666, %v5061
        %v5098 = vsub.f32 %v4580, %v5062
        %v5099 = vsub.f32 %v4669, %v5062
        %v5100 = vsub.f32 %v4582, %v5063
        %v5101 = vsub.f32 %v4671, %v5063
        %v5102 = vsub.f32 %v4585, %v5064
        %v5103 = vsub.f32 %v4674, %v5064
        %v5104 = vsub.f32 %v4587, %v5065
        %v5105 = vsub.f32 %v4676, %v5065
        %v5106 = vsub.f32 %v4590, %v5066
        %v5107 = vsub.f32 %v4679, %v5066
        %v5108 = vsub.f32 %v4592, %v5067
        %v5109 = vsub.f32 %v4681, %v5067
        %v5110 = vsub.f32 %v4595, %v5068
        %v5111 = vsub.f32 %v4684, %v5068
        %v5112 = vsub.f32 %v4597, %v5069
        %v5113 = vsub.f32 %v4686, %v5069
        %v5114 = vsub.f32 %v4600, %v5070
        %v5115 = vsub.f32 %v4689, %v5070
        %v5116 = vsub.f32 %v4602, %v5071
        %v5117 = vsub.f32 %v4691, %v5071
        %v5118 = vsub.f32 %v4605, %v5072
        %v5119 = vsub.f32 %v4694, %v5072
        %v5120 = vsub.f32 %v4607, %v5073
        %v5121 = vsub.f32 %v4696, %v5073
        %v5122 = vsub.f32 %v4610, %v5074
        %v5123 = vsub.f32 %v4699, %v5074
        %v5124 = vsub.f32 %v4612, %v5075
        %v5125 = vsub.f32 %v4701, %v5075
        %v5126 = vsub.f32 %v4615, %v5076
        %v5127 = vsub.f32 %v4704, %v5076
        %v5128 = vsub.f32 %v4617, %v5077
        %v5129 = vsub.f32 %v4706, %v5077
        %v5130 = vsub.f32 %v4620, %v5078
        %v5131 = vsub.f32 %v4709, %v5078
        %v5132 = vsub.f32 %v4622, %v5079
        %v5133 = vsub.f32 %v4711, %v5079
        %v5134 = vsub.f32 %v4625, %v5080
        %v5135 = vsub.f32 %v4714, %v5080
        %v5136 = vsub.f32 %v4627, %v5081
        %v5137 = vsub.f32 %v4716, %v5081
        %v5138 = vsub.f32 %v4630, %v5082
        %v5139 = vsub.f32 %v4719, %v5082
        %v5140 = vsub.f32 %v4632, %v5083
        %v5141 = vsub.f32 %v4721, %v5083
        %v5142 = vsub.f32 %v4635, %v5084
        %v5143 = vsub.f32 %v4724, %v5084
        %v5144 = vsub.f32 %v4637, %v5085
        %v5145 = vsub.f32 %v4726, %v5085
        %v5146 = vsub.f32 %v4640, %v5086
        %v5147 = vsub.f32 %v4729, %v5086
        %v5148 = vsub.f32 %v4642, %v5087
        %v5149 = vsub.f32 %v4731, %v5087
        %v5150 = vsub.f32 %v4645, %v5088
        %v5151 = vsub.f32 %v4734, %v5088
        %v5152 = vsub.f32 %v4647, %v5089
        %v5153 = vsub.f32 %v4736, %v5089
        %v5154 = vmul.f32 %v5090, 1.442695
        %v5155 = vpow.pop %v5154
        %v5156 = vmul.f32 %v5091, 1.442695
        %v5157 = vpow.pop %v5156
        %v5158 = vmul.f32 %v5092, 1.442695
        %v5159 = vpow.pop %v5158
        %v5160 = vmul.f32 %v5093, 1.442695
        %v5161 = vpow.pop %v5160
        %v5162 = vmul.f32 %v5094, 1.442695
        %v5163 = vpow.pop %v5162
        %v5164 = vmul.f32 %v5095, 1.442695
        %v5165 = vpow.pop %v5164
        %v5166 = vmul.f32 %v5096, 1.442695
        %v5167 = vpow.pop %v5166
        %v5168 = vmul.f32 %v5097, 1.442695
        %v5169 = vpow.pop %v5168
        %v5170 = vmul.f32 %v5098, 1.442695
        %v5171 = vpow.pop %v5170
        %v5172 = vmul.f32 %v5099, 1.442695
        %v5173 = vpow.pop %v5172
        %v5174 = vmul.f32 %v5100, 1.442695
        %v5175 = vpow.pop %v5174
        %v5176 = vmul.f32 %v5101, 1.442695
        %v5177 = vpow.pop %v5176
        %v5178 = vmul.f32 %v5102, 1.442695
        %v5179 = vpow.pop %v5178
        %v5180 = vmul.f32 %v5103, 1.442695
        %v5181 = vpow.pop %v5180
        %v5182 = vmul.f32 %v5104, 1.442695
        %v5183 = vpow.pop %v5182
        %v5184 = vmul.f32 %v5105, 1.442695
        %v5185 = vpow.pop %v5184
        %v5186 = vmul.f32 %v5106, 1.442695
        %v5187 = vpow.pop %v5186
        %v5188 = vmul.f32 %v5107, 1.442695
        %v5189 = vpow.pop %v5188
        %v5190 = vmul.f32 %v5108, 1.442695
        %v5191 = vpow.pop %v5190
        %v5192 = vmul.f32 %v5109, 1.442695
        %v5193 = vpow.pop %v5192
        %v5194 = vmul.f32 %v5110, 1.442695
        %v5195 = vpow.pop %v5194
        %v5196 = vmul.f32 %v5111, 1.442695
        %v5197 = vpow.pop %v5196
        %v5198 = vmul.f32 %v5112, 1.442695
        %v5199 = vpow.pop %v5198
        %v5200 = vmul.f32 %v5113, 1.442695
        %v5201 = vpow.pop %v5200
        %v5202 = vmul.f32 %v5114, 1.442695
        %v5203 = vpow.pop %v5202
        %v5204 = vmul.f32 %v5115, 1.442695
        %v5205 = vpow.pop %v5204
        %v5206 = vmul.f32 %v5116, 1.442695
        %v5207 = vpow.pop %v5206
        %v5208 = vmul.f32 %v5117, 1.442695
        %v5209 = vpow.pop %v5208
        %v5210 = vmul.f32 %v5118, 1.442695
        %v5211 = vpow.pop %v5210
        %v5212 = vmul.f32 %v5119, 1.442695
        %v5213 = vpow.pop %v5212
        %v5214 = vmul.f32 %v5120, 1.442695
        %v5215 = vpow.pop %v5214
        %v5216 = vmul.f32 %v5121, 1.442695
        %v5217 = vpow.pop %v5216
        %v5218 = vmul.f32 %v5122, 1.442695
        %v5219 = vpow.pop %v5218
        %v5220 = vmul.f32 %v5123, 1.442695
        %v5221 = vpow.pop %v5220
        %v5222 = vmul.f32 %v5124, 1.442695
        %v5223 = vpow.pop %v5222
        %v5224 = vmul.f32 %v5125, 1.442695
        %v5225 = vpow.pop %v5224
        %v5226 = vmul.f32 %v5126, 1.442695
        %v5227 = vpow.pop %v5226
        %v5228 = vmul.f32 %v5127, 1.442695
        %v5229 = vpow.pop %v5228
        %v5230 = vmul.f32 %v5128, 1.442695
        %v5231 = vpow.pop %v5230
        %v5232 = vmul.f32 %v5129, 1.442695
        %v5233 = vpow.pop %v5232
        %v5234 = vmul.f32 %v5130, 1.442695
        %v5235 = vpow.pop %v5234
        %v5236 = vmul.f32 %v5131, 1.442695
        %v5237 = vpow.pop %v5236
        %v5238 = vmul.f32 %v5132, 1.442695
        %v5239 = vpow.pop %v5238
        %v5240 = vmul.f32 %v5133, 1.442695
        %v5241 = vpow.pop %v5240
        %v5242 = vmul.f32 %v5134, 1.442695
        %v5243 = vpow.pop %v5242
        %v5244 = vmul.f32 %v5135, 1.442695
        %v5245 = vpow.pop %v5244
        %v5246 = vmul.f32 %v5136, 1.442695
        %v5247 = vpow.pop %v5246
        %v5248 = vmul.f32 %v5137, 1.442695
        %v5249 = vpow.pop %v5248
        %v5250 = vmul.f32 %v5138, 1.442695
        %v5251 = vpow.pop %v5250
        %v5252 = vmul.f32 %v5139, 1.442695
        %v5253 = vpow.pop %v5252
        %v5254 = vmul.f32 %v5140, 1.442695
        %v5255 = vpow.pop %v5254
        %v5256 = vmul.f32 %v5141, 1.442695
        %v5257 = vpow.pop %v5256
        %v5258 = vmul.f32 %v5142, 1.442695
        %v5259 = vpow.pop %v5258
        %v5260 = vmul.f32 %v5143, 1.442695
        %v5261 = vpow.pop %v5260
        %v5262 = vmul.f32 %v5144, 1.442695
        %v5263 = vpow.pop %v5262
        %v5264 = vmul.f32 %v5145, 1.442695
        %v5265 = vpow.pop %v5264
        %v5266 = vmul.f32 %v5146, 1.442695
        %v5267 = vpow.pop %v5266
        %v5268 = vmul.f32 %v5147, 1.442695
        %v5269 = vpow.pop %v5268
        %v5270 = vmul.f32 %v5148, 1.442695
        %v5271 = vpow.pop %v5270
        %v5272 = vmul.f32 %v5149, 1.442695
        %v5273 = vpow.pop %v5272
        %v5274 = vmul.f32 %v5150, 1.442695
        %v5275 = vpow.pop %v5274
        %v5276 = vmul.f32 %v5151, 1.442695
        %v5277 = vpow.pop %v5276
        %v5278 = vmul.f32 %v5152, 1.442695
        %v5279 = vpow.pop %v5278
        %v5280 = vmul.f32 %v5153, 1.442695
        %v5281 = vpow.pop %v5280
        %v5282 = vsub.f32 %v4868, %v5058
        %v5283 = vsub.f32 %v4871, %v5059
        %v5284 = vsub.f32 %v4874, %v5060
        %v5285 = vsub.f32 %v4877, %v5061
        %v5286 = vsub.f32 %v4880, %v5062
        %v5287 = vsub.f32 %v4883, %v5063
        %v5288 = vsub.f32 %v4886, %v5064
        %v5289 = vsub.f32 %v4889, %v5065
        %v5290 = vsub.f32 %v4892, %v5066
        %v5291 = vsub.f32 %v4895, %v5067
        %v5292 = vsub.f32 %v4898, %v5068
        %v5293 = vsub.f32 %v4901, %v5069
        %v5294 = vsub.f32 %v4904, %v5070
        %v5295 = vsub.f32 %v4907, %v5071
        %v5296 = vsub.f32 %v4910, %v5072
        %v5297 = vsub.f32 %v4913, %v5073
        %v5298 = vsub.f32 %v4916, %v5074
        %v5299 = vsub.f32 %v4919, %v5075
        %v5300 = vsub.f32 %v4922, %v5076
        %v5301 = vsub.f32 %v4925, %v5077
        %v5302 = vsub.f32 %v4928, %v5078
        %v5303 = vsub.f32 %v4931, %v5079
        %v5304 = vsub.f32 %v4934, %v5080
        %v5305 = vsub.f32 %v4937, %v5081
        %v5306 = vsub.f32 %v4940, %v5082
        %v5307 = vsub.f32 %v4943, %v5083
        %v5308 = vsub.f32 %v4946, %v5084
        %v5309 = vsub.f32 %v4949, %v5085
        %v5310 = vsub.f32 %v4952, %v5086
        %v5311 = vsub.f32 %v4955, %v5087
        %v5312 = vsub.f32 %v4958, %v5088
        %v5313 = vsub.f32 %v4961, %v5089
        %v5314 = vmul.f32 %v5282, 1.442695
        %v5315 = vpow.pop %v5314
        %v5316 = vmul.f32 %v5283, 1.442695
        %v5317 = vpow.pop %v5316
        %v5318 = vmul.f32 %v5284, 1.442695
        %v5319 = vpow.pop %v5318
        %v5320 = vmul.f32 %v5285, 1.442695
        %v5321 = vpow.pop %v5320
        %v5322 = vmul.f32 %v5286, 1.442695
        %v5323 = vpow.pop %v5322
        %v5324 = vmul.f32 %v5287, 1.442695
        %v5325 = vpow.pop %v5324
        %v5326 = vmul.f32 %v5288, 1.442695
        %v5327 = vpow.pop %v5326
        %v5328 = vmul.f32 %v5289, 1.442695
        %v5329 = vpow.pop %v5328
        %v5330 = vmul.f32 %v5290, 1.442695
        %v5331 = vpow.pop %v5330
        %v5332 = vmul.f32 %v5291, 1.442695
        %v5333 = vpow.pop %v5332
        %v5334 = vmul.f32 %v5292, 1.442695
        %v5335 = vpow.pop %v5334
        %v5336 = vmul.f32 %v5293, 1.442695
        %v5337 = vpow.pop %v5336
        %v5338 = vmul.f32 %v5294, 1.442695
        %v5339 = vpow.pop %v5338
        %v5340 = vmul.f32 %v5295, 1.442695
        %v5341 = vpow.pop %v5340
        %v5342 = vmul.f32 %v5296, 1.442695
        %v5343 = vpow.pop %v5342
        %v5344 = vmul.f32 %v5297, 1.442695
        %v5345 = vpow.pop %v5344
        %v5346 = vmul.f32 %v5298, 1.442695
        %v5347 = vpow.pop %v5346
        %v5348 = vmul.f32 %v5299, 1.442695
        %v5349 = vpow.pop %v5348
        %v5350 = vmul.f32 %v5300, 1.442695
        %v5351 = vpow.pop %v5350
        %v5352 = vmul.f32 %v5301, 1.442695
        %v5353 = vpow.pop %v5352
        %v5354 = vmul.f32 %v5302, 1.442695
        %v5355 = vpow.pop %v5354
        %v5356 = vmul.f32 %v5303, 1.442695
        %v5357 = vpow.pop %v5356
        %v5358 = vmul.f32 %v5304, 1.442695
        %v5359 = vpow.pop %v5358
        %v5360 = vmul.f32 %v5305, 1.442695
        %v5361 = vpow.pop %v5360
        %v5362 = vmul.f32 %v5306, 1.442695
        %v5363 = vpow.pop %v5362
        %v5364 = vmul.f32 %v5307, 1.442695
        %v5365 = vpow.pop %v5364
        %v5366 = vmul.f32 %v5308, 1.442695
        %v5367 = vpow.pop %v5366
        %v5368 = vmul.f32 %v5309, 1.442695
        %v5369 = vpow.pop %v5368
        %v5370 = vmul.f32 %v5310, 1.442695
        %v5371 = vpow.pop %v5370
        %v5372 = vmul.f32 %v5311, 1.442695
        %v5373 = vpow.pop %v5372
        %v5374 = vmul.f32 %v5312, 1.442695
        %v5375 = vpow.pop %v5374
        %v5376 = vmul.f32 %v5313, 1.442695
        %v5377 = vpow.pop %v5376
        %v5378 = vadd.f32 %v5155, %v5157
        %5379 = vadd.xlane.f32.xlu0 %v5378
        %v5380 = vpop.xlane.xlu0 %5379
        %v5381 = vadd.f32 %v5159, %v5161
        %5382 = vadd.xlane.f32.xlu0 %v5381
        %v5383 = vpop.xlane.xlu0 %5382
        %v5384 = vadd.f32 %v5163, %v5165
        %5385 = vadd.xlane.f32.xlu0 %v5384
        %v5386 = vpop.xlane.xlu0 %5385
        %v5387 = vadd.f32 %v5167, %v5169
        %5388 = vadd.xlane.f32.xlu0 %v5387
        %v5389 = vpop.xlane.xlu0 %5388
        %v5390 = vadd.f32 %v5171, %v5173
        %5391 = vadd.xlane.f32.xlu0 %v5390
        %v5392 = vpop.xlane.xlu0 %5391
        %v5393 = vadd.f32 %v5175, %v5177
        %5394 = vadd.xlane.f32.xlu0 %v5393
        %v5395 = vpop.xlane.xlu0 %5394
        %v5396 = vadd.f32 %v5179, %v5181
        %5397 = vadd.xlane.f32.xlu0 %v5396
        %v5398 = vpop.xlane.xlu0 %5397
        %v5399 = vadd.f32 %v5183, %v5185
        %5400 = vadd.xlane.f32.xlu0 %v5399
        %v5401 = vpop.xlane.xlu0 %5400
        %v5402 = vadd.f32 %v5187, %v5189
        %5403 = vadd.xlane.f32.xlu0 %v5402
        %v5404 = vpop.xlane.xlu0 %5403
        %v5405 = vadd.f32 %v5191, %v5193
        %5406 = vadd.xlane.f32.xlu0 %v5405
        %v5407 = vpop.xlane.xlu0 %5406
        %v5408 = vadd.f32 %v5195, %v5197
        %5409 = vadd.xlane.f32.xlu0 %v5408
        %v5410 = vpop.xlane.xlu0 %5409
        %v5411 = vadd.f32 %v5199, %v5201
        %5412 = vadd.xlane.f32.xlu0 %v5411
        %v5413 = vpop.xlane.xlu0 %5412
        %v5414 = vadd.f32 %v5203, %v5205
        %5415 = vadd.xlane.f32.xlu0 %v5414
        %v5416 = vpop.xlane.xlu0 %5415
        %v5417 = vadd.f32 %v5207, %v5209
        %5418 = vadd.xlane.f32.xlu0 %v5417
        %v5419 = vpop.xlane.xlu0 %5418
        %v5420 = vadd.f32 %v5211, %v5213
        %5421 = vadd.xlane.f32.xlu0 %v5420
        %v5422 = vpop.xlane.xlu0 %5421
        %v5423 = vadd.f32 %v5215, %v5217
        %5424 = vadd.xlane.f32.xlu0 %v5423
        %v5425 = vpop.xlane.xlu0 %5424
        %v5426 = vadd.f32 %v5219, %v5221
        %5427 = vadd.xlane.f32.xlu0 %v5426
        %v5428 = vpop.xlane.xlu0 %5427
        %v5429 = vadd.f32 %v5223, %v5225
        %5430 = vadd.xlane.f32.xlu0 %v5429
        %v5431 = vpop.xlane.xlu0 %5430
        %v5432 = vadd.f32 %v5227, %v5229
        %5433 = vadd.xlane.f32.xlu0 %v5432
        %v5434 = vpop.xlane.xlu0 %5433
        %v5435 = vadd.f32 %v5231, %v5233
        %5436 = vadd.xlane.f32.xlu0 %v5435
        %v5437 = vpop.xlane.xlu0 %5436
        %v5438 = vadd.f32 %v5235, %v5237
        %5439 = vadd.xlane.f32.xlu0 %v5438
        %v5440 = vpop.xlane.xlu0 %5439
        %v5441 = vadd.f32 %v5239, %v5241
        %5442 = vadd.xlane.f32.xlu0 %v5441
        %v5443 = vpop.xlane.xlu0 %5442
        %v5444 = vadd.f32 %v5243, %v5245
        %5445 = vadd.xlane.f32.xlu0 %v5444
        %v5446 = vpop.xlane.xlu0 %5445
        %v5447 = vadd.f32 %v5247, %v5249
        %5448 = vadd.xlane.f32.xlu0 %v5447
        %v5449 = vpop.xlane.xlu0 %5448
        %v5450 = vadd.f32 %v5251, %v5253
        %5451 = vadd.xlane.f32.xlu0 %v5450
        %v5452 = vpop.xlane.xlu0 %5451
        %v5453 = vadd.f32 %v5255, %v5257
        %5454 = vadd.xlane.f32.xlu0 %v5453
        %v5455 = vpop.xlane.xlu0 %5454
        %v5456 = vadd.f32 %v5259, %v5261
        %5457 = vadd.xlane.f32.xlu0 %v5456
        %v5458 = vpop.xlane.xlu0 %5457
        %v5459 = vadd.f32 %v5263, %v5265
        %5460 = vadd.xlane.f32.xlu0 %v5459
        %v5461 = vpop.xlane.xlu0 %5460
        %v5462 = vadd.f32 %v5267, %v5269
        %5463 = vadd.xlane.f32.xlu0 %v5462
        %v5464 = vpop.xlane.xlu0 %5463
        %v5465 = vadd.f32 %v5271, %v5273
        %5466 = vadd.xlane.f32.xlu0 %v5465
        %v5467 = vpop.xlane.xlu0 %5466
        %v5468 = vadd.f32 %v5275, %v5277
        %5469 = vadd.xlane.f32.xlu0 %v5468
        %v5470 = vpop.xlane.xlu0 %5469
        %v5471 = vadd.f32 %v5279, %v5281
        %5472 = vadd.xlane.f32.xlu0 %v5471
        %v5473 = vpop.xlane.xlu0 %5472
        %v5474 = vadd.f32 %v5380, %v5315
        %v5475 = vadd.f32 %v5383, %v5317
        %v5476 = vadd.f32 %v5386, %v5319
        %v5477 = vadd.f32 %v5389, %v5321
        %v5478 = vadd.f32 %v5392, %v5323
        %v5479 = vadd.f32 %v5395, %v5325
        %v5480 = vadd.f32 %v5398, %v5327
        %v5481 = vadd.f32 %v5401, %v5329
        %v5482 = vadd.f32 %v5404, %v5331
        %v5483 = vadd.f32 %v5407, %v5333
        %v5484 = vadd.f32 %v5410, %v5335
        %v5485 = vadd.f32 %v5413, %v5337
        %v5486 = vadd.f32 %v5416, %v5339
        %v5487 = vadd.f32 %v5419, %v5341
        %v5488 = vadd.f32 %v5422, %v5343
        %v5489 = vadd.f32 %v5425, %v5345
        %v5490 = vadd.f32 %v5428, %v5347
        %v5491 = vadd.f32 %v5431, %v5349
        %v5492 = vadd.f32 %v5434, %v5351
        %v5493 = vadd.f32 %v5437, %v5353
        %v5494 = vadd.f32 %v5440, %v5355
        %v5495 = vadd.f32 %v5443, %v5357
        %v5496 = vadd.f32 %v5446, %v5359
        %v5497 = vadd.f32 %v5449, %v5361
        %v5498 = vadd.f32 %v5452, %v5363
        %v5499 = vadd.f32 %v5455, %v5365
        %v5500 = vadd.f32 %v5458, %v5367
        %v5501 = vadd.f32 %v5461, %v5369
        %v5502 = vadd.f32 %v5464, %v5371
        %v5503 = vadd.f32 %v5467, %v5373
        %v5504 = vadd.f32 %v5470, %v5375
        %v5505 = vadd.f32 %v5473, %v5377
        %v5506 = vrcp.pop %v5474
        %v5507 = vrcp.pop %v5475
        %v5508 = vrcp.pop %v5476
        %v5509 = vrcp.pop %v5477
        %v5510 = vrcp.pop %v5478
        %v5511 = vrcp.pop %v5479
        %v5512 = vrcp.pop %v5480
        %v5513 = vrcp.pop %v5481
        %v5514 = vrcp.pop %v5482
        %v5515 = vrcp.pop %v5483
        %v5516 = vrcp.pop %v5484
        %v5517 = vrcp.pop %v5485
        %v5518 = vrcp.pop %v5486
        %v5519 = vrcp.pop %v5487
        %v5520 = vrcp.pop %v5488
        %v5521 = vrcp.pop %v5489
        %v5522 = vrcp.pop %v5490
        %v5523 = vrcp.pop %v5491
        %v5524 = vrcp.pop %v5492
        %v5525 = vrcp.pop %v5493
        %v5526 = vrcp.pop %v5494
        %v5527 = vrcp.pop %v5495
        %v5528 = vrcp.pop %v5496
        %v5529 = vrcp.pop %v5497
        %v5530 = vrcp.pop %v5498
        %v5531 = vrcp.pop %v5499
        %v5532 = vrcp.pop %v5500
        %v5533 = vrcp.pop %v5501
        %v5534 = vrcp.pop %v5502
        %v5535 = vrcp.pop %v5503
        %v5536 = vrcp.pop %v5504
        %v5537 = vrcp.pop %v5505
        %v5538 = vpack.c.bf16 %v5159, %v5155
        %v5539 = vpack.c.bf16 %v5161, %v5157
        %v5540 = vpack.c.bf16 %v5167, %v5163
        %v5541 = vpack.c.bf16 %v5169, %v5165
        %v5542 = vpack.c.bf16 %v5175, %v5171
        %v5543 = vpack.c.bf16 %v5177, %v5173
        %v5544 = vpack.c.bf16 %v5183, %v5179
        %v5545 = vpack.c.bf16 %v5185, %v5181
        %v5546 = vpack.c.bf16 %v5191, %v5187
        %v5547 = vpack.c.bf16 %v5193, %v5189
        %v5548 = vpack.c.bf16 %v5199, %v5195
        %v5549 = vpack.c.bf16 %v5201, %v5197
        %v5550 = vpack.c.bf16 %v5207, %v5203
        %v5551 = vpack.c.bf16 %v5209, %v5205
        %v5552 = vpack.c.bf16 %v5215, %v5211
        %v5553 = vpack.c.bf16 %v5217, %v5213
        %v5554 = vpack.c.bf16 %v5223, %v5219
        %v5555 = vpack.c.bf16 %v5225, %v5221
        %v5556 = vpack.c.bf16 %v5231, %v5227
        %v5557 = vpack.c.bf16 %v5233, %v5229
        %v5558 = vpack.c.bf16 %v5239, %v5235
        %v5559 = vpack.c.bf16 %v5241, %v5237
        %v5560 = vpack.c.bf16 %v5247, %v5243
        %v5561 = vpack.c.bf16 %v5249, %v5245
        %v5562 = vpack.c.bf16 %v5255, %v5251
        %v5563 = vpack.c.bf16 %v5257, %v5253
        %v5564 = vpack.c.bf16 %v5263, %v5259
        %v5565 = vpack.c.bf16 %v5265, %v5261
        %v5566 = vpack.c.bf16 %v5271, %v5267
        %v5567 = vpack.c.bf16 %v5273, %v5269
        %v5568 = vpack.c.bf16 %v5279, %v5275
        %v5569 = vpack.c.bf16 %v5281, %v5277
        %v5570 = vmul.f32 %v5315, %v3646
        %v5571 = vmul.f32 %v5317, %v3646
        %v5572 = vmul.f32 %v5319, %v3646
        %v5573 = vmul.f32 %v5321, %v3646
        %v5574 = vmul.f32 %v5323, %v3646
        %v5575 = vmul.f32 %v5325, %v3646
        %v5576 = vmul.f32 %v5327, %v3646
        %v5577 = vmul.f32 %v5329, %v3646
        %v5578 = vmul.f32 %v5331, %v3646
        %v5579 = vmul.f32 %v5333, %v3646
        %v5580 = vmul.f32 %v5335, %v3646
        %v5581 = vmul.f32 %v5337, %v3646
        %v5582 = vmul.f32 %v5339, %v3646
        %v5583 = vmul.f32 %v5341, %v3646
        %v5584 = vmul.f32 %v5343, %v3646
        %v5585 = vmul.f32 %v5345, %v3646
        %v5586 = vmul.f32 %v5347, %v3646
        %v5587 = vmul.f32 %v5349, %v3646
        %v5588 = vmul.f32 %v5351, %v3646
        %v5589 = vmul.f32 %v5353, %v3646
        %v5590 = vmul.f32 %v5355, %v3646
        %v5591 = vmul.f32 %v5357, %v3646
        %v5592 = vmul.f32 %v5359, %v3646
        %v5593 = vmul.f32 %v5361, %v3646
        %v5594 = vmul.f32 %v5363, %v3646
        %v5595 = vmul.f32 %v5365, %v3646
        %v5596 = vmul.f32 %v5367, %v3646
        %v5597 = vmul.f32 %v5369, %v3646
        %v5598 = vmul.f32 %v5371, %v3646
        %v5599 = vmul.f32 %v5373, %v3646
        %v5600 = vmul.f32 %v5375, %v3646
        %v5601 = vmul.f32 %v5377, %v3646
        %5602 = vrot.lane.b32.xlu0 %v3743, 112
        %v5603 = vpop.permute.xlu0 %5602
        %5604 = vrot.lane.b32.xlu0 %v3744, 112
        %v5605 = vpop.permute.xlu0 %5604
        %5606 = vrot.lane.b32.xlu0 %v3745, 112
        %v5607 = vpop.permute.xlu0 %5606
        %5608 = vrot.lane.b32.xlu0 %v3746, 112
        %v5609 = vpop.permute.xlu0 %5608
        %5610 = vrot.lane.b32.xlu0 %v3747, 112
        %v5611 = vpop.permute.xlu0 %5610
        %5612 = vrot.lane.b32.xlu0 %v3748, 112
        %v5613 = vpop.permute.xlu0 %5612
        %5614 = vrot.lane.b32.xlu0 %v3749, 112
        %v5615 = vpop.permute.xlu0 %5614
        %5616 = vrot.lane.b32.xlu0 %v3750, 112
        %v5617 = vpop.permute.xlu0 %5616
        %5618 = vrot.lane.b32.xlu0 %v3751, 112
        %v5619 = vpop.permute.xlu0 %5618
        %5620 = vrot.lane.b32.xlu0 %v3752, 112
        %v5621 = vpop.permute.xlu0 %5620
        %5622 = vrot.lane.b32.xlu0 %v3753, 112
        %v5623 = vpop.permute.xlu0 %5622
        %5624 = vrot.lane.b32.xlu0 %v3754, 112
        %v5625 = vpop.permute.xlu0 %5624
        %5626 = vrot.lane.b32.xlu0 %v3755, 112
        %v5627 = vpop.permute.xlu0 %5626
        %5628 = vrot.lane.b32.xlu0 %v3756, 112
        %v5629 = vpop.permute.xlu0 %5628
        %5630 = vrot.lane.b32.xlu0 %v3757, 112
        %v5631 = vpop.permute.xlu0 %5630
        %5632 = vrot.lane.b32.xlu0 %v3758, 112
        %v5633 = vpop.permute.xlu0 %5632
        %5682 = vrot.lane.b32.xlu0 %v5570, 112
        %v5683 = vpop.permute.xlu0 %5682
        %5684 = vrot.lane.b32.xlu0 %v5571, 112
        %v5685 = vpop.permute.xlu0 %5684
        %5686 = vrot.lane.b32.xlu0 %v5572, 112
        %v5687 = vpop.permute.xlu0 %5686
        %5688 = vrot.lane.b32.xlu0 %v5573, 112
        %v5689 = vpop.permute.xlu0 %5688
        %5690 = vrot.lane.b32.xlu0 %v5574, 112
        %v5691 = vpop.permute.xlu0 %5690
        %5692 = vrot.lane.b32.xlu0 %v5575, 112
        %v5693 = vpop.permute.xlu0 %5692
        %5694 = vrot.lane.b32.xlu0 %v5576, 112
        %v5695 = vpop.permute.xlu0 %5694
        %5696 = vrot.lane.b32.xlu0 %v5577, 112
        %v5697 = vpop.permute.xlu0 %5696
        %5698 = vrot.lane.b32.xlu0 %v5578, 112
        %v5699 = vpop.permute.xlu0 %5698
        %5700 = vrot.lane.b32.xlu0 %v5579, 112
        %v5701 = vpop.permute.xlu0 %5700
        %5702 = vrot.lane.b32.xlu0 %v5580, 112
        %v5703 = vpop.permute.xlu0 %5702
        %5704 = vrot.lane.b32.xlu0 %v5581, 112
        %v5705 = vpop.permute.xlu0 %5704
        %5706 = vrot.lane.b32.xlu0 %v5582, 112
        %v5707 = vpop.permute.xlu0 %5706
        %5708 = vrot.lane.b32.xlu0 %v5583, 112
        %v5709 = vpop.permute.xlu0 %5708
        %5710 = vrot.lane.b32.xlu0 %v5584, 112
        %v5711 = vpop.permute.xlu0 %5710
        %5712 = vrot.lane.b32.xlu0 %v5585, 112
        %v5713 = vpop.permute.xlu0 %5712
        %5714 = vrot.lane.b32.xlu0 %v5586, 112
        %v5715 = vpop.permute.xlu0 %5714
        %5716 = vrot.lane.b32.xlu0 %v5587, 112
        %v5717 = vpop.permute.xlu0 %5716
        %5718 = vrot.lane.b32.xlu0 %v5588, 112
        %v5719 = vpop.permute.xlu0 %5718
        %5720 = vrot.lane.b32.xlu0 %v5589, 112
        %v5721 = vpop.permute.xlu0 %5720
        %5722 = vrot.lane.b32.xlu0 %v5590, 112
        %v5723 = vpop.permute.xlu0 %5722
        %5724 = vrot.lane.b32.xlu0 %v5591, 112
        %v5725 = vpop.permute.xlu0 %5724
        %5726 = vrot.lane.b32.xlu0 %v5592, 112
        %v5727 = vpop.permute.xlu0 %5726
        %5728 = vrot.lane.b32.xlu0 %v5593, 112
        %v5729 = vpop.permute.xlu0 %5728
        %5730 = vrot.lane.b32.xlu0 %v5594, 112
        %v5731 = vpop.permute.xlu0 %5730
        %5732 = vrot.lane.b32.xlu0 %v5595, 112
        %v5733 = vpop.permute.xlu0 %5732
        %5734 = vrot.lane.b32.xlu0 %v5596, 112
        %v5735 = vpop.permute.xlu0 %5734
        %5736 = vrot.lane.b32.xlu0 %v5597, 112
        %v5737 = vpop.permute.xlu0 %5736
        %5738 = vrot.lane.b32.xlu0 %v5598, 112
        %v5739 = vpop.permute.xlu0 %5738
        %5740 = vrot.lane.b32.xlu0 %v5599, 112
        %v5741 = vpop.permute.xlu0 %5740
        %5742 = vrot.lane.b32.xlu0 %v5600, 112
        %v5743 = vpop.permute.xlu0 %5742
        %5744 = vrot.lane.b32.xlu0 %v5601, 112
        %v5745 = vpop.permute.xlu0 %5744
        %5778 = vmatpush.bf16.msra.mxu0 %v5617
        %5779 = vmatpush.bf16.msra.mxu0 %v5615
        %5780 = vmatpush.bf16.msra.mxu0 %v5613
        %5781 = vmatpush.bf16.msra.mxu0 %v5611
        %5782 = vmatpush.bf16.msra.mxu0 %v5609
        %5783 = vmatpush.bf16.msra.mxu0 %v5607
        %5784 = vmatpush.bf16.msra.mxu0 %v5605
        %5785 = vmatpush.bf16.msra.mxu0 %v5603
        %5786 = vmatmul.bf16.gmra.mxu0 %v5538
        %v5787 = vpop.f32.mrf.mxu0
        %v5788 = vadd.f32 %v5683, %v5787
        %v5789 = vpop.f32.mrf.mxu0
        %v5790 = vadd.f32 %v5685, %v5789
        %5791 = vmatmul.bf16.gmra.mxu0 %v5540
        %v5792 = vpop.f32.mrf.mxu0
        %v5793 = vadd.f32 %v5687, %v5792
        %v5794 = vpop.f32.mrf.mxu0
        %v5795 = vadd.f32 %v5689, %v5794
        %5796 = vmatmul.bf16.gmra.mxu0 %v5542
        %v5797 = vpop.f32.mrf.mxu0
        %v5798 = vadd.f32 %v5691, %v5797
        %v5799 = vpop.f32.mrf.mxu0
        %v5800 = vadd.f32 %v5693, %v5799
        %5801 = vmatmul.bf16.gmra.mxu0 %v5544
        %v5802 = vpop.f32.mrf.mxu0
        %v5803 = vadd.f32 %v5695, %v5802
        %v5804 = vpop.f32.mrf.mxu0
        %v5805 = vadd.f32 %v5697, %v5804
        %5806 = vmatmul.bf16.gmra.mxu0 %v5546
        %v5807 = vpop.f32.mrf.mxu0
        %v5808 = vadd.f32 %v5699, %v5807
        %v5809 = vpop.f32.mrf.mxu0
        %v5810 = vadd.f32 %v5701, %v5809
        %5811 = vmatmul.bf16.gmra.mxu0 %v5548
        %v5812 = vpop.f32.mrf.mxu0
        %v5813 = vadd.f32 %v5703, %v5812
        %v5814 = vpop.f32.mrf.mxu0
        %v5815 = vadd.f32 %v5705, %v5814
        %5816 = vmatmul.bf16.gmra.mxu0 %v5550
        %v5817 = vpop.f32.mrf.mxu0
        %v5818 = vadd.f32 %v5707, %v5817
        %v5819 = vpop.f32.mrf.mxu0
        %v5820 = vadd.f32 %v5709, %v5819
        %5821 = vmatmul.bf16.gmra.mxu0 %v5552
        %v5822 = vpop.f32.mrf.mxu0
        %v5823 = vadd.f32 %v5711, %v5822
        %v5824 = vpop.f32.mrf.mxu0
        %v5825 = vadd.f32 %v5713, %v5824
        %5826 = vmatmul.bf16.gmra.mxu0 %v5554
        %v5827 = vpop.f32.mrf.mxu0
        %v5828 = vadd.f32 %v5715, %v5827
        %v5829 = vpop.f32.mrf.mxu0
        %v5830 = vadd.f32 %v5717, %v5829
        %5831 = vmatmul.bf16.gmra.mxu0 %v5556
        %v5832 = vpop.f32.mrf.mxu0
        %v5833 = vadd.f32 %v5719, %v5832
        %v5834 = vpop.f32.mrf.mxu0
        %v5835 = vadd.f32 %v5721, %v5834
        %5836 = vmatmul.bf16.gmra.mxu0 %v5558
        %v5837 = vpop.f32.mrf.mxu0
        %v5838 = vadd.f32 %v5723, %v5837
        %v5839 = vpop.f32.mrf.mxu0
        %v5840 = vadd.f32 %v5725, %v5839
        %5841 = vmatmul.bf16.gmra.mxu0 %v5560
        %v5842 = vpop.f32.mrf.mxu0
        %v5843 = vadd.f32 %v5727, %v5842
        %v5844 = vpop.f32.mrf.mxu0
        %v5845 = vadd.f32 %v5729, %v5844
        %5846 = vmatmul.bf16.gmra.mxu0 %v5562
        %v5847 = vpop.f32.mrf.mxu0
        %v5848 = vadd.f32 %v5731, %v5847
        %v5849 = vpop.f32.mrf.mxu0
        %v5850 = vadd.f32 %v5733, %v5849
        %5851 = vmatmul.bf16.gmra.mxu0 %v5564
        %v5852 = vpop.f32.mrf.mxu0
        %v5853 = vadd.f32 %v5735, %v5852
        %v5854 = vpop.f32.mrf.mxu0
        %v5855 = vadd.f32 %v5737, %v5854
        %5856 = vmatmul.bf16.gmra.mxu0 %v5566
        %v5857 = vpop.f32.mrf.mxu0
        %v5858 = vadd.f32 %v5739, %v5857
        %v5859 = vpop.f32.mrf.mxu0
        %v5860 = vadd.f32 %v5741, %v5859
        %5861 = vmatmul.bf16.gmra.mxu0 %v5568
        %v5862 = vpop.f32.mrf.mxu0
        %v5863 = vadd.f32 %v5743, %v5862
        %v5864 = vpop.f32.mrf.mxu0
        %v5865 = vadd.f32 %v5745, %v5864
        %5866 = vdwg.mxu0
        %5867 = vmatpush.bf16.msra.mxu0 %v5633
        %5868 = vmatpush.bf16.msra.mxu0 %v5631
        %5869 = vmatpush.bf16.msra.mxu0 %v5629
        %5870 = vmatpush.bf16.msra.mxu0 %v5627
        %5871 = vmatpush.bf16.msra.mxu0 %v5625
        %5872 = vmatpush.bf16.msra.mxu0 %v5623
        %5873 = vmatpush.bf16.msra.mxu0 %v5621
        %5874 = vmatpush.bf16.msra.mxu0 %v5619
        %5875 = vmatmul.bf16.gmra.mxu0 %v5539
        %v5876 = vpop.f32.mrf.mxu0
        %v5877 = vadd.f32 %v5788, %v5876
        %v5878 = vpop.f32.mrf.mxu0
        %v5879 = vadd.f32 %v5790, %v5878
        %5880 = vmatmul.bf16.gmra.mxu0 %v5541
        %v5881 = vpop.f32.mrf.mxu0
        %v5882 = vadd.f32 %v5793, %v5881
        %v5883 = vpop.f32.mrf.mxu0
        %v5884 = vadd.f32 %v5795, %v5883
        %5885 = vmatmul.bf16.gmra.mxu0 %v5543
        %v5886 = vpop.f32.mrf.mxu0
        %v5887 = vadd.f32 %v5798, %v5886
        %v5888 = vpop.f32.mrf.mxu0
        %v5889 = vadd.f32 %v5800, %v5888
        %5890 = vmatmul.bf16.gmra.mxu0 %v5545
        %v5891 = vpop.f32.mrf.mxu0
        %v5892 = vadd.f32 %v5803, %v5891
        %v5893 = vpop.f32.mrf.mxu0
        %v5894 = vadd.f32 %v5805, %v5893
        %5895 = vmatmul.bf16.gmra.mxu0 %v5547
        %v5896 = vpop.f32.mrf.mxu0
        %v5897 = vadd.f32 %v5808, %v5896
        %v5898 = vpop.f32.mrf.mxu0
        %v5899 = vadd.f32 %v5810, %v5898
        %5900 = vmatmul.bf16.gmra.mxu0 %v5549
        %v5901 = vpop.f32.mrf.mxu0
        %v5902 = vadd.f32 %v5813, %v5901
        %v5903 = vpop.f32.mrf.mxu0
        %v5904 = vadd.f32 %v5815, %v5903
        %5905 = vmatmul.bf16.gmra.mxu0 %v5551
        %v5906 = vpop.f32.mrf.mxu0
        %v5907 = vadd.f32 %v5818, %v5906
        %v5908 = vpop.f32.mrf.mxu0
        %v5909 = vadd.f32 %v5820, %v5908
        %5910 = vmatmul.bf16.gmra.mxu0 %v5553
        %v5911 = vpop.f32.mrf.mxu0
        %v5912 = vadd.f32 %v5823, %v5911
        %v5913 = vpop.f32.mrf.mxu0
        %v5914 = vadd.f32 %v5825, %v5913
        %5915 = vmatmul.bf16.gmra.mxu0 %v5555
        %v5916 = vpop.f32.mrf.mxu0
        %v5917 = vadd.f32 %v5828, %v5916
        %v5918 = vpop.f32.mrf.mxu0
        %v5919 = vadd.f32 %v5830, %v5918
        %5920 = vmatmul.bf16.gmra.mxu0 %v5557
        %v5921 = vpop.f32.mrf.mxu0
        %v5922 = vadd.f32 %v5833, %v5921
        %v5923 = vpop.f32.mrf.mxu0
        %v5924 = vadd.f32 %v5835, %v5923
        %5925 = vmatmul.bf16.gmra.mxu0 %v5559
        %v5926 = vpop.f32.mrf.mxu0
        %v5927 = vadd.f32 %v5838, %v5926
        %v5928 = vpop.f32.mrf.mxu0
        %v5929 = vadd.f32 %v5840, %v5928
        %5930 = vmatmul.bf16.gmra.mxu0 %v5561
        %v5931 = vpop.f32.mrf.mxu0
        %v5932 = vadd.f32 %v5843, %v5931
        %v5933 = vpop.f32.mrf.mxu0
        %v5934 = vadd.f32 %v5845, %v5933
        %5935 = vmatmul.bf16.gmra.mxu0 %v5563
        %v5936 = vpop.f32.mrf.mxu0
        %v5937 = vadd.f32 %v5848, %v5936
        %v5938 = vpop.f32.mrf.mxu0
        %v5939 = vadd.f32 %v5850, %v5938
        %5940 = vmatmul.bf16.gmra.mxu0 %v5565
        %v5941 = vpop.f32.mrf.mxu0
        %v5942 = vadd.f32 %v5853, %v5941
        %v5943 = vpop.f32.mrf.mxu0
        %v5944 = vadd.f32 %v5855, %v5943
        %5945 = vmatmul.bf16.gmra.mxu0 %v5567
        %v5946 = vpop.f32.mrf.mxu0
        %v5947 = vadd.f32 %v5858, %v5946
        %v5948 = vpop.f32.mrf.mxu0
        %v5949 = vadd.f32 %v5860, %v5948
        %5950 = vmatmul.bf16.gmra.mxu0 %v5569
        %v5951 = vpop.f32.mrf.mxu0
        %v5952 = vadd.f32 %v5863, %v5951
        %v5953 = vpop.f32.mrf.mxu0
        %v5954 = vadd.f32 %v5865, %v5953
        %5955 = vdwg.mxu0
        %v5956 = vmul.f32 %v5877, %v5506
        %v5957 = vmul.f32 %v5879, %v5507
        %v5958 = vmul.f32 %v5882, %v5508
        %v5959 = vmul.f32 %v5884, %v5509
        %v5960 = vmul.f32 %v5887, %v5510
        %v5961 = vmul.f32 %v5889, %v5511
        %v5962 = vmul.f32 %v5892, %v5512
        %v5963 = vmul.f32 %v5894, %v5513
        %v5964 = vmul.f32 %v5897, %v5514
        %v5965 = vmul.f32 %v5899, %v5515
        %v5966 = vmul.f32 %v5902, %v5516
        %v5967 = vmul.f32 %v5904, %v5517
        %v5968 = vmul.f32 %v5907, %v5518
        %v5969 = vmul.f32 %v5909, %v5519
        %v5970 = vmul.f32 %v5912, %v5520
        %v5971 = vmul.f32 %v5914, %v5521
        %v5972 = vmul.f32 %v5917, %v5522
        %v5973 = vmul.f32 %v5919, %v5523
        %v5974 = vmul.f32 %v5922, %v5524
        %v5975 = vmul.f32 %v5924, %v5525
        %v5976 = vmul.f32 %v5927, %v5526
        %v5977 = vmul.f32 %v5929, %v5527
        %v5978 = vmul.f32 %v5932, %v5528
        %v5979 = vmul.f32 %v5934, %v5529
        %v5980 = vmul.f32 %v5937, %v5530
        %v5981 = vmul.f32 %v5939, %v5531
        %v5982 = vmul.f32 %v5942, %v5532
        %v5983 = vmul.f32 %v5944, %v5533
        %v5984 = vmul.f32 %v5947, %v5534
        %v5985 = vmul.f32 %v5949, %v5535
        %v5986 = vmul.f32 %v5952, %v5536
        %v5987 = vmul.f32 %v5954, %v5537
        %6020 = vrot.lane.b32.xlu0 %v3986, 112
        %v6021 = vpop.permute.xlu0 %6020
        %6022 = vrot.lane.b32.xlu0 %v3987, 112
        %v6023 = vpop.permute.xlu0 %6022
        %6024 = vrot.lane.b32.xlu0 %v3988, 112
        %v6025 = vpop.permute.xlu0 %6024
        %6026 = vrot.lane.b32.xlu0 %v3989, 112
        %v6027 = vpop.permute.xlu0 %6026
        %6028 = vrot.lane.b32.xlu0 %v3990, 112
        %v6029 = vpop.permute.xlu0 %6028
        %6030 = vrot.lane.b32.xlu0 %v3991, 112
        %v6031 = vpop.permute.xlu0 %6030
        %6032 = vrot.lane.b32.xlu0 %v3992, 112
        %v6033 = vpop.permute.xlu0 %6032
        %6034 = vrot.lane.b32.xlu0 %v3993, 112
        %v6035 = vpop.permute.xlu0 %6034
        %6036 = vrot.lane.b32.xlu0 %v3994, 112
        %v6037 = vpop.permute.xlu0 %6036
        %6038 = vrot.lane.b32.xlu0 %v3995, 112
        %v6039 = vpop.permute.xlu0 %6038
        %6040 = vrot.lane.b32.xlu0 %v3996, 112
        %v6041 = vpop.permute.xlu0 %6040
        %6042 = vrot.lane.b32.xlu0 %v3997, 112
        %v6043 = vpop.permute.xlu0 %6042
        %6044 = vrot.lane.b32.xlu0 %v3998, 112
        %v6045 = vpop.permute.xlu0 %6044
        %6046 = vrot.lane.b32.xlu0 %v3999, 112
        %v6047 = vpop.permute.xlu0 %6046
        %6048 = vrot.lane.b32.xlu0 %v4000, 112
        %v6049 = vpop.permute.xlu0 %6048
        %6050 = vrot.lane.b32.xlu0 %v4001, 112
        %v6051 = vpop.permute.xlu0 %6050
        %6052 = vrot.lane.b32.xlu0 %v4002, 112
        %v6053 = vpop.permute.xlu0 %6052
        %6054 = vrot.lane.b32.xlu0 %v4003, 112
        %v6055 = vpop.permute.xlu0 %6054
        %6056 = vrot.lane.b32.xlu0 %v4004, 112
        %v6057 = vpop.permute.xlu0 %6056
        %6058 = vrot.lane.b32.xlu0 %v4005, 112
        %v6059 = vpop.permute.xlu0 %6058
        %6060 = vrot.lane.b32.xlu0 %v4006, 112
        %v6061 = vpop.permute.xlu0 %6060
        %6062 = vrot.lane.b32.xlu0 %v4007, 112
        %v6063 = vpop.permute.xlu0 %6062
        %6064 = vrot.lane.b32.xlu0 %v4008, 112
        %v6065 = vpop.permute.xlu0 %6064
        %6066 = vrot.lane.b32.xlu0 %v4009, 112
        %v6067 = vpop.permute.xlu0 %6066
        %6068 = vrot.lane.b32.xlu0 %v4010, 112
        %v6069 = vpop.permute.xlu0 %6068
        %6070 = vrot.lane.b32.xlu0 %v4011, 112
        %v6071 = vpop.permute.xlu0 %6070
        %6072 = vrot.lane.b32.xlu0 %v4012, 112
        %v6073 = vpop.permute.xlu0 %6072
        %6074 = vrot.lane.b32.xlu0 %v4013, 112
        %v6075 = vpop.permute.xlu0 %6074
        %6076 = vrot.lane.b32.xlu0 %v4014, 112
        %v6077 = vpop.permute.xlu0 %6076
        %6078 = vrot.lane.b32.xlu0 %v4015, 112
        %v6079 = vpop.permute.xlu0 %6078
        %6080 = vrot.lane.b32.xlu0 %v4016, 112
        %v6081 = vpop.permute.xlu0 %6080
        %6082 = vrot.lane.b32.xlu0 %v4017, 112
        %v6083 = vpop.permute.xlu0 %6082
        %v6116 = vsel %vm2634, %v6021, 0.0
        %6117 = vadd.xlane.f32.xlu0 %v6116
        %v6118 = vpop.xlane.xlu0 %6117
        %v6119 = vsel %vm2634, %v6023, 0.0
        %6120 = vadd.xlane.f32.xlu0 %v6119
        %v6121 = vpop.xlane.xlu0 %6120
        %v6122 = vsel %vm2634, %v6025, 0.0
        %6123 = vadd.xlane.f32.xlu0 %v6122
        %v6124 = vpop.xlane.xlu0 %6123
        %v6125 = vsel %vm2634, %v6027, 0.0
        %6126 = vadd.xlane.f32.xlu0 %v6125
        %v6127 = vpop.xlane.xlu0 %6126
        %v6128 = vsel %vm2634, %v6029, 0.0
        %6129 = vadd.xlane.f32.xlu0 %v6128
        %v6130 = vpop.xlane.xlu0 %6129
        %v6131 = vsel %vm2634, %v6031, 0.0
        %6132 = vadd.xlane.f32.xlu0 %v6131
        %v6133 = vpop.xlane.xlu0 %6132
        %v6134 = vsel %vm2634, %v6033, 0.0
        %6135 = vadd.xlane.f32.xlu0 %v6134
        %v6136 = vpop.xlane.xlu0 %6135
        %v6137 = vsel %vm2634, %v6035, 0.0
        %6138 = vadd.xlane.f32.xlu0 %v6137
        %v6139 = vpop.xlane.xlu0 %6138
        %v6140 = vsel %vm2634, %v6037, 0.0
        %6141 = vadd.xlane.f32.xlu0 %v6140
        %v6142 = vpop.xlane.xlu0 %6141
        %v6143 = vsel %vm2634, %v6039, 0.0
        %6144 = vadd.xlane.f32.xlu0 %v6143
        %v6145 = vpop.xlane.xlu0 %6144
        %v6146 = vsel %vm2634, %v6041, 0.0
        %6147 = vadd.xlane.f32.xlu0 %v6146
        %v6148 = vpop.xlane.xlu0 %6147
        %v6149 = vsel %vm2634, %v6043, 0.0
        %6150 = vadd.xlane.f32.xlu0 %v6149
        %v6151 = vpop.xlane.xlu0 %6150
        %v6152 = vsel %vm2634, %v6045, 0.0
        %6153 = vadd.xlane.f32.xlu0 %v6152
        %v6154 = vpop.xlane.xlu0 %6153
        %v6155 = vsel %vm2634, %v6047, 0.0
        %6156 = vadd.xlane.f32.xlu0 %v6155
        %v6157 = vpop.xlane.xlu0 %6156
        %v6158 = vsel %vm2634, %v6049, 0.0
        %6159 = vadd.xlane.f32.xlu0 %v6158
        %v6160 = vpop.xlane.xlu0 %6159
        %v6161 = vsel %vm2634, %v6051, 0.0
        %6162 = vadd.xlane.f32.xlu0 %v6161
        %v6163 = vpop.xlane.xlu0 %6162
        %v6164 = vsel %vm2634, %v6053, 0.0
        %6165 = vadd.xlane.f32.xlu0 %v6164
        %v6166 = vpop.xlane.xlu0 %6165
        %v6167 = vsel %vm2634, %v6055, 0.0
        %6168 = vadd.xlane.f32.xlu0 %v6167
        %v6169 = vpop.xlane.xlu0 %6168
        %v6170 = vsel %vm2634, %v6057, 0.0
        %6171 = vadd.xlane.f32.xlu0 %v6170
        %v6172 = vpop.xlane.xlu0 %6171
        %v6173 = vsel %vm2634, %v6059, 0.0
        %6174 = vadd.xlane.f32.xlu0 %v6173
        %v6175 = vpop.xlane.xlu0 %6174
        %v6176 = vsel %vm2634, %v6061, 0.0
        %6177 = vadd.xlane.f32.xlu0 %v6176
        %v6178 = vpop.xlane.xlu0 %6177
        %v6179 = vsel %vm2634, %v6063, 0.0
        %6180 = vadd.xlane.f32.xlu0 %v6179
        %v6181 = vpop.xlane.xlu0 %6180
        %v6182 = vsel %vm2634, %v6065, 0.0
        %6183 = vadd.xlane.f32.xlu0 %v6182
        %v6184 = vpop.xlane.xlu0 %6183
        %v6185 = vsel %vm2634, %v6067, 0.0
        %6186 = vadd.xlane.f32.xlu0 %v6185
        %v6187 = vpop.xlane.xlu0 %6186
        %v6188 = vsel %vm2634, %v6069, 0.0
        %6189 = vadd.xlane.f32.xlu0 %v6188
        %v6190 = vpop.xlane.xlu0 %6189
        %v6191 = vsel %vm2634, %v6071, 0.0
        %6192 = vadd.xlane.f32.xlu0 %v6191
        %v6193 = vpop.xlane.xlu0 %6192
        %v6194 = vsel %vm2634, %v6073, 0.0
        %6195 = vadd.xlane.f32.xlu0 %v6194
        %v6196 = vpop.xlane.xlu0 %6195
        %v6197 = vsel %vm2634, %v6075, 0.0
        %6198 = vadd.xlane.f32.xlu0 %v6197
        %v6199 = vpop.xlane.xlu0 %6198
        %v6200 = vsel %vm2634, %v6077, 0.0
        %6201 = vadd.xlane.f32.xlu0 %v6200
        %v6202 = vpop.xlane.xlu0 %6201
        %v6203 = vsel %vm2634, %v6079, 0.0
        %6204 = vadd.xlane.f32.xlu0 %v6203
        %v6205 = vpop.xlane.xlu0 %6204
        %v6206 = vsel %vm2634, %v6081, 0.0
        %6207 = vadd.xlane.f32.xlu0 %v6206
        %v6208 = vpop.xlane.xlu0 %6207
        %v6209 = vsel %vm2634, %v6083, 0.0
        %6210 = vadd.xlane.f32.xlu0 %v6209
        %v6211 = vpop.xlane.xlu0 %6210
        %6213 = vrot.lane.b32.xlu0 %v4114, 112
        %v6214 = vpop.permute.xlu0 %6213
        %v6216 = vsel %vm4115, %v6214, 0.0
        %6217 = vadd.xlane.f32.xlu0 %v6216
        %v6218 = vpop.xlane.xlu0 %6217
        %v6219 = vmax.f32 %v6118, %v6130
        %v6220 = vmax.f32 %v6121, %v6133
        %v6221 = vmax.f32 %v6124, %v6136
        %v6222 = vmax.f32 %v6127, %v6139
        %v6223 = vmax.f32 %v6219, %v6142
        %v6224 = vmax.f32 %v6220, %v6145
        %v6225 = vmax.f32 %v6221, %v6148
        %v6226 = vmax.f32 %v6222, %v6151
        %v6227 = vmax.f32 %v6223, %v6154
        %v6228 = vmax.f32 %v6224, %v6157
        %v6229 = vmax.f32 %v6225, %v6160
        %v6230 = vmax.f32 %v6226, %v6163
        %v6231 = vmax.f32 %v6227, %v6166
        %v6232 = vmax.f32 %v6228, %v6169
        %v6233 = vmax.f32 %v6229, %v6172
        %v6234 = vmax.f32 %v6230, %v6175
        %v6235 = vmax.f32 %v6231, %v6178
        %v6236 = vmax.f32 %v6232, %v6181
        %v6237 = vmax.f32 %v6233, %v6184
        %v6238 = vmax.f32 %v6234, %v6187
        %v6239 = vmax.f32 %v6235, %v6190
        %v6240 = vmax.f32 %v6236, %v6193
        %v6241 = vmax.f32 %v6237, %v6196
        %v6242 = vmax.f32 %v6238, %v6199
        %v6243 = vmax.f32 %v6239, %v6202
        %v6244 = vmax.f32 %v6240, %v6205
        %v6245 = vmax.f32 %v6241, %v6208
        %v6246 = vmax.f32 %v6242, %v6211
        %v6247 = vmax.f32 %v6243, %v6244
        %v6248 = vmax.f32 %v6245, %v6246
        %v6249 = vmax.f32 %v6247, %v6248
        %v6250 = vrot.slane %v6249, 4
        %v6251 = vmax.f32 %v6249, %v6250
        %v6252 = vrot.slane %v6251, 2
        %v6253 = vmax.f32 %v6251, %v6252
        %v6254 = vrot.slane %v6253, 1
        %v6255 = vmax.f32 %v6253, %v6254
        %v6256 = vmax.f32 %v6255, %v6218
        %v6257 = vperm.slane %v6256, 0
        %v6258 = vsub.f32 %v6118, %v6257
        %v6259 = vsub.f32 %v6121, %v6257
        %v6260 = vsub.f32 %v6124, %v6257
        %v6261 = vsub.f32 %v6127, %v6257
        %v6262 = vsub.f32 %v6130, %v6257
        %v6263 = vsub.f32 %v6133, %v6257
        %v6264 = vsub.f32 %v6136, %v6257
        %v6265 = vsub.f32 %v6139, %v6257
        %v6266 = vsub.f32 %v6142, %v6257
        %v6267 = vsub.f32 %v6145, %v6257
        %v6268 = vsub.f32 %v6148, %v6257
        %v6269 = vsub.f32 %v6151, %v6257
        %v6270 = vsub.f32 %v6154, %v6257
        %v6271 = vsub.f32 %v6157, %v6257
        %v6272 = vsub.f32 %v6160, %v6257
        %v6273 = vsub.f32 %v6163, %v6257
        %v6274 = vsub.f32 %v6166, %v6257
        %v6275 = vsub.f32 %v6169, %v6257
        %v6276 = vsub.f32 %v6172, %v6257
        %v6277 = vsub.f32 %v6175, %v6257
        %v6278 = vsub.f32 %v6178, %v6257
        %v6279 = vsub.f32 %v6181, %v6257
        %v6280 = vsub.f32 %v6184, %v6257
        %v6281 = vsub.f32 %v6187, %v6257
        %v6282 = vsub.f32 %v6190, %v6257
        %v6283 = vsub.f32 %v6193, %v6257
        %v6284 = vsub.f32 %v6196, %v6257
        %v6285 = vsub.f32 %v6199, %v6257
        %v6286 = vsub.f32 %v6202, %v6257
        %v6287 = vsub.f32 %v6205, %v6257
        %v6288 = vsub.f32 %v6208, %v6257
        %v6289 = vsub.f32 %v6211, %v6257
        %v6290 = vmul.f32 %v6258, 1.442695
        %v6291 = vpow.pop %v6290
        %v6292 = vmul.f32 %v6259, 1.442695
        %v6293 = vpow.pop %v6292
        %v6294 = vmul.f32 %v6260, 1.442695
        %v6295 = vpow.pop %v6294
        %v6296 = vmul.f32 %v6261, 1.442695
        %v6297 = vpow.pop %v6296
        %v6298 = vmul.f32 %v6262, 1.442695
        %v6299 = vpow.pop %v6298
        %v6300 = vmul.f32 %v6263, 1.442695
        %v6301 = vpow.pop %v6300
        %v6302 = vmul.f32 %v6264, 1.442695
        %v6303 = vpow.pop %v6302
        %v6304 = vmul.f32 %v6265, 1.442695
        %v6305 = vpow.pop %v6304
        %v6306 = vmul.f32 %v6266, 1.442695
        %v6307 = vpow.pop %v6306
        %v6308 = vmul.f32 %v6267, 1.442695
        %v6309 = vpow.pop %v6308
        %v6310 = vmul.f32 %v6268, 1.442695
        %v6311 = vpow.pop %v6310
        %v6312 = vmul.f32 %v6269, 1.442695
        %v6313 = vpow.pop %v6312
        %v6314 = vmul.f32 %v6270, 1.442695
        %v6315 = vpow.pop %v6314
        %v6316 = vmul.f32 %v6271, 1.442695
        %v6317 = vpow.pop %v6316
        %v6318 = vmul.f32 %v6272, 1.442695
        %v6319 = vpow.pop %v6318
        %v6320 = vmul.f32 %v6273, 1.442695
        %v6321 = vpow.pop %v6320
        %v6322 = vmul.f32 %v6274, 1.442695
        %v6323 = vpow.pop %v6322
        %v6324 = vmul.f32 %v6275, 1.442695
        %v6325 = vpow.pop %v6324
        %v6326 = vmul.f32 %v6276, 1.442695
        %v6327 = vpow.pop %v6326
        %v6328 = vmul.f32 %v6277, 1.442695
        %v6329 = vpow.pop %v6328
        %v6330 = vmul.f32 %v6278, 1.442695
        %v6331 = vpow.pop %v6330
        %v6332 = vmul.f32 %v6279, 1.442695
        %v6333 = vpow.pop %v6332
        %v6334 = vmul.f32 %v6280, 1.442695
        %v6335 = vpow.pop %v6334
        %v6336 = vmul.f32 %v6281, 1.442695
        %v6337 = vpow.pop %v6336
        %v6338 = vmul.f32 %v6282, 1.442695
        %v6339 = vpow.pop %v6338
        %v6340 = vmul.f32 %v6283, 1.442695
        %v6341 = vpow.pop %v6340
        %v6342 = vmul.f32 %v6284, 1.442695
        %v6343 = vpow.pop %v6342
        %v6344 = vmul.f32 %v6285, 1.442695
        %v6345 = vpow.pop %v6344
        %v6346 = vmul.f32 %v6286, 1.442695
        %v6347 = vpow.pop %v6346
        %v6348 = vmul.f32 %v6287, 1.442695
        %v6349 = vpow.pop %v6348
        %v6350 = vmul.f32 %v6288, 1.442695
        %v6351 = vpow.pop %v6350
        %v6352 = vmul.f32 %v6289, 1.442695
        %v6353 = vpow.pop %v6352
        %v6354 = vsub.f32 %v6218, %v6256
        %v6355 = vmul.f32 %v6354, 1.442695
        %v6356 = vpow.pop %v6355
        %v6357 = vadd.f32 %v6291, %v6293
        %v6358 = vadd.f32 %v6357, %v6295
        %v6359 = vadd.f32 %v6358, %v6297
        %v6360 = vadd.f32 %v6359, %v6299
        %v6361 = vadd.f32 %v6360, %v6301
        %v6362 = vadd.f32 %v6361, %v6303
        %v6363 = vadd.f32 %v6362, %v6305
        %v6364 = vadd.f32 %v6363, %v6307
        %v6365 = vadd.f32 %v6364, %v6309
        %v6366 = vadd.f32 %v6365, %v6311
        %v6367 = vadd.f32 %v6366, %v6313
        %v6368 = vadd.f32 %v6367, %v6315
        %v6369 = vadd.f32 %v6368, %v6317
        %v6370 = vadd.f32 %v6369, %v6319
        %v6371 = vadd.f32 %v6370, %v6321
        %v6372 = vadd.f32 %v6371, %v6323
        %v6373 = vadd.f32 %v6372, %v6325
        %v6374 = vadd.f32 %v6373, %v6327
        %v6375 = vadd.f32 %v6374, %v6329
        %v6376 = vadd.f32 %v6375, %v6331
        %v6377 = vadd.f32 %v6376, %v6333
        %v6378 = vadd.f32 %v6377, %v6335
        %v6379 = vadd.f32 %v6378, %v6337
        %v6380 = vadd.f32 %v6379, %v6339
        %v6381 = vadd.f32 %v6380, %v6341
        %v6382 = vadd.f32 %v6381, %v6343
        %v6383 = vadd.f32 %v6382, %v6345
        %v6384 = vadd.f32 %v6383, %v6347
        %v6385 = vadd.f32 %v6384, %v6349
        %v6386 = vadd.f32 %v6385, %v6351
        %v6387 = vadd.f32 %v6386, %v6353
        %v6388 = vrot.slane %v6387, 4
        %v6389 = vadd.f32 %v6387, %v6388
        %v6390 = vrot.slane %v6389, 2
        %v6391 = vadd.f32 %v6389, %v6390
        %v6392 = vrot.slane %v6391, 1
        %v6393 = vadd.f32 %v6391, %v6392
        %v6394 = vadd.f32 %v6393, %v6356
        %v6395 = vrcp.pop %v6394
        %v6396 = vmul.f32 %v6291, %v2257
        %v6397 = vmul.f32 %v6293, %v2259
        %v6398 = vmul.f32 %v6295, %v2262
        %v6399 = vmul.f32 %v6297, %v2264
        %v6400 = vmul.f32 %v6299, %v2267
        %v6401 = vmul.f32 %v6301, %v2269
        %v6402 = vmul.f32 %v6303, %v2272
        %v6403 = vmul.f32 %v6305, %v2274
        %v6404 = vmul.f32 %v6307, %v2277
        %v6405 = vmul.f32 %v6309, %v2279
        %v6406 = vmul.f32 %v6311, %v2282
        %v6407 = vmul.f32 %v6313, %v2284
        %v6408 = vmul.f32 %v6315, %v2287
        %v6409 = vmul.f32 %v6317, %v2289
        %v6410 = vmul.f32 %v6319, %v2292
        %v6411 = vmul.f32 %v6321, %v2294
        %v6412 = vmul.f32 %v6323, %v2297
        %v6413 = vmul.f32 %v6325, %v2299
        %v6414 = vmul.f32 %v6327, %v2302
        %v6415 = vmul.f32 %v6329, %v2304
        %v6416 = vmul.f32 %v6331, %v2307
        %v6417 = vmul.f32 %v6333, %v2309
        %v6418 = vmul.f32 %v6335, %v2312
        %v6419 = vmul.f32 %v6337, %v2314
        %v6420 = vmul.f32 %v6339, %v2317
        %v6421 = vmul.f32 %v6341, %v2319
        %v6422 = vmul.f32 %v6343, %v2322
        %v6423 = vmul.f32 %v6345, %v2324
        %v6424 = vmul.f32 %v6347, %v2327
        %v6425 = vmul.f32 %v6349, %v2329
        %v6426 = vmul.f32 %v6351, %v2332
        %v6427 = vmul.f32 %v6353, %v2334
        %vm6428 = vcmask 261248
        %v6429 = vsel %vm6428, %v6396, 0.0
        %v6430 = vsel %vm6428, %v6397, 0.0
        %v6431 = vadd.f32 %v6429, %v6430
        %v6432 = vsel %vm6428, %v6398, 0.0
        %v6433 = vadd.f32 %v6431, %v6432
        %v6434 = vsel %vm6428, %v6399, 0.0
        %v6435 = vadd.f32 %v6433, %v6434
        %v6436 = vsel %vm6428, %v6400, 0.0
        %v6437 = vadd.f32 %v6435, %v6436
        %v6438 = vsel %vm6428, %v6401, 0.0
        %v6439 = vadd.f32 %v6437, %v6438
        %v6440 = vsel %vm6428, %v6402, 0.0
        %v6441 = vadd.f32 %v6439, %v6440
        %v6442 = vsel %vm6428, %v6403, 0.0
        %v6443 = vadd.f32 %v6441, %v6442
        %v6444 = vsel %vm6428, %v6404, 0.0
        %v6445 = vadd.f32 %v6443, %v6444
        %v6446 = vsel %vm6428, %v6405, 0.0
        %v6447 = vadd.f32 %v6445, %v6446
        %v6448 = vsel %vm6428, %v6406, 0.0
        %v6449 = vadd.f32 %v6447, %v6448
        %v6450 = vsel %vm6428, %v6407, 0.0
        %v6451 = vadd.f32 %v6449, %v6450
        %v6452 = vsel %vm6428, %v6408, 0.0
        %v6453 = vadd.f32 %v6451, %v6452
        %v6454 = vsel %vm6428, %v6409, 0.0
        %v6455 = vadd.f32 %v6453, %v6454
        %v6456 = vsel %vm6428, %v6410, 0.0
        %v6457 = vadd.f32 %v6455, %v6456
        %v6458 = vsel %vm6428, %v6411, 0.0
        %v6459 = vadd.f32 %v6457, %v6458
        %v6460 = vsel %vm6428, %v6412, 0.0
        %v6461 = vadd.f32 %v6459, %v6460
        %v6462 = vsel %vm6428, %v6413, 0.0
        %v6463 = vadd.f32 %v6461, %v6462
        %v6464 = vsel %vm6428, %v6414, 0.0
        %v6465 = vadd.f32 %v6463, %v6464
        %v6466 = vsel %vm6428, %v6415, 0.0
        %v6467 = vadd.f32 %v6465, %v6466
        %v6468 = vsel %vm6428, %v6416, 0.0
        %v6469 = vadd.f32 %v6467, %v6468
        %v6470 = vsel %vm6428, %v6417, 0.0
        %v6471 = vadd.f32 %v6469, %v6470
        %v6472 = vsel %vm6428, %v6418, 0.0
        %v6473 = vadd.f32 %v6471, %v6472
        %v6474 = vsel %vm6428, %v6419, 0.0
        %v6475 = vadd.f32 %v6473, %v6474
        %v6476 = vsel %vm6428, %v6420, 0.0
        %v6477 = vadd.f32 %v6475, %v6476
        %v6478 = vsel %vm6428, %v6421, 0.0
        %v6479 = vadd.f32 %v6477, %v6478
        %v6480 = vsel %vm6428, %v6422, 0.0
        %v6481 = vadd.f32 %v6479, %v6480
        %v6482 = vsel %vm6428, %v6423, 0.0
        %v6483 = vadd.f32 %v6481, %v6482
        %v6484 = vsel %vm6428, %v6424, 0.0
        %v6485 = vadd.f32 %v6483, %v6484
        %v6486 = vsel %vm6428, %v6425, 0.0
        %v6487 = vadd.f32 %v6485, %v6486
        %v6488 = vsel %vm6428, %v6426, 0.0
        %v6489 = vadd.f32 %v6487, %v6488
        %v6490 = vsel %vm6428, %v6427, 0.0
        %v6491 = vadd.f32 %v6489, %v6490
        %v6492 = vrot.slane %v6491, 4
        %v6493 = vadd.f32 %v6491, %v6492
        %v6494 = vrot.slane %v6493, 2
        %v6495 = vadd.f32 %v6493, %v6494
        %v6496 = vrot.slane %v6495, 1
        %v6497 = vadd.f32 %v6495, %v6496
        %v6498 = vmul.f32 %v6356, %v2375
        %v6499 = vadd.f32 %v6497, %v6498
        %v6500 = vmul.f32 %v6499, %v6395
        %6533 = vrot.lane.b32.xlu0 %v5956, 16
        %v6534 = vpop.permute.xlu0 %6533
        %6535 = vrot.lane.b32.xlu0 %v5957, 16
        %v6536 = vpop.permute.xlu0 %6535
        %6537 = vrot.lane.b32.xlu0 %v5958, 16
        %v6538 = vpop.permute.xlu0 %6537
        %6539 = vrot.lane.b32.xlu0 %v5959, 16
        %v6540 = vpop.permute.xlu0 %6539
        %6541 = vrot.lane.b32.xlu0 %v5960, 16
        %v6542 = vpop.permute.xlu0 %6541
        %6543 = vrot.lane.b32.xlu0 %v5961, 16
        %v6544 = vpop.permute.xlu0 %6543
        %6545 = vrot.lane.b32.xlu0 %v5962, 16
        %v6546 = vpop.permute.xlu0 %6545
        %6547 = vrot.lane.b32.xlu0 %v5963, 16
        %v6548 = vpop.permute.xlu0 %6547
        %6549 = vrot.lane.b32.xlu0 %v5964, 16
        %v6550 = vpop.permute.xlu0 %6549
        %6551 = vrot.lane.b32.xlu0 %v5965, 16
        %v6552 = vpop.permute.xlu0 %6551
        %6553 = vrot.lane.b32.xlu0 %v5966, 16
        %v6554 = vpop.permute.xlu0 %6553
        %6555 = vrot.lane.b32.xlu0 %v5967, 16
        %v6556 = vpop.permute.xlu0 %6555
        %6557 = vrot.lane.b32.xlu0 %v5968, 16
        %v6558 = vpop.permute.xlu0 %6557
        %6559 = vrot.lane.b32.xlu0 %v5969, 16
        %v6560 = vpop.permute.xlu0 %6559
        %6561 = vrot.lane.b32.xlu0 %v5970, 16
        %v6562 = vpop.permute.xlu0 %6561
        %6563 = vrot.lane.b32.xlu0 %v5971, 16
        %v6564 = vpop.permute.xlu0 %6563
        %6565 = vrot.lane.b32.xlu0 %v5972, 16
        %v6566 = vpop.permute.xlu0 %6565
        %6567 = vrot.lane.b32.xlu0 %v5973, 16
        %v6568 = vpop.permute.xlu0 %6567
        %6569 = vrot.lane.b32.xlu0 %v5974, 16
        %v6570 = vpop.permute.xlu0 %6569
        %6571 = vrot.lane.b32.xlu0 %v5975, 16
        %v6572 = vpop.permute.xlu0 %6571
        %6573 = vrot.lane.b32.xlu0 %v5976, 16
        %v6574 = vpop.permute.xlu0 %6573
        %6575 = vrot.lane.b32.xlu0 %v5977, 16
        %v6576 = vpop.permute.xlu0 %6575
        %6577 = vrot.lane.b32.xlu0 %v5978, 16
        %v6578 = vpop.permute.xlu0 %6577
        %6579 = vrot.lane.b32.xlu0 %v5979, 16
        %v6580 = vpop.permute.xlu0 %6579
        %6581 = vrot.lane.b32.xlu0 %v5980, 16
        %v6582 = vpop.permute.xlu0 %6581
        %6583 = vrot.lane.b32.xlu0 %v5981, 16
        %v6584 = vpop.permute.xlu0 %6583
        %6585 = vrot.lane.b32.xlu0 %v5982, 16
        %v6586 = vpop.permute.xlu0 %6585
        %6587 = vrot.lane.b32.xlu0 %v5983, 16
        %v6588 = vpop.permute.xlu0 %6587
        %6589 = vrot.lane.b32.xlu0 %v5984, 16
        %v6590 = vpop.permute.xlu0 %6589
        %6591 = vrot.lane.b32.xlu0 %v5985, 16
        %v6592 = vpop.permute.xlu0 %6591
        %6593 = vrot.lane.b32.xlu0 %v5986, 16
        %v6594 = vpop.permute.xlu0 %6593
        %6595 = vrot.lane.b32.xlu0 %v5987, 16
        %v6596 = vpop.permute.xlu0 %6595
        %v6629 = vsel %vm2634, %v3953, %v6534
        %v6630 = vsel %vm2634, %v3954, %v6536
        %v6631 = vsel %vm2634, %v3955, %v6538
        %v6632 = vsel %vm2634, %v3956, %v6540
        %v6633 = vsel %vm2634, %v3957, %v6542
        %v6634 = vsel %vm2634, %v3958, %v6544
        %v6635 = vsel %vm2634, %v3959, %v6546
        %v6636 = vsel %vm2634, %v3960, %v6548
        %v6637 = vsel %vm2634, %v3961, %v6550
        %v6638 = vsel %vm2634, %v3962, %v6552
        %v6639 = vsel %vm2634, %v3963, %v6554
        %v6640 = vsel %vm2634, %v3964, %v6556
        %v6641 = vsel %vm2634, %v3965, %v6558
        %v6642 = vsel %vm2634, %v3966, %v6560
        %v6643 = vsel %vm2634, %v3967, %v6562
        %v6644 = vsel %vm2634, %v3968, %v6564
        %v6645 = vsel %vm2634, %v3969, %v6566
        %v6646 = vsel %vm2634, %v3970, %v6568
        %v6647 = vsel %vm2634, %v3971, %v6570
        %v6648 = vsel %vm2634, %v3972, %v6572
        %v6649 = vsel %vm2634, %v3973, %v6574
        %v6650 = vsel %vm2634, %v3974, %v6576
        %v6651 = vsel %vm2634, %v3975, %v6578
        %v6652 = vsel %vm2634, %v3976, %v6580
        %v6653 = vsel %vm2634, %v3977, %v6582
        %v6654 = vsel %vm2634, %v3978, %v6584
        %v6655 = vsel %vm2634, %v3979, %v6586
        %v6656 = vsel %vm2634, %v3980, %v6588
        %v6657 = vsel %vm2634, %v3981, %v6590
        %v6658 = vsel %vm2634, %v3982, %v6592
        %v6659 = vsel %vm2634, %v3983, %v6594
        %v6660 = vsel %vm2634, %v3984, %v6596
        %v6661 = vpack.c.bf16 %v6630, %v6629
        %v6662 = vpack.c.bf16 %v6632, %v6631
        %v6663 = vpack.c.bf16 %v6634, %v6633
        %v6664 = vpack.c.bf16 %v6636, %v6635
        %v6665 = vpack.c.bf16 %v6638, %v6637
        %v6666 = vpack.c.bf16 %v6640, %v6639
        %v6667 = vpack.c.bf16 %v6642, %v6641
        %v6668 = vpack.c.bf16 %v6644, %v6643
        %v6669 = vpack.c.bf16 %v6646, %v6645
        %v6670 = vpack.c.bf16 %v6648, %v6647
        %v6671 = vpack.c.bf16 %v6650, %v6649
        %v6672 = vpack.c.bf16 %v6652, %v6651
        %v6673 = vpack.c.bf16 %v6654, %v6653
        %v6674 = vpack.c.bf16 %v6656, %v6655
        %v6675 = vpack.c.bf16 %v6658, %v6657
        %v6676 = vpack.c.bf16 %v6660, %v6659
        %v6677 = vsel %vm2634, %v4399, %v6500
        %v6678 = vpack.c.bf16 %v6677, %v6677
        %v6679 = vld [vmem:[%s788] sm:$0xf]
        %v6680 = vld [vmem:[%s788 + $0x4] sm:$0xf]
        %v6681 = vld [vmem:[%s788 + $0x8] sm:$0xf]
        %v6682 = vld [vmem:[%s788 + $0xc] sm:$0xf]
        %v6683 = vld [vmem:[%s791] sm:$0x1]
        %v6688 = vunpack.c.l.b16 %v6679
        %v6689 = vunpack.c.l.b16 %v6680
        %v6690 = vunpack.c.l.b16 %v6681
        %v6691 = vunpack.c.l.b16 %v6682
        %v6692 = vpack.c.b16 %v6689, %v6688
        %v6693 = vpack.c.b16 %v6691, %v6690
        %v6697 = vsel %vm1149, %v6661, 0
        %v6700 = vsel %vm1149, %v6662, 0
        %v6703 = vsel %vm1149, %v6663, 0
        %v6706 = vsel %vm1149, %v6664, 0
        %v6709 = vsel %vm1149, %v6665, 0
        %v6712 = vsel %vm1149, %v6666, 0
        %v6715 = vsel %vm1149, %v6667, 0
        %v6718 = vsel %vm1149, %v6668, 0
        %v6721 = vsel %vm1149, %v6669, 0
        %v6724 = vsel %vm1149, %v6670, 0
        %v6727 = vsel %vm1149, %v6671, 0
        %v6730 = vsel %vm1149, %v6672, 0
        %v6733 = vsel %vm1149, %v6673, 0
        %v6736 = vsel %vm1149, %v6674, 0
        %v6739 = vsel %vm1149, %v6675, 0
        %v6742 = vsel %vm1149, %v6676, 0
        %6744 = vmatpush.bf16.msra.mxu0 0
        %6745 = vmatpush.bf16.msra.mxu0 0
        %6746 = vmatpush.bf16.msra.mxu0 0
        %6747 = vmatpush.bf16.msra.mxu0 0
        %6748 = vmatpush.bf16.msra.mxu0 0
        %6749 = vmatpush.bf16.msra.mxu0 0
        %6750 = vmatpush.bf16.msra.mxu0 %v6693
        %6751 = vmatpush.bf16.msra.mxu0 %v6692
        %6752 = vmatmul.bf16.gmra.mxu0 %v6697
        %v6753 = vpop.f32.mrf.mxu0
        %v6754 = vadd.f32 0.0, %v6753
        %v6755 = vpop.f32.mrf.mxu0
        %v6756 = vadd.f32 0.0, %v6755
        %6757 = vmatmul.bf16.gmra.mxu0 %v6700
        %v6758 = vpop.f32.mrf.mxu0
        %v6759 = vadd.f32 0.0, %v6758
        %v6760 = vpop.f32.mrf.mxu0
        %v6761 = vadd.f32 0.0, %v6760
        %6762 = vmatmul.bf16.gmra.mxu0 %v6703
        %v6763 = vpop.f32.mrf.mxu0
        %v6764 = vadd.f32 0.0, %v6763
        %v6765 = vpop.f32.mrf.mxu0
        %v6766 = vadd.f32 0.0, %v6765
        %6767 = vmatmul.bf16.gmra.mxu0 %v6706
        %v6768 = vpop.f32.mrf.mxu0
        %v6769 = vadd.f32 0.0, %v6768
        %v6770 = vpop.f32.mrf.mxu0
        %v6771 = vadd.f32 0.0, %v6770
        %6772 = vmatmul.bf16.gmra.mxu0 %v6709
        %v6773 = vpop.f32.mrf.mxu0
        %v6774 = vadd.f32 0.0, %v6773
        %v6775 = vpop.f32.mrf.mxu0
        %v6776 = vadd.f32 0.0, %v6775
        %6777 = vmatmul.bf16.gmra.mxu0 %v6712
        %v6778 = vpop.f32.mrf.mxu0
        %v6779 = vadd.f32 0.0, %v6778
        %v6780 = vpop.f32.mrf.mxu0
        %v6781 = vadd.f32 0.0, %v6780
        %6782 = vmatmul.bf16.gmra.mxu0 %v6715
        %v6783 = vpop.f32.mrf.mxu0
        %v6784 = vadd.f32 0.0, %v6783
        %v6785 = vpop.f32.mrf.mxu0
        %v6786 = vadd.f32 0.0, %v6785
        %6787 = vmatmul.bf16.gmra.mxu0 %v6718
        %v6788 = vpop.f32.mrf.mxu0
        %v6789 = vadd.f32 0.0, %v6788
        %v6790 = vpop.f32.mrf.mxu0
        %v6791 = vadd.f32 0.0, %v6790
        %6792 = vmatmul.bf16.gmra.mxu0 %v6721
        %v6793 = vpop.f32.mrf.mxu0
        %v6794 = vadd.f32 0.0, %v6793
        %v6795 = vpop.f32.mrf.mxu0
        %v6796 = vadd.f32 0.0, %v6795
        %6797 = vmatmul.bf16.gmra.mxu0 %v6724
        %v6798 = vpop.f32.mrf.mxu0
        %v6799 = vadd.f32 0.0, %v6798
        %v6800 = vpop.f32.mrf.mxu0
        %v6801 = vadd.f32 0.0, %v6800
        %6802 = vmatmul.bf16.gmra.mxu0 %v6727
        %v6803 = vpop.f32.mrf.mxu0
        %v6804 = vadd.f32 0.0, %v6803
        %v6805 = vpop.f32.mrf.mxu0
        %v6806 = vadd.f32 0.0, %v6805
        %6807 = vmatmul.bf16.gmra.mxu0 %v6730
        %v6808 = vpop.f32.mrf.mxu0
        %v6809 = vadd.f32 0.0, %v6808
        %v6810 = vpop.f32.mrf.mxu0
        %v6811 = vadd.f32 0.0, %v6810
        %6812 = vmatmul.bf16.gmra.mxu0 %v6733
        %v6813 = vpop.f32.mrf.mxu0
        %v6814 = vadd.f32 0.0, %v6813
        %v6815 = vpop.f32.mrf.mxu0
        %v6816 = vadd.f32 0.0, %v6815
        %6817 = vmatmul.bf16.gmra.mxu0 %v6736
        %v6818 = vpop.f32.mrf.mxu0
        %v6819 = vadd.f32 0.0, %v6818
        %v6820 = vpop.f32.mrf.mxu0
        %v6821 = vadd.f32 0.0, %v6820
        %6822 = vmatmul.bf16.gmra.mxu0 %v6739
        %v6823 = vpop.f32.mrf.mxu0
        %v6824 = vadd.f32 0.0, %v6823
        %v6825 = vpop.f32.mrf.mxu0
        %v6826 = vadd.f32 0.0, %v6825
        %6827 = vmatmul.bf16.gmra.mxu0 %v6742
        %v6828 = vpop.f32.mrf.mxu0
        %v6829 = vadd.f32 0.0, %v6828
        %v6830 = vpop.f32.mrf.mxu0
        %v6831 = vadd.f32 0.0, %v6830
        %6832 = vdwg.mxu0
        %v6833 = vadd.f32 %v1114, %v6754
        %v6834 = vadd.f32 %v1115, %v6756
        %v6835 = vadd.f32 %v1116, %v6759
        %v6836 = vadd.f32 %v1117, %v6761
        %v6837 = vadd.f32 %v1118, %v6764
        %v6838 = vadd.f32 %v1119, %v6766
        %v6839 = vadd.f32 %v1120, %v6769
        %v6840 = vadd.f32 %v1121, %v6771
        %v6841 = vadd.f32 %v1122, %v6774
        %v6842 = vadd.f32 %v1123, %v6776
        %v6843 = vadd.f32 %v1124, %v6779
        %v6844 = vadd.f32 %v1125, %v6781
        %v6845 = vadd.f32 %v1126, %v6784
        %v6846 = vadd.f32 %v1127, %v6786
        %v6847 = vadd.f32 %v1128, %v6789
        %v6848 = vadd.f32 %v1129, %v6791
        %v6849 = vadd.f32 %v1130, %v6794
        %v6850 = vadd.f32 %v1131, %v6796
        %v6851 = vadd.f32 %v1132, %v6799
        %v6852 = vadd.f32 %v1133, %v6801
        %v6853 = vadd.f32 %v1134, %v6804
        %v6854 = vadd.f32 %v1135, %v6806
        %v6855 = vadd.f32 %v1136, %v6809
        %v6856 = vadd.f32 %v1137, %v6811
        %v6857 = vadd.f32 %v1138, %v6814
        %v6858 = vadd.f32 %v1139, %v6816
        %v6859 = vadd.f32 %v1140, %v6819
        %v6860 = vadd.f32 %v1141, %v6821
        %v6861 = vadd.f32 %v1142, %v6824
        %v6862 = vadd.f32 %v1143, %v6826
        %v6863 = vadd.f32 %v1144, %v6829
        %v6864 = vadd.f32 %v1145, %v6831
        %v6866 = vperm.slane %v6683, 0
        %v6868 = vadd.f32 %v6833, %v6866
        %v6869 = vadd.f32 %v6834, %v6866
        %v6870 = vadd.f32 %v6835, %v6866
        %v6871 = vadd.f32 %v6836, %v6866
        %v6872 = vadd.f32 %v6837, %v6866
        %v6873 = vadd.f32 %v6838, %v6866
        %v6874 = vadd.f32 %v6839, %v6866
        %v6875 = vadd.f32 %v6840, %v6866
        %v6876 = vadd.f32 %v6841, %v6866
        %v6877 = vadd.f32 %v6842, %v6866
        %v6878 = vadd.f32 %v6843, %v6866
        %v6879 = vadd.f32 %v6844, %v6866
        %v6880 = vadd.f32 %v6845, %v6866
        %v6881 = vadd.f32 %v6846, %v6866
        %v6882 = vadd.f32 %v6847, %v6866
        %v6883 = vadd.f32 %v6848, %v6866
        %v6884 = vadd.f32 %v6849, %v6866
        %v6885 = vadd.f32 %v6850, %v6866
        %v6886 = vadd.f32 %v6851, %v6866
        %v6887 = vadd.f32 %v6852, %v6866
        %v6888 = vadd.f32 %v6853, %v6866
        %v6889 = vadd.f32 %v6854, %v6866
        %v6890 = vadd.f32 %v6855, %v6866
        %v6891 = vadd.f32 %v6856, %v6866
        %v6892 = vadd.f32 %v6857, %v6866
        %v6893 = vadd.f32 %v6858, %v6866
        %v6894 = vadd.f32 %v6859, %v6866
        %v6895 = vadd.f32 %v6860, %v6866
        %v6896 = vadd.f32 %v6861, %v6866
        %v6897 = vadd.f32 %v6862, %v6866
        %v6898 = vadd.f32 %v6863, %v6866
        %v6899 = vadd.f32 %v6864, %v6866
        %v6901 = vsel %vm1149, %v6678, 0
        %6903 = vmatpush.bf16.msra.mxu0 0
        %6904 = vmatpush.bf16.msra.mxu0 0
        %6905 = vmatpush.bf16.msra.mxu0 0
        %6906 = vmatpush.bf16.msra.mxu0 0
        %6907 = vmatpush.bf16.msra.mxu0 0
        %6908 = vmatpush.bf16.msra.mxu0 0
        %6909 = vmatpush.bf16.msra.mxu0 %v6693
        %6910 = vmatpush.bf16.msra.mxu0 %v6692
        %6911 = vmatmul.bf16.gmra.mxu0 %v6901
        %v6912 = vpop.f32.mrf.mxu0
        %v6913 = vadd.f32 0.0, %v6912
        %v6914 = vpop.f32.mrf.mxu0
        %6915 = vdwg.mxu0
        %v6916 = vadd.f32 %v1146, %v6913
        %v6917 = vadd.f32 %v6916, %v6683
        %v6918 = vld [vmem:[%s794] sm:$0x1]
        %v6919 = vld [vmem:[%s797] sm:$0x1]
        %v6920 = vld [vmem:[%s802] sm:$0xf]
        %v6921 = vld [vmem:[%s802 + $0x4] sm:$0xf]
        %v6922 = vld [vmem:[%s802 + $0x8] sm:$0xf]
        %v6923 = vld [vmem:[%s802 + $0xc] sm:$0xf]
        %v6924 = vld [vmem:[%s805] sm:$0x1]
        %v6925 = vld [vmem:[%s810] sm:$0xf]
        %v6926 = vld [vmem:[%s810 + $0x4] sm:$0xf]
        %v6927 = vld [vmem:[%s810 + $0x8] sm:$0xf]
        %v6928 = vld [vmem:[%s810 + $0xc] sm:$0xf]
        %v6929 = vld [vmem:[%s810 + $0x10] sm:$0xf]
        %v6930 = vld [vmem:[%s810 + $0x14] sm:$0xf]
        %v6931 = vld [vmem:[%s810 + $0x18] sm:$0xf]
        %v6932 = vld [vmem:[%s810 + $0x1c] sm:$0xf]
        %v6933 = vld [vmem:[%s813] sm:$0x1]
        %v6934 = vsel %vm1149, %v6868, 0.0
        %6935 = vadd.xlane.f32.xlu0 %v6934
        %v6936 = vpop.xlane.xlu0 %6935
        %v6937 = vsel %vm1149, %v6869, 0.0
        %6938 = vadd.xlane.f32.xlu0 %v6937
        %v6939 = vpop.xlane.xlu0 %6938
        %v6940 = vsel %vm1149, %v6870, 0.0
        %6941 = vadd.xlane.f32.xlu0 %v6940
        %v6942 = vpop.xlane.xlu0 %6941
        %v6943 = vsel %vm1149, %v6871, 0.0
        %6944 = vadd.xlane.f32.xlu0 %v6943
        %v6945 = vpop.xlane.xlu0 %6944
        %v6946 = vsel %vm1149, %v6872, 0.0
        %6947 = vadd.xlane.f32.xlu0 %v6946
        %v6948 = vpop.xlane.xlu0 %6947
        %v6949 = vsel %vm1149, %v6873, 0.0
        %6950 = vadd.xlane.f32.xlu0 %v6949
        %v6951 = vpop.xlane.xlu0 %6950
        %v6952 = vsel %vm1149, %v6874, 0.0
        %6953 = vadd.xlane.f32.xlu0 %v6952
        %v6954 = vpop.xlane.xlu0 %6953
        %v6955 = vsel %vm1149, %v6875, 0.0
        %6956 = vadd.xlane.f32.xlu0 %v6955
        %v6957 = vpop.xlane.xlu0 %6956
        %v6958 = vsel %vm1149, %v6876, 0.0
        %6959 = vadd.xlane.f32.xlu0 %v6958
        %v6960 = vpop.xlane.xlu0 %6959
        %v6961 = vsel %vm1149, %v6877, 0.0
        %6962 = vadd.xlane.f32.xlu0 %v6961
        %v6963 = vpop.xlane.xlu0 %6962
        %v6964 = vsel %vm1149, %v6878, 0.0
        %6965 = vadd.xlane.f32.xlu0 %v6964
        %v6966 = vpop.xlane.xlu0 %6965
        %v6967 = vsel %vm1149, %v6879, 0.0
        %6968 = vadd.xlane.f32.xlu0 %v6967
        %v6969 = vpop.xlane.xlu0 %6968
        %v6970 = vsel %vm1149, %v6880, 0.0
        %6971 = vadd.xlane.f32.xlu0 %v6970
        %v6972 = vpop.xlane.xlu0 %6971
        %v6973 = vsel %vm1149, %v6881, 0.0
        %6974 = vadd.xlane.f32.xlu0 %v6973
        %v6975 = vpop.xlane.xlu0 %6974
        %v6976 = vsel %vm1149, %v6882, 0.0
        %6977 = vadd.xlane.f32.xlu0 %v6976
        %v6978 = vpop.xlane.xlu0 %6977
        %v6979 = vsel %vm1149, %v6883, 0.0
        %6980 = vadd.xlane.f32.xlu0 %v6979
        %v6981 = vpop.xlane.xlu0 %6980
        %v6982 = vsel %vm1149, %v6884, 0.0
        %6983 = vadd.xlane.f32.xlu0 %v6982
        %v6984 = vpop.xlane.xlu0 %6983
        %v6985 = vsel %vm1149, %v6885, 0.0
        %6986 = vadd.xlane.f32.xlu0 %v6985
        %v6987 = vpop.xlane.xlu0 %6986
        %v6988 = vsel %vm1149, %v6886, 0.0
        %6989 = vadd.xlane.f32.xlu0 %v6988
        %v6990 = vpop.xlane.xlu0 %6989
        %v6991 = vsel %vm1149, %v6887, 0.0
        %6992 = vadd.xlane.f32.xlu0 %v6991
        %v6993 = vpop.xlane.xlu0 %6992
        %v6994 = vsel %vm1149, %v6888, 0.0
        %6995 = vadd.xlane.f32.xlu0 %v6994
        %v6996 = vpop.xlane.xlu0 %6995
        %v6997 = vsel %vm1149, %v6889, 0.0
        %6998 = vadd.xlane.f32.xlu0 %v6997
        %v6999 = vpop.xlane.xlu0 %6998
        %v7000 = vsel %vm1149, %v6890, 0.0
        %7001 = vadd.xlane.f32.xlu0 %v7000
        %v7002 = vpop.xlane.xlu0 %7001
        %v7003 = vsel %vm1149, %v6891, 0.0
        %7004 = vadd.xlane.f32.xlu0 %v7003
        %v7005 = vpop.xlane.xlu0 %7004
        %v7006 = vsel %vm1149, %v6892, 0.0
        %7007 = vadd.xlane.f32.xlu0 %v7006
        %v7008 = vpop.xlane.xlu0 %7007
        %v7009 = vsel %vm1149, %v6893, 0.0
        %7010 = vadd.xlane.f32.xlu0 %v7009
        %v7011 = vpop.xlane.xlu0 %7010
        %v7012 = vsel %vm1149, %v6894, 0.0
        %7013 = vadd.xlane.f32.xlu0 %v7012
        %v7014 = vpop.xlane.xlu0 %7013
        %v7015 = vsel %vm1149, %v6895, 0.0
        %7016 = vadd.xlane.f32.xlu0 %v7015
        %v7017 = vpop.xlane.xlu0 %7016
        %v7018 = vsel %vm1149, %v6896, 0.0
        %7019 = vadd.xlane.f32.xlu0 %v7018
        %v7020 = vpop.xlane.xlu0 %7019
        %v7021 = vsel %vm1149, %v6897, 0.0
        %7022 = vadd.xlane.f32.xlu0 %v7021
        %v7023 = vpop.xlane.xlu0 %7022
        %v7024 = vsel %vm1149, %v6898, 0.0
        %7025 = vadd.xlane.f32.xlu0 %v7024
        %v7026 = vpop.xlane.xlu0 %7025
        %v7027 = vsel %vm1149, %v6899, 0.0
        %7028 = vadd.xlane.f32.xlu0 %v7027
        %v7029 = vpop.xlane.xlu0 %7028
        %v7030 = vmul.f32 %v6936, %v1252
        %v7031 = vmul.f32 %v6939, %v1252
        %v7032 = vmul.f32 %v6942, %v1252
        %v7033 = vmul.f32 %v6945, %v1252
        %v7034 = vmul.f32 %v6948, %v1252
        %v7035 = vmul.f32 %v6951, %v1252
        %v7036 = vmul.f32 %v6954, %v1252
        %v7037 = vmul.f32 %v6957, %v1252
        %v7038 = vmul.f32 %v6960, %v1252
        %v7039 = vmul.f32 %v6963, %v1252
        %v7040 = vmul.f32 %v6966, %v1252
        %v7041 = vmul.f32 %v6969, %v1252
        %v7042 = vmul.f32 %v6972, %v1252
        %v7043 = vmul.f32 %v6975, %v1252
        %v7044 = vmul.f32 %v6978, %v1252
        %v7045 = vmul.f32 %v6981, %v1252
        %v7046 = vmul.f32 %v6984, %v1252
        %v7047 = vmul.f32 %v6987, %v1252
        %v7048 = vmul.f32 %v6990, %v1252
        %v7049 = vmul.f32 %v6993, %v1252
        %v7050 = vmul.f32 %v6996, %v1252
        %v7051 = vmul.f32 %v6999, %v1252
        %v7052 = vmul.f32 %v7002, %v1252
        %v7053 = vmul.f32 %v7005, %v1252
        %v7054 = vmul.f32 %v7008, %v1252
        %v7055 = vmul.f32 %v7011, %v1252
        %v7056 = vmul.f32 %v7014, %v1252
        %v7057 = vmul.f32 %v7017, %v1252
        %v7058 = vmul.f32 %v7020, %v1252
        %v7059 = vmul.f32 %v7023, %v1252
        %v7060 = vmul.f32 %v7026, %v1252
        %v7061 = vmul.f32 %v7029, %v1252
        %v7062 = vsub.f32 %v6868, %v7030
        %v7063 = vsub.f32 %v6869, %v7031
        %v7064 = vsub.f32 %v6870, %v7032
        %v7065 = vsub.f32 %v6871, %v7033
        %v7066 = vsub.f32 %v6872, %v7034
        %v7067 = vsub.f32 %v6873, %v7035
        %v7068 = vsub.f32 %v6874, %v7036
        %v7069 = vsub.f32 %v6875, %v7037
        %v7070 = vsub.f32 %v6876, %v7038
        %v7071 = vsub.f32 %v6877, %v7039
        %v7072 = vsub.f32 %v6878, %v7040
        %v7073 = vsub.f32 %v6879, %v7041
        %v7074 = vsub.f32 %v6880, %v7042
        %v7075 = vsub.f32 %v6881, %v7043
        %v7076 = vsub.f32 %v6882, %v7044
        %v7077 = vsub.f32 %v6883, %v7045
        %v7078 = vsub.f32 %v6884, %v7046
        %v7079 = vsub.f32 %v6885, %v7047
        %v7080 = vsub.f32 %v6886, %v7048
        %v7081 = vsub.f32 %v6887, %v7049
        %v7082 = vsub.f32 %v6888, %v7050
        %v7083 = vsub.f32 %v6889, %v7051
        %v7084 = vsub.f32 %v6890, %v7052
        %v7085 = vsub.f32 %v6891, %v7053
        %v7086 = vsub.f32 %v6892, %v7054
        %v7087 = vsub.f32 %v6893, %v7055
        %v7088 = vsub.f32 %v6894, %v7056
        %v7089 = vsub.f32 %v6895, %v7057
        %v7090 = vsub.f32 %v6896, %v7058
        %v7091 = vsub.f32 %v6897, %v7059
        %v7092 = vsub.f32 %v6898, %v7060
        %v7093 = vsub.f32 %v6899, %v7061
        %v7094 = vmul.f32 %v7062, %v7062
        %v7095 = vmul.f32 %v7063, %v7063
        %v7096 = vmul.f32 %v7064, %v7064
        %v7097 = vmul.f32 %v7065, %v7065
        %v7098 = vmul.f32 %v7066, %v7066
        %v7099 = vmul.f32 %v7067, %v7067
        %v7100 = vmul.f32 %v7068, %v7068
        %v7101 = vmul.f32 %v7069, %v7069
        %v7102 = vmul.f32 %v7070, %v7070
        %v7103 = vmul.f32 %v7071, %v7071
        %v7104 = vmul.f32 %v7072, %v7072
        %v7105 = vmul.f32 %v7073, %v7073
        %v7106 = vmul.f32 %v7074, %v7074
        %v7107 = vmul.f32 %v7075, %v7075
        %v7108 = vmul.f32 %v7076, %v7076
        %v7109 = vmul.f32 %v7077, %v7077
        %v7110 = vmul.f32 %v7078, %v7078
        %v7111 = vmul.f32 %v7079, %v7079
        %v7112 = vmul.f32 %v7080, %v7080
        %v7113 = vmul.f32 %v7081, %v7081
        %v7114 = vmul.f32 %v7082, %v7082
        %v7115 = vmul.f32 %v7083, %v7083
        %v7116 = vmul.f32 %v7084, %v7084
        %v7117 = vmul.f32 %v7085, %v7085
        %v7118 = vmul.f32 %v7086, %v7086
        %v7119 = vmul.f32 %v7087, %v7087
        %v7120 = vmul.f32 %v7088, %v7088
        %v7121 = vmul.f32 %v7089, %v7089
        %v7122 = vmul.f32 %v7090, %v7090
        %v7123 = vmul.f32 %v7091, %v7091
        %v7124 = vmul.f32 %v7092, %v7092
        %v7125 = vmul.f32 %v7093, %v7093
        %v7126 = vsel %vm1149, %v7094, 0.0
        %7127 = vadd.xlane.f32.xlu0 %v7126
        %v7128 = vpop.xlane.xlu0 %7127
        %v7129 = vsel %vm1149, %v7095, 0.0
        %7130 = vadd.xlane.f32.xlu0 %v7129
        %v7131 = vpop.xlane.xlu0 %7130
        %v7132 = vsel %vm1149, %v7096, 0.0
        %7133 = vadd.xlane.f32.xlu0 %v7132
        %v7134 = vpop.xlane.xlu0 %7133
        %v7135 = vsel %vm1149, %v7097, 0.0
        %7136 = vadd.xlane.f32.xlu0 %v7135
        %v7137 = vpop.xlane.xlu0 %7136
        %v7138 = vsel %vm1149, %v7098, 0.0
        %7139 = vadd.xlane.f32.xlu0 %v7138
        %v7140 = vpop.xlane.xlu0 %7139
        %v7141 = vsel %vm1149, %v7099, 0.0
        %7142 = vadd.xlane.f32.xlu0 %v7141
        %v7143 = vpop.xlane.xlu0 %7142
        %v7144 = vsel %vm1149, %v7100, 0.0
        %7145 = vadd.xlane.f32.xlu0 %v7144
        %v7146 = vpop.xlane.xlu0 %7145
        %v7147 = vsel %vm1149, %v7101, 0.0
        %7148 = vadd.xlane.f32.xlu0 %v7147
        %v7149 = vpop.xlane.xlu0 %7148
        %v7150 = vsel %vm1149, %v7102, 0.0
        %7151 = vadd.xlane.f32.xlu0 %v7150
        %v7152 = vpop.xlane.xlu0 %7151
        %v7153 = vsel %vm1149, %v7103, 0.0
        %7154 = vadd.xlane.f32.xlu0 %v7153
        %v7155 = vpop.xlane.xlu0 %7154
        %v7156 = vsel %vm1149, %v7104, 0.0
        %7157 = vadd.xlane.f32.xlu0 %v7156
        %v7158 = vpop.xlane.xlu0 %7157
        %v7159 = vsel %vm1149, %v7105, 0.0
        %7160 = vadd.xlane.f32.xlu0 %v7159
        %v7161 = vpop.xlane.xlu0 %7160
        %v7162 = vsel %vm1149, %v7106, 0.0
        %7163 = vadd.xlane.f32.xlu0 %v7162
        %v7164 = vpop.xlane.xlu0 %7163
        %v7165 = vsel %vm1149, %v7107, 0.0
        %7166 = vadd.xlane.f32.xlu0 %v7165
        %v7167 = vpop.xlane.xlu0 %7166
        %v7168 = vsel %vm1149, %v7108, 0.0
        %7169 = vadd.xlane.f32.xlu0 %v7168
        %v7170 = vpop.xlane.xlu0 %7169
        %v7171 = vsel %vm1149, %v7109, 0.0
        %7172 = vadd.xlane.f32.xlu0 %v7171
        %v7173 = vpop.xlane.xlu0 %7172
        %v7174 = vsel %vm1149, %v7110, 0.0
        %7175 = vadd.xlane.f32.xlu0 %v7174
        %v7176 = vpop.xlane.xlu0 %7175
        %v7177 = vsel %vm1149, %v7111, 0.0
        %7178 = vadd.xlane.f32.xlu0 %v7177
        %v7179 = vpop.xlane.xlu0 %7178
        %v7180 = vsel %vm1149, %v7112, 0.0
        %7181 = vadd.xlane.f32.xlu0 %v7180
        %v7182 = vpop.xlane.xlu0 %7181
        %v7183 = vsel %vm1149, %v7113, 0.0
        %7184 = vadd.xlane.f32.xlu0 %v7183
        %v7185 = vpop.xlane.xlu0 %7184
        %v7186 = vsel %vm1149, %v7114, 0.0
        %7187 = vadd.xlane.f32.xlu0 %v7186
        %v7188 = vpop.xlane.xlu0 %7187
        %v7189 = vsel %vm1149, %v7115, 0.0
        %7190 = vadd.xlane.f32.xlu0 %v7189
        %v7191 = vpop.xlane.xlu0 %7190
        %v7192 = vsel %vm1149, %v7116, 0.0
        %7193 = vadd.xlane.f32.xlu0 %v7192
        %v7194 = vpop.xlane.xlu0 %7193
        %v7195 = vsel %vm1149, %v7117, 0.0
        %7196 = vadd.xlane.f32.xlu0 %v7195
        %v7197 = vpop.xlane.xlu0 %7196
        %v7198 = vsel %vm1149, %v7118, 0.0
        %7199 = vadd.xlane.f32.xlu0 %v7198
        %v7200 = vpop.xlane.xlu0 %7199
        %v7201 = vsel %vm1149, %v7119, 0.0
        %7202 = vadd.xlane.f32.xlu0 %v7201
        %v7203 = vpop.xlane.xlu0 %7202
        %v7204 = vsel %vm1149, %v7120, 0.0
        %7205 = vadd.xlane.f32.xlu0 %v7204
        %v7206 = vpop.xlane.xlu0 %7205
        %v7207 = vsel %vm1149, %v7121, 0.0
        %7208 = vadd.xlane.f32.xlu0 %v7207
        %v7209 = vpop.xlane.xlu0 %7208
        %v7210 = vsel %vm1149, %v7122, 0.0
        %7211 = vadd.xlane.f32.xlu0 %v7210
        %v7212 = vpop.xlane.xlu0 %7211
        %v7213 = vsel %vm1149, %v7123, 0.0
        %7214 = vadd.xlane.f32.xlu0 %v7213
        %v7215 = vpop.xlane.xlu0 %7214
        %v7216 = vsel %vm1149, %v7124, 0.0
        %7217 = vadd.xlane.f32.xlu0 %v7216
        %v7218 = vpop.xlane.xlu0 %7217
        %v7219 = vsel %vm1149, %v7125, 0.0
        %7220 = vadd.xlane.f32.xlu0 %v7219
        %v7221 = vpop.xlane.xlu0 %7220
        %v7222 = vmul.f32 %v7128, %v1252
        %v7223 = vmul.f32 %v7131, %v1252
        %v7224 = vmul.f32 %v7134, %v1252
        %v7225 = vmul.f32 %v7137, %v1252
        %v7226 = vmul.f32 %v7140, %v1252
        %v7227 = vmul.f32 %v7143, %v1252
        %v7228 = vmul.f32 %v7146, %v1252
        %v7229 = vmul.f32 %v7149, %v1252
        %v7230 = vmul.f32 %v7152, %v1252
        %v7231 = vmul.f32 %v7155, %v1252
        %v7232 = vmul.f32 %v7158, %v1252
        %v7233 = vmul.f32 %v7161, %v1252
        %v7234 = vmul.f32 %v7164, %v1252
        %v7235 = vmul.f32 %v7167, %v1252
        %v7236 = vmul.f32 %v7170, %v1252
        %v7237 = vmul.f32 %v7173, %v1252
        %v7238 = vmul.f32 %v7176, %v1252
        %v7239 = vmul.f32 %v7179, %v1252
        %v7240 = vmul.f32 %v7182, %v1252
        %v7241 = vmul.f32 %v7185, %v1252
        %v7242 = vmul.f32 %v7188, %v1252
        %v7243 = vmul.f32 %v7191, %v1252
        %v7244 = vmul.f32 %v7194, %v1252
        %v7245 = vmul.f32 %v7197, %v1252
        %v7246 = vmul.f32 %v7200, %v1252
        %v7247 = vmul.f32 %v7203, %v1252
        %v7248 = vmul.f32 %v7206, %v1252
        %v7249 = vmul.f32 %v7209, %v1252
        %v7250 = vmul.f32 %v7212, %v1252
        %v7251 = vmul.f32 %v7215, %v1252
        %v7252 = vmul.f32 %v7218, %v1252
        %v7253 = vmul.f32 %v7221, %v1252
        %v7254 = vadd.f32 %v7222, 1e-05
        %v7255 = vadd.f32 %v7223, 1e-05
        %v7256 = vadd.f32 %v7224, 1e-05
        %v7257 = vadd.f32 %v7225, 1e-05
        %v7258 = vadd.f32 %v7226, 1e-05
        %v7259 = vadd.f32 %v7227, 1e-05
        %v7260 = vadd.f32 %v7228, 1e-05
        %v7261 = vadd.f32 %v7229, 1e-05
        %v7262 = vadd.f32 %v7230, 1e-05
        %v7263 = vadd.f32 %v7231, 1e-05
        %v7264 = vadd.f32 %v7232, 1e-05
        %v7265 = vadd.f32 %v7233, 1e-05
        %v7266 = vadd.f32 %v7234, 1e-05
        %v7267 = vadd.f32 %v7235, 1e-05
        %v7268 = vadd.f32 %v7236, 1e-05
        %v7269 = vadd.f32 %v7237, 1e-05
        %v7270 = vadd.f32 %v7238, 1e-05
        %v7271 = vadd.f32 %v7239, 1e-05
        %v7272 = vadd.f32 %v7240, 1e-05
        %v7273 = vadd.f32 %v7241, 1e-05
        %v7274 = vadd.f32 %v7242, 1e-05
        %v7275 = vadd.f32 %v7243, 1e-05
        %v7276 = vadd.f32 %v7244, 1e-05
        %v7277 = vadd.f32 %v7245, 1e-05
        %v7278 = vadd.f32 %v7246, 1e-05
        %v7279 = vadd.f32 %v7247, 1e-05
        %v7280 = vadd.f32 %v7248, 1e-05
        %v7281 = vadd.f32 %v7249, 1e-05
        %v7282 = vadd.f32 %v7250, 1e-05
        %v7283 = vadd.f32 %v7251, 1e-05
        %v7284 = vadd.f32 %v7252, 1e-05
        %v7285 = vadd.f32 %v7253, 1e-05
        %v7286 = vrsqrt.pop %v7254
        %v7287 = vmul.f32 %v7286, %v7254
        %v7288 = vmul.f32 %v7287, %v7286
        %v7289 = vmul.f32 0.5, %v7288
        %v7290 = vsub.f32 1.5, %v7289
        %v7291 = vmul.f32 %v7286, %v7290
        %vm7292 = vweird.f32 %v7254
        %vm7293 = vweird.f32 %v7286
        %vm7294 = vmor %vm7292, %vm7293
        %v7295 = vsel %vm7294, %v7286, %v7291
        %v7296 = vrsqrt.pop %v7255
        %v7297 = vmul.f32 %v7296, %v7255
        %v7298 = vmul.f32 %v7297, %v7296
        %v7299 = vmul.f32 0.5, %v7298
        %v7300 = vsub.f32 1.5, %v7299
        %v7301 = vmul.f32 %v7296, %v7300
        %vm7302 = vweird.f32 %v7255
        %vm7303 = vweird.f32 %v7296
        %vm7304 = vmor %vm7302, %vm7303
        %v7305 = vsel %vm7304, %v7296, %v7301
        %v7306 = vrsqrt.pop %v7256
        %v7307 = vmul.f32 %v7306, %v7256
        %v7308 = vmul.f32 %v7307, %v7306
        %v7309 = vmul.f32 0.5, %v7308
        %v7310 = vsub.f32 1.5, %v7309
        %v7311 = vmul.f32 %v7306, %v7310
        %vm7312 = vweird.f32 %v7256
        %vm7313 = vweird.f32 %v7306
        %vm7314 = vmor %vm7312, %vm7313
        %v7315 = vsel %vm7314, %v7306, %v7311
        %v7316 = vrsqrt.pop %v7257
        %v7317 = vmul.f32 %v7316, %v7257
        %v7318 = vmul.f32 %v7317, %v7316
        %v7319 = vmul.f32 0.5, %v7318
        %v7320 = vsub.f32 1.5, %v7319
        %v7321 = vmul.f32 %v7316, %v7320
        %vm7322 = vweird.f32 %v7257
        %vm7323 = vweird.f32 %v7316
        %vm7324 = vmor %vm7322, %vm7323
        %v7325 = vsel %vm7324, %v7316, %v7321
        %v7326 = vrsqrt.pop %v7258
        %v7327 = vmul.f32 %v7326, %v7258
        %v7328 = vmul.f32 %v7327, %v7326
        %v7329 = vmul.f32 0.5, %v7328
        %v7330 = vsub.f32 1.5, %v7329
        %v7331 = vmul.f32 %v7326, %v7330
        %vm7332 = vweird.f32 %v7258
        %vm7333 = vweird.f32 %v7326
        %vm7334 = vmor %vm7332, %vm7333
        %v7335 = vsel %vm7334, %v7326, %v7331
        %v7336 = vrsqrt.pop %v7259
        %v7337 = vmul.f32 %v7336, %v7259
        %v7338 = vmul.f32 %v7337, %v7336
        %v7339 = vmul.f32 0.5, %v7338
        %v7340 = vsub.f32 1.5, %v7339
        %v7341 = vmul.f32 %v7336, %v7340
        %vm7342 = vweird.f32 %v7259
        %vm7343 = vweird.f32 %v7336
        %vm7344 = vmor %vm7342, %vm7343
        %v7345 = vsel %vm7344, %v7336, %v7341
        %v7346 = vrsqrt.pop %v7260
        %v7347 = vmul.f32 %v7346, %v7260
        %v7348 = vmul.f32 %v7347, %v7346
        %v7349 = vmul.f32 0.5, %v7348
        %v7350 = vsub.f32 1.5, %v7349
        %v7351 = vmul.f32 %v7346, %v7350
        %vm7352 = vweird.f32 %v7260
        %vm7353 = vweird.f32 %v7346
        %vm7354 = vmor %vm7352, %vm7353
        %v7355 = vsel %vm7354, %v7346, %v7351
        %v7356 = vrsqrt.pop %v7261
        %v7357 = vmul.f32 %v7356, %v7261
        %v7358 = vmul.f32 %v7357, %v7356
        %v7359 = vmul.f32 0.5, %v7358
        %v7360 = vsub.f32 1.5, %v7359
        %v7361 = vmul.f32 %v7356, %v7360
        %vm7362 = vweird.f32 %v7261
        %vm7363 = vweird.f32 %v7356
        %vm7364 = vmor %vm7362, %vm7363
        %v7365 = vsel %vm7364, %v7356, %v7361
        %v7366 = vrsqrt.pop %v7262
        %v7367 = vmul.f32 %v7366, %v7262
        %v7368 = vmul.f32 %v7367, %v7366
        %v7369 = vmul.f32 0.5, %v7368
        %v7370 = vsub.f32 1.5, %v7369
        %v7371 = vmul.f32 %v7366, %v7370
        %vm7372 = vweird.f32 %v7262
        %vm7373 = vweird.f32 %v7366
        %vm7374 = vmor %vm7372, %vm7373
        %v7375 = vsel %vm7374, %v7366, %v7371
        %v7376 = vrsqrt.pop %v7263
        %v7377 = vmul.f32 %v7376, %v7263
        %v7378 = vmul.f32 %v7377, %v7376
        %v7379 = vmul.f32 0.5, %v7378
        %v7380 = vsub.f32 1.5, %v7379
        %v7381 = vmul.f32 %v7376, %v7380
        %vm7382 = vweird.f32 %v7263
        %vm7383 = vweird.f32 %v7376
        %vm7384 = vmor %vm7382, %vm7383
        %v7385 = vsel %vm7384, %v7376, %v7381
        %v7386 = vrsqrt.pop %v7264
        %v7387 = vmul.f32 %v7386, %v7264
        %v7388 = vmul.f32 %v7387, %v7386
        %v7389 = vmul.f32 0.5, %v7388
        %v7390 = vsub.f32 1.5, %v7389
        %v7391 = vmul.f32 %v7386, %v7390
        %vm7392 = vweird.f32 %v7264
        %vm7393 = vweird.f32 %v7386
        %vm7394 = vmor %vm7392, %vm7393
        %v7395 = vsel %vm7394, %v7386, %v7391
        %v7396 = vrsqrt.pop %v7265
        %v7397 = vmul.f32 %v7396, %v7265
        %v7398 = vmul.f32 %v7397, %v7396
        %v7399 = vmul.f32 0.5, %v7398
        %v7400 = vsub.f32 1.5, %v7399
        %v7401 = vmul.f32 %v7396, %v7400
        %vm7402 = vweird.f32 %v7265
        %vm7403 = vweird.f32 %v7396
        %vm7404 = vmor %vm7402, %vm7403
        %v7405 = vsel %vm7404, %v7396, %v7401
        %v7406 = vrsqrt.pop %v7266
        %v7407 = vmul.f32 %v7406, %v7266
        %v7408 = vmul.f32 %v7407, %v7406
        %v7409 = vmul.f32 0.5, %v7408
        %v7410 = vsub.f32 1.5, %v7409
        %v7411 = vmul.f32 %v7406, %v7410
        %vm7412 = vweird.f32 %v7266
        %vm7413 = vweird.f32 %v7406
        %vm7414 = vmor %vm7412, %vm7413
        %v7415 = vsel %vm7414, %v7406, %v7411
        %v7416 = vrsqrt.pop %v7267
        %v7417 = vmul.f32 %v7416, %v7267
        %v7418 = vmul.f32 %v7417, %v7416
        %v7419 = vmul.f32 0.5, %v7418
        %v7420 = vsub.f32 1.5, %v7419
        %v7421 = vmul.f32 %v7416, %v7420
        %vm7422 = vweird.f32 %v7267
        %vm7423 = vweird.f32 %v7416
        %vm7424 = vmor %vm7422, %vm7423
        %v7425 = vsel %vm7424, %v7416, %v7421
        %v7426 = vrsqrt.pop %v7268
        %v7427 = vmul.f32 %v7426, %v7268
        %v7428 = vmul.f32 %v7427, %v7426
        %v7429 = vmul.f32 0.5, %v7428
        %v7430 = vsub.f32 1.5, %v7429
        %v7431 = vmul.f32 %v7426, %v7430
        %vm7432 = vweird.f32 %v7268
        %vm7433 = vweird.f32 %v7426
        %vm7434 = vmor %vm7432, %vm7433
        %v7435 = vsel %vm7434, %v7426, %v7431
        %v7436 = vrsqrt.pop %v7269
        %v7437 = vmul.f32 %v7436, %v7269
        %v7438 = vmul.f32 %v7437, %v7436
        %v7439 = vmul.f32 0.5, %v7438
        %v7440 = vsub.f32 1.5, %v7439
        %v7441 = vmul.f32 %v7436, %v7440
        %vm7442 = vweird.f32 %v7269
        %vm7443 = vweird.f32 %v7436
        %vm7444 = vmor %vm7442, %vm7443
        %v7445 = vsel %vm7444, %v7436, %v7441
        %v7446 = vrsqrt.pop %v7270
        %v7447 = vmul.f32 %v7446, %v7270
        %v7448 = vmul.f32 %v7447, %v7446
        %v7449 = vmul.f32 0.5, %v7448
        %v7450 = vsub.f32 1.5, %v7449
        %v7451 = vmul.f32 %v7446, %v7450
        %vm7452 = vweird.f32 %v7270
        %vm7453 = vweird.f32 %v7446
        %vm7454 = vmor %vm7452, %vm7453
        %v7455 = vsel %vm7454, %v7446, %v7451
        %v7456 = vrsqrt.pop %v7271
        %v7457 = vmul.f32 %v7456, %v7271
        %v7458 = vmul.f32 %v7457, %v7456
        %v7459 = vmul.f32 0.5, %v7458
        %v7460 = vsub.f32 1.5, %v7459
        %v7461 = vmul.f32 %v7456, %v7460
        %vm7462 = vweird.f32 %v7271
        %vm7463 = vweird.f32 %v7456
        %vm7464 = vmor %vm7462, %vm7463
        %v7465 = vsel %vm7464, %v7456, %v7461
        %v7466 = vrsqrt.pop %v7272
        %v7467 = vmul.f32 %v7466, %v7272
        %v7468 = vmul.f32 %v7467, %v7466
        %v7469 = vmul.f32 0.5, %v7468
        %v7470 = vsub.f32 1.5, %v7469
        %v7471 = vmul.f32 %v7466, %v7470
        %vm7472 = vweird.f32 %v7272
        %vm7473 = vweird.f32 %v7466
        %vm7474 = vmor %vm7472, %vm7473
        %v7475 = vsel %vm7474, %v7466, %v7471
        %v7476 = vrsqrt.pop %v7273
        %v7477 = vmul.f32 %v7476, %v7273
        %v7478 = vmul.f32 %v7477, %v7476
        %v7479 = vmul.f32 0.5, %v7478
        %v7480 = vsub.f32 1.5, %v7479
        %v7481 = vmul.f32 %v7476, %v7480
        %vm7482 = vweird.f32 %v7273
        %vm7483 = vweird.f32 %v7476
        %vm7484 = vmor %vm7482, %vm7483
        %v7485 = vsel %vm7484, %v7476, %v7481
        %v7486 = vrsqrt.pop %v7274
        %v7487 = vmul.f32 %v7486, %v7274
        %v7488 = vmul.f32 %v7487, %v7486
        %v7489 = vmul.f32 0.5, %v7488
        %v7490 = vsub.f32 1.5, %v7489
        %v7491 = vmul.f32 %v7486, %v7490
        %vm7492 = vweird.f32 %v7274
        %vm7493 = vweird.f32 %v7486
        %vm7494 = vmor %vm7492, %vm7493
        %v7495 = vsel %vm7494, %v7486, %v7491
        %v7496 = vrsqrt.pop %v7275
        %v7497 = vmul.f32 %v7496, %v7275
        %v7498 = vmul.f32 %v7497, %v7496
        %v7499 = vmul.f32 0.5, %v7498
        %v7500 = vsub.f32 1.5, %v7499
        %v7501 = vmul.f32 %v7496, %v7500
        %vm7502 = vweird.f32 %v7275
        %vm7503 = vweird.f32 %v7496
        %vm7504 = vmor %vm7502, %vm7503
        %v7505 = vsel %vm7504, %v7496, %v7501
        %v7506 = vrsqrt.pop %v7276
        %v7507 = vmul.f32 %v7506, %v7276
        %v7508 = vmul.f32 %v7507, %v7506
        %v7509 = vmul.f32 0.5, %v7508
        %v7510 = vsub.f32 1.5, %v7509
        %v7511 = vmul.f32 %v7506, %v7510
        %vm7512 = vweird.f32 %v7276
        %vm7513 = vweird.f32 %v7506
        %vm7514 = vmor %vm7512, %vm7513
        %v7515 = vsel %vm7514, %v7506, %v7511
        %v7516 = vrsqrt.pop %v7277
        %v7517 = vmul.f32 %v7516, %v7277
        %v7518 = vmul.f32 %v7517, %v7516
        %v7519 = vmul.f32 0.5, %v7518
        %v7520 = vsub.f32 1.5, %v7519
        %v7521 = vmul.f32 %v7516, %v7520
        %vm7522 = vweird.f32 %v7277
        %vm7523 = vweird.f32 %v7516
        %vm7524 = vmor %vm7522, %vm7523
        %v7525 = vsel %vm7524, %v7516, %v7521
        %v7526 = vrsqrt.pop %v7278
        %v7527 = vmul.f32 %v7526, %v7278
        %v7528 = vmul.f32 %v7527, %v7526
        %v7529 = vmul.f32 0.5, %v7528
        %v7530 = vsub.f32 1.5, %v7529
        %v7531 = vmul.f32 %v7526, %v7530
        %vm7532 = vweird.f32 %v7278
        %vm7533 = vweird.f32 %v7526
        %vm7534 = vmor %vm7532, %vm7533
        %v7535 = vsel %vm7534, %v7526, %v7531
        %v7536 = vrsqrt.pop %v7279
        %v7537 = vmul.f32 %v7536, %v7279
        %v7538 = vmul.f32 %v7537, %v7536
        %v7539 = vmul.f32 0.5, %v7538
        %v7540 = vsub.f32 1.5, %v7539
        %v7541 = vmul.f32 %v7536, %v7540
        %vm7542 = vweird.f32 %v7279
        %vm7543 = vweird.f32 %v7536
        %vm7544 = vmor %vm7542, %vm7543
        %v7545 = vsel %vm7544, %v7536, %v7541
        %v7546 = vrsqrt.pop %v7280
        %v7547 = vmul.f32 %v7546, %v7280
        %v7548 = vmul.f32 %v7547, %v7546
        %v7549 = vmul.f32 0.5, %v7548
        %v7550 = vsub.f32 1.5, %v7549
        %v7551 = vmul.f32 %v7546, %v7550
        %vm7552 = vweird.f32 %v7280
        %vm7553 = vweird.f32 %v7546
        %vm7554 = vmor %vm7552, %vm7553
        %v7555 = vsel %vm7554, %v7546, %v7551
        %v7556 = vrsqrt.pop %v7281
        %v7557 = vmul.f32 %v7556, %v7281
        %v7558 = vmul.f32 %v7557, %v7556
        %v7559 = vmul.f32 0.5, %v7558
        %v7560 = vsub.f32 1.5, %v7559
        %v7561 = vmul.f32 %v7556, %v7560
        %vm7562 = vweird.f32 %v7281
        %vm7563 = vweird.f32 %v7556
        %vm7564 = vmor %vm7562, %vm7563
        %v7565 = vsel %vm7564, %v7556, %v7561
        %v7566 = vrsqrt.pop %v7282
        %v7567 = vmul.f32 %v7566, %v7282
        %v7568 = vmul.f32 %v7567, %v7566
        %v7569 = vmul.f32 0.5, %v7568
        %v7570 = vsub.f32 1.5, %v7569
        %v7571 = vmul.f32 %v7566, %v7570
        %vm7572 = vweird.f32 %v7282
        %vm7573 = vweird.f32 %v7566
        %vm7574 = vmor %vm7572, %vm7573
        %v7575 = vsel %vm7574, %v7566, %v7571
        %v7576 = vrsqrt.pop %v7283
        %v7577 = vmul.f32 %v7576, %v7283
        %v7578 = vmul.f32 %v7577, %v7576
        %v7579 = vmul.f32 0.5, %v7578
        %v7580 = vsub.f32 1.5, %v7579
        %v7581 = vmul.f32 %v7576, %v7580
        %vm7582 = vweird.f32 %v7283
        %vm7583 = vweird.f32 %v7576
        %vm7584 = vmor %vm7582, %vm7583
        %v7585 = vsel %vm7584, %v7576, %v7581
        %v7586 = vrsqrt.pop %v7284
        %v7587 = vmul.f32 %v7586, %v7284
        %v7588 = vmul.f32 %v7587, %v7586
        %v7589 = vmul.f32 0.5, %v7588
        %v7590 = vsub.f32 1.5, %v7589
        %v7591 = vmul.f32 %v7586, %v7590
        %vm7592 = vweird.f32 %v7284
        %vm7593 = vweird.f32 %v7586
        %vm7594 = vmor %vm7592, %vm7593
        %v7595 = vsel %vm7594, %v7586, %v7591
        %v7596 = vrsqrt.pop %v7285
        %v7597 = vmul.f32 %v7596, %v7285
        %v7598 = vmul.f32 %v7597, %v7596
        %v7599 = vmul.f32 0.5, %v7598
        %v7600 = vsub.f32 1.5, %v7599
        %v7601 = vmul.f32 %v7596, %v7600
        %vm7602 = vweird.f32 %v7285
        %vm7603 = vweird.f32 %v7596
        %vm7604 = vmor %vm7602, %vm7603
        %v7605 = vsel %vm7604, %v7596, %v7601
        %v7606 = vmul.f32 %v7062, %v7295
        %v7607 = vmul.f32 %v7063, %v7305
        %v7608 = vmul.f32 %v7064, %v7315
        %v7609 = vmul.f32 %v7065, %v7325
        %v7610 = vmul.f32 %v7066, %v7335
        %v7611 = vmul.f32 %v7067, %v7345
        %v7612 = vmul.f32 %v7068, %v7355
        %v7613 = vmul.f32 %v7069, %v7365
        %v7614 = vmul.f32 %v7070, %v7375
        %v7615 = vmul.f32 %v7071, %v7385
        %v7616 = vmul.f32 %v7072, %v7395
        %v7617 = vmul.f32 %v7073, %v7405
        %v7618 = vmul.f32 %v7074, %v7415
        %v7619 = vmul.f32 %v7075, %v7425
        %v7620 = vmul.f32 %v7076, %v7435
        %v7621 = vmul.f32 %v7077, %v7445
        %v7622 = vmul.f32 %v7078, %v7455
        %v7623 = vmul.f32 %v7079, %v7465
        %v7624 = vmul.f32 %v7080, %v7475
        %v7625 = vmul.f32 %v7081, %v7485
        %v7626 = vmul.f32 %v7082, %v7495
        %v7627 = vmul.f32 %v7083, %v7505
        %v7628 = vmul.f32 %v7084, %v7515
        %v7629 = vmul.f32 %v7085, %v7525
        %v7630 = vmul.f32 %v7086, %v7535
        %v7631 = vmul.f32 %v7087, %v7545
        %v7632 = vmul.f32 %v7088, %v7555
        %v7633 = vmul.f32 %v7089, %v7565
        %v7634 = vmul.f32 %v7090, %v7575
        %v7635 = vmul.f32 %v7091, %v7585
        %v7636 = vmul.f32 %v7092, %v7595
        %v7637 = vmul.f32 %v7093, %v7605
        %v7639 = vperm.slane %v6918, 0
        %v7641 = vmul.f32 %v7606, %v7639
        %v7642 = vmul.f32 %v7607, %v7639
        %v7643 = vmul.f32 %v7608, %v7639
        %v7644 = vmul.f32 %v7609, %v7639
        %v7645 = vmul.f32 %v7610, %v7639
        %v7646 = vmul.f32 %v7611, %v7639
        %v7647 = vmul.f32 %v7612, %v7639
        %v7648 = vmul.f32 %v7613, %v7639
        %v7649 = vmul.f32 %v7614, %v7639
        %v7650 = vmul.f32 %v7615, %v7639
        %v7651 = vmul.f32 %v7616, %v7639
        %v7652 = vmul.f32 %v7617, %v7639
        %v7653 = vmul.f32 %v7618, %v7639
        %v7654 = vmul.f32 %v7619, %v7639
        %v7655 = vmul.f32 %v7620, %v7639
        %v7656 = vmul.f32 %v7621, %v7639
        %v7657 = vmul.f32 %v7622, %v7639
        %v7658 = vmul.f32 %v7623, %v7639
        %v7659 = vmul.f32 %v7624, %v7639
        %v7660 = vmul.f32 %v7625, %v7639
        %v7661 = vmul.f32 %v7626, %v7639
        %v7662 = vmul.f32 %v7627, %v7639
        %v7663 = vmul.f32 %v7628, %v7639
        %v7664 = vmul.f32 %v7629, %v7639
        %v7665 = vmul.f32 %v7630, %v7639
        %v7666 = vmul.f32 %v7631, %v7639
        %v7667 = vmul.f32 %v7632, %v7639
        %v7668 = vmul.f32 %v7633, %v7639
        %v7669 = vmul.f32 %v7634, %v7639
        %v7670 = vmul.f32 %v7635, %v7639
        %v7671 = vmul.f32 %v7636, %v7639
        %v7672 = vmul.f32 %v7637, %v7639
        %v7674 = vperm.slane %v6919, 0
        %v7676 = vadd.f32 %v7641, %v7674
        %v7677 = vadd.f32 %v7642, %v7674
        %v7678 = vadd.f32 %v7643, %v7674
        %v7679 = vadd.f32 %v7644, %v7674
        %v7680 = vadd.f32 %v7645, %v7674
        %v7681 = vadd.f32 %v7646, %v7674
        %v7682 = vadd.f32 %v7647, %v7674
        %v7683 = vadd.f32 %v7648, %v7674
        %v7684 = vadd.f32 %v7649, %v7674
        %v7685 = vadd.f32 %v7650, %v7674
        %v7686 = vadd.f32 %v7651, %v7674
        %v7687 = vadd.f32 %v7652, %v7674
        %v7688 = vadd.f32 %v7653, %v7674
        %v7689 = vadd.f32 %v7654, %v7674
        %v7690 = vadd.f32 %v7655, %v7674
        %v7691 = vadd.f32 %v7656, %v7674
        %v7692 = vadd.f32 %v7657, %v7674
        %v7693 = vadd.f32 %v7658, %v7674
        %v7694 = vadd.f32 %v7659, %v7674
        %v7695 = vadd.f32 %v7660, %v7674
        %v7696 = vadd.f32 %v7661, %v7674
        %v7697 = vadd.f32 %v7662, %v7674
        %v7698 = vadd.f32 %v7663, %v7674
        %v7699 = vadd.f32 %v7664, %v7674
        %v7700 = vadd.f32 %v7665, %v7674
        %v7701 = vadd.f32 %v7666, %v7674
        %v7702 = vadd.f32 %v7667, %v7674
        %v7703 = vadd.f32 %v7668, %v7674
        %v7704 = vadd.f32 %v7669, %v7674
        %v7705 = vadd.f32 %v7670, %v7674
        %v7706 = vadd.f32 %v7671, %v7674
        %v7707 = vadd.f32 %v7672, %v7674
        %v7708 = vpack.c.bf16 %v7677, %v7676
        %v7709 = vpack.c.bf16 %v7679, %v7678
        %v7710 = vpack.c.bf16 %v7681, %v7680
        %v7711 = vpack.c.bf16 %v7683, %v7682
        %v7712 = vpack.c.bf16 %v7685, %v7684
        %v7713 = vpack.c.bf16 %v7687, %v7686
        %v7714 = vpack.c.bf16 %v7689, %v7688
        %v7715 = vpack.c.bf16 %v7691, %v7690
        %v7716 = vpack.c.bf16 %v7693, %v7692
        %v7717 = vpack.c.bf16 %v7695, %v7694
        %v7718 = vpack.c.bf16 %v7697, %v7696
        %v7719 = vpack.c.bf16 %v7699, %v7698
        %v7720 = vpack.c.bf16 %v7701, %v7700
        %v7721 = vpack.c.bf16 %v7703, %v7702
        %v7722 = vpack.c.bf16 %v7705, %v7704
        %v7723 = vpack.c.bf16 %v7707, %v7706
        %v7725 = vperm.slane %v6924, 0
        %v7731 = vunpack.c.l.b16 %v6920
        %v7732 = vunpack.c.l.b16 %v6921
        %v7733 = vunpack.c.l.b16 %v6922
        %v7734 = vunpack.c.l.b16 %v6923
        %v7735 = vpack.c.b16 %v7732, %v7731
        %v7736 = vpack.c.b16 %v7734, %v7733
        %v7740 = vsel %vm1149, %v7708, 0
        %v7743 = vsel %vm1149, %v7709, 0
        %v7746 = vsel %vm1149, %v7710, 0
        %v7749 = vsel %vm1149, %v7711, 0
        %v7752 = vsel %vm1149, %v7712, 0
        %v7755 = vsel %vm1149, %v7713, 0
        %v7758 = vsel %vm1149, %v7714, 0
        %v7761 = vsel %vm1149, %v7715, 0
        %v7764 = vsel %vm1149, %v7716, 0
        %v7767 = vsel %vm1149, %v7717, 0
        %v7770 = vsel %vm1149, %v7718, 0
        %v7773 = vsel %vm1149, %v7719, 0
        %v7776 = vsel %vm1149, %v7720, 0
        %v7779 = vsel %vm1149, %v7721, 0
        %v7782 = vsel %vm1149, %v7722, 0
        %v7785 = vsel %vm1149, %v7723, 0
        %7787 = vmatpush.bf16.msra.mxu0 0
        %7788 = vmatpush.bf16.msra.mxu0 0
        %7789 = vmatpush.bf16.msra.mxu0 0
        %7790 = vmatpush.bf16.msra.mxu0 0
        %7791 = vmatpush.bf16.msra.mxu0 0
        %7792 = vmatpush.bf16.msra.mxu0 0
        %7793 = vmatpush.bf16.msra.mxu0 %v7736
        %7794 = vmatpush.bf16.msra.mxu0 %v7735
        %7795 = vmatmul.bf16.gmra.mxu0 %v7740
        %v7796 = vpop.f32.mrf.mxu0
        %v7797 = vadd.f32 %v7725, %v7796
        %v7798 = vpop.f32.mrf.mxu0
        %v7799 = vadd.f32 %v7725, %v7798
        %7800 = vmatmul.bf16.gmra.mxu0 %v7743
        %v7801 = vpop.f32.mrf.mxu0
        %v7802 = vadd.f32 %v7725, %v7801
        %v7803 = vpop.f32.mrf.mxu0
        %v7804 = vadd.f32 %v7725, %v7803
        %7805 = vmatmul.bf16.gmra.mxu0 %v7746
        %v7806 = vpop.f32.mrf.mxu0
        %v7807 = vadd.f32 %v7725, %v7806
        %v7808 = vpop.f32.mrf.mxu0
        %v7809 = vadd.f32 %v7725, %v7808
        %7810 = vmatmul.bf16.gmra.mxu0 %v7749
        %v7811 = vpop.f32.mrf.mxu0
        %v7812 = vadd.f32 %v7725, %v7811
        %v7813 = vpop.f32.mrf.mxu0
        %v7814 = vadd.f32 %v7725, %v7813
        %7815 = vmatmul.bf16.gmra.mxu0 %v7752
        %v7816 = vpop.f32.mrf.mxu0
        %v7817 = vadd.f32 %v7725, %v7816
        %v7818 = vpop.f32.mrf.mxu0
        %v7819 = vadd.f32 %v7725, %v7818
        %7820 = vmatmul.bf16.gmra.mxu0 %v7755
        %v7821 = vpop.f32.mrf.mxu0
        %v7822 = vadd.f32 %v7725, %v7821
        %v7823 = vpop.f32.mrf.mxu0
        %v7824 = vadd.f32 %v7725, %v7823
        %7825 = vmatmul.bf16.gmra.mxu0 %v7758
        %v7826 = vpop.f32.mrf.mxu0
        %v7827 = vadd.f32 %v7725, %v7826
        %v7828 = vpop.f32.mrf.mxu0
        %v7829 = vadd.f32 %v7725, %v7828
        %7830 = vmatmul.bf16.gmra.mxu0 %v7761
        %v7831 = vpop.f32.mrf.mxu0
        %v7832 = vadd.f32 %v7725, %v7831
        %v7833 = vpop.f32.mrf.mxu0
        %v7834 = vadd.f32 %v7725, %v7833
        %7835 = vmatmul.bf16.gmra.mxu0 %v7764
        %v7836 = vpop.f32.mrf.mxu0
        %v7837 = vadd.f32 %v7725, %v7836
        %v7838 = vpop.f32.mrf.mxu0
        %v7839 = vadd.f32 %v7725, %v7838
        %7840 = vmatmul.bf16.gmra.mxu0 %v7767
        %v7841 = vpop.f32.mrf.mxu0
        %v7842 = vadd.f32 %v7725, %v7841
        %v7843 = vpop.f32.mrf.mxu0
        %v7844 = vadd.f32 %v7725, %v7843
        %7845 = vmatmul.bf16.gmra.mxu0 %v7770
        %v7846 = vpop.f32.mrf.mxu0
        %v7847 = vadd.f32 %v7725, %v7846
        %v7848 = vpop.f32.mrf.mxu0
        %v7849 = vadd.f32 %v7725, %v7848
        %7850 = vmatmul.bf16.gmra.mxu0 %v7773
        %v7851 = vpop.f32.mrf.mxu0
        %v7852 = vadd.f32 %v7725, %v7851
        %v7853 = vpop.f32.mrf.mxu0
        %v7854 = vadd.f32 %v7725, %v7853
        %7855 = vmatmul.bf16.gmra.mxu0 %v7776
        %v7856 = vpop.f32.mrf.mxu0
        %v7857 = vadd.f32 %v7725, %v7856
        %v7858 = vpop.f32.mrf.mxu0
        %v7859 = vadd.f32 %v7725, %v7858
        %7860 = vmatmul.bf16.gmra.mxu0 %v7779
        %v7861 = vpop.f32.mrf.mxu0
        %v7862 = vadd.f32 %v7725, %v7861
        %v7863 = vpop.f32.mrf.mxu0
        %v7864 = vadd.f32 %v7725, %v7863
        %7865 = vmatmul.bf16.gmra.mxu0 %v7782
        %v7866 = vpop.f32.mrf.mxu0
        %v7867 = vadd.f32 %v7725, %v7866
        %v7868 = vpop.f32.mrf.mxu0
        %v7869 = vadd.f32 %v7725, %v7868
        %7870 = vmatmul.bf16.gmra.mxu0 %v7785
        %v7871 = vpop.f32.mrf.mxu0
        %v7872 = vadd.f32 %v7725, %v7871
        %v7873 = vpop.f32.mrf.mxu0
        %v7874 = vadd.f32 %v7725, %v7873
        %7875 = vdwg.mxu0
        %v7876 = vmul.f32 %v7797, 0.5
        %v7877 = vmul.f32 %v7799, 0.5
        %v7878 = vmul.f32 %v7802, 0.5
        %v7879 = vmul.f32 %v7804, 0.5
        %v7880 = vmul.f32 %v7807, 0.5
        %v7881 = vmul.f32 %v7809, 0.5
        %v7882 = vmul.f32 %v7812, 0.5
        %v7883 = vmul.f32 %v7814, 0.5
        %v7884 = vmul.f32 %v7817, 0.5
        %v7885 = vmul.f32 %v7819, 0.5
        %v7886 = vmul.f32 %v7822, 0.5
        %v7887 = vmul.f32 %v7824, 0.5
        %v7888 = vmul.f32 %v7827, 0.5
        %v7889 = vmul.f32 %v7829, 0.5
        %v7890 = vmul.f32 %v7832, 0.5
        %v7891 = vmul.f32 %v7834, 0.5
        %v7892 = vmul.f32 %v7837, 0.5
        %v7893 = vmul.f32 %v7839, 0.5
        %v7894 = vmul.f32 %v7842, 0.5
        %v7895 = vmul.f32 %v7844, 0.5
        %v7896 = vmul.f32 %v7847, 0.5
        %v7897 = vmul.f32 %v7849, 0.5
        %v7898 = vmul.f32 %v7852, 0.5
        %v7899 = vmul.f32 %v7854, 0.5
        %v7900 = vmul.f32 %v7857, 0.5
        %v7901 = vmul.f32 %v7859, 0.5
        %v7902 = vmul.f32 %v7862, 0.5
        %v7903 = vmul.f32 %v7864, 0.5
        %v7904 = vmul.f32 %v7867, 0.5
        %v7905 = vmul.f32 %v7869, 0.5
        %v7906 = vmul.f32 %v7872, 0.5
        %v7907 = vmul.f32 %v7874, 0.5
        %v7908 = vmul.f32 %v7797, 0.044715
        %v7909 = vmul.f32 %v7799, 0.044715
        %v7910 = vmul.f32 %v7802, 0.044715
        %v7911 = vmul.f32 %v7804, 0.044715
        %v7912 = vmul.f32 %v7807, 0.044715
        %v7913 = vmul.f32 %v7809, 0.044715
        %v7914 = vmul.f32 %v7812, 0.044715
        %v7915 = vmul.f32 %v7814, 0.044715
        %v7916 = vmul.f32 %v7817, 0.044715
        %v7917 = vmul.f32 %v7819, 0.044715
        %v7918 = vmul.f32 %v7822, 0.044715
        %v7919 = vmul.f32 %v7824, 0.044715
        %v7920 = vmul.f32 %v7827, 0.044715
        %v7921 = vmul.f32 %v7829, 0.044715
        %v7922 = vmul.f32 %v7832, 0.044715
        %v7923 = vmul.f32 %v7834, 0.044715
        %v7924 = vmul.f32 %v7837, 0.044715
        %v7925 = vmul.f32 %v7839, 0.044715
        %v7926 = vmul.f32 %v7842, 0.044715
        %v7927 = vmul.f32 %v7844, 0.044715
        %v7928 = vmul.f32 %v7847, 0.044715
        %v7929 = vmul.f32 %v7849, 0.044715
        %v7930 = vmul.f32 %v7852, 0.044715
        %v7931 = vmul.f32 %v7854, 0.044715
        %v7932 = vmul.f32 %v7857, 0.044715
        %v7933 = vmul.f32 %v7859, 0.044715
        %v7934 = vmul.f32 %v7862, 0.044715
        %v7935 = vmul.f32 %v7864, 0.044715
        %v7936 = vmul.f32 %v7867, 0.044715
        %v7937 = vmul.f32 %v7869, 0.044715
        %v7938 = vmul.f32 %v7872, 0.044715
        %v7939 = vmul.f32 %v7874, 0.044715
        %v7940 = vmul.f32 %v7908, %v7797
        %v7941 = vmul.f32 %v7909, %v7799
        %v7942 = vmul.f32 %v7910, %v7802
        %v7943 = vmul.f32 %v7911, %v7804
        %v7944 = vmul.f32 %v7912, %v7807
        %v7945 = vmul.f32 %v7913, %v7809
        %v7946 = vmul.f32 %v7914, %v7812
        %v7947 = vmul.f32 %v7915, %v7814
        %v7948 = vmul.f32 %v7916, %v7817
        %v7949 = vmul.f32 %v7917, %v7819
        %v7950 = vmul.f32 %v7918, %v7822
        %v7951 = vmul.f32 %v7919, %v7824
        %v7952 = vmul.f32 %v7920, %v7827
        %v7953 = vmul.f32 %v7921, %v7829
        %v7954 = vmul.f32 %v7922, %v7832
        %v7955 = vmul.f32 %v7923, %v7834
        %v7956 = vmul.f32 %v7924, %v7837
        %v7957 = vmul.f32 %v7925, %v7839
        %v7958 = vmul.f32 %v7926, %v7842
        %v7959 = vmul.f32 %v7927, %v7844
        %v7960 = vmul.f32 %v7928, %v7847
        %v7961 = vmul.f32 %v7929, %v7849
        %v7962 = vmul.f32 %v7930, %v7852
        %v7963 = vmul.f32 %v7931, %v7854
        %v7964 = vmul.f32 %v7932, %v7857
        %v7965 = vmul.f32 %v7933, %v7859
        %v7966 = vmul.f32 %v7934, %v7862
        %v7967 = vmul.f32 %v7935, %v7864
        %v7968 = vmul.f32 %v7936, %v7867
        %v7969 = vmul.f32 %v7937, %v7869
        %v7970 = vmul.f32 %v7938, %v7872
        %v7971 = vmul.f32 %v7939, %v7874
        %v7972 = vmul.f32 %v7940, %v7797
        %v7973 = vmul.f32 %v7941, %v7799
        %v7974 = vmul.f32 %v7942, %v7802
        %v7975 = vmul.f32 %v7943, %v7804
        %v7976 = vmul.f32 %v7944, %v7807
        %v7977 = vmul.f32 %v7945, %v7809
        %v7978 = vmul.f32 %v7946, %v7812
        %v7979 = vmul.f32 %v7947, %v7814
        %v7980 = vmul.f32 %v7948, %v7817
        %v7981 = vmul.f32 %v7949, %v7819
        %v7982 = vmul.f32 %v7950, %v7822
        %v7983 = vmul.f32 %v7951, %v7824
        %v7984 = vmul.f32 %v7952, %v7827
        %v7985 = vmul.f32 %v7953, %v7829
        %v7986 = vmul.f32 %v7954, %v7832
        %v7987 = vmul.f32 %v7955, %v7834
        %v7988 = vmul.f32 %v7956, %v7837
        %v7989 = vmul.f32 %v7957, %v7839
        %v7990 = vmul.f32 %v7958, %v7842
        %v7991 = vmul.f32 %v7959, %v7844
        %v7992 = vmul.f32 %v7960, %v7847
        %v7993 = vmul.f32 %v7961, %v7849
        %v7994 = vmul.f32 %v7962, %v7852
        %v7995 = vmul.f32 %v7963, %v7854
        %v7996 = vmul.f32 %v7964, %v7857
        %v7997 = vmul.f32 %v7965, %v7859
        %v7998 = vmul.f32 %v7966, %v7862
        %v7999 = vmul.f32 %v7967, %v7864
        %v8000 = vmul.f32 %v7968, %v7867
        %v8001 = vmul.f32 %v7969, %v7869
        %v8002 = vmul.f32 %v7970, %v7872
        %v8003 = vmul.f32 %v7971, %v7874
        %v8004 = vadd.f32 %v7797, %v7972
        %v8005 = vadd.f32 %v7799, %v7973
        %v8006 = vadd.f32 %v7802, %v7974
        %v8007 = vadd.f32 %v7804, %v7975
        %v8008 = vadd.f32 %v7807, %v7976
        %v8009 = vadd.f32 %v7809, %v7977
        %v8010 = vadd.f32 %v7812, %v7978
        %v8011 = vadd.f32 %v7814, %v7979
        %v8012 = vadd.f32 %v7817, %v7980
        %v8013 = vadd.f32 %v7819, %v7981
        %v8014 = vadd.f32 %v7822, %v7982
        %v8015 = vadd.f32 %v7824, %v7983
        %v8016 = vadd.f32 %v7827, %v7984
        %v8017 = vadd.f32 %v7829, %v7985
        %v8018 = vadd.f32 %v7832, %v7986
        %v8019 = vadd.f32 %v7834, %v7987
        %v8020 = vadd.f32 %v7837, %v7988
        %v8021 = vadd.f32 %v7839, %v7989
        %v8022 = vadd.f32 %v7842, %v7990
        %v8023 = vadd.f32 %v7844, %v7991
        %v8024 = vadd.f32 %v7847, %v7992
        %v8025 = vadd.f32 %v7849, %v7993
        %v8026 = vadd.f32 %v7852, %v7994
        %v8027 = vadd.f32 %v7854, %v7995
        %v8028 = vadd.f32 %v7857, %v7996
        %v8029 = vadd.f32 %v7859, %v7997
        %v8030 = vadd.f32 %v7862, %v7998
        %v8031 = vadd.f32 %v7864, %v7999
        %v8032 = vadd.f32 %v7867, %v8000
        %v8033 = vadd.f32 %v7869, %v8001
        %v8034 = vadd.f32 %v7872, %v8002
        %v8035 = vadd.f32 %v7874, %v8003
        %v8036 = vmul.f32 %v8004, 0.7978846
        %v8037 = vmul.f32 %v8005, 0.7978846
        %v8038 = vmul.f32 %v8006, 0.7978846
        %v8039 = vmul.f32 %v8007, 0.7978846
        %v8040 = vmul.f32 %v8008, 0.7978846
        %v8041 = vmul.f32 %v8009, 0.7978846
        %v8042 = vmul.f32 %v8010, 0.7978846
        %v8043 = vmul.f32 %v8011, 0.7978846
        %v8044 = vmul.f32 %v8012, 0.7978846
        %v8045 = vmul.f32 %v8013, 0.7978846
        %v8046 = vmul.f32 %v8014, 0.7978846
        %v8047 = vmul.f32 %v8015, 0.7978846
        %v8048 = vmul.f32 %v8016, 0.7978846
        %v8049 = vmul.f32 %v8017, 0.7978846
        %v8050 = vmul.f32 %v8018, 0.7978846
        %v8051 = vmul.f32 %v8019, 0.7978846
        %v8052 = vmul.f32 %v8020, 0.7978846
        %v8053 = vmul.f32 %v8021, 0.7978846
        %v8054 = vmul.f32 %v8022, 0.7978846
        %v8055 = vmul.f32 %v8023, 0.7978846
        %v8056 = vmul.f32 %v8024, 0.7978846
        %v8057 = vmul.f32 %v8025, 0.7978846
        %v8058 = vmul.f32 %v8026, 0.7978846
        %v8059 = vmul.f32 %v8027, 0.7978846
        %v8060 = vmul.f32 %v8028, 0.7978846
        %v8061 = vmul.f32 %v8029, 0.7978846
        %v8062 = vmul.f32 %v8030, 0.7978846
        %v8063 = vmul.f32 %v8031, 0.7978846
        %v8064 = vmul.f32 %v8032, 0.7978846
        %v8065 = vmul.f32 %v8033, 0.7978846
        %v8066 = vmul.f32 %v8034, 0.7978846
        %v8067 = vmul.f32 %v8035, 0.7978846
        %v8068 = vtanh.pop %v8036
        %v8069 = vtanh.pop %v8037
        %v8070 = vtanh.pop %v8038
        %v8071 = vtanh.pop %v8039
        %v8072 = vtanh.pop %v8040
        %v8073 = vtanh.pop %v8041
        %v8074 = vtanh.pop %v8042
        %v8075 = vtanh.pop %v8043
        %v8076 = vtanh.pop %v8044
        %v8077 = vtanh.pop %v8045
        %v8078 = vtanh.pop %v8046
        %v8079 = vtanh.pop %v8047
        %v8080 = vtanh.pop %v8048
        %v8081 = vtanh.pop %v8049
        %v8082 = vtanh.pop %v8050
        %v8083 = vtanh.pop %v8051
        %v8084 = vtanh.pop %v8052
        %v8085 = vtanh.pop %v8053
        %v8086 = vtanh.pop %v8054
        %v8087 = vtanh.pop %v8055
        %v8088 = vtanh.pop %v8056
        %v8089 = vtanh.pop %v8057
        %v8090 = vtanh.pop %v8058
        %v8091 = vtanh.pop %v8059
        %v8092 = vtanh.pop %v8060
        %v8093 = vtanh.pop %v8061
        %v8094 = vtanh.pop %v8062
        %v8095 = vtanh.pop %v8063
        %v8096 = vtanh.pop %v8064
        %v8097 = vtanh.pop %v8065
        %v8098 = vtanh.pop %v8066
        %v8099 = vtanh.pop %v8067
        %v8100 = vadd.f32 %v8068, 1.0
        %v8101 = vadd.f32 %v8069, 1.0
        %v8102 = vadd.f32 %v8070, 1.0
        %v8103 = vadd.f32 %v8071, 1.0
        %v8104 = vadd.f32 %v8072, 1.0
        %v8105 = vadd.f32 %v8073, 1.0
        %v8106 = vadd.f32 %v8074, 1.0
        %v8107 = vadd.f32 %v8075, 1.0
        %v8108 = vadd.f32 %v8076, 1.0
        %v8109 = vadd.f32 %v8077, 1.0
        %v8110 = vadd.f32 %v8078, 1.0
        %v8111 = vadd.f32 %v8079, 1.0
        %v8112 = vadd.f32 %v8080, 1.0
        %v8113 = vadd.f32 %v8081, 1.0
        %v8114 = vadd.f32 %v8082, 1.0
        %v8115 = vadd.f32 %v8083, 1.0
        %v8116 = vadd.f32 %v8084, 1.0
        %v8117 = vadd.f32 %v8085, 1.0
        %v8118 = vadd.f32 %v8086, 1.0
        %v8119 = vadd.f32 %v8087, 1.0
        %v8120 = vadd.f32 %v8088, 1.0
        %v8121 = vadd.f32 %v8089, 1.0
        %v8122 = vadd.f32 %v8090, 1.0
        %v8123 = vadd.f32 %v8091, 1.0
        %v8124 = vadd.f32 %v8092, 1.0
        %v8125 = vadd.f32 %v8093, 1.0
        %v8126 = vadd.f32 %v8094, 1.0
        %v8127 = vadd.f32 %v8095, 1.0
        %v8128 = vadd.f32 %v8096, 1.0
        %v8129 = vadd.f32 %v8097, 1.0
        %v8130 = vadd.f32 %v8098, 1.0
        %v8131 = vadd.f32 %v8099, 1.0
        %v8132 = vmul.f32 %v7876, %v8100
        %v8133 = vmul.f32 %v7877, %v8101
        %v8134 = vmul.f32 %v7878, %v8102
        %v8135 = vmul.f32 %v7879, %v8103
        %v8136 = vmul.f32 %v7880, %v8104
        %v8137 = vmul.f32 %v7881, %v8105
        %v8138 = vmul.f32 %v7882, %v8106
        %v8139 = vmul.f32 %v7883, %v8107
        %v8140 = vmul.f32 %v7884, %v8108
        %v8141 = vmul.f32 %v7885, %v8109
        %v8142 = vmul.f32 %v7886, %v8110
        %v8143 = vmul.f32 %v7887, %v8111
        %v8144 = vmul.f32 %v7888, %v8112
        %v8145 = vmul.f32 %v7889, %v8113
        %v8146 = vmul.f32 %v7890, %v8114
        %v8147 = vmul.f32 %v7891, %v8115
        %v8148 = vmul.f32 %v7892, %v8116
        %v8149 = vmul.f32 %v7893, %v8117
        %v8150 = vmul.f32 %v7894, %v8118
        %v8151 = vmul.f32 %v7895, %v8119
        %v8152 = vmul.f32 %v7896, %v8120
        %v8153 = vmul.f32 %v7897, %v8121
        %v8154 = vmul.f32 %v7898, %v8122
        %v8155 = vmul.f32 %v7899, %v8123
        %v8156 = vmul.f32 %v7900, %v8124
        %v8157 = vmul.f32 %v7901, %v8125
        %v8158 = vmul.f32 %v7902, %v8126
        %v8159 = vmul.f32 %v7903, %v8127
        %v8160 = vmul.f32 %v7904, %v8128
        %v8161 = vmul.f32 %v7905, %v8129
        %v8162 = vmul.f32 %v7906, %v8130
        %v8163 = vmul.f32 %v7907, %v8131
        %v8164 = vpack.c.bf16 %v8133, %v8132
        %v8165 = vpack.c.bf16 %v8135, %v8134
        %v8166 = vpack.c.bf16 %v8137, %v8136
        %v8167 = vpack.c.bf16 %v8139, %v8138
        %v8168 = vpack.c.bf16 %v8141, %v8140
        %v8169 = vpack.c.bf16 %v8143, %v8142
        %v8170 = vpack.c.bf16 %v8145, %v8144
        %v8171 = vpack.c.bf16 %v8147, %v8146
        %v8172 = vpack.c.bf16 %v8149, %v8148
        %v8173 = vpack.c.bf16 %v8151, %v8150
        %v8174 = vpack.c.bf16 %v8153, %v8152
        %v8175 = vpack.c.bf16 %v8155, %v8154
        %v8176 = vpack.c.bf16 %v8157, %v8156
        %v8177 = vpack.c.bf16 %v8159, %v8158
        %v8178 = vpack.c.bf16 %v8161, %v8160
        %v8179 = vpack.c.bf16 %v8163, %v8162
        %v8181 = vperm.slane %v6933, 0
        %v8191 = vunpack.c.l.b16 %v6925
        %v8192 = vunpack.c.l.b16 %v6926
        %v8193 = vunpack.c.l.b16 %v6927
        %v8194 = vunpack.c.l.b16 %v6928
        %v8195 = vunpack.c.l.b16 %v6929
        %v8196 = vunpack.c.l.b16 %v6930
        %v8197 = vunpack.c.l.b16 %v6931
        %v8198 = vunpack.c.l.b16 %v6932
        %v8199 = vpack.c.b16 %v8192, %v8191
        %v8200 = vpack.c.b16 %v8194, %v8193
        %v8201 = vpack.c.b16 %v8196, %v8195
        %v8202 = vpack.c.b16 %v8198, %v8197
        %vm8207 = vcmask 523264
        %v8209 = vsel %vm8207, %v8164, 0
        %v8212 = vsel %vm8207, %v8165, 0
        %v8215 = vsel %vm8207, %v8166, 0
        %v8218 = vsel %vm8207, %v8167, 0
        %v8221 = vsel %vm8207, %v8168, 0
        %v8224 = vsel %vm8207, %v8169, 0
        %v8227 = vsel %vm8207, %v8170, 0
        %v8230 = vsel %vm8207, %v8171, 0
        %v8233 = vsel %vm8207, %v8172, 0
        %v8236 = vsel %vm8207, %v8173, 0
        %v8239 = vsel %vm8207, %v8174, 0
        %v8242 = vsel %vm8207, %v8175, 0
        %v8245 = vsel %vm8207, %v8176, 0
        %v8248 = vsel %vm8207, %v8177, 0
        %v8251 = vsel %vm8207, %v8178, 0
        %v8254 = vsel %vm8207, %v8179, 0
        %8256 = vmatpush.bf16.msra.mxu0 0
        %8257 = vmatpush.bf16.msra.mxu0 0
        %8258 = vmatpush.bf16.msra.mxu0 0
        %8259 = vmatpush.bf16.msra.mxu0 0
        %8260 = vmatpush.bf16.msra.mxu0 %v8202
        %8261 = vmatpush.bf16.msra.mxu0 %v8201
        %8262 = vmatpush.bf16.msra.mxu0 %v8200
        %8263 = vmatpush.bf16.msra.mxu0 %v8199
        %8264 = vmatmul.bf16.gmra.mxu0 %v8209
        %v8265 = vpop.f32.mrf.mxu0
        %v8266 = vadd.f32 %v8181, %v8265
        %v8267 = vpop.f32.mrf.mxu0
        %v8268 = vadd.f32 %v8181, %v8267
        %8269 = vmatmul.bf16.gmra.mxu0 %v8212
        %v8270 = vpop.f32.mrf.mxu0
        %v8271 = vadd.f32 %v8181, %v8270
        %v8272 = vpop.f32.mrf.mxu0
        %v8273 = vadd.f32 %v8181, %v8272
        %8274 = vmatmul.bf16.gmra.mxu0 %v8215
        %v8275 = vpop.f32.mrf.mxu0
        %v8276 = vadd.f32 %v8181, %v8275
        %v8277 = vpop.f32.mrf.mxu0
        %v8278 = vadd.f32 %v8181, %v8277
        %8279 = vmatmul.bf16.gmra.mxu0 %v8218
        %v8280 = vpop.f32.mrf.mxu0
        %v8281 = vadd.f32 %v8181, %v8280
        %v8282 = vpop.f32.mrf.mxu0
        %v8283 = vadd.f32 %v8181, %v8282
        %8284 = vmatmul.bf16.gmra.mxu0 %v8221
        %v8285 = vpop.f32.mrf.mxu0
        %v8286 = vadd.f32 %v8181, %v8285
        %v8287 = vpop.f32.mrf.mxu0
        %v8288 = vadd.f32 %v8181, %v8287
        %8289 = vmatmul.bf16.gmra.mxu0 %v8224
        %v8290 = vpop.f32.mrf.mxu0
        %v8291 = vadd.f32 %v8181, %v8290
        %v8292 = vpop.f32.mrf.mxu0
        %v8293 = vadd.f32 %v8181, %v8292
        %8294 = vmatmul.bf16.gmra.mxu0 %v8227
        %v8295 = vpop.f32.mrf.mxu0
        %v8296 = vadd.f32 %v8181, %v8295
        %v8297 = vpop.f32.mrf.mxu0
        %v8298 = vadd.f32 %v8181, %v8297
        %8299 = vmatmul.bf16.gmra.mxu0 %v8230
        %v8300 = vpop.f32.mrf.mxu0
        %v8301 = vadd.f32 %v8181, %v8300
        %v8302 = vpop.f32.mrf.mxu0
        %v8303 = vadd.f32 %v8181, %v8302
        %8304 = vmatmul.bf16.gmra.mxu0 %v8233
        %v8305 = vpop.f32.mrf.mxu0
        %v8306 = vadd.f32 %v8181, %v8305
        %v8307 = vpop.f32.mrf.mxu0
        %v8308 = vadd.f32 %v8181, %v8307
        %8309 = vmatmul.bf16.gmra.mxu0 %v8236
        %v8310 = vpop.f32.mrf.mxu0
        %v8311 = vadd.f32 %v8181, %v8310
        %v8312 = vpop.f32.mrf.mxu0
        %v8313 = vadd.f32 %v8181, %v8312
        %8314 = vmatmul.bf16.gmra.mxu0 %v8239
        %v8315 = vpop.f32.mrf.mxu0
        %v8316 = vadd.f32 %v8181, %v8315
        %v8317 = vpop.f32.mrf.mxu0
        %v8318 = vadd.f32 %v8181, %v8317
        %8319 = vmatmul.bf16.gmra.mxu0 %v8242
        %v8320 = vpop.f32.mrf.mxu0
        %v8321 = vadd.f32 %v8181, %v8320
        %v8322 = vpop.f32.mrf.mxu0
        %v8323 = vadd.f32 %v8181, %v8322
        %8324 = vmatmul.bf16.gmra.mxu0 %v8245
        %v8325 = vpop.f32.mrf.mxu0
        %v8326 = vadd.f32 %v8181, %v8325
        %v8327 = vpop.f32.mrf.mxu0
        %v8328 = vadd.f32 %v8181, %v8327
        %8329 = vmatmul.bf16.gmra.mxu0 %v8248
        %v8330 = vpop.f32.mrf.mxu0
        %v8331 = vadd.f32 %v8181, %v8330
        %v8332 = vpop.f32.mrf.mxu0
        %v8333 = vadd.f32 %v8181, %v8332
        %8334 = vmatmul.bf16.gmra.mxu0 %v8251
        %v8335 = vpop.f32.mrf.mxu0
        %v8336 = vadd.f32 %v8181, %v8335
        %v8337 = vpop.f32.mrf.mxu0
        %v8338 = vadd.f32 %v8181, %v8337
        %8339 = vmatmul.bf16.gmra.mxu0 %v8254
        %v8340 = vpop.f32.mrf.mxu0
        %v8341 = vadd.f32 %v8181, %v8340
        %v8342 = vpop.f32.mrf.mxu0
        %v8343 = vadd.f32 %v8181, %v8342
        %8344 = vdwg.mxu0
        %v8345 = vadd.f32 %v6868, %v8266
        %v8346 = vadd.f32 %v6869, %v8268
        %v8347 = vadd.f32 %v6870, %v8271
        %v8348 = vadd.f32 %v6871, %v8273
        %v8349 = vadd.f32 %v6872, %v8276
        %v8350 = vadd.f32 %v6873, %v8278
        %v8351 = vadd.f32 %v6874, %v8281
        %v8352 = vadd.f32 %v6875, %v8283
        %v8353 = vadd.f32 %v6876, %v8286
        %v8354 = vadd.f32 %v6877, %v8288
        %v8355 = vadd.f32 %v6878, %v8291
        %v8356 = vadd.f32 %v6879, %v8293
        %v8357 = vadd.f32 %v6880, %v8296
        %v8358 = vadd.f32 %v6881, %v8298
        %v8359 = vadd.f32 %v6882, %v8301
        %v8360 = vadd.f32 %v6883, %v8303
        %v8361 = vadd.f32 %v6884, %v8306
        %v8362 = vadd.f32 %v6885, %v8308
        %v8363 = vadd.f32 %v6886, %v8311
        %v8364 = vadd.f32 %v6887, %v8313
        %v8365 = vadd.f32 %v6888, %v8316
        %v8366 = vadd.f32 %v6889, %v8318
        %v8367 = vadd.f32 %v6890, %v8321
        %v8368 = vadd.f32 %v6891, %v8323
        %v8369 = vadd.f32 %v6892, %v8326
        %v8370 = vadd.f32 %v6893, %v8328
        %v8371 = vadd.f32 %v6894, %v8331
        %v8372 = vadd.f32 %v6895, %v8333
        %v8373 = vadd.f32 %v6896, %v8336
        %v8374 = vadd.f32 %v6897, %v8338
        %v8375 = vadd.f32 %v6898, %v8341
        %v8376 = vadd.f32 %v6899, %v8343
        %v8377 = vsel %vm1947, %v6917, 0.0
        %8378 = vadd.xlane.f32.xlu0 %v8377
        %v8379 = vpop.xlane.xlu0 %8378
        %v8380 = vmul.f32 %v8379, %v1252
        %v8381 = vsub.f32 %v6917, %v8380
        %v8382 = vmul.f32 %v8381, %v8381
        %v8383 = vsel %vm1947, %v8382, 0.0
        %8384 = vadd.xlane.f32.xlu0 %v8383
        %v8385 = vpop.xlane.xlu0 %8384
        %v8386 = vmul.f32 %v8385, %v1252
        %v8387 = vadd.f32 %v8386, 1e-05
        %v8388 = vrsqrt.pop %v8387
        %v8389 = vmul.f32 %v8388, %v8387
        %v8390 = vmul.f32 %v8389, %v8388
        %v8391 = vmul.f32 0.5, %v8390
        %v8392 = vsub.f32 1.5, %v8391
        %v8393 = vmul.f32 %v8388, %v8392
        %vm8394 = vweird.f32 %v8387
        %vm8395 = vweird.f32 %v8388
        %vm8396 = vmor %vm8394, %vm8395
        %v8397 = vsel %vm8396, %v8388, %v8393
        %v8398 = vmul.f32 %v8381, %v8397
        %v8399 = vmul.f32 %v8398, %v6918
        %v8400 = vadd.f32 %v8399, %v6919
        %v8401 = vpack.c.bf16 %v8400, %v8400
        %v8403 = vsel %vm1149, %v8401, 0
        %8405 = vmatpush.bf16.msra.mxu0 0
        %8406 = vmatpush.bf16.msra.mxu0 0
        %8407 = vmatpush.bf16.msra.mxu0 0
        %8408 = vmatpush.bf16.msra.mxu0 0
        %8409 = vmatpush.bf16.msra.mxu0 0
        %8410 = vmatpush.bf16.msra.mxu0 0
        %8411 = vmatpush.bf16.msra.mxu0 %v7736
        %8412 = vmatpush.bf16.msra.mxu0 %v7735
        %8413 = vmatmul.bf16.gmra.mxu0 %v8403
        %v8414 = vpop.f32.mrf.mxu0
        %v8415 = vadd.f32 %v6924, %v8414
        %v8416 = vpop.f32.mrf.mxu0
        %8417 = vdwg.mxu0
        %v8418 = vmul.f32 %v8415, 0.5
        %v8419 = vmul.f32 %v8415, 0.044715
        %v8420 = vmul.f32 %v8419, %v8415
        %v8421 = vmul.f32 %v8420, %v8415
        %v8422 = vadd.f32 %v8415, %v8421
        %v8423 = vmul.f32 %v8422, 0.7978846
        %v8424 = vtanh.pop %v8423
        %v8425 = vadd.f32 %v8424, 1.0
        %v8426 = vmul.f32 %v8418, %v8425
        %v8427 = vpack.c.bf16 %v8426, %v8426
        %v8429 = vsel %vm8207, %v8427, 0
        %8431 = vmatpush.bf16.msra.mxu0 0
        %8432 = vmatpush.bf16.msra.mxu0 0
        %8433 = vmatpush.bf16.msra.mxu0 0
        %8434 = vmatpush.bf16.msra.mxu0 0
        %8435 = vmatpush.bf16.msra.mxu0 %v8202
        %8436 = vmatpush.bf16.msra.mxu0 %v8201
        %8437 = vmatpush.bf16.msra.mxu0 %v8200
        %8438 = vmatpush.bf16.msra.mxu0 %v8199
        %8439 = vmatmul.bf16.gmra.mxu0 %v8429
        %v8440 = vpop.f32.mrf.mxu0
        %v8441 = vadd.f32 %v6933, %v8440
        %v8442 = vpop.f32.mrf.mxu0
        %8443 = vdwg.mxu0
        %v8444 = vadd.f32 %v6917, %v8441
        %8445 = vst.msk [vmem:[#allocation2] sm:$0xff] %vm1149, %v8345
        %8446 = vst.msk [vmem:[#allocation2 + $0x8] sm:$0xff] %vm1149, %v8346
        %8447 = vst.msk [vmem:[#allocation2 + $0x10] sm:$0xff] %vm1149, %v8347
        %8448 = vst.msk [vmem:[#allocation2 + $0x18] sm:$0xff] %vm1149, %v8348
        %8449 = vst.msk [vmem:[#allocation2 + $0x20] sm:$0xff] %vm1149, %v8349
        %8450 = vst.msk [vmem:[#allocation2 + $0x28] sm:$0xff] %vm1149, %v8350
        %8451 = vst.msk [vmem:[#allocation2 + $0x30] sm:$0xff] %vm1149, %v8351
        %8452 = vst.msk [vmem:[#allocation2 + $0x38] sm:$0xff] %vm1149, %v8352
        %8453 = vst.msk [vmem:[#allocation2 + $0x40] sm:$0xff] %vm1149, %v8353
        %8454 = vst.msk [vmem:[#allocation2 + $0x48] sm:$0xff] %vm1149, %v8354
        %8455 = vst.msk [vmem:[#allocation2 + $0x50] sm:$0xff] %vm1149, %v8355
        %8456 = vst.msk [vmem:[#allocation2 + $0x58] sm:$0xff] %vm1149, %v8356
        %8457 = vst.msk [vmem:[#allocation2 + $0x60] sm:$0xff] %vm1149, %v8357
        %8458 = vst.msk [vmem:[#allocation2 + $0x68] sm:$0xff] %vm1149, %v8358
        %8459 = vst.msk [vmem:[#allocation2 + $0x70] sm:$0xff] %vm1149, %v8359
        %8460 = vst.msk [vmem:[#allocation2 + $0x78] sm:$0xff] %vm1149, %v8360
        %8461 = vst.msk [vmem:[#allocation2 + $0x80] sm:$0xff] %vm1149, %v8361
        %8462 = vst.msk [vmem:[#allocation2 + $0x88] sm:$0xff] %vm1149, %v8362
        %8463 = vst.msk [vmem:[#allocation2 + $0x90] sm:$0xff] %vm1149, %v8363
        %8464 = vst.msk [vmem:[#allocation2 + $0x98] sm:$0xff] %vm1149, %v8364
        %8465 = vst.msk [vmem:[#allocation2 + $0xa0] sm:$0xff] %vm1149, %v8365
        %8466 = vst.msk [vmem:[#allocation2 + $0xa8] sm:$0xff] %vm1149, %v8366
        %8467 = vst.msk [vmem:[#allocation2 + $0xb0] sm:$0xff] %vm1149, %v8367
        %8468 = vst.msk [vmem:[#allocation2 + $0xb8] sm:$0xff] %vm1149, %v8368
        %8469 = vst.msk [vmem:[#allocation2 + $0xc0] sm:$0xff] %vm1149, %v8369
        %8470 = vst.msk [vmem:[#allocation2 + $0xc8] sm:$0xff] %vm1149, %v8370
        %8471 = vst.msk [vmem:[#allocation2 + $0xd0] sm:$0xff] %vm1149, %v8371
        %8472 = vst.msk [vmem:[#allocation2 + $0xd8] sm:$0xff] %vm1149, %v8372
        %8473 = vst.msk [vmem:[#allocation2 + $0xe0] sm:$0xff] %vm1149, %v8373
        %8474 = vst.msk [vmem:[#allocation2 + $0xe8] sm:$0xff] %vm1149, %v8374
        %8475 = vst.msk [vmem:[#allocation2 + $0xf0] sm:$0xff] %vm1149, %v8375
        %8476 = vst.msk [vmem:[#allocation2 + $0xf8] sm:$0xff] %vm1149, %v8376
        %8477 = vst.msk [vmem:[#allocation3] sm:$0x1] %vm1947, %v8444
        %p8478 = scmp.eq.s32.totalorder %s41, 1
        // Predicated region
        $region93: #{transm_forward.1} parent=87 // pred_check
          %p8479 = pneg %p8478
        $region94: #{transm_forward.1} parent=87 // pred_check_branch
          %8481 = sbr.rel (%p8479) target = $region96
        $region95: #{transm_forward.1} parent=87 // pred_region
          %8482 = vst.msk [vmem:[%s751] sm:$0xff] %vm1149, %v8345
          %8483 = vst.msk [vmem:[%s751 + $0x8] sm:$0xff] %vm1149, %v8346
          %8484 = vst.msk [vmem:[%s751 + $0x10] sm:$0xff] %vm1149, %v8347
          %8485 = vst.msk [vmem:[%s751 + $0x18] sm:$0xff] %vm1149, %v8348
          %8486 = vst.msk [vmem:[%s751 + $0x20] sm:$0xff] %vm1149, %v8349
          %8487 = vst.msk [vmem:[%s751 + $0x28] sm:$0xff] %vm1149, %v8350
          %8488 = vst.msk [vmem:[%s751 + $0x30] sm:$0xff] %vm1149, %v8351
          %8489 = vst.msk [vmem:[%s751 + $0x38] sm:$0xff] %vm1149, %v8352
          %8490 = vst.msk [vmem:[%s751 + $0x40] sm:$0xff] %vm1149, %v8353
          %8491 = vst.msk [vmem:[%s751 + $0x48] sm:$0xff] %vm1149, %v8354
          %8492 = vst.msk [vmem:[%s751 + $0x50] sm:$0xff] %vm1149, %v8355
          %8493 = vst.msk [vmem:[%s751 + $0x58] sm:$0xff] %vm1149, %v8356
          %8494 = vst.msk [vmem:[%s751 + $0x60] sm:$0xff] %vm1149, %v8357
          %8495 = vst.msk [vmem:[%s751 + $0x68] sm:$0xff] %vm1149, %v8358
          %8496 = vst.msk [vmem:[%s751 + $0x70] sm:$0xff] %vm1149, %v8359
          %8497 = vst.msk [vmem:[%s751 + $0x78] sm:$0xff] %vm1149, %v8360
          %8498 = vst.msk [vmem:[%s751 + $0x80] sm:$0xff] %vm1149, %v8361
          %8499 = vst.msk [vmem:[%s751 + $0x88] sm:$0xff] %vm1149, %v8362
          %8500 = vst.msk [vmem:[%s751 + $0x90] sm:$0xff] %vm1149, %v8363
          %8501 = vst.msk [vmem:[%s751 + $0x98] sm:$0xff] %vm1149, %v8364
          %8502 = vst.msk [vmem:[%s751 + $0xa0] sm:$0xff] %vm1149, %v8365
          %8503 = vst.msk [vmem:[%s751 + $0xa8] sm:$0xff] %vm1149, %v8366
          %8504 = vst.msk [vmem:[%s751 + $0xb0] sm:$0xff] %vm1149, %v8367
          %8505 = vst.msk [vmem:[%s751 + $0xb8] sm:$0xff] %vm1149, %v8368
          %8506 = vst.msk [vmem:[%s751 + $0xc0] sm:$0xff] %vm1149, %v8369
          %8507 = vst.msk [vmem:[%s751 + $0xc8] sm:$0xff] %vm1149, %v8370
          %8508 = vst.msk [vmem:[%s751 + $0xd0] sm:$0xff] %vm1149, %v8371
          %8509 = vst.msk [vmem:[%s751 + $0xd8] sm:$0xff] %vm1149, %v8372
          %8510 = vst.msk [vmem:[%s751 + $0xe0] sm:$0xff] %vm1149, %v8373
          %8511 = vst.msk [vmem:[%s751 + $0xe8] sm:$0xff] %vm1149, %v8374
          %8512 = vst.msk [vmem:[%s751 + $0xf0] sm:$0xff] %vm1149, %v8375
          %8513 = vst.msk [vmem:[%s751 + $0xf8] sm:$0xff] %vm1149, %v8376
          %8514 = vst.msk [vmem:[%s757] sm:$0x1] %vm1947, %v8444
        $region96: #{transm_forward.1} parent=87 // pred_fallthru
          _
        %s8515 = sand.u32 %s483, 1
        %s8516 = scalar_lea.sflag [#allocation5], %s8515
        %s8517 = sand.u32 %s483, 1
        %s8518 = smul.addr %s8517, 256
        %s8519 = scalar_lea.vmem [#allocation4], %s8518
        %s8520 = sand.u32 %s509, 1
        %s8521 = scalar_lea.sflag [#allocation7], %s8520
        %s8522 = sand.u32 %s509, 1
        %s8523 = scalar_lea.vmem [#allocation6], %s8522
        // Predicated region
        $region97: #{transm_forward.1} parent=87 // pred_check
          %p8524 = pneg %p493
        $region98: #{transm_forward.1} parent=87 // pred_check_branch
          %8526 = sbr.rel (%p8524) target = $region100
        $region99: #{transm_forward.1} parent=87 // pred_region
          %8528 = vsyncadd %s8516, 0
          %s8529 = smul.addr %s40, 32
          %s8530 = smul.addr %s8529, 8
          %s8531 = scalar_lea.hbm %s17, %s8530
          %s8532 = sshll.u32 %s8519, 4
          %s8533 = int_to_ptr.vmem [resolvable:$true] %s8532
          %s8534 = sshll.u32 %s8531, 4
          %s8535 = int_to_ptr.hbm [resolvable:$true] %s8534
          %8540 = dma.vmem_to_hbm [thread:$0]  %s8533, 4096, %s8535, %s8516, 128, 128, 8
        $region100: #{transm_forward.1} parent=87 // pred_fallthru
          _
        // Predicated region
        $region101: #{transm_forward.1} parent=87 // pred_check
          %p8541 = pneg %p519
        $region102: #{transm_forward.1} parent=87 // pred_check_branch
          %8543 = sbr.rel (%p8541) target = $region104
        $region103: #{transm_forward.1} parent=87 // pred_region
          %8545 = vsyncadd %s8521, 0
          %s8546 = scalar_lea.hbm %s18, %s40
          %s8548 = sshll.u32 %s8523, 4
          %s8549 = int_to_ptr.vmem [resolvable:$true] %s8548
          %s8550 = sshll.u32 %s8546, 4
          %s8551 = int_to_ptr.hbm [resolvable:$true] %s8550
          %8553 = dma.vmem_to_hbm [thread:$0]  %s8549, 16, %s8551, %s8521
        $region104: #{transm_forward.1} parent=87 // pred_fallthru
          _
      $region88: #{transm_forward.1} parent=5 // pred_fallthru
        _
      %p8554 = scmp.le.s32.totalorder 2, %s31
      // Predicated region
      $region105: #{transm_forward.1} parent=5 // pred_check
        %p8555 = pneg %p8554
      $region106: #{transm_forward.1} parent=5 // pred_check_branch
        %8557 = sbr.rel (%p8555) target = $region108
      $region107: #{transm_forward.1} parent=5 // pred_region
        %s8558 = ssub.s32 %s31, 2
        // Predicated region
        $region109: #{transm_forward.1} parent=107 // pred_check
          %p8559 = pneg %p499
        $region110: #{transm_forward.1} parent=107 // pred_check_branch
          %8561 = sbr.rel (%p8559) target = $region112
        $region111: #{transm_forward.1} parent=107 // pred_region
          %s8562 = sand.u32 %s484, 1
          %s8563 = scalar_lea.sflag [#allocation5], %s8562
          %s8564 = sand.u32 %s484, 1
          %s8565 = smul.addr %s8564, 256
          %s8566 = scalar_lea.vmem [#allocation4], %s8565
          %8568 = dma.done %s8563, 4096
        $region112: #{transm_forward.1} parent=107 // pred_fallthru
          _
        // Predicated region
        $region113: #{transm_forward.1} parent=107 // pred_check
          %p8569 = pneg %p525
        $region114: #{transm_forward.1} parent=107 // pred_check_branch
          %8571 = sbr.rel (%p8569) target = $region116
        $region115: #{transm_forward.1} parent=107 // pred_region
          %s8572 = sand.u32 %s510, 1
          %s8573 = scalar_lea.sflag [#allocation7], %s8572
          %s8574 = sand.u32 %s510, 1
          %s8575 = scalar_lea.vmem [#allocation6], %s8574
          %8577 = dma.done %s8573, 16
        $region116: #{transm_forward.1} parent=107 // pred_fallthru
          _
      $region108: #{transm_forward.1} parent=5 // pred_fallthru
        _
    $region6: #{transm_forward.1} parent=1 // loop_footer
      %s35 = sadd.s32 1, %s31
    $region7: #{transm_forward.1} parent=1 // loop_footer_branch
      %30 = sbr.rel target = $region3
    $region8: #{transm_forward.1} parent=1 // loop_exit
      _
    %8578 = vsyncpa [#allocation5], 1
    %s8579 = scalar_lea.sflag [#allocation5], 1
    %8580 = vsyncpa %s8579, 1
    %8581 = vsyncpa [#allocation7], 1
    %s8582 = scalar_lea.sflag [#allocation7], 1
    %8583 = vsyncpa %s8582, 1

</llo_original>
